<compile_context>
chip_gen: v5e
topology: v5e:2x2
jax: 0.10.0
libtpu: 0.0.40
codegen_flags: <defaults>
</compile_context>

<pallas_src>
import jax
import jax.numpy as jnp
from jax import lax
from jax.experimental import pallas as pl
from jax.experimental.pallas import tpu as pltpu


# ----------------------------------------------------------------------------
# Conv + bias + ReLU + 2x2 maxpool as a single kernel:
#   x_ref: (1, 4, K, PHW)   phase-split im2col, PHW = (H//2)*(W//2) on lanes
#   w_ref: (Cout, K)        tap order (kh, kw, ci)
#   b_ref: (Cout, 1)
#   o_ref: (1, Cout, PHW)   lane-dense output, already in NCHW-flatten order
# ----------------------------------------------------------------------------
def conv_pool_kernel(x_ref, w_ref, b_ref, o_ref):
    w = w_ref[...]
    m = jnp.dot(w, x_ref[0, 0], preferred_element_type=jnp.float32)
    for p in range(1, 4):  # static unroll over the 4 pool phases
        m = jnp.maximum(
            m, jnp.dot(w, x_ref[0, p], preferred_element_type=jnp.float32))
    # maxpool(relu(conv + b)) == relu(max_over_phases(conv) + b)
    o_ref[0] = jnp.maximum(m + b_ref[...], 0.0).astype(o_ref.dtype)


def _im2col_pooled(x_nchw):
    """(N, C, H, W) -> (N, 4, 9*C, (H//2)*(W//2)).

    Phase p = 2*hp + wp selects the pool tap (h = 2*ph + hp, w = 2*pw + wp);
    tap index k = (kh*3 + kw)*C + ci.  Pure XLA glue (pad + strided slices).
    """
    N, C, H, W = x_nchw.shape
    PH, PW = H // 2, W // 2
    xp = jnp.pad(x_nchw, ((0, 0), (0, 0), (1, 1), (1, 1)))
    phases = []
    for hp in range(2):
        for wp in range(2):
            taps = []
            for kh in range(3):
                for kw in range(3):
                    s = xp[:, :, hp + kh: hp + kh + H: 2, wp + kw: wp + kw + W: 2]
                    taps.append(s.reshape(N, C, PH * PW))
            phases.append(jnp.concatenate(taps, axis=1))    # (N, 9*C, PH*PW)
    return jnp.stack(phases, axis=1)                         # (N, 4, 9*C, PH*PW)


def conv_relu_pool(cols, w_mat, b_col):
    """cols (N,4,K,PHW), w_mat (Cout,K), b_col (Cout,1) -> (N, Cout, PHW)."""
    N, P, K, PHW = cols.shape
    Cout = w_mat.shape[0]
    return pl.pallas_call(
        conv_pool_kernel,
        out_shape=jax.ShapeDtypeStruct((N, Cout, PHW), cols.dtype),
        grid_spec=pltpu.PrefetchScalarGridSpec(
            num_scalar_prefetch=0,
            grid=(N,),                                       # whole image per step
            in_specs=[
                pl.BlockSpec((1, P, K, PHW), lambda n: (n, 0, 0, 0)),
                pl.BlockSpec((Cout, K), lambda n: (0, 0)),   # resident weight
                pl.BlockSpec((Cout, 1), lambda n: (0, 0)),   # resident bias
            ],
            out_specs=pl.BlockSpec((1, Cout, PHW), lambda n: (n, 0, 0)),
        ),
        compiler_params=pltpu.CompilerParams(
            dimension_semantics=("parallel",),               # megacore: 1 image / TC
            vmem_limit_bytes=32 * 1024 * 1024,
        ),
    )(cols, w_mat, b_col)


# ----------------------------------------------------------------------------
# Fused FC head: K-tiled fc1 matmul + bias + ReLU, with fc2 applied in the
# finalize step of the same kernel (fc2 weight is tiny and stays resident).
# ----------------------------------------------------------------------------
def fc_fused_kernel(x_ref, w1_ref, b1_ref, w2_ref, b2_ref, o_ref, acc_ref):
    @pl.when(pl.program_id(0) == 0)
    def _init():
        acc_ref[...] = jnp.zeros_like(acc_ref)

    acc_ref[...] += jnp.dot(x_ref[...], w1_ref[...],
                            preferred_element_type=jnp.float32)

    @pl.when(pl.program_id(0) == pl.num_programs(0) - 1)
    def _finish():
        h = jnp.maximum(acc_ref[...] + b1_ref[...], 0.0)          # fc1 bias + ReLU
        logits = jnp.dot(h, w2_ref[...],
                         preferred_element_type=jnp.float32) + b2_ref[...]
        o_ref[...] = logits.astype(o_ref.dtype)


def fc_head(x, w1, b1, w2, b2, *, tk=8192):
    """x (N,Kin), w1 (Kin,M), b1 (1,M), w2 (M,NC), b2 (1,NC) -> (N,NC)."""
    N, Kin = x.shape
    M = w1.shape[1]
    NC = w2.shape[1]
    assert Kin % tk == 0, (Kin, tk)
    return pl.pallas_call(
        fc_fused_kernel,
        out_shape=jax.ShapeDtypeStruct((N, NC), x.dtype),
        grid_spec=pltpu.PrefetchScalarGridSpec(
            num_scalar_prefetch=0,
            grid=(Kin // tk,),
            in_specs=[
                pl.BlockSpec((N, tk), lambda k: (0, k)),
                pl.BlockSpec((tk, M), lambda k: (k, 0)),
                pl.BlockSpec((1, M), lambda k: (0, 0)),
                pl.BlockSpec((M, NC), lambda k: (0, 0)),
                pl.BlockSpec((1, NC), lambda k: (0, 0)),
            ],
            out_specs=pl.BlockSpec((N, NC), lambda k: (0, 0)),
            scratch_shapes=[pltpu.VMEM((N, M), jnp.float32)],
        ),
        compiler_params=pltpu.CompilerParams(
            dimension_semantics=("arbitrary",),               # K-reduction axis
            vmem_limit_bytes=32 * 1024 * 1024,
        ),
    )(x, w1, b1, w2, b2)


# ----------------------------------------------------------------------------
# Full forward pass (SimpleCNN.forward).
# ----------------------------------------------------------------------------
def simple_cnn_forward(x_nchw, params):
    N = x_nchw.shape[0]
    cols1 = _im2col_pooled(x_nchw)                                   # (N,4,9,4096)
    h1 = conv_relu_pool(cols1, params["conv1_w"], params["conv1_b"]) # (N,16,4096)
    cols2 = _im2col_pooled(h1.reshape(N, 16, 64, 64))                # (N,4,144,1024)
    h2 = conv_relu_pool(cols2, params["conv2_w"], params["conv2_b"]) # (N,32,1024)
    # (N, C, H*W) is already torch's x.view(-1, 32*32*32) order -> no transpose.
    flat = h2.reshape(N, 32 * 32 * 32)
    return fc_head(flat, params["fc1_w"], params["fc1_b"],
                   params["fc2_w"], params["fc2_b"], tk=8192)        # (N,num_classes)


# ----------------------------------------------------------------------------
# Pure-JAX reference (lax.conv + reduce_window) for correctness verification.
# ----------------------------------------------------------------------------
def reference_forward(x_nchw, params):
    def conv(x, w_oihw, b):
        y = lax.conv_general_dilated(
            x, w_oihw, window_strides=(1, 1), padding=((1, 1), (1, 1)),
            dimension_numbers=("NCHW", "OIHW", "NCHW"),
            precision=lax.Precision.HIGHEST)
        return y + b.reshape(1, -1, 1, 1)

    def pool(x):
        return lax.reduce_window(x, -jnp.inf, lax.max,
                                 (1, 1, 2, 2), (1, 1, 2, 2), "VALID")

    # Unpack (Cout, K) tap-ordered weights back to torch OIHW layout.
    w1 = params["conv1_w"].reshape(16, 3, 3, 1).transpose(0, 3, 1, 2)
    w2 = params["conv2_w"].reshape(32, 3, 3, 16).transpose(0, 3, 1, 2)
    h = pool(jnp.maximum(conv(x_nchw, w1, params["conv1_b"]), 0.0))
    h = pool(jnp.maximum(conv(h, w2, params["conv2_b"]), 0.0))
    flat = h.reshape(h.shape[0], -1)
    h3 = jnp.maximum(
        jnp.dot(flat, params["fc1_w"], precision=lax.Precision.HIGHEST)
        + params["fc1_b"], 0.0)
    return (jnp.dot(h3, params["fc2_w"], precision=lax.Precision.HIGHEST)
            + params["fc2_b"])


def init_params(key, num_classes):
    ks = jax.random.split(key, 8)

    def uinit(k, shape, fan_in):
        bound = 1.0 / (fan_in ** 0.5)
        return jax.random.uniform(k, shape, jnp.float32, -bound, bound)

    # torch layouts: conv weight (Cout, Cin, 3, 3); linear weight (out, in).
    c1w = uinit(ks[0], (16, 1, 3, 3), 1 * 9)
    c2w = uinit(ks[2], (32, 16, 3, 3), 16 * 9)
    fc1w = uinit(ks[4], (128, 32 * 32 * 32), 32 * 32 * 32)
    fc2w = uinit(ks[6], (num_classes, 128), 128)
    return {
        # conv weights as (Cout, K), tap order (kh, kw, ci) to match _im2col_pooled.
        "conv1_w": jnp.transpose(c1w, (0, 2, 3, 1)).reshape(16, 9),
        "conv1_b": uinit(ks[1], (16, 1), 1 * 9),
        "conv2_w": jnp.transpose(c2w, (0, 2, 3, 1)).reshape(32, 16 * 9),
        "conv2_b": uinit(ks[3], (32, 1), 16 * 9),
        "fc1_w": fc1w.T,                      # (32768, 128); flatten order already NCHW
        "fc1_b": uinit(ks[5], (1, 128), 32 * 32 * 32),
        "fc2_w": fc2w.T,                      # (128, num_classes)
        "fc2_b": uinit(ks[7], (1, num_classes), 128),
    }


if __name__ == "__main__":
    num_classes = 10
    key = jax.random.PRNGKey(0)
    k_params, k_x = jax.random.split(key)

    params = init_params(k_params, num_classes)
    # fc1 expects 32*32*32 features after two 2x2 pools -> input must be 1x128x128.
    x = jax.random.normal(k_x, (2, 1, 128, 128), dtype=jnp.float32)

    logits = jax.jit(simple_cnn_forward)(x, params)
    jax.block_until_ready(logits)
    assert logits.shape == (2, num_classes)

    ref = jax.jit(reference_forward)(x, params)
    jax.block_until_ready(ref)
    assert jnp.all(jnp.isfinite(logits))
    assert jnp.allclose(logits, ref, atol=1e-2, rtol=1e-2), \
        float(jnp.max(jnp.abs(logits - ref)))

    print("KERNEL_OK")
</pallas_src>

<mosaic_0001>
module attributes {stable_mosaic.version = 11 : i64} {
  func.func @conv_pool_kernel(%arg0: i32, %arg1: memref<1x4x9x4096xf32, #tpu.memory_space<vmem>>, %arg2: memref<16x9xf32, #tpu.memory_space<vmem>>, %arg3: memref<16x1xf32, #tpu.memory_space<vmem>>, %arg4: memref<1x16x4096xf32, #tpu.memory_space<vmem>>) attributes {dimension_semantics = [#tpu.dimension_semantics<parallel>], iteration_bounds = array<i64: 2>, scalar_prefetch = 0 : i64, scratch_operands = 0 : i64, tpu.core_type = #tpu.core_type<tc>, window_params = [{transform_indices = @transform_0, window_bounds = array<i64: 1, 4, 9, 4096>}, {pipeline_mode = #tpu.pipeline_mode<synchronous>, transform_indices = @transform_1, window_bounds = array<i64: 16, 9>}, {pipeline_mode = #tpu.pipeline_mode<synchronous>, transform_indices = @transform_2, window_bounds = array<i64: 16, 1>}, {transform_indices = @transform_3, window_bounds = array<i64: 1, 16, 4096>}]} {
    %c0 = arith.constant 0 : index
    %c0_0 = arith.constant 0 : index
    %0 = vector.load %arg2[%c0, %c0_0] : memref<16x9xf32, #tpu.memory_space<vmem>>, vector<16x9xf32>
    %c0_1 = arith.constant 0 : index
    %c0_2 = arith.constant 0 : index
    %c0_3 = arith.constant 0 : index
    %c0_4 = arith.constant 0 : index
    %1 = vector.load %arg1[%c0_1, %c0_2, %c0_3, %c0_4] : memref<1x4x9x4096xf32, #tpu.memory_space<vmem>>, vector<1x1x9x4096xf32>
    %2 = vector.shape_cast %1 : vector<1x1x9x4096xf32> to vector<9x4096xf32>
    %cst = arith.constant dense<0.000000e+00> : vector<16x4096xf32>
    %3 = tpu.matmul %0, %2, %cst {dimension_numbers = #tpu.dot_dimension_numbers<[1], [0], [0], [1], [0, 0, 1, 1], [], []>} : vector<16x9xf32>, vector<9x4096xf32>, vector<16x4096xf32> -> vector<16x4096xf32>
    %c0_5 = arith.constant 0 : index
    %c1 = arith.constant 1 : index
    %c0_6 = arith.constant 0 : index
    %c0_7 = arith.constant 0 : index
    %4 = vector.load %arg1[%c0_5, %c1, %c0_6, %c0_7] : memref<1x4x9x4096xf32, #tpu.memory_space<vmem>>, vector<1x1x9x4096xf32>
    %5 = vector.shape_cast %4 : vector<1x1x9x4096xf32> to vector<9x4096xf32>
    %cst_8 = arith.constant dense<0.000000e+00> : vector<16x4096xf32>
    %6 = tpu.matmul %0, %5, %cst_8 {dimension_numbers = #tpu.dot_dimension_numbers<[1], [0], [0], [1], [0, 0, 1, 1], [], []>} : vector<16x9xf32>, vector<9x4096xf32>, vector<16x4096xf32> -> vector<16x4096xf32>
    %7 = arith.maximumf %3, %6 : vector<16x4096xf32>
    %c0_9 = arith.constant 0 : index
    %c2 = arith.constant 2 : index
    %c0_10 = arith.constant 0 : index
    %c0_11 = arith.constant 0 : index
    %8 = vector.load %arg1[%c0_9, %c2, %c0_10, %c0_11] : memref<1x4x9x4096xf32, #tpu.memory_space<vmem>>, vector<1x1x9x4096xf32>
    %9 = vector.shape_cast %8 : vector<1x1x9x4096xf32> to vector<9x4096xf32>
    %cst_12 = arith.constant dense<0.000000e+00> : vector<16x4096xf32>
    %10 = tpu.matmul %0, %9, %cst_12 {dimension_numbers = #tpu.dot_dimension_numbers<[1], [0], [0], [1], [0, 0, 1, 1], [], []>} : vector<16x9xf32>, vector<9x4096xf32>, vector<16x4096xf32> -> vector<16x4096xf32>
    %11 = arith.maximumf %7, %10 : vector<16x4096xf32>
    %c0_13 = arith.constant 0 : index
    %c3 = arith.constant 3 : index
    %c0_14 = arith.constant 0 : index
    %c0_15 = arith.constant 0 : index
    %12 = vector.load %arg1[%c0_13, %c3, %c0_14, %c0_15] : memref<1x4x9x4096xf32, #tpu.memory_space<vmem>>, vector<1x1x9x4096xf32>
    %13 = vector.shape_cast %12 : vector<1x1x9x4096xf32> to vector<9x4096xf32>
    %cst_16 = arith.constant dense<0.000000e+00> : vector<16x4096xf32>
    %14 = tpu.matmul %0, %13, %cst_16 {dimension_numbers = #tpu.dot_dimension_numbers<[1], [0], [0], [1], [0, 0, 1, 1], [], []>} : vector<16x9xf32>, vector<9x4096xf32>, vector<16x4096xf32> -> vector<16x4096xf32>
    %15 = arith.maximumf %11, %14 : vector<16x4096xf32>
    %c0_17 = arith.constant 0 : index
    %c0_18 = arith.constant 0 : index
    %16 = vector.load %arg3[%c0_17, %c0_18] : memref<16x1xf32, #tpu.memory_space<vmem>>, vector<16x1xf32>
    %17 = vector.broadcast %16 : vector<16x1xf32> to vector<16x4096xf32>
    %18 = arith.addf %15, %17 : vector<16x4096xf32>
    %cst_19 = arith.constant 0.000000e+00 : f32
    %19 = vector.broadcast %cst_19 : f32 to vector<16x4096xf32>
    %20 = arith.maximumf %18, %19 : vector<16x4096xf32>
    %c0_20 = arith.constant 0 : index
    %c0_21 = arith.constant 0 : index
    %c0_22 = arith.constant 0 : index
    %21 = vector.load %arg4[%c0_20, %c0_21, %c0_22] : memref<1x16x4096xf32, #tpu.memory_space<vmem>>, vector<1x16x4096xf32>
    %22 = vector.shape_cast %21 : vector<1x16x4096xf32> to vector<16x4096xf32>
    %23 = vector.shape_cast %20 : vector<16x4096xf32> to vector<1x16x4096xf32>
    tpu.vector_store %arg4[%c0_20, %c0_21, %c0_22], %23 {strides = array<i32>} : memref<1x16x4096xf32, #tpu.memory_space<vmem>>, vector<1x16x4096xf32>,
    return
  }
  func.func @transform_0(%arg0: i32) -> (i32, i32, i32, i32) {
    %c0_i32 = arith.constant 0 : i32
    %c0_i32_0 = arith.constant 0 : i32
    %c0_i32_1 = arith.constant 0 : i32
    %c0_i32_2 = arith.constant 0 : i32
    return %arg0, %c0_i32, %c0_i32_0, %c0_i32_1 : i32, i32, i32, i32
  }
  func.func @transform_1(%arg0: i32) -> (i32, i32) {
    %c0_i32 = arith.constant 0 : i32
    %c0_i32_0 = arith.constant 0 : i32
    %c0_i32_1 = arith.constant 0 : i32
    return %c0_i32, %c0_i32_0 : i32, i32
  }
  func.func @transform_2(%arg0: i32) -> (i32, i32) {
    %c0_i32 = arith.constant 0 : i32
    %c0_i32_0 = arith.constant 0 : i32
    %c0_i32_1 = arith.constant 0 : i32
    return %c0_i32, %c0_i32_0 : i32, i32
  }
  func.func @transform_3(%arg0: i32) -> (i32, i32, i32) {
    %c0_i32 = arith.constant 0 : i32
    %c0_i32_0 = arith.constant 0 : i32
    %c0_i32_1 = arith.constant 0 : i32
    return %arg0, %c0_i32, %c0_i32_0 : i32, i32, i32
  }
}

module attributes {stable_mosaic.version = 11 : i64} {
  func.func @conv_pool_kernel(%arg0: i32, %arg1: memref<1x4x144x1024xf32, #tpu.memory_space<vmem>>, %arg2: memref<32x144xf32, #tpu.memory_space<vmem>>, %arg3: memref<32x1xf32, #tpu.memory_space<vmem>>, %arg4: memref<1x32x1024xf32, #tpu.memory_space<vmem>>) attributes {dimension_semantics = [#tpu.dimension_semantics<parallel>], iteration_bounds = array<i64: 2>, scalar_prefetch = 0 : i64, scratch_operands = 0 : i64, tpu.core_type = #tpu.core_type<tc>, window_params = [{transform_indices = @transform_0, window_bounds = array<i64: 1, 4, 144, 1024>}, {pipeline_mode = #tpu.pipeline_mode<synchronous>, transform_indices = @transform_1, window_bounds = array<i64: 32, 144>}, {pipeline_mode = #tpu.pipeline_mode<synchronous>, transform_indices = @transform_2, window_bounds = array<i64: 32, 1>}, {transform_indices = @transform_3, window_bounds = array<i64: 1, 32, 1024>}]} {
    %c0 = arith.constant 0 : index
    %c0_0 = arith.constant 0 : index
    %0 = vector.load %arg2[%c0, %c0_0] : memref<32x144xf32, #tpu.memory_space<vmem>>, vector<32x144xf32>
    %c0_1 = arith.constant 0 : index
    %c0_2 = arith.constant 0 : index
    %c0_3 = arith.constant 0 : index
    %c0_4 = arith.constant 0 : index
    %1 = vector.load %arg1[%c0_1, %c0_2, %c0_3, %c0_4] : memref<1x4x144x1024xf32, #tpu.memory_space<vmem>>, vector<1x1x144x1024xf32>
    %2 = vector.shape_cast %1 : vector<1x1x144x1024xf32> to vector<144x1024xf32>
    %cst = arith.constant dense<0.000000e+00> : vector<32x1024xf32>
    %3 = tpu.matmul %0, %2, %cst {dimension_numbers = #tpu.dot_dimension_numbers<[1], [0], [0], [1], [0, 0, 1, 1], [], []>} : vector<32x144xf32>, vector<144x1024xf32>, vector<32x1024xf32> -> vector<32x1024xf32>
    %c0_5 = arith.constant 0 : index
    %c1 = arith.constant 1 : index
    %c0_6 = arith.constant 0 : index
    %c0_7 = arith.constant 0 : index
    %4 = vector.load %arg1[%c0_5, %c1, %c0_6, %c0_7] : memref<1x4x144x1024xf32, #tpu.memory_space<vmem>>, vector<1x1x144x1024xf32>
    %5 = vector.shape_cast %4 : vector<1x1x144x1024xf32> to vector<144x1024xf32>
    %cst_8 = arith.constant dense<0.000000e+00> : vector<32x1024xf32>
    %6 = tpu.matmul %0, %5, %cst_8 {dimension_numbers = #tpu.dot_dimension_numbers<[1], [0], [0], [1], [0, 0, 1, 1], [], []>} : vector<32x144xf32>, vector<144x1024xf32>, vector<32x1024xf32> -> vector<32x1024xf32>
    %7 = arith.maximumf %3, %6 : vector<32x1024xf32>
    %c0_9 = arith.constant 0 : index
    %c2 = arith.constant 2 : index
    %c0_10 = arith.constant 0 : index
    %c0_11 = arith.constant 0 : index
    %8 = vector.load %arg1[%c0_9, %c2, %c0_10, %c0_11] : memref<1x4x144x1024xf32, #tpu.memory_space<vmem>>, vector<1x1x144x1024xf32>
    %9 = vector.shape_cast %8 : vector<1x1x144x1024xf32> to vector<144x1024xf32>
    %cst_12 = arith.constant dense<0.000000e+00> : vector<32x1024xf32>
    %10 = tpu.matmul %0, %9, %cst_12 {dimension_numbers = #tpu.dot_dimension_numbers<[1], [0], [0], [1], [0, 0, 1, 1], [], []>} : vector<32x144xf32>, vector<144x1024xf32>, vector<32x1024xf32> -> vector<32x1024xf32>
    %11 = arith.maximumf %7, %10 : vector<32x1024xf32>
    %c0_13 = arith.constant 0 : index
    %c3 = arith.constant 3 : index
    %c0_14 = arith.constant 0 : index
    %c0_15 = arith.constant 0 : index
    %12 = vector.load %arg1[%c0_13, %c3, %c0_14, %c0_15] : memref<1x4x144x1024xf32, #tpu.memory_space<vmem>>, vector<1x1x144x1024xf32>
    %13 = vector.shape_cast %12 : vector<1x1x144x1024xf32> to vector<144x1024xf32>
    %cst_16 = arith.constant dense<0.000000e+00> : vector<32x1024xf32>
    %14 = tpu.matmul %0, %13, %cst_16 {dimension_numbers = #tpu.dot_dimension_numbers<[1], [0], [0], [1], [0, 0, 1, 1], [], []>} : vector<32x144xf32>, vector<144x1024xf32>, vector<32x1024xf32> -> vector<32x1024xf32>
    %15 = arith.maximumf %11, %14 : vector<32x1024xf32>
    %c0_17 = arith.constant 0 : index
    %c0_18 = arith.constant 0 : index
    %16 = vector.load %arg3[%c0_17, %c0_18] : memref<32x1xf32, #tpu.memory_space<vmem>>, vector<32x1xf32>
    %17 = vector.broadcast %16 : vector<32x1xf32> to vector<32x1024xf32>
    %18 = arith.addf %15, %17 : vector<32x1024xf32>
    %cst_19 = arith.constant 0.000000e+00 : f32
    %19 = vector.broadcast %cst_19 : f32 to vector<32x1024xf32>
    %20 = arith.maximumf %18, %19 : vector<32x1024xf32>
    %c0_20 = arith.constant 0 : index
    %c0_21 = arith.constant 0 : index
    %c0_22 = arith.constant 0 : index
    %21 = vector.load %arg4[%c0_20, %c0_21, %c0_22] : memref<1x32x1024xf32, #tpu.memory_space<vmem>>, vector<1x32x1024xf32>
    %22 = vector.shape_cast %21 : vector<1x32x1024xf32> to vector<32x1024xf32>
    %23 = vector.shape_cast %20 : vector<32x1024xf32> to vector<1x32x1024xf32>
    tpu.vector_store %arg4[%c0_20, %c0_21, %c0_22], %23 {strides = array<i32>} : memref<1x32x1024xf32, #tpu.memory_space<vmem>>, vector<1x32x1024xf32>,
    return
  }
  func.func @transform_0(%arg0: i32) -> (i32, i32, i32, i32) {
    %c0_i32 = arith.constant 0 : i32
    %c0_i32_0 = arith.constant 0 : i32
    %c0_i32_1 = arith.constant 0 : i32
    %c0_i32_2 = arith.constant 0 : i32
    return %arg0, %c0_i32, %c0_i32_0, %c0_i32_1 : i32, i32, i32, i32
  }
  func.func @transform_1(%arg0: i32) -> (i32, i32) {
    %c0_i32 = arith.constant 0 : i32
    %c0_i32_0 = arith.constant 0 : i32
    %c0_i32_1 = arith.constant 0 : i32
    return %c0_i32, %c0_i32_0 : i32, i32
  }
  func.func @transform_2(%arg0: i32) -> (i32, i32) {
    %c0_i32 = arith.constant 0 : i32
    %c0_i32_0 = arith.constant 0 : i32
    %c0_i32_1 = arith.constant 0 : i32
    return %c0_i32, %c0_i32_0 : i32, i32
  }
  func.func @transform_3(%arg0: i32) -> (i32, i32, i32) {
    %c0_i32 = arith.constant 0 : i32
    %c0_i32_0 = arith.constant 0 : i32
    %c0_i32_1 = arith.constant 0 : i32
    return %arg0, %c0_i32, %c0_i32_0 : i32, i32, i32
  }
}

module attributes {stable_mosaic.version = 11 : i64} {
  func.func @fc_fused_kernel(%arg0: i32, %arg1: memref<2x8192xf32, #tpu.memory_space<vmem>>, %arg2: memref<8192x128xf32, #tpu.memory_space<vmem>>, %arg3: memref<1x128xf32, #tpu.memory_space<vmem>>, %arg4: memref<128x10xf32, #tpu.memory_space<vmem>>, %arg5: memref<1x10xf32, #tpu.memory_space<vmem>>, %arg6: memref<2x10xf32, #tpu.memory_space<vmem>>, %arg7: memref<2x128xf32, #tpu.memory_space<vmem>>) attributes {dimension_semantics = [#tpu.dimension_semantics<arbitrary>], iteration_bounds = array<i64: 4>, scalar_prefetch = 0 : i64, scratch_operands = 1 : i64, tpu.core_type = #tpu.core_type<tc>, window_params = [{transform_indices = @transform_0, window_bounds = array<i64: 2, 8192>}, {transform_indices = @transform_1, window_bounds = array<i64: 8192, 128>}, {pipeline_mode = #tpu.pipeline_mode<synchronous>, transform_indices = @transform_2, window_bounds = array<i64: 1, 128>}, {pipeline_mode = #tpu.pipeline_mode<synchronous>, transform_indices = @transform_3, window_bounds = array<i64: 128, 10>}, {pipeline_mode = #tpu.pipeline_mode<synchronous>, transform_indices = @transform_4, window_bounds = array<i64: 1, 10>}, {pipeline_mode = #tpu.pipeline_mode<synchronous>, transform_indices = @transform_5, window_bounds = array<i64: 2, 10>}]} {
    %c0_i32 = arith.constant 0 : i32
    %0 = arith.cmpi eq, %arg0, %c0_i32 : i32
    %1 = arith.extui %0 : i1 to i32
    %c0_i32_0 = arith.constant 0 : i32
    %2 = arith.cmpi ne, %1, %c0_i32_0 : i32
    scf.if %2 {
      %cst_9 = arith.constant 0.000000e+00 : f32
      %12 = vector.broadcast %cst_9 : f32 to vector<2x128xf32>
      %c0_10 = arith.constant 0 : index
      %c0_11 = arith.constant 0 : index
      %13 = vector.load %arg7[%c0_10, %c0_11] : memref<2x128xf32, #tpu.memory_space<vmem>>, vector<2x128xf32>
      tpu.vector_store %arg7[%c0_10, %c0_11], %12 {strides = array<i32>} : memref<2x128xf32, #tpu.memory_space<vmem>>, vector<2x128xf32>,
    } else {
    }
    %c0 = arith.constant 0 : index
    %c0_1 = arith.constant 0 : index
    %3 = vector.load %arg7[%c0, %c0_1] : memref<2x128xf32, #tpu.memory_space<vmem>>, vector<2x128xf32>
    %c0_2 = arith.constant 0 : index
    %c0_3 = arith.constant 0 : index
    %4 = vector.load %arg1[%c0_2, %c0_3] : memref<2x8192xf32, #tpu.memory_space<vmem>>, vector<2x8192xf32>
    %c0_4 = arith.constant 0 : index
    %c0_5 = arith.constant 0 : index
    %5 = vector.load %arg2[%c0_4, %c0_5] : memref<8192x128xf32, #tpu.memory_space<vmem>>, vector<8192x128xf32>
    %cst = arith.constant dense<0.000000e+00> : vector<2x128xf32>
    %6 = tpu.matmul %4, %5, %cst {dimension_numbers = #tpu.dot_dimension_numbers<[1], [0], [0], [1], [0, 0, 1, 1], [], []>} : vector<2x8192xf32>, vector<8192x128xf32>, vector<2x128xf32> -> vector<2x128xf32>
    %7 = arith.addf %3, %6 : vector<2x128xf32>
    %c0_6 = arith.constant 0 : index
    %c0_7 = arith.constant 0 : index
    %8 = vector.load %arg7[%c0_6, %c0_7] : memref<2x128xf32, #tpu.memory_space<vmem>>, vector<2x128xf32>
    tpu.vector_store %arg7[%c0_6, %c0_7], %7 {strides = array<i32>} : memref<2x128xf32, #tpu.memory_space<vmem>>, vector<2x128xf32>,
    %c3_i32 = arith.constant 3 : i32
    %9 = arith.cmpi eq, %arg0, %c3_i32 : i32
    %10 = arith.extui %9 : i1 to i32
    %c0_i32_8 = arith.constant 0 : i32
    %11 = arith.cmpi ne, %10, %c0_i32_8 : i32
    scf.if %11 {
      %c0_9 = arith.constant 0 : index
      %c0_10 = arith.constant 0 : index
      %12 = vector.load %arg7[%c0_9, %c0_10] : memref<2x128xf32, #tpu.memory_space<vmem>>, vector<2x128xf32>
      %c0_11 = arith.constant 0 : index
      %c0_12 = arith.constant 0 : index
      %13 = vector.load %arg3[%c0_11, %c0_12] : memref<1x128xf32, #tpu.memory_space<vmem>>, vector<1x128xf32>
      %14 = vector.broadcast %13 : vector<1x128xf32> to vector<2x128xf32>
      %15 = arith.addf %12, %14 : vector<2x128xf32>
      %cst_13 = arith.constant 0.000000e+00 : f32
      %16 = vector.broadcast %cst_13 : f32 to vector<2x128xf32>
      %17 = arith.maximumf %15, %16 : vector<2x128xf32>
      %c0_14 = arith.constant 0 : index
      %c0_15 = arith.constant 0 : index
      %18 = vector.load %arg4[%c0_14, %c0_15] : memref<128x10xf32, #tpu.memory_space<vmem>>, vector<128x10xf32>
      %cst_16 = arith.constant dense<0.000000e+00> : vector<2x10xf32>
      %19 = tpu.matmul %17, %18, %cst_16 {dimension_numbers = #tpu.dot_dimension_numbers<[1], [0], [0], [1], [0, 0, 1, 1], [], []>} : vector<2x128xf32>, vector<128x10xf32>, vector<2x10xf32> -> vector<2x10xf32>
      %c0_17 = arith.constant 0 : index
      %c0_18 = arith.constant 0 : index
      %20 = vector.load %arg5[%c0_17, %c0_18] : memref<1x10xf32, #tpu.memory_space<vmem>>, vector<1x10xf32>
      %21 = vector.broadcast %20 : vector<1x10xf32> to vector<2x10xf32>
      %22 = arith.addf %19, %21 : vector<2x10xf32>
      %c0_19 = arith.constant 0 : index
      %c0_20 = arith.constant 0 : index
      %23 = vector.load %arg6[%c0_19, %c0_20] : memref<2x10xf32, #tpu.memory_space<vmem>>, vector<2x10xf32>
      tpu.vector_store %arg6[%c0_19, %c0_20], %22 {strides = array<i32>} : memref<2x10xf32, #tpu.memory_space<vmem>>, vector<2x10xf32>,
    } else {
    }
    return
  }
  func.func @transform_0(%arg0: i32) -> (i32, i32) {
    %c0_i32 = arith.constant 0 : i32
    %c0_i32_0 = arith.constant 0 : i32
    return %c0_i32, %arg0 : i32, i32
  }
  func.func @transform_1(%arg0: i32) -> (i32, i32) {
    %c0_i32 = arith.constant 0 : i32
    %c0_i32_0 = arith.constant 0 : i32
    return %arg0, %c0_i32 : i32, i32
  }
  func.func @transform_2(%arg0: i32) -> (i32, i32) {
    %c0_i32 = arith.constant 0 : i32
    %c0_i32_0 = arith.constant 0 : i32
    %c0_i32_1 = arith.constant 0 : i32
    return %c0_i32, %c0_i32_0 : i32, i32
  }
  func.func @transform_3(%arg0: i32) -> (i32, i32) {
    %c0_i32 = arith.constant 0 : i32
    %c0_i32_0 = arith.constant 0 : i32
    %c0_i32_1 = arith.constant 0 : i32
    return %c0_i32, %c0_i32_0 : i32, i32
  }
  func.func @transform_4(%arg0: i32) -> (i32, i32) {
    %c0_i32 = arith.constant 0 : i32
    %c0_i32_0 = arith.constant 0 : i32
    %c0_i32_1 = arith.constant 0 : i32
    return %c0_i32, %c0_i32_0 : i32, i32
  }
  func.func @transform_5(%arg0: i32) -> (i32, i32) {
    %c0_i32 = arith.constant 0 : i32
    %c0_i32_0 = arith.constant 0 : i32
    %c0_i32_1 = arith.constant 0 : i32
    return %c0_i32, %c0_i32_0 : i32, i32
  }
}

</mosaic_0001>

<llo_original>
// kernel: simple_cnn_forward.3
$region0: #{simple_cnn_forward.3}
  #allocation0 [shape = 'u32[]', space=smem, size = 0x4, offset = 0x4, fixed_abs, tag = 'smem constant byte address 0x4 - core index']
  #allocation1 [shape = 'u32[72,128]{1,0:T(1,128)}', space=vmem, size = 0x9000, scoped, tag = 'internal scratch']
  %s0 = inlined_call_operand.vmem [shape: f32[2,4,9,4096], index: 0, kind: input, shape index: {}]
  %s1 = inlined_call_operand.vmem [shape: f32[16,9], index: 1, kind: input, shape index: {}]
  %s2 = inlined_call_operand.vmem [shape: f32[16,1], index: 2, kind: input, shape index: {}]
  %s3 = inlined_call_operand.vmem [shape: f32[2,16,4096], index: 3, kind: output, shape index: {}]
  %s4 = sld [smem:[#allocation0]]
  $region45: #{simple_cnn_forward.3} parent=0
    _
  %s6 = ssub.s32 1, %s4
  %s7 = scalar_select 0, %s6, %s4
  loop: start=0, step=1, limit=4
  $region2: #{simple_cnn_forward.3} parent=0 // loop_pre_header
    _
  $region3: #{simple_cnn_forward.3} parent=0 // loop_header
    %s9 = sphi 0, %s13
    %p10 = scmp.ge.s32.totalorder %s9, 4
    %s19 = sphi 0, %s21
    %s22 = sphi 0, %s19
    %s23 = sphi 0, %s22
    %s39 = sphi 0, %s23
    %s43 = sphi 0, %s43
    %s45 = sphi 0, %s43
    %s46 = sphi 0, %s45
    %s60 = sphi 0, %s46
    %s64 = sphi 0, %s64
    %s66 = sphi 0, %s64
    %s67 = sphi 0, %s66
    %s81 = sphi 0, %s67
    %s87 = sphi 0, %s89
    %s90 = sphi 0, %s87
    %s91 = sphi 0, %s90
    %s107 = sphi 0, %s91
  $region4: #{simple_cnn_forward.3} parent=0 // loop_header_branch
    %12 = sbr.rel (%p10) target = $region8
  $region5: #{simple_cnn_forward.3} parent=0 // loop_body
    %s14 = ssub.s32 %s9, 1
    %s15 = ssub.s32 %s9, 2
    %s16 = sadd.s32 %s9, 1
    %s17 = ssub.s32 %s9, %s16
    %p18 = scmp.eq.s32.totalorder %s17, 0
    %s20 = sadd.s32 %s19, 1
    %s21 = scalar_select %p18, %s19, %s20
    %p24 = pneg %p18
    %p25 = scmp.eq.s32.totalorder %s9, 1
    %p26 = por %p24, %p25
    %p27 = scmp.ne.s32.totalorder %s19, %s22
    %p28 = scmp.eq.s32.totalorder %s9, 0
    %p29 = por %p27, %p28
    %p30 = scmp.ne.s32.totalorder %s19, %s22
    %p31 = scmp.eq.s32.totalorder %s14, 1
    %p32 = por %p30, %p31
    %p33 = scmp.ne.s32.totalorder %s22, %s23
    %p34 = scmp.eq.s32.totalorder %s14, 0
    %p35 = por %p33, %p34
    %p36 = scmp.ne.s32.totalorder %s22, %s23
    %p37 = scmp.eq.s32.totalorder %s15, 1
    %p38 = por %p36, %p37
    %p40 = scmp.ne.s32.totalorder %s23, %s39
    %p41 = scmp.eq.s32.totalorder %s15, 0
    %p42 = por %p40, %p41
    %s44 = sadd.s32 %s43, 1
    %p47 = scmp.eq.s32.totalorder %s9, 1
    %p48 = scmp.ne.s32.totalorder %s43, %s45
    %p49 = scmp.eq.s32.totalorder %s9, 0
    %p50 = por %p48, %p49
    %p51 = scmp.ne.s32.totalorder %s43, %s45
    %p52 = scmp.eq.s32.totalorder %s14, 1
    %p53 = por %p51, %p52
    %p54 = scmp.ne.s32.totalorder %s45, %s46
    %p55 = scmp.eq.s32.totalorder %s14, 0
    %p56 = por %p54, %p55
    %p57 = scmp.ne.s32.totalorder %s45, %s46
    %p58 = scmp.eq.s32.totalorder %s15, 1
    %p59 = por %p57, %p58
    %p61 = scmp.ne.s32.totalorder %s46, %s60
    %p62 = scmp.eq.s32.totalorder %s15, 0
    %p63 = por %p61, %p62
    %s65 = sadd.s32 %s64, 1
    %p68 = scmp.eq.s32.totalorder %s9, 1
    %p69 = scmp.ne.s32.totalorder %s64, %s66
    %p70 = scmp.eq.s32.totalorder %s9, 0
    %p71 = por %p69, %p70
    %p72 = scmp.ne.s32.totalorder %s64, %s66
    %p73 = scmp.eq.s32.totalorder %s14, 1
    %p74 = por %p72, %p73
    %p75 = scmp.ne.s32.totalorder %s66, %s67
    %p76 = scmp.eq.s32.totalorder %s14, 0
    %p77 = por %p75, %p76
    %p78 = scmp.ne.s32.totalorder %s66, %s67
    %p79 = scmp.eq.s32.totalorder %s15, 1
    %p80 = por %p78, %p79
    %p82 = scmp.ne.s32.totalorder %s67, %s81
    %p83 = scmp.eq.s32.totalorder %s15, 0
    %p84 = por %p82, %p83
    %s85 = ssub.s32 %s9, %s16
    %p86 = scmp.eq.s32.totalorder %s85, 0
    %s88 = sadd.s32 %s87, 1
    %s89 = scalar_select %p86, %s87, %s88
    %p92 = pneg %p86
    %p93 = scmp.eq.s32.totalorder %s9, 1
    %p94 = por %p92, %p93
    %p95 = scmp.ne.s32.totalorder %s87, %s90
    %p96 = scmp.eq.s32.totalorder %s9, 0
    %p97 = por %p95, %p96
    %p98 = scmp.ne.s32.totalorder %s87, %s90
    %p99 = scmp.eq.s32.totalorder %s14, 1
    %p100 = por %p98, %p99
    %p101 = scmp.ne.s32.totalorder %s90, %s91
    %p102 = scmp.eq.s32.totalorder %s14, 0
    %p103 = por %p101, %p102
    %p104 = scmp.ne.s32.totalorder %s90, %s91
    %p105 = scmp.eq.s32.totalorder %s15, 1
    %p106 = por %p104, %p105
    %p108 = scmp.ne.s32.totalorder %s91, %s107
    %p109 = scmp.eq.s32.totalorder %s15, 0
    %p110 = por %p108, %p109
    %p111 = scmp.le.s32.totalorder 1, %s9
    %p112 = scmp.lt.s32.totalorder %s9, 3
    %p113 = pnand %p111, %p112
    %p114 = pneg %p113
    // Predicated region
    $region9: #{simple_cnn_forward.3} parent=5 // pred_check
      _
    $region10: #{simple_cnn_forward.3} parent=5 // pred_check_branch
      %116 = sbr.rel (%p113) target = $region12
    $region11: #{simple_cnn_forward.3} parent=5 // pred_region
      %s117 = ssub.s32 %s9, 1
      // Predicated region
      $region13: #{simple_cnn_forward.3} parent=11 // pred_check
        %p118 = pneg %p56
      $region14: #{simple_cnn_forward.3} parent=11 // pred_check_branch
        %120 = sbr.rel (%p118) target = $region16
      $region15: #{simple_cnn_forward.3} parent=11 // pred_region
        _
      $region16: #{simple_cnn_forward.3} parent=11 // pred_fallthru
        _
      // Predicated region
      $region17: #{simple_cnn_forward.3} parent=11 // pred_check
        %p121 = pneg %p77
      $region18: #{simple_cnn_forward.3} parent=11 // pred_check_branch
        %123 = sbr.rel (%p121) target = $region20
      $region19: #{simple_cnn_forward.3} parent=11 // pred_region
        _
      $region20: #{simple_cnn_forward.3} parent=11 // pred_fallthru
        _
    $region12: #{simple_cnn_forward.3} parent=5 // pred_fallthru
      _
    %p124 = scmp.lt.s32.totalorder %s9, 2
    // Predicated region
    $region21: #{simple_cnn_forward.3} parent=5 // pred_check
      %p125 = pneg %p124
    $region22: #{simple_cnn_forward.3} parent=5 // pred_check_branch
      %127 = sbr.rel (%p125) target = $region24
    $region23: #{simple_cnn_forward.3} parent=5 // pred_region
      // Predicated region
      $region25: #{simple_cnn_forward.3} parent=23 // pred_check
        %p128 = pneg %p29
      $region26: #{simple_cnn_forward.3} parent=23 // pred_check_branch
        %130 = sbr.rel (%p128) target = $region28
      $region27: #{simple_cnn_forward.3} parent=23 // pred_region
        %p131 = scmp.lt.s32.totalorder %s9, 1
        %s132 = scalar_select %p131, %s9, 1
        %s133 = smul.addr %s132, 256
        %s134 = smul.addr %s133, 8
        %s135 = scalar_lea.vmem %s0, %s134
      $region28: #{simple_cnn_forward.3} parent=23 // pred_fallthru
        _
    $region24: #{simple_cnn_forward.3} parent=5 // pred_fallthru
      _
    %p136 = scmp.le.s32.totalorder 1, %s9
    %p137 = scmp.lt.s32.totalorder %s9, 3
    %p138 = pnand %p136, %p137
    %p139 = pneg %p138
    // Predicated region
    $region29: #{simple_cnn_forward.3} parent=5 // pred_check
      _
    $region30: #{simple_cnn_forward.3} parent=5 // pred_check_branch
      %141 = sbr.rel (%p138) target = $region32
    $region31: #{simple_cnn_forward.3} parent=5 // pred_region
      %s142 = ssub.s32 %s9, 1
      %p143 = scmp.lt.s32.totalorder %s14, 1
      %s144 = scalar_select %p143, %s14, 1
      %s145 = smul.addr %s144, 256
      %s146 = smul.addr %s145, 8
      %s147 = scalar_lea.vmem %s0, %s146
      %p148 = pneg %p35
      %p149 = pneg %p32
      %p150 = pneg %p56
      %p151 = pneg %p53
      %p152 = pneg %p77
      %p153 = pneg %p74
      %p154 = pneg %p103
      %p155 = pneg %p100
      %p156 = scmp.lt.s32.totalorder %s14, 1
      %s157 = scalar_select %p156, %s14, 1
      %s158 = smul.addr %s157, 64
      %s159 = smul.addr %s158, 8
      %s160 = scalar_lea.vmem %s3, %s159
      %p161 = scmp.lt.s32.totalorder %s14, 1
      %s162 = scalar_select %p161, %s14, 1
      %s163 = smul.addr %s162, 256
      %s164 = smul.addr %s163, 8
      %s165 = scalar_lea.vmem %s0, %s164
      %p166 = scmp.lt.s32.totalorder %s14, 1
      %s167 = scalar_select %p166, %s14, 1
      %s168 = smul.addr %s167, 64
      %s169 = smul.addr %s168, 8
      %s170 = scalar_lea.vmem %s3, %s169
      %v171 = vld [vmem:[%s1] sm:$0xff]
      %v172 = vld [vmem:[%s1 + $0x8] sm:$0xff]
      %v173 = vld [vmem:[%s165] sm:$0xff]
      %v174 = vld [vmem:[%s165 + $0x8] sm:$0xff]
      %v175 = vld [vmem:[%s165 + $0x10] sm:$0xff]
      %v176 = vld [vmem:[%s165 + $0x18] sm:$0xff]
      %v177 = vld [vmem:[%s165 + $0x20] sm:$0xff]
      %v178 = vld [vmem:[%s165 + $0x28] sm:$0xff]
      %v179 = vld [vmem:[%s165 + $0x30] sm:$0xff]
      %v180 = vld [vmem:[%s165 + $0x38] sm:$0xff]
      %v181 = vld [vmem:[%s165 + $0x40] sm:$0xff]
      %v182 = vld [vmem:[%s165 + $0x48] sm:$0xff]
      %v183 = vld [vmem:[%s165 + $0x50] sm:$0xff]
      %v184 = vld [vmem:[%s165 + $0x58] sm:$0xff]
      %v185 = vld [vmem:[%s165 + $0x60] sm:$0xff]
      %v186 = vld [vmem:[%s165 + $0x68] sm:$0xff]
      %v187 = vld [vmem:[%s165 + $0x70] sm:$0xff]
      %v188 = vld [vmem:[%s165 + $0x78] sm:$0xff]
      %v189 = vld [vmem:[%s165 + $0x80] sm:$0xff]
      %v190 = vld [vmem:[%s165 + $0x88] sm:$0xff]
      %v191 = vld [vmem:[%s165 + $0x90] sm:$0xff]
      %v192 = vld [vmem:[%s165 + $0x98] sm:$0xff]
      %v193 = vld [vmem:[%s165 + $0xa0] sm:$0xff]
      %v194 = vld [vmem:[%s165 + $0xa8] sm:$0xff]
      %v195 = vld [vmem:[%s165 + $0xb0] sm:$0xff]
      %v196 = vld [vmem:[%s165 + $0xb8] sm:$0xff]
      %v197 = vld [vmem:[%s165 + $0xc0] sm:$0xff]
      %v198 = vld [vmem:[%s165 + $0xc8] sm:$0xff]
      %v199 = vld [vmem:[%s165 + $0xd0] sm:$0xff]
      %v200 = vld [vmem:[%s165 + $0xd8] sm:$0xff]
      %v201 = vld [vmem:[%s165 + $0xe0] sm:$0xff]
      %v202 = vld [vmem:[%s165 + $0xe8] sm:$0xff]
      %v203 = vld [vmem:[%s165 + $0xf0] sm:$0xff]
      %v204 = vld [vmem:[%s165 + $0xf8] sm:$0xff]
      %v205 = vld [vmem:[%s165 + $0x100] sm:$0x1]
      %v206 = vld [vmem:[%s165 + $0x108] sm:$0x1]
      %v207 = vld [vmem:[%s165 + $0x110] sm:$0x1]
      %v208 = vld [vmem:[%s165 + $0x118] sm:$0x1]
      %v209 = vld [vmem:[%s165 + $0x120] sm:$0x1]
      %v210 = vld [vmem:[%s165 + $0x128] sm:$0x1]
      %v211 = vld [vmem:[%s165 + $0x130] sm:$0x1]
      %v212 = vld [vmem:[%s165 + $0x138] sm:$0x1]
      %v213 = vld [vmem:[%s165 + $0x140] sm:$0x1]
      %v214 = vld [vmem:[%s165 + $0x148] sm:$0x1]
      %v215 = vld [vmem:[%s165 + $0x150] sm:$0x1]
      %v216 = vld [vmem:[%s165 + $0x158] sm:$0x1]
      %v217 = vld [vmem:[%s165 + $0x160] sm:$0x1]
      %v218 = vld [vmem:[%s165 + $0x168] sm:$0x1]
      %v219 = vld [vmem:[%s165 + $0x170] sm:$0x1]
      %v220 = vld [vmem:[%s165 + $0x178] sm:$0x1]
      %v221 = vld [vmem:[%s165 + $0x180] sm:$0x1]
      %v222 = vld [vmem:[%s165 + $0x188] sm:$0x1]
      %v223 = vld [vmem:[%s165 + $0x190] sm:$0x1]
      %v224 = vld [vmem:[%s165 + $0x198] sm:$0x1]
      %v225 = vld [vmem:[%s165 + $0x1a0] sm:$0x1]
      %v226 = vld [vmem:[%s165 + $0x1a8] sm:$0x1]
      %v227 = vld [vmem:[%s165 + $0x1b0] sm:$0x1]
      %v228 = vld [vmem:[%s165 + $0x1b8] sm:$0x1]
      %v229 = vld [vmem:[%s165 + $0x1c0] sm:$0x1]
      %v230 = vld [vmem:[%s165 + $0x1c8] sm:$0x1]
      %v231 = vld [vmem:[%s165 + $0x1d0] sm:$0x1]
      %v232 = vld [vmem:[%s165 + $0x1d8] sm:$0x1]
      %v233 = vld [vmem:[%s165 + $0x1e0] sm:$0x1]
      %v234 = vld [vmem:[%s165 + $0x1e8] sm:$0x1]
      %v235 = vld [vmem:[%s165 + $0x1f0] sm:$0x1]
      %v236 = vld [vmem:[%s165 + $0x1f8] sm:$0x1]
      %vm237 = vcmask 72704
      %v239 = vsel %vm237, %v171, 0
      %v242 = vsel %vm237, %v172, 0
      %vm244 = vcmask 1040384
      %v246 = vsel %vm244, %v205, 0
      %v249 = vsel %vm244, %v206, 0
      %v252 = vsel %vm244, %v207, 0
      %v255 = vsel %vm244, %v208, 0
      %v258 = vsel %vm244, %v209, 0
      %v261 = vsel %vm244, %v210, 0
      %v264 = vsel %vm244, %v211, 0
      %v267 = vsel %vm244, %v212, 0
      %v270 = vsel %vm244, %v213, 0
      %v273 = vsel %vm244, %v214, 0
      %v276 = vsel %vm244, %v215, 0
      %v279 = vsel %vm244, %v216, 0
      %v282 = vsel %vm244, %v217, 0
      %v285 = vsel %vm244, %v218, 0
      %v288 = vsel %vm244, %v219, 0
      %v291 = vsel %vm244, %v220, 0
      %v294 = vsel %vm244, %v221, 0
      %v297 = vsel %vm244, %v222, 0
      %v300 = vsel %vm244, %v223, 0
      %v303 = vsel %vm244, %v224, 0
      %v306 = vsel %vm244, %v225, 0
      %v309 = vsel %vm244, %v226, 0
      %v312 = vsel %vm244, %v227, 0
      %v315 = vsel %vm244, %v228, 0
      %v318 = vsel %vm244, %v229, 0
      %v321 = vsel %vm244, %v230, 0
      %v324 = vsel %vm244, %v231, 0
      %v327 = vsel %vm244, %v232, 0
      %v330 = vsel %vm244, %v233, 0
      %v333 = vsel %vm244, %v234, 0
      %v336 = vsel %vm244, %v235, 0
      %v339 = vsel %vm244, %v236, 0
      %341 = vmatpush.msra.mxu0 0.0
      %342 = vmatpush.msra.mxu0 0.0
      %343 = vmatpush.msra.mxu0 0.0
      %344 = vmatpush.msra.mxu0 0.0
      %345 = vmatpush.msra.mxu0 0.0
      %346 = vmatpush.msra.mxu0 0.0
      %347 = vmatpush.msra.mxu0 0.0
      %348 = vmatpush.msra.mxu0 0.0
      %349 = vmatpush.msra.mxu0 0.0
      %350 = vmatpush.msra.mxu0 0.0
      %351 = vmatpush.msra.mxu0 0.0
      %352 = vmatpush.msra.mxu0 0.0
      %353 = vmatpush.msra.mxu0 0.0
      %354 = vmatpush.msra.mxu0 0.0
      %355 = vmatpush.msra.mxu0 %v246
      %356 = vmatpush.msra.mxu0 %v173
      %357 = vmatmul.f32.gmra.mxu0 %v239
      %v358 = vpop.f32.mrf.mxu0
      %v359 = vadd.f32 0.0, %v358
      %360 = vmatmul.f32.gmra.mxu0 %v242
      %v361 = vpop.f32.mrf.mxu0
      %v362 = vadd.f32 0.0, %v361
      %363 = vdwg.mxu0
      %364 = vmatpush.msra.mxu0 0.0
      %365 = vmatpush.msra.mxu0 0.0
      %366 = vmatpush.msra.mxu0 0.0
      %367 = vmatpush.msra.mxu0 0.0
      %368 = vmatpush.msra.mxu0 0.0
      %369 = vmatpush.msra.mxu0 0.0
      %370 = vmatpush.msra.mxu0 0.0
      %371 = vmatpush.msra.mxu0 0.0
      %372 = vmatpush.msra.mxu0 0.0
      %373 = vmatpush.msra.mxu0 0.0
      %374 = vmatpush.msra.mxu0 0.0
      %375 = vmatpush.msra.mxu0 0.0
      %376 = vmatpush.msra.mxu0 0.0
      %377 = vmatpush.msra.mxu0 0.0
      %378 = vmatpush.msra.mxu0 %v249
      %379 = vmatpush.msra.mxu0 %v174
      %380 = vmatmul.f32.gmra.mxu0 %v239
      %v381 = vpop.f32.mrf.mxu0
      %v382 = vadd.f32 0.0, %v381
      %383 = vmatmul.f32.gmra.mxu0 %v242
      %v384 = vpop.f32.mrf.mxu0
      %v385 = vadd.f32 0.0, %v384
      %386 = vdwg.mxu0
      %387 = vmatpush.msra.mxu0 0.0
      %388 = vmatpush.msra.mxu0 0.0
      %389 = vmatpush.msra.mxu0 0.0
      %390 = vmatpush.msra.mxu0 0.0
      %391 = vmatpush.msra.mxu0 0.0
      %392 = vmatpush.msra.mxu0 0.0
      %393 = vmatpush.msra.mxu0 0.0
      %394 = vmatpush.msra.mxu0 0.0
      %395 = vmatpush.msra.mxu0 0.0
      %396 = vmatpush.msra.mxu0 0.0
      %397 = vmatpush.msra.mxu0 0.0
      %398 = vmatpush.msra.mxu0 0.0
      %399 = vmatpush.msra.mxu0 0.0
      %400 = vmatpush.msra.mxu0 0.0
      %401 = vmatpush.msra.mxu0 %v252
      %402 = vmatpush.msra.mxu0 %v175
      %403 = vmatmul.f32.gmra.mxu0 %v239
      %v404 = vpop.f32.mrf.mxu0
      %v405 = vadd.f32 0.0, %v404
      %406 = vmatmul.f32.gmra.mxu0 %v242
      %v407 = vpop.f32.mrf.mxu0
      %v408 = vadd.f32 0.0, %v407
      %409 = vdwg.mxu0
      %410 = vmatpush.msra.mxu0 0.0
      %411 = vmatpush.msra.mxu0 0.0
      %412 = vmatpush.msra.mxu0 0.0
      %413 = vmatpush.msra.mxu0 0.0
      %414 = vmatpush.msra.mxu0 0.0
      %415 = vmatpush.msra.mxu0 0.0
      %416 = vmatpush.msra.mxu0 0.0
      %417 = vmatpush.msra.mxu0 0.0
      %418 = vmatpush.msra.mxu0 0.0
      %419 = vmatpush.msra.mxu0 0.0
      %420 = vmatpush.msra.mxu0 0.0
      %421 = vmatpush.msra.mxu0 0.0
      %422 = vmatpush.msra.mxu0 0.0
      %423 = vmatpush.msra.mxu0 0.0
      %424 = vmatpush.msra.mxu0 %v255
      %425 = vmatpush.msra.mxu0 %v176
      %426 = vmatmul.f32.gmra.mxu0 %v239
      %v427 = vpop.f32.mrf.mxu0
      %v428 = vadd.f32 0.0, %v427
      %429 = vmatmul.f32.gmra.mxu0 %v242
      %v430 = vpop.f32.mrf.mxu0
      %v431 = vadd.f32 0.0, %v430
      %432 = vdwg.mxu0
      %433 = vmatpush.msra.mxu0 0.0
      %434 = vmatpush.msra.mxu0 0.0
      %435 = vmatpush.msra.mxu0 0.0
      %436 = vmatpush.msra.mxu0 0.0
      %437 = vmatpush.msra.mxu0 0.0
      %438 = vmatpush.msra.mxu0 0.0
      %439 = vmatpush.msra.mxu0 0.0
      %440 = vmatpush.msra.mxu0 0.0
      %441 = vmatpush.msra.mxu0 0.0
      %442 = vmatpush.msra.mxu0 0.0
      %443 = vmatpush.msra.mxu0 0.0
      %444 = vmatpush.msra.mxu0 0.0
      %445 = vmatpush.msra.mxu0 0.0
      %446 = vmatpush.msra.mxu0 0.0
      %447 = vmatpush.msra.mxu0 %v258
      %448 = vmatpush.msra.mxu0 %v177
      %449 = vmatmul.f32.gmra.mxu0 %v239
      %v450 = vpop.f32.mrf.mxu0
      %v451 = vadd.f32 0.0, %v450
      %452 = vmatmul.f32.gmra.mxu0 %v242
      %v453 = vpop.f32.mrf.mxu0
      %v454 = vadd.f32 0.0, %v453
      %455 = vdwg.mxu0
      %456 = vmatpush.msra.mxu0 0.0
      %457 = vmatpush.msra.mxu0 0.0
      %458 = vmatpush.msra.mxu0 0.0
      %459 = vmatpush.msra.mxu0 0.0
      %460 = vmatpush.msra.mxu0 0.0
      %461 = vmatpush.msra.mxu0 0.0
      %462 = vmatpush.msra.mxu0 0.0
      %463 = vmatpush.msra.mxu0 0.0
      %464 = vmatpush.msra.mxu0 0.0
      %465 = vmatpush.msra.mxu0 0.0
      %466 = vmatpush.msra.mxu0 0.0
      %467 = vmatpush.msra.mxu0 0.0
      %468 = vmatpush.msra.mxu0 0.0
      %469 = vmatpush.msra.mxu0 0.0
      %470 = vmatpush.msra.mxu0 %v261
      %471 = vmatpush.msra.mxu0 %v178
      %472 = vmatmul.f32.gmra.mxu0 %v239
      %v473 = vpop.f32.mrf.mxu0
      %v474 = vadd.f32 0.0, %v473
      %475 = vmatmul.f32.gmra.mxu0 %v242
      %v476 = vpop.f32.mrf.mxu0
      %v477 = vadd.f32 0.0, %v476
      %478 = vdwg.mxu0
      %479 = vmatpush.msra.mxu0 0.0
      %480 = vmatpush.msra.mxu0 0.0
      %481 = vmatpush.msra.mxu0 0.0
      %482 = vmatpush.msra.mxu0 0.0
      %483 = vmatpush.msra.mxu0 0.0
      %484 = vmatpush.msra.mxu0 0.0
      %485 = vmatpush.msra.mxu0 0.0
      %486 = vmatpush.msra.mxu0 0.0
      %487 = vmatpush.msra.mxu0 0.0
      %488 = vmatpush.msra.mxu0 0.0
      %489 = vmatpush.msra.mxu0 0.0
      %490 = vmatpush.msra.mxu0 0.0
      %491 = vmatpush.msra.mxu0 0.0
      %492 = vmatpush.msra.mxu0 0.0
      %493 = vmatpush.msra.mxu0 %v264
      %494 = vmatpush.msra.mxu0 %v179
      %495 = vmatmul.f32.gmra.mxu0 %v239
      %v496 = vpop.f32.mrf.mxu0
      %v497 = vadd.f32 0.0, %v496
      %498 = vmatmul.f32.gmra.mxu0 %v242
      %v499 = vpop.f32.mrf.mxu0
      %v500 = vadd.f32 0.0, %v499
      %501 = vdwg.mxu0
      %502 = vmatpush.msra.mxu0 0.0
      %503 = vmatpush.msra.mxu0 0.0
      %504 = vmatpush.msra.mxu0 0.0
      %505 = vmatpush.msra.mxu0 0.0
      %506 = vmatpush.msra.mxu0 0.0
      %507 = vmatpush.msra.mxu0 0.0
      %508 = vmatpush.msra.mxu0 0.0
      %509 = vmatpush.msra.mxu0 0.0
      %510 = vmatpush.msra.mxu0 0.0
      %511 = vmatpush.msra.mxu0 0.0
      %512 = vmatpush.msra.mxu0 0.0
      %513 = vmatpush.msra.mxu0 0.0
      %514 = vmatpush.msra.mxu0 0.0
      %515 = vmatpush.msra.mxu0 0.0
      %516 = vmatpush.msra.mxu0 %v267
      %517 = vmatpush.msra.mxu0 %v180
      %518 = vmatmul.f32.gmra.mxu0 %v239
      %v519 = vpop.f32.mrf.mxu0
      %v520 = vadd.f32 0.0, %v519
      %521 = vmatmul.f32.gmra.mxu0 %v242
      %v522 = vpop.f32.mrf.mxu0
      %v523 = vadd.f32 0.0, %v522
      %524 = vdwg.mxu0
      %525 = vmatpush.msra.mxu0 0.0
      %526 = vmatpush.msra.mxu0 0.0
      %527 = vmatpush.msra.mxu0 0.0
      %528 = vmatpush.msra.mxu0 0.0
      %529 = vmatpush.msra.mxu0 0.0
      %530 = vmatpush.msra.mxu0 0.0
      %531 = vmatpush.msra.mxu0 0.0
      %532 = vmatpush.msra.mxu0 0.0
      %533 = vmatpush.msra.mxu0 0.0
      %534 = vmatpush.msra.mxu0 0.0
      %535 = vmatpush.msra.mxu0 0.0
      %536 = vmatpush.msra.mxu0 0.0
      %537 = vmatpush.msra.mxu0 0.0
      %538 = vmatpush.msra.mxu0 0.0
      %539 = vmatpush.msra.mxu0 %v270
      %540 = vmatpush.msra.mxu0 %v181
      %541 = vmatmul.f32.gmra.mxu0 %v239
      %v542 = vpop.f32.mrf.mxu0
      %v543 = vadd.f32 0.0, %v542
      %544 = vmatmul.f32.gmra.mxu0 %v242
      %v545 = vpop.f32.mrf.mxu0
      %v546 = vadd.f32 0.0, %v545
      %547 = vdwg.mxu0
      %548 = vmatpush.msra.mxu0 0.0
      %549 = vmatpush.msra.mxu0 0.0
      %550 = vmatpush.msra.mxu0 0.0
      %551 = vmatpush.msra.mxu0 0.0
      %552 = vmatpush.msra.mxu0 0.0
      %553 = vmatpush.msra.mxu0 0.0
      %554 = vmatpush.msra.mxu0 0.0
      %555 = vmatpush.msra.mxu0 0.0
      %556 = vmatpush.msra.mxu0 0.0
      %557 = vmatpush.msra.mxu0 0.0
      %558 = vmatpush.msra.mxu0 0.0
      %559 = vmatpush.msra.mxu0 0.0
      %560 = vmatpush.msra.mxu0 0.0
      %561 = vmatpush.msra.mxu0 0.0
      %562 = vmatpush.msra.mxu0 %v273
      %563 = vmatpush.msra.mxu0 %v182
      %564 = vmatmul.f32.gmra.mxu0 %v239
      %v565 = vpop.f32.mrf.mxu0
      %v566 = vadd.f32 0.0, %v565
      %567 = vmatmul.f32.gmra.mxu0 %v242
      %v568 = vpop.f32.mrf.mxu0
      %v569 = vadd.f32 0.0, %v568
      %570 = vdwg.mxu0
      %571 = vmatpush.msra.mxu0 0.0
      %572 = vmatpush.msra.mxu0 0.0
      %573 = vmatpush.msra.mxu0 0.0
      %574 = vmatpush.msra.mxu0 0.0
      %575 = vmatpush.msra.mxu0 0.0
      %576 = vmatpush.msra.mxu0 0.0
      %577 = vmatpush.msra.mxu0 0.0
      %578 = vmatpush.msra.mxu0 0.0
      %579 = vmatpush.msra.mxu0 0.0
      %580 = vmatpush.msra.mxu0 0.0
      %581 = vmatpush.msra.mxu0 0.0
      %582 = vmatpush.msra.mxu0 0.0
      %583 = vmatpush.msra.mxu0 0.0
      %584 = vmatpush.msra.mxu0 0.0
      %585 = vmatpush.msra.mxu0 %v276
      %586 = vmatpush.msra.mxu0 %v183
      %587 = vmatmul.f32.gmra.mxu0 %v239
      %v588 = vpop.f32.mrf.mxu0
      %v589 = vadd.f32 0.0, %v588
      %590 = vmatmul.f32.gmra.mxu0 %v242
      %v591 = vpop.f32.mrf.mxu0
      %v592 = vadd.f32 0.0, %v591
      %593 = vdwg.mxu0
      %594 = vmatpush.msra.mxu0 0.0
      %595 = vmatpush.msra.mxu0 0.0
      %596 = vmatpush.msra.mxu0 0.0
      %597 = vmatpush.msra.mxu0 0.0
      %598 = vmatpush.msra.mxu0 0.0
      %599 = vmatpush.msra.mxu0 0.0
      %600 = vmatpush.msra.mxu0 0.0
      %601 = vmatpush.msra.mxu0 0.0
      %602 = vmatpush.msra.mxu0 0.0
      %603 = vmatpush.msra.mxu0 0.0
      %604 = vmatpush.msra.mxu0 0.0
      %605 = vmatpush.msra.mxu0 0.0
      %606 = vmatpush.msra.mxu0 0.0
      %607 = vmatpush.msra.mxu0 0.0
      %608 = vmatpush.msra.mxu0 %v279
      %609 = vmatpush.msra.mxu0 %v184
      %610 = vmatmul.f32.gmra.mxu0 %v239
      %v611 = vpop.f32.mrf.mxu0
      %v612 = vadd.f32 0.0, %v611
      %613 = vmatmul.f32.gmra.mxu0 %v242
      %v614 = vpop.f32.mrf.mxu0
      %v615 = vadd.f32 0.0, %v614
      %616 = vdwg.mxu0
      %617 = vmatpush.msra.mxu0 0.0
      %618 = vmatpush.msra.mxu0 0.0
      %619 = vmatpush.msra.mxu0 0.0
      %620 = vmatpush.msra.mxu0 0.0
      %621 = vmatpush.msra.mxu0 0.0
      %622 = vmatpush.msra.mxu0 0.0
      %623 = vmatpush.msra.mxu0 0.0
      %624 = vmatpush.msra.mxu0 0.0
      %625 = vmatpush.msra.mxu0 0.0
      %626 = vmatpush.msra.mxu0 0.0
      %627 = vmatpush.msra.mxu0 0.0
      %628 = vmatpush.msra.mxu0 0.0
      %629 = vmatpush.msra.mxu0 0.0
      %630 = vmatpush.msra.mxu0 0.0
      %631 = vmatpush.msra.mxu0 %v282
      %632 = vmatpush.msra.mxu0 %v185
      %633 = vmatmul.f32.gmra.mxu0 %v239
      %v634 = vpop.f32.mrf.mxu0
      %v635 = vadd.f32 0.0, %v634
      %636 = vmatmul.f32.gmra.mxu0 %v242
      %v637 = vpop.f32.mrf.mxu0
      %v638 = vadd.f32 0.0, %v637
      %639 = vdwg.mxu0
      %640 = vmatpush.msra.mxu0 0.0
      %641 = vmatpush.msra.mxu0 0.0
      %642 = vmatpush.msra.mxu0 0.0
      %643 = vmatpush.msra.mxu0 0.0
      %644 = vmatpush.msra.mxu0 0.0
      %645 = vmatpush.msra.mxu0 0.0
      %646 = vmatpush.msra.mxu0 0.0
      %647 = vmatpush.msra.mxu0 0.0
      %648 = vmatpush.msra.mxu0 0.0
      %649 = vmatpush.msra.mxu0 0.0
      %650 = vmatpush.msra.mxu0 0.0
      %651 = vmatpush.msra.mxu0 0.0
      %652 = vmatpush.msra.mxu0 0.0
      %653 = vmatpush.msra.mxu0 0.0
      %654 = vmatpush.msra.mxu0 %v285
      %655 = vmatpush.msra.mxu0 %v186
      %656 = vmatmul.f32.gmra.mxu0 %v239
      %v657 = vpop.f32.mrf.mxu0
      %v658 = vadd.f32 0.0, %v657
      %659 = vmatmul.f32.gmra.mxu0 %v242
      %v660 = vpop.f32.mrf.mxu0
      %v661 = vadd.f32 0.0, %v660
      %662 = vdwg.mxu0
      %663 = vmatpush.msra.mxu0 0.0
      %664 = vmatpush.msra.mxu0 0.0
      %665 = vmatpush.msra.mxu0 0.0
      %666 = vmatpush.msra.mxu0 0.0
      %667 = vmatpush.msra.mxu0 0.0
      %668 = vmatpush.msra.mxu0 0.0
      %669 = vmatpush.msra.mxu0 0.0
      %670 = vmatpush.msra.mxu0 0.0
      %671 = vmatpush.msra.mxu0 0.0
      %672 = vmatpush.msra.mxu0 0.0
      %673 = vmatpush.msra.mxu0 0.0
      %674 = vmatpush.msra.mxu0 0.0
      %675 = vmatpush.msra.mxu0 0.0
      %676 = vmatpush.msra.mxu0 0.0
      %677 = vmatpush.msra.mxu0 %v288
      %678 = vmatpush.msra.mxu0 %v187
      %679 = vmatmul.f32.gmra.mxu0 %v239
      %v680 = vpop.f32.mrf.mxu0
      %v681 = vadd.f32 0.0, %v680
      %682 = vmatmul.f32.gmra.mxu0 %v242
      %v683 = vpop.f32.mrf.mxu0
      %v684 = vadd.f32 0.0, %v683
      %685 = vdwg.mxu0
      %686 = vmatpush.msra.mxu0 0.0
      %687 = vmatpush.msra.mxu0 0.0
      %688 = vmatpush.msra.mxu0 0.0
      %689 = vmatpush.msra.mxu0 0.0
      %690 = vmatpush.msra.mxu0 0.0
      %691 = vmatpush.msra.mxu0 0.0
      %692 = vmatpush.msra.mxu0 0.0
      %693 = vmatpush.msra.mxu0 0.0
      %694 = vmatpush.msra.mxu0 0.0
      %695 = vmatpush.msra.mxu0 0.0
      %696 = vmatpush.msra.mxu0 0.0
      %697 = vmatpush.msra.mxu0 0.0
      %698 = vmatpush.msra.mxu0 0.0
      %699 = vmatpush.msra.mxu0 0.0
      %700 = vmatpush.msra.mxu0 %v291
      %701 = vmatpush.msra.mxu0 %v188
      %702 = vmatmul.f32.gmra.mxu0 %v239
      %v703 = vpop.f32.mrf.mxu0
      %v704 = vadd.f32 0.0, %v703
      %705 = vmatmul.f32.gmra.mxu0 %v242
      %v706 = vpop.f32.mrf.mxu0
      %v707 = vadd.f32 0.0, %v706
      %708 = vdwg.mxu0
      %709 = vmatpush.msra.mxu0 0.0
      %710 = vmatpush.msra.mxu0 0.0
      %711 = vmatpush.msra.mxu0 0.0
      %712 = vmatpush.msra.mxu0 0.0
      %713 = vmatpush.msra.mxu0 0.0
      %714 = vmatpush.msra.mxu0 0.0
      %715 = vmatpush.msra.mxu0 0.0
      %716 = vmatpush.msra.mxu0 0.0
      %717 = vmatpush.msra.mxu0 0.0
      %718 = vmatpush.msra.mxu0 0.0
      %719 = vmatpush.msra.mxu0 0.0
      %720 = vmatpush.msra.mxu0 0.0
      %721 = vmatpush.msra.mxu0 0.0
      %722 = vmatpush.msra.mxu0 0.0
      %723 = vmatpush.msra.mxu0 %v294
      %724 = vmatpush.msra.mxu0 %v189
      %725 = vmatmul.f32.gmra.mxu0 %v239
      %v726 = vpop.f32.mrf.mxu0
      %v727 = vadd.f32 0.0, %v726
      %728 = vmatmul.f32.gmra.mxu0 %v242
      %v729 = vpop.f32.mrf.mxu0
      %v730 = vadd.f32 0.0, %v729
      %731 = vdwg.mxu0
      %732 = vmatpush.msra.mxu0 0.0
      %733 = vmatpush.msra.mxu0 0.0
      %734 = vmatpush.msra.mxu0 0.0
      %735 = vmatpush.msra.mxu0 0.0
      %736 = vmatpush.msra.mxu0 0.0
      %737 = vmatpush.msra.mxu0 0.0
      %738 = vmatpush.msra.mxu0 0.0
      %739 = vmatpush.msra.mxu0 0.0
      %740 = vmatpush.msra.mxu0 0.0
      %741 = vmatpush.msra.mxu0 0.0
      %742 = vmatpush.msra.mxu0 0.0
      %743 = vmatpush.msra.mxu0 0.0
      %744 = vmatpush.msra.mxu0 0.0
      %745 = vmatpush.msra.mxu0 0.0
      %746 = vmatpush.msra.mxu0 %v297
      %747 = vmatpush.msra.mxu0 %v190
      %748 = vmatmul.f32.gmra.mxu0 %v239
      %v749 = vpop.f32.mrf.mxu0
      %v750 = vadd.f32 0.0, %v749
      %751 = vmatmul.f32.gmra.mxu0 %v242
      %v752 = vpop.f32.mrf.mxu0
      %v753 = vadd.f32 0.0, %v752
      %754 = vdwg.mxu0
      %755 = vmatpush.msra.mxu0 0.0
      %756 = vmatpush.msra.mxu0 0.0
      %757 = vmatpush.msra.mxu0 0.0
      %758 = vmatpush.msra.mxu0 0.0
      %759 = vmatpush.msra.mxu0 0.0
      %760 = vmatpush.msra.mxu0 0.0
      %761 = vmatpush.msra.mxu0 0.0
      %762 = vmatpush.msra.mxu0 0.0
      %763 = vmatpush.msra.mxu0 0.0
      %764 = vmatpush.msra.mxu0 0.0
      %765 = vmatpush.msra.mxu0 0.0
      %766 = vmatpush.msra.mxu0 0.0
      %767 = vmatpush.msra.mxu0 0.0
      %768 = vmatpush.msra.mxu0 0.0
      %769 = vmatpush.msra.mxu0 %v300
      %770 = vmatpush.msra.mxu0 %v191
      %771 = vmatmul.f32.gmra.mxu0 %v239
      %v772 = vpop.f32.mrf.mxu0
      %v773 = vadd.f32 0.0, %v772
      %774 = vmatmul.f32.gmra.mxu0 %v242
      %v775 = vpop.f32.mrf.mxu0
      %v776 = vadd.f32 0.0, %v775
      %777 = vdwg.mxu0
      %778 = vmatpush.msra.mxu0 0.0
      %779 = vmatpush.msra.mxu0 0.0
      %780 = vmatpush.msra.mxu0 0.0
      %781 = vmatpush.msra.mxu0 0.0
      %782 = vmatpush.msra.mxu0 0.0
      %783 = vmatpush.msra.mxu0 0.0
      %784 = vmatpush.msra.mxu0 0.0
      %785 = vmatpush.msra.mxu0 0.0
      %786 = vmatpush.msra.mxu0 0.0
      %787 = vmatpush.msra.mxu0 0.0
      %788 = vmatpush.msra.mxu0 0.0
      %789 = vmatpush.msra.mxu0 0.0
      %790 = vmatpush.msra.mxu0 0.0
      %791 = vmatpush.msra.mxu0 0.0
      %792 = vmatpush.msra.mxu0 %v303
      %793 = vmatpush.msra.mxu0 %v192
      %794 = vmatmul.f32.gmra.mxu0 %v239
      %v795 = vpop.f32.mrf.mxu0
      %v796 = vadd.f32 0.0, %v795
      %797 = vmatmul.f32.gmra.mxu0 %v242
      %v798 = vpop.f32.mrf.mxu0
      %v799 = vadd.f32 0.0, %v798
      %800 = vdwg.mxu0
      %801 = vmatpush.msra.mxu0 0.0
      %802 = vmatpush.msra.mxu0 0.0
      %803 = vmatpush.msra.mxu0 0.0
      %804 = vmatpush.msra.mxu0 0.0
      %805 = vmatpush.msra.mxu0 0.0
      %806 = vmatpush.msra.mxu0 0.0
      %807 = vmatpush.msra.mxu0 0.0
      %808 = vmatpush.msra.mxu0 0.0
      %809 = vmatpush.msra.mxu0 0.0
      %810 = vmatpush.msra.mxu0 0.0
      %811 = vmatpush.msra.mxu0 0.0
      %812 = vmatpush.msra.mxu0 0.0
      %813 = vmatpush.msra.mxu0 0.0
      %814 = vmatpush.msra.mxu0 0.0
      %815 = vmatpush.msra.mxu0 %v306
      %816 = vmatpush.msra.mxu0 %v193
      %817 = vmatmul.f32.gmra.mxu0 %v239
      %v818 = vpop.f32.mrf.mxu0
      %v819 = vadd.f32 0.0, %v818
      %820 = vmatmul.f32.gmra.mxu0 %v242
      %v821 = vpop.f32.mrf.mxu0
      %v822 = vadd.f32 0.0, %v821
      %823 = vdwg.mxu0
      %824 = vmatpush.msra.mxu0 0.0
      %825 = vmatpush.msra.mxu0 0.0
      %826 = vmatpush.msra.mxu0 0.0
      %827 = vmatpush.msra.mxu0 0.0
      %828 = vmatpush.msra.mxu0 0.0
      %829 = vmatpush.msra.mxu0 0.0
      %830 = vmatpush.msra.mxu0 0.0
      %831 = vmatpush.msra.mxu0 0.0
      %832 = vmatpush.msra.mxu0 0.0
      %833 = vmatpush.msra.mxu0 0.0
      %834 = vmatpush.msra.mxu0 0.0
      %835 = vmatpush.msra.mxu0 0.0
      %836 = vmatpush.msra.mxu0 0.0
      %837 = vmatpush.msra.mxu0 0.0
      %838 = vmatpush.msra.mxu0 %v309
      %839 = vmatpush.msra.mxu0 %v194
      %840 = vmatmul.f32.gmra.mxu0 %v239
      %v841 = vpop.f32.mrf.mxu0
      %v842 = vadd.f32 0.0, %v841
      %843 = vmatmul.f32.gmra.mxu0 %v242
      %v844 = vpop.f32.mrf.mxu0
      %v845 = vadd.f32 0.0, %v844
      %846 = vdwg.mxu0
      %847 = vmatpush.msra.mxu0 0.0
      %848 = vmatpush.msra.mxu0 0.0
      %849 = vmatpush.msra.mxu0 0.0
      %850 = vmatpush.msra.mxu0 0.0
      %851 = vmatpush.msra.mxu0 0.0
      %852 = vmatpush.msra.mxu0 0.0
      %853 = vmatpush.msra.mxu0 0.0
      %854 = vmatpush.msra.mxu0 0.0
      %855 = vmatpush.msra.mxu0 0.0
      %856 = vmatpush.msra.mxu0 0.0
      %857 = vmatpush.msra.mxu0 0.0
      %858 = vmatpush.msra.mxu0 0.0
      %859 = vmatpush.msra.mxu0 0.0
      %860 = vmatpush.msra.mxu0 0.0
      %861 = vmatpush.msra.mxu0 %v312
      %862 = vmatpush.msra.mxu0 %v195
      %863 = vmatmul.f32.gmra.mxu0 %v239
      %v864 = vpop.f32.mrf.mxu0
      %v865 = vadd.f32 0.0, %v864
      %866 = vmatmul.f32.gmra.mxu0 %v242
      %v867 = vpop.f32.mrf.mxu0
      %v868 = vadd.f32 0.0, %v867
      %869 = vdwg.mxu0
      %870 = vmatpush.msra.mxu0 0.0
      %871 = vmatpush.msra.mxu0 0.0
      %872 = vmatpush.msra.mxu0 0.0
      %873 = vmatpush.msra.mxu0 0.0
      %874 = vmatpush.msra.mxu0 0.0
      %875 = vmatpush.msra.mxu0 0.0
      %876 = vmatpush.msra.mxu0 0.0
      %877 = vmatpush.msra.mxu0 0.0
      %878 = vmatpush.msra.mxu0 0.0
      %879 = vmatpush.msra.mxu0 0.0
      %880 = vmatpush.msra.mxu0 0.0
      %881 = vmatpush.msra.mxu0 0.0
      %882 = vmatpush.msra.mxu0 0.0
      %883 = vmatpush.msra.mxu0 0.0
      %884 = vmatpush.msra.mxu0 %v315
      %885 = vmatpush.msra.mxu0 %v196
      %886 = vmatmul.f32.gmra.mxu0 %v239
      %v887 = vpop.f32.mrf.mxu0
      %v888 = vadd.f32 0.0, %v887
      %889 = vmatmul.f32.gmra.mxu0 %v242
      %v890 = vpop.f32.mrf.mxu0
      %v891 = vadd.f32 0.0, %v890
      %892 = vdwg.mxu0
      %893 = vmatpush.msra.mxu0 0.0
      %894 = vmatpush.msra.mxu0 0.0
      %895 = vmatpush.msra.mxu0 0.0
      %896 = vmatpush.msra.mxu0 0.0
      %897 = vmatpush.msra.mxu0 0.0
      %898 = vmatpush.msra.mxu0 0.0
      %899 = vmatpush.msra.mxu0 0.0
      %900 = vmatpush.msra.mxu0 0.0
      %901 = vmatpush.msra.mxu0 0.0
      %902 = vmatpush.msra.mxu0 0.0
      %903 = vmatpush.msra.mxu0 0.0
      %904 = vmatpush.msra.mxu0 0.0
      %905 = vmatpush.msra.mxu0 0.0
      %906 = vmatpush.msra.mxu0 0.0
      %907 = vmatpush.msra.mxu0 %v318
      %908 = vmatpush.msra.mxu0 %v197
      %909 = vmatmul.f32.gmra.mxu0 %v239
      %v910 = vpop.f32.mrf.mxu0
      %v911 = vadd.f32 0.0, %v910
      %912 = vmatmul.f32.gmra.mxu0 %v242
      %v913 = vpop.f32.mrf.mxu0
      %v914 = vadd.f32 0.0, %v913
      %915 = vdwg.mxu0
      %916 = vmatpush.msra.mxu0 0.0
      %917 = vmatpush.msra.mxu0 0.0
      %918 = vmatpush.msra.mxu0 0.0
      %919 = vmatpush.msra.mxu0 0.0
      %920 = vmatpush.msra.mxu0 0.0
      %921 = vmatpush.msra.mxu0 0.0
      %922 = vmatpush.msra.mxu0 0.0
      %923 = vmatpush.msra.mxu0 0.0
      %924 = vmatpush.msra.mxu0 0.0
      %925 = vmatpush.msra.mxu0 0.0
      %926 = vmatpush.msra.mxu0 0.0
      %927 = vmatpush.msra.mxu0 0.0
      %928 = vmatpush.msra.mxu0 0.0
      %929 = vmatpush.msra.mxu0 0.0
      %930 = vmatpush.msra.mxu0 %v321
      %931 = vmatpush.msra.mxu0 %v198
      %932 = vmatmul.f32.gmra.mxu0 %v239
      %v933 = vpop.f32.mrf.mxu0
      %v934 = vadd.f32 0.0, %v933
      %935 = vmatmul.f32.gmra.mxu0 %v242
      %v936 = vpop.f32.mrf.mxu0
      %v937 = vadd.f32 0.0, %v936
      %938 = vdwg.mxu0
      %939 = vmatpush.msra.mxu0 0.0
      %940 = vmatpush.msra.mxu0 0.0
      %941 = vmatpush.msra.mxu0 0.0
      %942 = vmatpush.msra.mxu0 0.0
      %943 = vmatpush.msra.mxu0 0.0
      %944 = vmatpush.msra.mxu0 0.0
      %945 = vmatpush.msra.mxu0 0.0
      %946 = vmatpush.msra.mxu0 0.0
      %947 = vmatpush.msra.mxu0 0.0
      %948 = vmatpush.msra.mxu0 0.0
      %949 = vmatpush.msra.mxu0 0.0
      %950 = vmatpush.msra.mxu0 0.0
      %951 = vmatpush.msra.mxu0 0.0
      %952 = vmatpush.msra.mxu0 0.0
      %953 = vmatpush.msra.mxu0 %v324
      %954 = vmatpush.msra.mxu0 %v199
      %955 = vmatmul.f32.gmra.mxu0 %v239
      %v956 = vpop.f32.mrf.mxu0
      %v957 = vadd.f32 0.0, %v956
      %958 = vmatmul.f32.gmra.mxu0 %v242
      %v959 = vpop.f32.mrf.mxu0
      %v960 = vadd.f32 0.0, %v959
      %961 = vdwg.mxu0
      %962 = vmatpush.msra.mxu0 0.0
      %963 = vmatpush.msra.mxu0 0.0
      %964 = vmatpush.msra.mxu0 0.0
      %965 = vmatpush.msra.mxu0 0.0
      %966 = vmatpush.msra.mxu0 0.0
      %967 = vmatpush.msra.mxu0 0.0
      %968 = vmatpush.msra.mxu0 0.0
      %969 = vmatpush.msra.mxu0 0.0
      %970 = vmatpush.msra.mxu0 0.0
      %971 = vmatpush.msra.mxu0 0.0
      %972 = vmatpush.msra.mxu0 0.0
      %973 = vmatpush.msra.mxu0 0.0
      %974 = vmatpush.msra.mxu0 0.0
      %975 = vmatpush.msra.mxu0 0.0
      %976 = vmatpush.msra.mxu0 %v327
      %977 = vmatpush.msra.mxu0 %v200
      %978 = vmatmul.f32.gmra.mxu0 %v239
      %v979 = vpop.f32.mrf.mxu0
      %v980 = vadd.f32 0.0, %v979
      %981 = vmatmul.f32.gmra.mxu0 %v242
      %v982 = vpop.f32.mrf.mxu0
      %v983 = vadd.f32 0.0, %v982
      %984 = vdwg.mxu0
      %985 = vmatpush.msra.mxu0 0.0
      %986 = vmatpush.msra.mxu0 0.0
      %987 = vmatpush.msra.mxu0 0.0
      %988 = vmatpush.msra.mxu0 0.0
      %989 = vmatpush.msra.mxu0 0.0
      %990 = vmatpush.msra.mxu0 0.0
      %991 = vmatpush.msra.mxu0 0.0
      %992 = vmatpush.msra.mxu0 0.0
      %993 = vmatpush.msra.mxu0 0.0
      %994 = vmatpush.msra.mxu0 0.0
      %995 = vmatpush.msra.mxu0 0.0
      %996 = vmatpush.msra.mxu0 0.0
      %997 = vmatpush.msra.mxu0 0.0
      %998 = vmatpush.msra.mxu0 0.0
      %999 = vmatpush.msra.mxu0 %v330
      %1000 = vmatpush.msra.mxu0 %v201
      %1001 = vmatmul.f32.gmra.mxu0 %v239
      %v1002 = vpop.f32.mrf.mxu0
      %v1003 = vadd.f32 0.0, %v1002
      %1004 = vmatmul.f32.gmra.mxu0 %v242
      %v1005 = vpop.f32.mrf.mxu0
      %v1006 = vadd.f32 0.0, %v1005
      %1007 = vdwg.mxu0
      %1008 = vmatpush.msra.mxu0 0.0
      %1009 = vmatpush.msra.mxu0 0.0
      %1010 = vmatpush.msra.mxu0 0.0
      %1011 = vmatpush.msra.mxu0 0.0
      %1012 = vmatpush.msra.mxu0 0.0
      %1013 = vmatpush.msra.mxu0 0.0
      %1014 = vmatpush.msra.mxu0 0.0
      %1015 = vmatpush.msra.mxu0 0.0
      %1016 = vmatpush.msra.mxu0 0.0
      %1017 = vmatpush.msra.mxu0 0.0
      %1018 = vmatpush.msra.mxu0 0.0
      %1019 = vmatpush.msra.mxu0 0.0
      %1020 = vmatpush.msra.mxu0 0.0
      %1021 = vmatpush.msra.mxu0 0.0
      %1022 = vmatpush.msra.mxu0 %v333
      %1023 = vmatpush.msra.mxu0 %v202
      %1024 = vmatmul.f32.gmra.mxu0 %v239
      %v1025 = vpop.f32.mrf.mxu0
      %v1026 = vadd.f32 0.0, %v1025
      %1027 = vmatmul.f32.gmra.mxu0 %v242
      %v1028 = vpop.f32.mrf.mxu0
      %v1029 = vadd.f32 0.0, %v1028
      %1030 = vdwg.mxu0
      %1031 = vmatpush.msra.mxu0 0.0
      %1032 = vmatpush.msra.mxu0 0.0
      %1033 = vmatpush.msra.mxu0 0.0
      %1034 = vmatpush.msra.mxu0 0.0
      %1035 = vmatpush.msra.mxu0 0.0
      %1036 = vmatpush.msra.mxu0 0.0
      %1037 = vmatpush.msra.mxu0 0.0
      %1038 = vmatpush.msra.mxu0 0.0
      %1039 = vmatpush.msra.mxu0 0.0
      %1040 = vmatpush.msra.mxu0 0.0
      %1041 = vmatpush.msra.mxu0 0.0
      %1042 = vmatpush.msra.mxu0 0.0
      %1043 = vmatpush.msra.mxu0 0.0
      %1044 = vmatpush.msra.mxu0 0.0
      %1045 = vmatpush.msra.mxu0 %v336
      %1046 = vmatpush.msra.mxu0 %v203
      %1047 = vmatmul.f32.gmra.mxu0 %v239
      %v1048 = vpop.f32.mrf.mxu0
      %v1049 = vadd.f32 0.0, %v1048
      %1050 = vmatmul.f32.gmra.mxu0 %v242
      %v1051 = vpop.f32.mrf.mxu0
      %v1052 = vadd.f32 0.0, %v1051
      %1053 = vdwg.mxu0
      %1054 = vmatpush.msra.mxu0 0.0
      %1055 = vmatpush.msra.mxu0 0.0
      %1056 = vmatpush.msra.mxu0 0.0
      %1057 = vmatpush.msra.mxu0 0.0
      %1058 = vmatpush.msra.mxu0 0.0
      %1059 = vmatpush.msra.mxu0 0.0
      %1060 = vmatpush.msra.mxu0 0.0
      %1061 = vmatpush.msra.mxu0 0.0
      %1062 = vmatpush.msra.mxu0 0.0
      %1063 = vmatpush.msra.mxu0 0.0
      %1064 = vmatpush.msra.mxu0 0.0
      %1065 = vmatpush.msra.mxu0 0.0
      %1066 = vmatpush.msra.mxu0 0.0
      %1067 = vmatpush.msra.mxu0 0.0
      %1068 = vmatpush.msra.mxu0 %v339
      %1069 = vmatpush.msra.mxu0 %v204
      %1070 = vmatmul.f32.gmra.mxu0 %v239
      %v1071 = vpop.f32.mrf.mxu0
      %v1072 = vadd.f32 0.0, %v1071
      %1073 = vmatmul.f32.gmra.mxu0 %v242
      %v1074 = vpop.f32.mrf.mxu0
      %v1075 = vadd.f32 0.0, %v1074
      %1076 = vdwg.mxu0
      %s1077 = scalar_lea.vmem %s165, 512
      %v1078 = vld [vmem:[%s1077] sm:$0xff]
      %v1079 = vld [vmem:[%s1077 + $0x8] sm:$0xff]
      %v1080 = vld [vmem:[%s1077 + $0x10] sm:$0xff]
      %v1081 = vld [vmem:[%s1077 + $0x18] sm:$0xff]
      %v1082 = vld [vmem:[%s1077 + $0x20] sm:$0xff]
      %v1083 = vld [vmem:[%s1077 + $0x28] sm:$0xff]
      %v1084 = vld [vmem:[%s1077 + $0x30] sm:$0xff]
      %v1085 = vld [vmem:[%s1077 + $0x38] sm:$0xff]
      %v1086 = vld [vmem:[%s1077 + $0x40] sm:$0xff]
      %v1087 = vld [vmem:[%s1077 + $0x48] sm:$0xff]
      %v1088 = vld [vmem:[%s1077 + $0x50] sm:$0xff]
      %v1089 = vld [vmem:[%s1077 + $0x58] sm:$0xff]
      %v1090 = vld [vmem:[%s1077 + $0x60] sm:$0xff]
      %v1091 = vld [vmem:[%s1077 + $0x68] sm:$0xff]
      %v1092 = vld [vmem:[%s1077 + $0x70] sm:$0xff]
      %v1093 = vld [vmem:[%s1077 + $0x78] sm:$0xff]
      %v1094 = vld [vmem:[%s1077 + $0x80] sm:$0xff]
      %v1095 = vld [vmem:[%s1077 + $0x88] sm:$0xff]
      %v1096 = vld [vmem:[%s1077 + $0x90] sm:$0xff]
      %v1097 = vld [vmem:[%s1077 + $0x98] sm:$0xff]
      %v1098 = vld [vmem:[%s1077 + $0xa0] sm:$0xff]
      %v1099 = vld [vmem:[%s1077 + $0xa8] sm:$0xff]
      %v1100 = vld [vmem:[%s1077 + $0xb0] sm:$0xff]
      %v1101 = vld [vmem:[%s1077 + $0xb8] sm:$0xff]
      %v1102 = vld [vmem:[%s1077 + $0xc0] sm:$0xff]
      %v1103 = vld [vmem:[%s1077 + $0xc8] sm:$0xff]
      %v1104 = vld [vmem:[%s1077 + $0xd0] sm:$0xff]
      %v1105 = vld [vmem:[%s1077 + $0xd8] sm:$0xff]
      %v1106 = vld [vmem:[%s1077 + $0xe0] sm:$0xff]
      %v1107 = vld [vmem:[%s1077 + $0xe8] sm:$0xff]
      %v1108 = vld [vmem:[%s1077 + $0xf0] sm:$0xff]
      %v1109 = vld [vmem:[%s1077 + $0xf8] sm:$0xff]
      %v1110 = vld [vmem:[%s1077 + $0x100] sm:$0x1]
      %v1111 = vld [vmem:[%s1077 + $0x108] sm:$0x1]
      %v1112 = vld [vmem:[%s1077 + $0x110] sm:$0x1]
      %v1113 = vld [vmem:[%s1077 + $0x118] sm:$0x1]
      %v1114 = vld [vmem:[%s1077 + $0x120] sm:$0x1]
      %v1115 = vld [vmem:[%s1077 + $0x128] sm:$0x1]
      %v1116 = vld [vmem:[%s1077 + $0x130] sm:$0x1]
      %v1117 = vld [vmem:[%s1077 + $0x138] sm:$0x1]
      %v1118 = vld [vmem:[%s1077 + $0x140] sm:$0x1]
      %v1119 = vld [vmem:[%s1077 + $0x148] sm:$0x1]
      %v1120 = vld [vmem:[%s1077 + $0x150] sm:$0x1]
      %v1121 = vld [vmem:[%s1077 + $0x158] sm:$0x1]
      %v1122 = vld [vmem:[%s1077 + $0x160] sm:$0x1]
      %v1123 = vld [vmem:[%s1077 + $0x168] sm:$0x1]
      %v1124 = vld [vmem:[%s1077 + $0x170] sm:$0x1]
      %v1125 = vld [vmem:[%s1077 + $0x178] sm:$0x1]
      %v1126 = vld [vmem:[%s1077 + $0x180] sm:$0x1]
      %v1127 = vld [vmem:[%s1077 + $0x188] sm:$0x1]
      %v1128 = vld [vmem:[%s1077 + $0x190] sm:$0x1]
      %v1129 = vld [vmem:[%s1077 + $0x198] sm:$0x1]
      %v1130 = vld [vmem:[%s1077 + $0x1a0] sm:$0x1]
      %v1131 = vld [vmem:[%s1077 + $0x1a8] sm:$0x1]
      %v1132 = vld [vmem:[%s1077 + $0x1b0] sm:$0x1]
      %v1133 = vld [vmem:[%s1077 + $0x1b8] sm:$0x1]
      %v1134 = vld [vmem:[%s1077 + $0x1c0] sm:$0x1]
      %v1135 = vld [vmem:[%s1077 + $0x1c8] sm:$0x1]
      %v1136 = vld [vmem:[%s1077 + $0x1d0] sm:$0x1]
      %v1137 = vld [vmem:[%s1077 + $0x1d8] sm:$0x1]
      %v1138 = vld [vmem:[%s1077 + $0x1e0] sm:$0x1]
      %v1139 = vld [vmem:[%s1077 + $0x1e8] sm:$0x1]
      %v1140 = vld [vmem:[%s1077 + $0x1f0] sm:$0x1]
      %v1141 = vld [vmem:[%s1077 + $0x1f8] sm:$0x1]
      %v1143 = vsel %vm244, %v1110, 0
      %v1146 = vsel %vm244, %v1111, 0
      %v1149 = vsel %vm244, %v1112, 0
      %v1152 = vsel %vm244, %v1113, 0
      %v1155 = vsel %vm244, %v1114, 0
      %v1158 = vsel %vm244, %v1115, 0
      %v1161 = vsel %vm244, %v1116, 0
      %v1164 = vsel %vm244, %v1117, 0
      %v1167 = vsel %vm244, %v1118, 0
      %v1170 = vsel %vm244, %v1119, 0
      %v1173 = vsel %vm244, %v1120, 0
      %v1176 = vsel %vm244, %v1121, 0
      %v1179 = vsel %vm244, %v1122, 0
      %v1182 = vsel %vm244, %v1123, 0
      %v1185 = vsel %vm244, %v1124, 0
      %v1188 = vsel %vm244, %v1125, 0
      %v1191 = vsel %vm244, %v1126, 0
      %v1194 = vsel %vm244, %v1127, 0
      %v1197 = vsel %vm244, %v1128, 0
      %v1200 = vsel %vm244, %v1129, 0
      %v1203 = vsel %vm244, %v1130, 0
      %v1206 = vsel %vm244, %v1131, 0
      %v1209 = vsel %vm244, %v1132, 0
      %v1212 = vsel %vm244, %v1133, 0
      %v1215 = vsel %vm244, %v1134, 0
      %v1218 = vsel %vm244, %v1135, 0
      %v1221 = vsel %vm244, %v1136, 0
      %v1224 = vsel %vm244, %v1137, 0
      %v1227 = vsel %vm244, %v1138, 0
      %v1230 = vsel %vm244, %v1139, 0
      %v1233 = vsel %vm244, %v1140, 0
      %v1236 = vsel %vm244, %v1141, 0
      %1238 = vmatpush.msra.mxu0 0.0
      %1239 = vmatpush.msra.mxu0 0.0
      %1240 = vmatpush.msra.mxu0 0.0
      %1241 = vmatpush.msra.mxu0 0.0
      %1242 = vmatpush.msra.mxu0 0.0
      %1243 = vmatpush.msra.mxu0 0.0
      %1244 = vmatpush.msra.mxu0 0.0
      %1245 = vmatpush.msra.mxu0 0.0
      %1246 = vmatpush.msra.mxu0 0.0
      %1247 = vmatpush.msra.mxu0 0.0
      %1248 = vmatpush.msra.mxu0 0.0
      %1249 = vmatpush.msra.mxu0 0.0
      %1250 = vmatpush.msra.mxu0 0.0
      %1251 = vmatpush.msra.mxu0 0.0
      %1252 = vmatpush.msra.mxu0 %v1143
      %1253 = vmatpush.msra.mxu0 %v1078
      %1254 = vmatmul.f32.gmra.mxu0 %v239
      %v1255 = vpop.f32.mrf.mxu0
      %v1256 = vadd.f32 0.0, %v1255
      %1257 = vmatmul.f32.gmra.mxu0 %v242
      %v1258 = vpop.f32.mrf.mxu0
      %v1259 = vadd.f32 0.0, %v1258
      %1260 = vdwg.mxu0
      %1261 = vmatpush.msra.mxu0 0.0
      %1262 = vmatpush.msra.mxu0 0.0
      %1263 = vmatpush.msra.mxu0 0.0
      %1264 = vmatpush.msra.mxu0 0.0
      %1265 = vmatpush.msra.mxu0 0.0
      %1266 = vmatpush.msra.mxu0 0.0
      %1267 = vmatpush.msra.mxu0 0.0
      %1268 = vmatpush.msra.mxu0 0.0
      %1269 = vmatpush.msra.mxu0 0.0
      %1270 = vmatpush.msra.mxu0 0.0
      %1271 = vmatpush.msra.mxu0 0.0
      %1272 = vmatpush.msra.mxu0 0.0
      %1273 = vmatpush.msra.mxu0 0.0
      %1274 = vmatpush.msra.mxu0 0.0
      %1275 = vmatpush.msra.mxu0 %v1146
      %1276 = vmatpush.msra.mxu0 %v1079
      %1277 = vmatmul.f32.gmra.mxu0 %v239
      %v1278 = vpop.f32.mrf.mxu0
      %v1279 = vadd.f32 0.0, %v1278
      %1280 = vmatmul.f32.gmra.mxu0 %v242
      %v1281 = vpop.f32.mrf.mxu0
      %v1282 = vadd.f32 0.0, %v1281
      %1283 = vdwg.mxu0
      %1284 = vmatpush.msra.mxu0 0.0
      %1285 = vmatpush.msra.mxu0 0.0
      %1286 = vmatpush.msra.mxu0 0.0
      %1287 = vmatpush.msra.mxu0 0.0
      %1288 = vmatpush.msra.mxu0 0.0
      %1289 = vmatpush.msra.mxu0 0.0
      %1290 = vmatpush.msra.mxu0 0.0
      %1291 = vmatpush.msra.mxu0 0.0
      %1292 = vmatpush.msra.mxu0 0.0
      %1293 = vmatpush.msra.mxu0 0.0
      %1294 = vmatpush.msra.mxu0 0.0
      %1295 = vmatpush.msra.mxu0 0.0
      %1296 = vmatpush.msra.mxu0 0.0
      %1297 = vmatpush.msra.mxu0 0.0
      %1298 = vmatpush.msra.mxu0 %v1149
      %1299 = vmatpush.msra.mxu0 %v1080
      %1300 = vmatmul.f32.gmra.mxu0 %v239
      %v1301 = vpop.f32.mrf.mxu0
      %v1302 = vadd.f32 0.0, %v1301
      %1303 = vmatmul.f32.gmra.mxu0 %v242
      %v1304 = vpop.f32.mrf.mxu0
      %v1305 = vadd.f32 0.0, %v1304
      %1306 = vdwg.mxu0
      %1307 = vmatpush.msra.mxu0 0.0
      %1308 = vmatpush.msra.mxu0 0.0
      %1309 = vmatpush.msra.mxu0 0.0
      %1310 = vmatpush.msra.mxu0 0.0
      %1311 = vmatpush.msra.mxu0 0.0
      %1312 = vmatpush.msra.mxu0 0.0
      %1313 = vmatpush.msra.mxu0 0.0
      %1314 = vmatpush.msra.mxu0 0.0
      %1315 = vmatpush.msra.mxu0 0.0
      %1316 = vmatpush.msra.mxu0 0.0
      %1317 = vmatpush.msra.mxu0 0.0
      %1318 = vmatpush.msra.mxu0 0.0
      %1319 = vmatpush.msra.mxu0 0.0
      %1320 = vmatpush.msra.mxu0 0.0
      %1321 = vmatpush.msra.mxu0 %v1152
      %1322 = vmatpush.msra.mxu0 %v1081
      %1323 = vmatmul.f32.gmra.mxu0 %v239
      %v1324 = vpop.f32.mrf.mxu0
      %v1325 = vadd.f32 0.0, %v1324
      %1326 = vmatmul.f32.gmra.mxu0 %v242
      %v1327 = vpop.f32.mrf.mxu0
      %v1328 = vadd.f32 0.0, %v1327
      %1329 = vdwg.mxu0
      %1330 = vmatpush.msra.mxu0 0.0
      %1331 = vmatpush.msra.mxu0 0.0
      %1332 = vmatpush.msra.mxu0 0.0
      %1333 = vmatpush.msra.mxu0 0.0
      %1334 = vmatpush.msra.mxu0 0.0
      %1335 = vmatpush.msra.mxu0 0.0
      %1336 = vmatpush.msra.mxu0 0.0
      %1337 = vmatpush.msra.mxu0 0.0
      %1338 = vmatpush.msra.mxu0 0.0
      %1339 = vmatpush.msra.mxu0 0.0
      %1340 = vmatpush.msra.mxu0 0.0
      %1341 = vmatpush.msra.mxu0 0.0
      %1342 = vmatpush.msra.mxu0 0.0
      %1343 = vmatpush.msra.mxu0 0.0
      %1344 = vmatpush.msra.mxu0 %v1155
      %1345 = vmatpush.msra.mxu0 %v1082
      %1346 = vmatmul.f32.gmra.mxu0 %v239
      %v1347 = vpop.f32.mrf.mxu0
      %v1348 = vadd.f32 0.0, %v1347
      %1349 = vmatmul.f32.gmra.mxu0 %v242
      %v1350 = vpop.f32.mrf.mxu0
      %v1351 = vadd.f32 0.0, %v1350
      %1352 = vdwg.mxu0
      %1353 = vmatpush.msra.mxu0 0.0
      %1354 = vmatpush.msra.mxu0 0.0
      %1355 = vmatpush.msra.mxu0 0.0
      %1356 = vmatpush.msra.mxu0 0.0
      %1357 = vmatpush.msra.mxu0 0.0
      %1358 = vmatpush.msra.mxu0 0.0
      %1359 = vmatpush.msra.mxu0 0.0
      %1360 = vmatpush.msra.mxu0 0.0
      %1361 = vmatpush.msra.mxu0 0.0
      %1362 = vmatpush.msra.mxu0 0.0
      %1363 = vmatpush.msra.mxu0 0.0
      %1364 = vmatpush.msra.mxu0 0.0
      %1365 = vmatpush.msra.mxu0 0.0
      %1366 = vmatpush.msra.mxu0 0.0
      %1367 = vmatpush.msra.mxu0 %v1158
      %1368 = vmatpush.msra.mxu0 %v1083
      %1369 = vmatmul.f32.gmra.mxu0 %v239
      %v1370 = vpop.f32.mrf.mxu0
      %v1371 = vadd.f32 0.0, %v1370
      %1372 = vmatmul.f32.gmra.mxu0 %v242
      %v1373 = vpop.f32.mrf.mxu0
      %v1374 = vadd.f32 0.0, %v1373
      %1375 = vdwg.mxu0
      %1376 = vmatpush.msra.mxu0 0.0
      %1377 = vmatpush.msra.mxu0 0.0
      %1378 = vmatpush.msra.mxu0 0.0
      %1379 = vmatpush.msra.mxu0 0.0
      %1380 = vmatpush.msra.mxu0 0.0
      %1381 = vmatpush.msra.mxu0 0.0
      %1382 = vmatpush.msra.mxu0 0.0
      %1383 = vmatpush.msra.mxu0 0.0
      %1384 = vmatpush.msra.mxu0 0.0
      %1385 = vmatpush.msra.mxu0 0.0
      %1386 = vmatpush.msra.mxu0 0.0
      %1387 = vmatpush.msra.mxu0 0.0
      %1388 = vmatpush.msra.mxu0 0.0
      %1389 = vmatpush.msra.mxu0 0.0
      %1390 = vmatpush.msra.mxu0 %v1161
      %1391 = vmatpush.msra.mxu0 %v1084
      %1392 = vmatmul.f32.gmra.mxu0 %v239
      %v1393 = vpop.f32.mrf.mxu0
      %v1394 = vadd.f32 0.0, %v1393
      %1395 = vmatmul.f32.gmra.mxu0 %v242
      %v1396 = vpop.f32.mrf.mxu0
      %v1397 = vadd.f32 0.0, %v1396
      %1398 = vdwg.mxu0
      %1399 = vmatpush.msra.mxu0 0.0
      %1400 = vmatpush.msra.mxu0 0.0
      %1401 = vmatpush.msra.mxu0 0.0
      %1402 = vmatpush.msra.mxu0 0.0
      %1403 = vmatpush.msra.mxu0 0.0
      %1404 = vmatpush.msra.mxu0 0.0
      %1405 = vmatpush.msra.mxu0 0.0
      %1406 = vmatpush.msra.mxu0 0.0
      %1407 = vmatpush.msra.mxu0 0.0
      %1408 = vmatpush.msra.mxu0 0.0
      %1409 = vmatpush.msra.mxu0 0.0
      %1410 = vmatpush.msra.mxu0 0.0
      %1411 = vmatpush.msra.mxu0 0.0
      %1412 = vmatpush.msra.mxu0 0.0
      %1413 = vmatpush.msra.mxu0 %v1164
      %1414 = vmatpush.msra.mxu0 %v1085
      %1415 = vmatmul.f32.gmra.mxu0 %v239
      %v1416 = vpop.f32.mrf.mxu0
      %v1417 = vadd.f32 0.0, %v1416
      %1418 = vmatmul.f32.gmra.mxu0 %v242
      %v1419 = vpop.f32.mrf.mxu0
      %v1420 = vadd.f32 0.0, %v1419
      %1421 = vdwg.mxu0
      %1422 = vmatpush.msra.mxu0 0.0
      %1423 = vmatpush.msra.mxu0 0.0
      %1424 = vmatpush.msra.mxu0 0.0
      %1425 = vmatpush.msra.mxu0 0.0
      %1426 = vmatpush.msra.mxu0 0.0
      %1427 = vmatpush.msra.mxu0 0.0
      %1428 = vmatpush.msra.mxu0 0.0
      %1429 = vmatpush.msra.mxu0 0.0
      %1430 = vmatpush.msra.mxu0 0.0
      %1431 = vmatpush.msra.mxu0 0.0
      %1432 = vmatpush.msra.mxu0 0.0
      %1433 = vmatpush.msra.mxu0 0.0
      %1434 = vmatpush.msra.mxu0 0.0
      %1435 = vmatpush.msra.mxu0 0.0
      %1436 = vmatpush.msra.mxu0 %v1167
      %1437 = vmatpush.msra.mxu0 %v1086
      %1438 = vmatmul.f32.gmra.mxu0 %v239
      %v1439 = vpop.f32.mrf.mxu0
      %v1440 = vadd.f32 0.0, %v1439
      %1441 = vmatmul.f32.gmra.mxu0 %v242
      %v1442 = vpop.f32.mrf.mxu0
      %v1443 = vadd.f32 0.0, %v1442
      %1444 = vdwg.mxu0
      %1445 = vmatpush.msra.mxu0 0.0
      %1446 = vmatpush.msra.mxu0 0.0
      %1447 = vmatpush.msra.mxu0 0.0
      %1448 = vmatpush.msra.mxu0 0.0
      %1449 = vmatpush.msra.mxu0 0.0
      %1450 = vmatpush.msra.mxu0 0.0
      %1451 = vmatpush.msra.mxu0 0.0
      %1452 = vmatpush.msra.mxu0 0.0
      %1453 = vmatpush.msra.mxu0 0.0
      %1454 = vmatpush.msra.mxu0 0.0
      %1455 = vmatpush.msra.mxu0 0.0
      %1456 = vmatpush.msra.mxu0 0.0
      %1457 = vmatpush.msra.mxu0 0.0
      %1458 = vmatpush.msra.mxu0 0.0
      %1459 = vmatpush.msra.mxu0 %v1170
      %1460 = vmatpush.msra.mxu0 %v1087
      %1461 = vmatmul.f32.gmra.mxu0 %v239
      %v1462 = vpop.f32.mrf.mxu0
      %v1463 = vadd.f32 0.0, %v1462
      %1464 = vmatmul.f32.gmra.mxu0 %v242
      %v1465 = vpop.f32.mrf.mxu0
      %v1466 = vadd.f32 0.0, %v1465
      %1467 = vdwg.mxu0
      %1468 = vmatpush.msra.mxu0 0.0
      %1469 = vmatpush.msra.mxu0 0.0
      %1470 = vmatpush.msra.mxu0 0.0
      %1471 = vmatpush.msra.mxu0 0.0
      %1472 = vmatpush.msra.mxu0 0.0
      %1473 = vmatpush.msra.mxu0 0.0
      %1474 = vmatpush.msra.mxu0 0.0
      %1475 = vmatpush.msra.mxu0 0.0
      %1476 = vmatpush.msra.mxu0 0.0
      %1477 = vmatpush.msra.mxu0 0.0
      %1478 = vmatpush.msra.mxu0 0.0
      %1479 = vmatpush.msra.mxu0 0.0
      %1480 = vmatpush.msra.mxu0 0.0
      %1481 = vmatpush.msra.mxu0 0.0
      %1482 = vmatpush.msra.mxu0 %v1173
      %1483 = vmatpush.msra.mxu0 %v1088
      %1484 = vmatmul.f32.gmra.mxu0 %v239
      %v1485 = vpop.f32.mrf.mxu0
      %v1486 = vadd.f32 0.0, %v1485
      %1487 = vmatmul.f32.gmra.mxu0 %v242
      %v1488 = vpop.f32.mrf.mxu0
      %v1489 = vadd.f32 0.0, %v1488
      %1490 = vdwg.mxu0
      %1491 = vmatpush.msra.mxu0 0.0
      %1492 = vmatpush.msra.mxu0 0.0
      %1493 = vmatpush.msra.mxu0 0.0
      %1494 = vmatpush.msra.mxu0 0.0
      %1495 = vmatpush.msra.mxu0 0.0
      %1496 = vmatpush.msra.mxu0 0.0
      %1497 = vmatpush.msra.mxu0 0.0
      %1498 = vmatpush.msra.mxu0 0.0
      %1499 = vmatpush.msra.mxu0 0.0
      %1500 = vmatpush.msra.mxu0 0.0
      %1501 = vmatpush.msra.mxu0 0.0
      %1502 = vmatpush.msra.mxu0 0.0
      %1503 = vmatpush.msra.mxu0 0.0
      %1504 = vmatpush.msra.mxu0 0.0
      %1505 = vmatpush.msra.mxu0 %v1176
      %1506 = vmatpush.msra.mxu0 %v1089
      %1507 = vmatmul.f32.gmra.mxu0 %v239
      %v1508 = vpop.f32.mrf.mxu0
      %v1509 = vadd.f32 0.0, %v1508
      %1510 = vmatmul.f32.gmra.mxu0 %v242
      %v1511 = vpop.f32.mrf.mxu0
      %v1512 = vadd.f32 0.0, %v1511
      %1513 = vdwg.mxu0
      %1514 = vmatpush.msra.mxu0 0.0
      %1515 = vmatpush.msra.mxu0 0.0
      %1516 = vmatpush.msra.mxu0 0.0
      %1517 = vmatpush.msra.mxu0 0.0
      %1518 = vmatpush.msra.mxu0 0.0
      %1519 = vmatpush.msra.mxu0 0.0
      %1520 = vmatpush.msra.mxu0 0.0
      %1521 = vmatpush.msra.mxu0 0.0
      %1522 = vmatpush.msra.mxu0 0.0
      %1523 = vmatpush.msra.mxu0 0.0
      %1524 = vmatpush.msra.mxu0 0.0
      %1525 = vmatpush.msra.mxu0 0.0
      %1526 = vmatpush.msra.mxu0 0.0
      %1527 = vmatpush.msra.mxu0 0.0
      %1528 = vmatpush.msra.mxu0 %v1179
      %1529 = vmatpush.msra.mxu0 %v1090
      %1530 = vmatmul.f32.gmra.mxu0 %v239
      %v1531 = vpop.f32.mrf.mxu0
      %v1532 = vadd.f32 0.0, %v1531
      %1533 = vmatmul.f32.gmra.mxu0 %v242
      %v1534 = vpop.f32.mrf.mxu0
      %v1535 = vadd.f32 0.0, %v1534
      %1536 = vdwg.mxu0
      %1537 = vmatpush.msra.mxu0 0.0
      %1538 = vmatpush.msra.mxu0 0.0
      %1539 = vmatpush.msra.mxu0 0.0
      %1540 = vmatpush.msra.mxu0 0.0
      %1541 = vmatpush.msra.mxu0 0.0
      %1542 = vmatpush.msra.mxu0 0.0
      %1543 = vmatpush.msra.mxu0 0.0
      %1544 = vmatpush.msra.mxu0 0.0
      %1545 = vmatpush.msra.mxu0 0.0
      %1546 = vmatpush.msra.mxu0 0.0
      %1547 = vmatpush.msra.mxu0 0.0
      %1548 = vmatpush.msra.mxu0 0.0
      %1549 = vmatpush.msra.mxu0 0.0
      %1550 = vmatpush.msra.mxu0 0.0
      %1551 = vmatpush.msra.mxu0 %v1182
      %1552 = vmatpush.msra.mxu0 %v1091
      %1553 = vmatmul.f32.gmra.mxu0 %v239
      %v1554 = vpop.f32.mrf.mxu0
      %v1555 = vadd.f32 0.0, %v1554
      %1556 = vmatmul.f32.gmra.mxu0 %v242
      %v1557 = vpop.f32.mrf.mxu0
      %v1558 = vadd.f32 0.0, %v1557
      %1559 = vdwg.mxu0
      %1560 = vmatpush.msra.mxu0 0.0
      %1561 = vmatpush.msra.mxu0 0.0
      %1562 = vmatpush.msra.mxu0 0.0
      %1563 = vmatpush.msra.mxu0 0.0
      %1564 = vmatpush.msra.mxu0 0.0
      %1565 = vmatpush.msra.mxu0 0.0
      %1566 = vmatpush.msra.mxu0 0.0
      %1567 = vmatpush.msra.mxu0 0.0
      %1568 = vmatpush.msra.mxu0 0.0
      %1569 = vmatpush.msra.mxu0 0.0
      %1570 = vmatpush.msra.mxu0 0.0
      %1571 = vmatpush.msra.mxu0 0.0
      %1572 = vmatpush.msra.mxu0 0.0
      %1573 = vmatpush.msra.mxu0 0.0
      %1574 = vmatpush.msra.mxu0 %v1185
      %1575 = vmatpush.msra.mxu0 %v1092
      %1576 = vmatmul.f32.gmra.mxu0 %v239
      %v1577 = vpop.f32.mrf.mxu0
      %v1578 = vadd.f32 0.0, %v1577
      %1579 = vmatmul.f32.gmra.mxu0 %v242
      %v1580 = vpop.f32.mrf.mxu0
      %v1581 = vadd.f32 0.0, %v1580
      %1582 = vdwg.mxu0
      %1583 = vmatpush.msra.mxu0 0.0
      %1584 = vmatpush.msra.mxu0 0.0
      %1585 = vmatpush.msra.mxu0 0.0
      %1586 = vmatpush.msra.mxu0 0.0
      %1587 = vmatpush.msra.mxu0 0.0
      %1588 = vmatpush.msra.mxu0 0.0
      %1589 = vmatpush.msra.mxu0 0.0
      %1590 = vmatpush.msra.mxu0 0.0
      %1591 = vmatpush.msra.mxu0 0.0
      %1592 = vmatpush.msra.mxu0 0.0
      %1593 = vmatpush.msra.mxu0 0.0
      %1594 = vmatpush.msra.mxu0 0.0
      %1595 = vmatpush.msra.mxu0 0.0
      %1596 = vmatpush.msra.mxu0 0.0
      %1597 = vmatpush.msra.mxu0 %v1188
      %1598 = vmatpush.msra.mxu0 %v1093
      %1599 = vmatmul.f32.gmra.mxu0 %v239
      %v1600 = vpop.f32.mrf.mxu0
      %v1601 = vadd.f32 0.0, %v1600
      %1602 = vmatmul.f32.gmra.mxu0 %v242
      %v1603 = vpop.f32.mrf.mxu0
      %v1604 = vadd.f32 0.0, %v1603
      %1605 = vdwg.mxu0
      %1606 = vmatpush.msra.mxu0 0.0
      %1607 = vmatpush.msra.mxu0 0.0
      %1608 = vmatpush.msra.mxu0 0.0
      %1609 = vmatpush.msra.mxu0 0.0
      %1610 = vmatpush.msra.mxu0 0.0
      %1611 = vmatpush.msra.mxu0 0.0
      %1612 = vmatpush.msra.mxu0 0.0
      %1613 = vmatpush.msra.mxu0 0.0
      %1614 = vmatpush.msra.mxu0 0.0
      %1615 = vmatpush.msra.mxu0 0.0
      %1616 = vmatpush.msra.mxu0 0.0
      %1617 = vmatpush.msra.mxu0 0.0
      %1618 = vmatpush.msra.mxu0 0.0
      %1619 = vmatpush.msra.mxu0 0.0
      %1620 = vmatpush.msra.mxu0 %v1191
      %1621 = vmatpush.msra.mxu0 %v1094
      %1622 = vmatmul.f32.gmra.mxu0 %v239
      %v1623 = vpop.f32.mrf.mxu0
      %v1624 = vadd.f32 0.0, %v1623
      %1625 = vmatmul.f32.gmra.mxu0 %v242
      %v1626 = vpop.f32.mrf.mxu0
      %v1627 = vadd.f32 0.0, %v1626
      %1628 = vdwg.mxu0
      %1629 = vmatpush.msra.mxu0 0.0
      %1630 = vmatpush.msra.mxu0 0.0
      %1631 = vmatpush.msra.mxu0 0.0
      %1632 = vmatpush.msra.mxu0 0.0
      %1633 = vmatpush.msra.mxu0 0.0
      %1634 = vmatpush.msra.mxu0 0.0
      %1635 = vmatpush.msra.mxu0 0.0
      %1636 = vmatpush.msra.mxu0 0.0
      %1637 = vmatpush.msra.mxu0 0.0
      %1638 = vmatpush.msra.mxu0 0.0
      %1639 = vmatpush.msra.mxu0 0.0
      %1640 = vmatpush.msra.mxu0 0.0
      %1641 = vmatpush.msra.mxu0 0.0
      %1642 = vmatpush.msra.mxu0 0.0
      %1643 = vmatpush.msra.mxu0 %v1194
      %1644 = vmatpush.msra.mxu0 %v1095
      %1645 = vmatmul.f32.gmra.mxu0 %v239
      %v1646 = vpop.f32.mrf.mxu0
      %v1647 = vadd.f32 0.0, %v1646
      %1648 = vmatmul.f32.gmra.mxu0 %v242
      %v1649 = vpop.f32.mrf.mxu0
      %v1650 = vadd.f32 0.0, %v1649
      %1651 = vdwg.mxu0
      %1652 = vmatpush.msra.mxu0 0.0
      %1653 = vmatpush.msra.mxu0 0.0
      %1654 = vmatpush.msra.mxu0 0.0
      %1655 = vmatpush.msra.mxu0 0.0
      %1656 = vmatpush.msra.mxu0 0.0
      %1657 = vmatpush.msra.mxu0 0.0
      %1658 = vmatpush.msra.mxu0 0.0
      %1659 = vmatpush.msra.mxu0 0.0
      %1660 = vmatpush.msra.mxu0 0.0
      %1661 = vmatpush.msra.mxu0 0.0
      %1662 = vmatpush.msra.mxu0 0.0
      %1663 = vmatpush.msra.mxu0 0.0
      %1664 = vmatpush.msra.mxu0 0.0
      %1665 = vmatpush.msra.mxu0 0.0
      %1666 = vmatpush.msra.mxu0 %v1197
      %1667 = vmatpush.msra.mxu0 %v1096
      %1668 = vmatmul.f32.gmra.mxu0 %v239
      %v1669 = vpop.f32.mrf.mxu0
      %v1670 = vadd.f32 0.0, %v1669
      %1671 = vmatmul.f32.gmra.mxu0 %v242
      %v1672 = vpop.f32.mrf.mxu0
      %v1673 = vadd.f32 0.0, %v1672
      %1674 = vdwg.mxu0
      %1675 = vmatpush.msra.mxu0 0.0
      %1676 = vmatpush.msra.mxu0 0.0
      %1677 = vmatpush.msra.mxu0 0.0
      %1678 = vmatpush.msra.mxu0 0.0
      %1679 = vmatpush.msra.mxu0 0.0
      %1680 = vmatpush.msra.mxu0 0.0
      %1681 = vmatpush.msra.mxu0 0.0
      %1682 = vmatpush.msra.mxu0 0.0
      %1683 = vmatpush.msra.mxu0 0.0
      %1684 = vmatpush.msra.mxu0 0.0
      %1685 = vmatpush.msra.mxu0 0.0
      %1686 = vmatpush.msra.mxu0 0.0
      %1687 = vmatpush.msra.mxu0 0.0
      %1688 = vmatpush.msra.mxu0 0.0
      %1689 = vmatpush.msra.mxu0 %v1200
      %1690 = vmatpush.msra.mxu0 %v1097
      %1691 = vmatmul.f32.gmra.mxu0 %v239
      %v1692 = vpop.f32.mrf.mxu0
      %v1693 = vadd.f32 0.0, %v1692
      %1694 = vmatmul.f32.gmra.mxu0 %v242
      %v1695 = vpop.f32.mrf.mxu0
      %v1696 = vadd.f32 0.0, %v1695
      %1697 = vdwg.mxu0
      %1698 = vmatpush.msra.mxu0 0.0
      %1699 = vmatpush.msra.mxu0 0.0
      %1700 = vmatpush.msra.mxu0 0.0
      %1701 = vmatpush.msra.mxu0 0.0
      %1702 = vmatpush.msra.mxu0 0.0
      %1703 = vmatpush.msra.mxu0 0.0
      %1704 = vmatpush.msra.mxu0 0.0
      %1705 = vmatpush.msra.mxu0 0.0
      %1706 = vmatpush.msra.mxu0 0.0
      %1707 = vmatpush.msra.mxu0 0.0
      %1708 = vmatpush.msra.mxu0 0.0
      %1709 = vmatpush.msra.mxu0 0.0
      %1710 = vmatpush.msra.mxu0 0.0
      %1711 = vmatpush.msra.mxu0 0.0
      %1712 = vmatpush.msra.mxu0 %v1203
      %1713 = vmatpush.msra.mxu0 %v1098
      %1714 = vmatmul.f32.gmra.mxu0 %v239
      %v1715 = vpop.f32.mrf.mxu0
      %v1716 = vadd.f32 0.0, %v1715
      %1717 = vmatmul.f32.gmra.mxu0 %v242
      %v1718 = vpop.f32.mrf.mxu0
      %v1719 = vadd.f32 0.0, %v1718
      %1720 = vdwg.mxu0
      %1721 = vmatpush.msra.mxu0 0.0
      %1722 = vmatpush.msra.mxu0 0.0
      %1723 = vmatpush.msra.mxu0 0.0
      %1724 = vmatpush.msra.mxu0 0.0
      %1725 = vmatpush.msra.mxu0 0.0
      %1726 = vmatpush.msra.mxu0 0.0
      %1727 = vmatpush.msra.mxu0 0.0
      %1728 = vmatpush.msra.mxu0 0.0
      %1729 = vmatpush.msra.mxu0 0.0
      %1730 = vmatpush.msra.mxu0 0.0
      %1731 = vmatpush.msra.mxu0 0.0
      %1732 = vmatpush.msra.mxu0 0.0
      %1733 = vmatpush.msra.mxu0 0.0
      %1734 = vmatpush.msra.mxu0 0.0
      %1735 = vmatpush.msra.mxu0 %v1206
      %1736 = vmatpush.msra.mxu0 %v1099
      %1737 = vmatmul.f32.gmra.mxu0 %v239
      %v1738 = vpop.f32.mrf.mxu0
      %v1739 = vadd.f32 0.0, %v1738
      %1740 = vmatmul.f32.gmra.mxu0 %v242
      %v1741 = vpop.f32.mrf.mxu0
      %v1742 = vadd.f32 0.0, %v1741
      %1743 = vdwg.mxu0
      %1744 = vmatpush.msra.mxu0 0.0
      %1745 = vmatpush.msra.mxu0 0.0
      %1746 = vmatpush.msra.mxu0 0.0
      %1747 = vmatpush.msra.mxu0 0.0
      %1748 = vmatpush.msra.mxu0 0.0
      %1749 = vmatpush.msra.mxu0 0.0
      %1750 = vmatpush.msra.mxu0 0.0
      %1751 = vmatpush.msra.mxu0 0.0
      %1752 = vmatpush.msra.mxu0 0.0
      %1753 = vmatpush.msra.mxu0 0.0
      %1754 = vmatpush.msra.mxu0 0.0
      %1755 = vmatpush.msra.mxu0 0.0
      %1756 = vmatpush.msra.mxu0 0.0
      %1757 = vmatpush.msra.mxu0 0.0
      %1758 = vmatpush.msra.mxu0 %v1209
      %1759 = vmatpush.msra.mxu0 %v1100
      %1760 = vmatmul.f32.gmra.mxu0 %v239
      %v1761 = vpop.f32.mrf.mxu0
      %v1762 = vadd.f32 0.0, %v1761
      %1763 = vmatmul.f32.gmra.mxu0 %v242
      %v1764 = vpop.f32.mrf.mxu0
      %v1765 = vadd.f32 0.0, %v1764
      %1766 = vdwg.mxu0
      %1767 = vmatpush.msra.mxu0 0.0
      %1768 = vmatpush.msra.mxu0 0.0
      %1769 = vmatpush.msra.mxu0 0.0
      %1770 = vmatpush.msra.mxu0 0.0
      %1771 = vmatpush.msra.mxu0 0.0
      %1772 = vmatpush.msra.mxu0 0.0
      %1773 = vmatpush.msra.mxu0 0.0
      %1774 = vmatpush.msra.mxu0 0.0
      %1775 = vmatpush.msra.mxu0 0.0
      %1776 = vmatpush.msra.mxu0 0.0
      %1777 = vmatpush.msra.mxu0 0.0
      %1778 = vmatpush.msra.mxu0 0.0
      %1779 = vmatpush.msra.mxu0 0.0
      %1780 = vmatpush.msra.mxu0 0.0
      %1781 = vmatpush.msra.mxu0 %v1212
      %1782 = vmatpush.msra.mxu0 %v1101
      %1783 = vmatmul.f32.gmra.mxu0 %v239
      %v1784 = vpop.f32.mrf.mxu0
      %v1785 = vadd.f32 0.0, %v1784
      %1786 = vmatmul.f32.gmra.mxu0 %v242
      %v1787 = vpop.f32.mrf.mxu0
      %v1788 = vadd.f32 0.0, %v1787
      %1789 = vdwg.mxu0
      %1790 = vmatpush.msra.mxu0 0.0
      %1791 = vmatpush.msra.mxu0 0.0
      %1792 = vmatpush.msra.mxu0 0.0
      %1793 = vmatpush.msra.mxu0 0.0
      %1794 = vmatpush.msra.mxu0 0.0
      %1795 = vmatpush.msra.mxu0 0.0
      %1796 = vmatpush.msra.mxu0 0.0
      %1797 = vmatpush.msra.mxu0 0.0
      %1798 = vmatpush.msra.mxu0 0.0
      %1799 = vmatpush.msra.mxu0 0.0
      %1800 = vmatpush.msra.mxu0 0.0
      %1801 = vmatpush.msra.mxu0 0.0
      %1802 = vmatpush.msra.mxu0 0.0
      %1803 = vmatpush.msra.mxu0 0.0
      %1804 = vmatpush.msra.mxu0 %v1215
      %1805 = vmatpush.msra.mxu0 %v1102
      %1806 = vmatmul.f32.gmra.mxu0 %v239
      %v1807 = vpop.f32.mrf.mxu0
      %v1808 = vadd.f32 0.0, %v1807
      %1809 = vmatmul.f32.gmra.mxu0 %v242
      %v1810 = vpop.f32.mrf.mxu0
      %v1811 = vadd.f32 0.0, %v1810
      %1812 = vdwg.mxu0
      %1813 = vmatpush.msra.mxu0 0.0
      %1814 = vmatpush.msra.mxu0 0.0
      %1815 = vmatpush.msra.mxu0 0.0
      %1816 = vmatpush.msra.mxu0 0.0
      %1817 = vmatpush.msra.mxu0 0.0
      %1818 = vmatpush.msra.mxu0 0.0
      %1819 = vmatpush.msra.mxu0 0.0
      %1820 = vmatpush.msra.mxu0 0.0
      %1821 = vmatpush.msra.mxu0 0.0
      %1822 = vmatpush.msra.mxu0 0.0
      %1823 = vmatpush.msra.mxu0 0.0
      %1824 = vmatpush.msra.mxu0 0.0
      %1825 = vmatpush.msra.mxu0 0.0
      %1826 = vmatpush.msra.mxu0 0.0
      %1827 = vmatpush.msra.mxu0 %v1218
      %1828 = vmatpush.msra.mxu0 %v1103
      %1829 = vmatmul.f32.gmra.mxu0 %v239
      %v1830 = vpop.f32.mrf.mxu0
      %v1831 = vadd.f32 0.0, %v1830
      %1832 = vmatmul.f32.gmra.mxu0 %v242
      %v1833 = vpop.f32.mrf.mxu0
      %v1834 = vadd.f32 0.0, %v1833
      %1835 = vdwg.mxu0
      %1836 = vmatpush.msra.mxu0 0.0
      %1837 = vmatpush.msra.mxu0 0.0
      %1838 = vmatpush.msra.mxu0 0.0
      %1839 = vmatpush.msra.mxu0 0.0
      %1840 = vmatpush.msra.mxu0 0.0
      %1841 = vmatpush.msra.mxu0 0.0
      %1842 = vmatpush.msra.mxu0 0.0
      %1843 = vmatpush.msra.mxu0 0.0
      %1844 = vmatpush.msra.mxu0 0.0
      %1845 = vmatpush.msra.mxu0 0.0
      %1846 = vmatpush.msra.mxu0 0.0
      %1847 = vmatpush.msra.mxu0 0.0
      %1848 = vmatpush.msra.mxu0 0.0
      %1849 = vmatpush.msra.mxu0 0.0
      %1850 = vmatpush.msra.mxu0 %v1221
      %1851 = vmatpush.msra.mxu0 %v1104
      %1852 = vmatmul.f32.gmra.mxu0 %v239
      %v1853 = vpop.f32.mrf.mxu0
      %v1854 = vadd.f32 0.0, %v1853
      %1855 = vmatmul.f32.gmra.mxu0 %v242
      %v1856 = vpop.f32.mrf.mxu0
      %v1857 = vadd.f32 0.0, %v1856
      %1858 = vdwg.mxu0
      %1859 = vmatpush.msra.mxu0 0.0
      %1860 = vmatpush.msra.mxu0 0.0
      %1861 = vmatpush.msra.mxu0 0.0
      %1862 = vmatpush.msra.mxu0 0.0
      %1863 = vmatpush.msra.mxu0 0.0
      %1864 = vmatpush.msra.mxu0 0.0
      %1865 = vmatpush.msra.mxu0 0.0
      %1866 = vmatpush.msra.mxu0 0.0
      %1867 = vmatpush.msra.mxu0 0.0
      %1868 = vmatpush.msra.mxu0 0.0
      %1869 = vmatpush.msra.mxu0 0.0
      %1870 = vmatpush.msra.mxu0 0.0
      %1871 = vmatpush.msra.mxu0 0.0
      %1872 = vmatpush.msra.mxu0 0.0
      %1873 = vmatpush.msra.mxu0 %v1224
      %1874 = vmatpush.msra.mxu0 %v1105
      %1875 = vmatmul.f32.gmra.mxu0 %v239
      %v1876 = vpop.f32.mrf.mxu0
      %v1877 = vadd.f32 0.0, %v1876
      %1878 = vmatmul.f32.gmra.mxu0 %v242
      %v1879 = vpop.f32.mrf.mxu0
      %v1880 = vadd.f32 0.0, %v1879
      %1881 = vdwg.mxu0
      %1882 = vmatpush.msra.mxu0 0.0
      %1883 = vmatpush.msra.mxu0 0.0
      %1884 = vmatpush.msra.mxu0 0.0
      %1885 = vmatpush.msra.mxu0 0.0
      %1886 = vmatpush.msra.mxu0 0.0
      %1887 = vmatpush.msra.mxu0 0.0
      %1888 = vmatpush.msra.mxu0 0.0
      %1889 = vmatpush.msra.mxu0 0.0
      %1890 = vmatpush.msra.mxu0 0.0
      %1891 = vmatpush.msra.mxu0 0.0
      %1892 = vmatpush.msra.mxu0 0.0
      %1893 = vmatpush.msra.mxu0 0.0
      %1894 = vmatpush.msra.mxu0 0.0
      %1895 = vmatpush.msra.mxu0 0.0
      %1896 = vmatpush.msra.mxu0 %v1227
      %1897 = vmatpush.msra.mxu0 %v1106
      %1898 = vmatmul.f32.gmra.mxu0 %v239
      %v1899 = vpop.f32.mrf.mxu0
      %v1900 = vadd.f32 0.0, %v1899
      %1901 = vmatmul.f32.gmra.mxu0 %v242
      %v1902 = vpop.f32.mrf.mxu0
      %v1903 = vadd.f32 0.0, %v1902
      %1904 = vdwg.mxu0
      %1905 = vmatpush.msra.mxu0 0.0
      %1906 = vmatpush.msra.mxu0 0.0
      %1907 = vmatpush.msra.mxu0 0.0
      %1908 = vmatpush.msra.mxu0 0.0
      %1909 = vmatpush.msra.mxu0 0.0
      %1910 = vmatpush.msra.mxu0 0.0
      %1911 = vmatpush.msra.mxu0 0.0
      %1912 = vmatpush.msra.mxu0 0.0
      %1913 = vmatpush.msra.mxu0 0.0
      %1914 = vmatpush.msra.mxu0 0.0
      %1915 = vmatpush.msra.mxu0 0.0
      %1916 = vmatpush.msra.mxu0 0.0
      %1917 = vmatpush.msra.mxu0 0.0
      %1918 = vmatpush.msra.mxu0 0.0
      %1919 = vmatpush.msra.mxu0 %v1230
      %1920 = vmatpush.msra.mxu0 %v1107
      %1921 = vmatmul.f32.gmra.mxu0 %v239
      %v1922 = vpop.f32.mrf.mxu0
      %v1923 = vadd.f32 0.0, %v1922
      %1924 = vmatmul.f32.gmra.mxu0 %v242
      %v1925 = vpop.f32.mrf.mxu0
      %v1926 = vadd.f32 0.0, %v1925
      %1927 = vdwg.mxu0
      %1928 = vmatpush.msra.mxu0 0.0
      %1929 = vmatpush.msra.mxu0 0.0
      %1930 = vmatpush.msra.mxu0 0.0
      %1931 = vmatpush.msra.mxu0 0.0
      %1932 = vmatpush.msra.mxu0 0.0
      %1933 = vmatpush.msra.mxu0 0.0
      %1934 = vmatpush.msra.mxu0 0.0
      %1935 = vmatpush.msra.mxu0 0.0
      %1936 = vmatpush.msra.mxu0 0.0
      %1937 = vmatpush.msra.mxu0 0.0
      %1938 = vmatpush.msra.mxu0 0.0
      %1939 = vmatpush.msra.mxu0 0.0
      %1940 = vmatpush.msra.mxu0 0.0
      %1941 = vmatpush.msra.mxu0 0.0
      %1942 = vmatpush.msra.mxu0 %v1233
      %1943 = vmatpush.msra.mxu0 %v1108
      %1944 = vmatmul.f32.gmra.mxu0 %v239
      %v1945 = vpop.f32.mrf.mxu0
      %v1946 = vadd.f32 0.0, %v1945
      %1947 = vmatmul.f32.gmra.mxu0 %v242
      %v1948 = vpop.f32.mrf.mxu0
      %v1949 = vadd.f32 0.0, %v1948
      %1950 = vdwg.mxu0
      %1951 = vmatpush.msra.mxu0 0.0
      %1952 = vmatpush.msra.mxu0 0.0
      %1953 = vmatpush.msra.mxu0 0.0
      %1954 = vmatpush.msra.mxu0 0.0
      %1955 = vmatpush.msra.mxu0 0.0
      %1956 = vmatpush.msra.mxu0 0.0
      %1957 = vmatpush.msra.mxu0 0.0
      %1958 = vmatpush.msra.mxu0 0.0
      %1959 = vmatpush.msra.mxu0 0.0
      %1960 = vmatpush.msra.mxu0 0.0
      %1961 = vmatpush.msra.mxu0 0.0
      %1962 = vmatpush.msra.mxu0 0.0
      %1963 = vmatpush.msra.mxu0 0.0
      %1964 = vmatpush.msra.mxu0 0.0
      %1965 = vmatpush.msra.mxu0 %v1236
      %1966 = vmatpush.msra.mxu0 %v1109
      %1967 = vmatmul.f32.gmra.mxu0 %v239
      %v1968 = vpop.f32.mrf.mxu0
      %v1969 = vadd.f32 0.0, %v1968
      %1970 = vmatmul.f32.gmra.mxu0 %v242
      %v1971 = vpop.f32.mrf.mxu0
      %v1972 = vadd.f32 0.0, %v1971
      %1973 = vdwg.mxu0
      %v1974 = vmax.f32 %v359, %v1256
      %v1975 = vmax.f32 %v382, %v1279
      %v1976 = vmax.f32 %v405, %v1302
      %v1977 = vmax.f32 %v428, %v1325
      %v1978 = vmax.f32 %v451, %v1348
      %v1979 = vmax.f32 %v474, %v1371
      %v1980 = vmax.f32 %v497, %v1394
      %v1981 = vmax.f32 %v520, %v1417
      %v1982 = vmax.f32 %v543, %v1440
      %v1983 = vmax.f32 %v566, %v1463
      %v1984 = vmax.f32 %v589, %v1486
      %v1985 = vmax.f32 %v612, %v1509
      %v1986 = vmax.f32 %v635, %v1532
      %v1987 = vmax.f32 %v658, %v1555
      %v1988 = vmax.f32 %v681, %v1578
      %v1989 = vmax.f32 %v704, %v1601
      %v1990 = vmax.f32 %v727, %v1624
      %v1991 = vmax.f32 %v750, %v1647
      %v1992 = vmax.f32 %v773, %v1670
      %v1993 = vmax.f32 %v796, %v1693
      %v1994 = vmax.f32 %v819, %v1716
      %v1995 = vmax.f32 %v842, %v1739
      %v1996 = vmax.f32 %v865, %v1762
      %v1997 = vmax.f32 %v888, %v1785
      %v1998 = vmax.f32 %v911, %v1808
      %v1999 = vmax.f32 %v934, %v1831
      %v2000 = vmax.f32 %v957, %v1854
      %v2001 = vmax.f32 %v980, %v1877
      %v2002 = vmax.f32 %v1003, %v1900
      %v2003 = vmax.f32 %v1026, %v1923
      %v2004 = vmax.f32 %v1049, %v1946
      %v2005 = vmax.f32 %v1072, %v1969
      %v2006 = vmax.f32 %v362, %v1259
      %v2007 = vmax.f32 %v385, %v1282
      %v2008 = vmax.f32 %v408, %v1305
      %v2009 = vmax.f32 %v431, %v1328
      %v2010 = vmax.f32 %v454, %v1351
      %v2011 = vmax.f32 %v477, %v1374
      %v2012 = vmax.f32 %v500, %v1397
      %v2013 = vmax.f32 %v523, %v1420
      %v2014 = vmax.f32 %v546, %v1443
      %v2015 = vmax.f32 %v569, %v1466
      %v2016 = vmax.f32 %v592, %v1489
      %v2017 = vmax.f32 %v615, %v1512
      %v2018 = vmax.f32 %v638, %v1535
      %v2019 = vmax.f32 %v661, %v1558
      %v2020 = vmax.f32 %v684, %v1581
      %v2021 = vmax.f32 %v707, %v1604
      %v2022 = vmax.f32 %v730, %v1627
      %v2023 = vmax.f32 %v753, %v1650
      %v2024 = vmax.f32 %v776, %v1673
      %v2025 = vmax.f32 %v799, %v1696
      %v2026 = vmax.f32 %v822, %v1719
      %v2027 = vmax.f32 %v845, %v1742
      %v2028 = vmax.f32 %v868, %v1765
      %v2029 = vmax.f32 %v891, %v1788
      %v2030 = vmax.f32 %v914, %v1811
      %v2031 = vmax.f32 %v937, %v1834
      %v2032 = vmax.f32 %v960, %v1857
      %v2033 = vmax.f32 %v983, %v1880
      %v2034 = vmax.f32 %v1006, %v1903
      %v2035 = vmax.f32 %v1029, %v1926
      %v2036 = vmax.f32 %v1052, %v1949
      %v2037 = vmax.f32 %v1075, %v1972
      %s2038 = scalar_lea.vmem %s165, 1024
      %v2039 = vld [vmem:[%s2038] sm:$0xff]
      %v2040 = vld [vmem:[%s2038 + $0x8] sm:$0xff]
      %v2041 = vld [vmem:[%s2038 + $0x10] sm:$0xff]
      %v2042 = vld [vmem:[%s2038 + $0x18] sm:$0xff]
      %v2043 = vld [vmem:[%s2038 + $0x20] sm:$0xff]
      %v2044 = vld [vmem:[%s2038 + $0x28] sm:$0xff]
      %v2045 = vld [vmem:[%s2038 + $0x30] sm:$0xff]
      %v2046 = vld [vmem:[%s2038 + $0x38] sm:$0xff]
      %v2047 = vld [vmem:[%s2038 + $0x40] sm:$0xff]
      %v2048 = vld [vmem:[%s2038 + $0x48] sm:$0xff]
      %v2049 = vld [vmem:[%s2038 + $0x50] sm:$0xff]
      %v2050 = vld [vmem:[%s2038 + $0x58] sm:$0xff]
      %v2051 = vld [vmem:[%s2038 + $0x60] sm:$0xff]
      %v2052 = vld [vmem:[%s2038 + $0x68] sm:$0xff]
      %v2053 = vld [vmem:[%s2038 + $0x70] sm:$0xff]
      %v2054 = vld [vmem:[%s2038 + $0x78] sm:$0xff]
      %v2055 = vld [vmem:[%s2038 + $0x80] sm:$0xff]
      %v2056 = vld [vmem:[%s2038 + $0x88] sm:$0xff]
      %v2057 = vld [vmem:[%s2038 + $0x90] sm:$0xff]
      %v2058 = vld [vmem:[%s2038 + $0x98] sm:$0xff]
      %v2059 = vld [vmem:[%s2038 + $0xa0] sm:$0xff]
      %v2060 = vld [vmem:[%s2038 + $0xa8] sm:$0xff]
      %v2061 = vld [vmem:[%s2038 + $0xb0] sm:$0xff]
      %v2062 = vld [vmem:[%s2038 + $0xb8] sm:$0xff]
      %v2063 = vld [vmem:[%s2038 + $0xc0] sm:$0xff]
      %v2064 = vld [vmem:[%s2038 + $0xc8] sm:$0xff]
      %v2065 = vld [vmem:[%s2038 + $0xd0] sm:$0xff]
      %v2066 = vld [vmem:[%s2038 + $0xd8] sm:$0xff]
      %v2067 = vld [vmem:[%s2038 + $0xe0] sm:$0xff]
      %v2068 = vld [vmem:[%s2038 + $0xe8] sm:$0xff]
      %v2069 = vld [vmem:[%s2038 + $0xf0] sm:$0xff]
      %v2070 = vld [vmem:[%s2038 + $0xf8] sm:$0xff]
      %v2071 = vld [vmem:[%s2038 + $0x100] sm:$0x1]
      %v2072 = vld [vmem:[%s2038 + $0x108] sm:$0x1]
      %v2073 = vld [vmem:[%s2038 + $0x110] sm:$0x1]
      %v2074 = vld [vmem:[%s2038 + $0x118] sm:$0x1]
      %v2075 = vld [vmem:[%s2038 + $0x120] sm:$0x1]
      %v2076 = vld [vmem:[%s2038 + $0x128] sm:$0x1]
      %v2077 = vld [vmem:[%s2038 + $0x130] sm:$0x1]
      %v2078 = vld [vmem:[%s2038 + $0x138] sm:$0x1]
      %v2079 = vld [vmem:[%s2038 + $0x140] sm:$0x1]
      %v2080 = vld [vmem:[%s2038 + $0x148] sm:$0x1]
      %v2081 = vld [vmem:[%s2038 + $0x150] sm:$0x1]
      %v2082 = vld [vmem:[%s2038 + $0x158] sm:$0x1]
      %v2083 = vld [vmem:[%s2038 + $0x160] sm:$0x1]
      %v2084 = vld [vmem:[%s2038 + $0x168] sm:$0x1]
      %v2085 = vld [vmem:[%s2038 + $0x170] sm:$0x1]
      %v2086 = vld [vmem:[%s2038 + $0x178] sm:$0x1]
      %v2087 = vld [vmem:[%s2038 + $0x180] sm:$0x1]
      %v2088 = vld [vmem:[%s2038 + $0x188] sm:$0x1]
      %v2089 = vld [vmem:[%s2038 + $0x190] sm:$0x1]
      %v2090 = vld [vmem:[%s2038 + $0x198] sm:$0x1]
      %v2091 = vld [vmem:[%s2038 + $0x1a0] sm:$0x1]
      %v2092 = vld [vmem:[%s2038 + $0x1a8] sm:$0x1]
      %v2093 = vld [vmem:[%s2038 + $0x1b0] sm:$0x1]
      %v2094 = vld [vmem:[%s2038 + $0x1b8] sm:$0x1]
      %v2095 = vld [vmem:[%s2038 + $0x1c0] sm:$0x1]
      %v2096 = vld [vmem:[%s2038 + $0x1c8] sm:$0x1]
      %v2097 = vld [vmem:[%s2038 + $0x1d0] sm:$0x1]
      %v2098 = vld [vmem:[%s2038 + $0x1d8] sm:$0x1]
      %v2099 = vld [vmem:[%s2038 + $0x1e0] sm:$0x1]
      %v2100 = vld [vmem:[%s2038 + $0x1e8] sm:$0x1]
      %v2101 = vld [vmem:[%s2038 + $0x1f0] sm:$0x1]
      %v2102 = vld [vmem:[%s2038 + $0x1f8] sm:$0x1]
      %v2104 = vsel %vm244, %v2071, 0
      %v2107 = vsel %vm244, %v2072, 0
      %v2110 = vsel %vm244, %v2073, 0
      %v2113 = vsel %vm244, %v2074, 0
      %v2116 = vsel %vm244, %v2075, 0
      %v2119 = vsel %vm244, %v2076, 0
      %v2122 = vsel %vm244, %v2077, 0
      %v2125 = vsel %vm244, %v2078, 0
      %v2128 = vsel %vm244, %v2079, 0
      %v2131 = vsel %vm244, %v2080, 0
      %v2134 = vsel %vm244, %v2081, 0
      %v2137 = vsel %vm244, %v2082, 0
      %v2140 = vsel %vm244, %v2083, 0
      %v2143 = vsel %vm244, %v2084, 0
      %v2146 = vsel %vm244, %v2085, 0
      %v2149 = vsel %vm244, %v2086, 0
      %v2152 = vsel %vm244, %v2087, 0
      %v2155 = vsel %vm244, %v2088, 0
      %v2158 = vsel %vm244, %v2089, 0
      %v2161 = vsel %vm244, %v2090, 0
      %v2164 = vsel %vm244, %v2091, 0
      %v2167 = vsel %vm244, %v2092, 0
      %v2170 = vsel %vm244, %v2093, 0
      %v2173 = vsel %vm244, %v2094, 0
      %v2176 = vsel %vm244, %v2095, 0
      %v2179 = vsel %vm244, %v2096, 0
      %v2182 = vsel %vm244, %v2097, 0
      %v2185 = vsel %vm244, %v2098, 0
      %v2188 = vsel %vm244, %v2099, 0
      %v2191 = vsel %vm244, %v2100, 0
      %v2194 = vsel %vm244, %v2101, 0
      %v2197 = vsel %vm244, %v2102, 0
      %2199 = vmatpush.msra.mxu0 0.0
      %2200 = vmatpush.msra.mxu0 0.0
      %2201 = vmatpush.msra.mxu0 0.0
      %2202 = vmatpush.msra.mxu0 0.0
      %2203 = vmatpush.msra.mxu0 0.0
      %2204 = vmatpush.msra.mxu0 0.0
      %2205 = vmatpush.msra.mxu0 0.0
      %2206 = vmatpush.msra.mxu0 0.0
      %2207 = vmatpush.msra.mxu0 0.0
      %2208 = vmatpush.msra.mxu0 0.0
      %2209 = vmatpush.msra.mxu0 0.0
      %2210 = vmatpush.msra.mxu0 0.0
      %2211 = vmatpush.msra.mxu0 0.0
      %2212 = vmatpush.msra.mxu0 0.0
      %2213 = vmatpush.msra.mxu0 %v2104
      %2214 = vmatpush.msra.mxu0 %v2039
      %2215 = vmatmul.f32.gmra.mxu0 %v239
      %v2216 = vpop.f32.mrf.mxu0
      %v2217 = vadd.f32 0.0, %v2216
      %2218 = vmatmul.f32.gmra.mxu0 %v242
      %v2219 = vpop.f32.mrf.mxu0
      %v2220 = vadd.f32 0.0, %v2219
      %2221 = vdwg.mxu0
      %2222 = vmatpush.msra.mxu0 0.0
      %2223 = vmatpush.msra.mxu0 0.0
      %2224 = vmatpush.msra.mxu0 0.0
      %2225 = vmatpush.msra.mxu0 0.0
      %2226 = vmatpush.msra.mxu0 0.0
      %2227 = vmatpush.msra.mxu0 0.0
      %2228 = vmatpush.msra.mxu0 0.0
      %2229 = vmatpush.msra.mxu0 0.0
      %2230 = vmatpush.msra.mxu0 0.0
      %2231 = vmatpush.msra.mxu0 0.0
      %2232 = vmatpush.msra.mxu0 0.0
      %2233 = vmatpush.msra.mxu0 0.0
      %2234 = vmatpush.msra.mxu0 0.0
      %2235 = vmatpush.msra.mxu0 0.0
      %2236 = vmatpush.msra.mxu0 %v2107
      %2237 = vmatpush.msra.mxu0 %v2040
      %2238 = vmatmul.f32.gmra.mxu0 %v239
      %v2239 = vpop.f32.mrf.mxu0
      %v2240 = vadd.f32 0.0, %v2239
      %2241 = vmatmul.f32.gmra.mxu0 %v242
      %v2242 = vpop.f32.mrf.mxu0
      %v2243 = vadd.f32 0.0, %v2242
      %2244 = vdwg.mxu0
      %2245 = vmatpush.msra.mxu0 0.0
      %2246 = vmatpush.msra.mxu0 0.0
      %2247 = vmatpush.msra.mxu0 0.0
      %2248 = vmatpush.msra.mxu0 0.0
      %2249 = vmatpush.msra.mxu0 0.0
      %2250 = vmatpush.msra.mxu0 0.0
      %2251 = vmatpush.msra.mxu0 0.0
      %2252 = vmatpush.msra.mxu0 0.0
      %2253 = vmatpush.msra.mxu0 0.0
      %2254 = vmatpush.msra.mxu0 0.0
      %2255 = vmatpush.msra.mxu0 0.0
      %2256 = vmatpush.msra.mxu0 0.0
      %2257 = vmatpush.msra.mxu0 0.0
      %2258 = vmatpush.msra.mxu0 0.0
      %2259 = vmatpush.msra.mxu0 %v2110
      %2260 = vmatpush.msra.mxu0 %v2041
      %2261 = vmatmul.f32.gmra.mxu0 %v239
      %v2262 = vpop.f32.mrf.mxu0
      %v2263 = vadd.f32 0.0, %v2262
      %2264 = vmatmul.f32.gmra.mxu0 %v242
      %v2265 = vpop.f32.mrf.mxu0
      %v2266 = vadd.f32 0.0, %v2265
      %2267 = vdwg.mxu0
      %2268 = vmatpush.msra.mxu0 0.0
      %2269 = vmatpush.msra.mxu0 0.0
      %2270 = vmatpush.msra.mxu0 0.0
      %2271 = vmatpush.msra.mxu0 0.0
      %2272 = vmatpush.msra.mxu0 0.0
      %2273 = vmatpush.msra.mxu0 0.0
      %2274 = vmatpush.msra.mxu0 0.0
      %2275 = vmatpush.msra.mxu0 0.0
      %2276 = vmatpush.msra.mxu0 0.0
      %2277 = vmatpush.msra.mxu0 0.0
      %2278 = vmatpush.msra.mxu0 0.0
      %2279 = vmatpush.msra.mxu0 0.0
      %2280 = vmatpush.msra.mxu0 0.0
      %2281 = vmatpush.msra.mxu0 0.0
      %2282 = vmatpush.msra.mxu0 %v2113
      %2283 = vmatpush.msra.mxu0 %v2042
      %2284 = vmatmul.f32.gmra.mxu0 %v239
      %v2285 = vpop.f32.mrf.mxu0
      %v2286 = vadd.f32 0.0, %v2285
      %2287 = vmatmul.f32.gmra.mxu0 %v242
      %v2288 = vpop.f32.mrf.mxu0
      %v2289 = vadd.f32 0.0, %v2288
      %2290 = vdwg.mxu0
      %2291 = vmatpush.msra.mxu0 0.0
      %2292 = vmatpush.msra.mxu0 0.0
      %2293 = vmatpush.msra.mxu0 0.0
      %2294 = vmatpush.msra.mxu0 0.0
      %2295 = vmatpush.msra.mxu0 0.0
      %2296 = vmatpush.msra.mxu0 0.0
      %2297 = vmatpush.msra.mxu0 0.0
      %2298 = vmatpush.msra.mxu0 0.0
      %2299 = vmatpush.msra.mxu0 0.0
      %2300 = vmatpush.msra.mxu0 0.0
      %2301 = vmatpush.msra.mxu0 0.0
      %2302 = vmatpush.msra.mxu0 0.0
      %2303 = vmatpush.msra.mxu0 0.0
      %2304 = vmatpush.msra.mxu0 0.0
      %2305 = vmatpush.msra.mxu0 %v2116
      %2306 = vmatpush.msra.mxu0 %v2043
      %2307 = vmatmul.f32.gmra.mxu0 %v239
      %v2308 = vpop.f32.mrf.mxu0
      %v2309 = vadd.f32 0.0, %v2308
      %2310 = vmatmul.f32.gmra.mxu0 %v242
      %v2311 = vpop.f32.mrf.mxu0
      %v2312 = vadd.f32 0.0, %v2311
      %2313 = vdwg.mxu0
      %2314 = vmatpush.msra.mxu0 0.0
      %2315 = vmatpush.msra.mxu0 0.0
      %2316 = vmatpush.msra.mxu0 0.0
      %2317 = vmatpush.msra.mxu0 0.0
      %2318 = vmatpush.msra.mxu0 0.0
      %2319 = vmatpush.msra.mxu0 0.0
      %2320 = vmatpush.msra.mxu0 0.0
      %2321 = vmatpush.msra.mxu0 0.0
      %2322 = vmatpush.msra.mxu0 0.0
      %2323 = vmatpush.msra.mxu0 0.0
      %2324 = vmatpush.msra.mxu0 0.0
      %2325 = vmatpush.msra.mxu0 0.0
      %2326 = vmatpush.msra.mxu0 0.0
      %2327 = vmatpush.msra.mxu0 0.0
      %2328 = vmatpush.msra.mxu0 %v2119
      %2329 = vmatpush.msra.mxu0 %v2044
      %2330 = vmatmul.f32.gmra.mxu0 %v239
      %v2331 = vpop.f32.mrf.mxu0
      %v2332 = vadd.f32 0.0, %v2331
      %2333 = vmatmul.f32.gmra.mxu0 %v242
      %v2334 = vpop.f32.mrf.mxu0
      %v2335 = vadd.f32 0.0, %v2334
      %2336 = vdwg.mxu0
      %2337 = vmatpush.msra.mxu0 0.0
      %2338 = vmatpush.msra.mxu0 0.0
      %2339 = vmatpush.msra.mxu0 0.0
      %2340 = vmatpush.msra.mxu0 0.0
      %2341 = vmatpush.msra.mxu0 0.0
      %2342 = vmatpush.msra.mxu0 0.0
      %2343 = vmatpush.msra.mxu0 0.0
      %2344 = vmatpush.msra.mxu0 0.0
      %2345 = vmatpush.msra.mxu0 0.0
      %2346 = vmatpush.msra.mxu0 0.0
      %2347 = vmatpush.msra.mxu0 0.0
      %2348 = vmatpush.msra.mxu0 0.0
      %2349 = vmatpush.msra.mxu0 0.0
      %2350 = vmatpush.msra.mxu0 0.0
      %2351 = vmatpush.msra.mxu0 %v2122
      %2352 = vmatpush.msra.mxu0 %v2045
      %2353 = vmatmul.f32.gmra.mxu0 %v239
      %v2354 = vpop.f32.mrf.mxu0
      %v2355 = vadd.f32 0.0, %v2354
      %2356 = vmatmul.f32.gmra.mxu0 %v242
      %v2357 = vpop.f32.mrf.mxu0
      %v2358 = vadd.f32 0.0, %v2357
      %2359 = vdwg.mxu0
      %2360 = vmatpush.msra.mxu0 0.0
      %2361 = vmatpush.msra.mxu0 0.0
      %2362 = vmatpush.msra.mxu0 0.0
      %2363 = vmatpush.msra.mxu0 0.0
      %2364 = vmatpush.msra.mxu0 0.0
      %2365 = vmatpush.msra.mxu0 0.0
      %2366 = vmatpush.msra.mxu0 0.0
      %2367 = vmatpush.msra.mxu0 0.0
      %2368 = vmatpush.msra.mxu0 0.0
      %2369 = vmatpush.msra.mxu0 0.0
      %2370 = vmatpush.msra.mxu0 0.0
      %2371 = vmatpush.msra.mxu0 0.0
      %2372 = vmatpush.msra.mxu0 0.0
      %2373 = vmatpush.msra.mxu0 0.0
      %2374 = vmatpush.msra.mxu0 %v2125
      %2375 = vmatpush.msra.mxu0 %v2046
      %2376 = vmatmul.f32.gmra.mxu0 %v239
      %v2377 = vpop.f32.mrf.mxu0
      %v2378 = vadd.f32 0.0, %v2377
      %2379 = vmatmul.f32.gmra.mxu0 %v242
      %v2380 = vpop.f32.mrf.mxu0
      %v2381 = vadd.f32 0.0, %v2380
      %2382 = vdwg.mxu0
      %2383 = vmatpush.msra.mxu0 0.0
      %2384 = vmatpush.msra.mxu0 0.0
      %2385 = vmatpush.msra.mxu0 0.0
      %2386 = vmatpush.msra.mxu0 0.0
      %2387 = vmatpush.msra.mxu0 0.0
      %2388 = vmatpush.msra.mxu0 0.0
      %2389 = vmatpush.msra.mxu0 0.0
      %2390 = vmatpush.msra.mxu0 0.0
      %2391 = vmatpush.msra.mxu0 0.0
      %2392 = vmatpush.msra.mxu0 0.0
      %2393 = vmatpush.msra.mxu0 0.0
      %2394 = vmatpush.msra.mxu0 0.0
      %2395 = vmatpush.msra.mxu0 0.0
      %2396 = vmatpush.msra.mxu0 0.0
      %2397 = vmatpush.msra.mxu0 %v2128
      %2398 = vmatpush.msra.mxu0 %v2047
      %2399 = vmatmul.f32.gmra.mxu0 %v239
      %v2400 = vpop.f32.mrf.mxu0
      %v2401 = vadd.f32 0.0, %v2400
      %2402 = vmatmul.f32.gmra.mxu0 %v242
      %v2403 = vpop.f32.mrf.mxu0
      %v2404 = vadd.f32 0.0, %v2403
      %2405 = vdwg.mxu0
      %2406 = vmatpush.msra.mxu0 0.0
      %2407 = vmatpush.msra.mxu0 0.0
      %2408 = vmatpush.msra.mxu0 0.0
      %2409 = vmatpush.msra.mxu0 0.0
      %2410 = vmatpush.msra.mxu0 0.0
      %2411 = vmatpush.msra.mxu0 0.0
      %2412 = vmatpush.msra.mxu0 0.0
      %2413 = vmatpush.msra.mxu0 0.0
      %2414 = vmatpush.msra.mxu0 0.0
      %2415 = vmatpush.msra.mxu0 0.0
      %2416 = vmatpush.msra.mxu0 0.0
      %2417 = vmatpush.msra.mxu0 0.0
      %2418 = vmatpush.msra.mxu0 0.0
      %2419 = vmatpush.msra.mxu0 0.0
      %2420 = vmatpush.msra.mxu0 %v2131
      %2421 = vmatpush.msra.mxu0 %v2048
      %2422 = vmatmul.f32.gmra.mxu0 %v239
      %v2423 = vpop.f32.mrf.mxu0
      %v2424 = vadd.f32 0.0, %v2423
      %2425 = vmatmul.f32.gmra.mxu0 %v242
      %v2426 = vpop.f32.mrf.mxu0
      %v2427 = vadd.f32 0.0, %v2426
      %2428 = vdwg.mxu0
      %2429 = vmatpush.msra.mxu0 0.0
      %2430 = vmatpush.msra.mxu0 0.0
      %2431 = vmatpush.msra.mxu0 0.0
      %2432 = vmatpush.msra.mxu0 0.0
      %2433 = vmatpush.msra.mxu0 0.0
      %2434 = vmatpush.msra.mxu0 0.0
      %2435 = vmatpush.msra.mxu0 0.0
      %2436 = vmatpush.msra.mxu0 0.0
      %2437 = vmatpush.msra.mxu0 0.0
      %2438 = vmatpush.msra.mxu0 0.0
      %2439 = vmatpush.msra.mxu0 0.0
      %2440 = vmatpush.msra.mxu0 0.0
      %2441 = vmatpush.msra.mxu0 0.0
      %2442 = vmatpush.msra.mxu0 0.0
      %2443 = vmatpush.msra.mxu0 %v2134
      %2444 = vmatpush.msra.mxu0 %v2049
      %2445 = vmatmul.f32.gmra.mxu0 %v239
      %v2446 = vpop.f32.mrf.mxu0
      %v2447 = vadd.f32 0.0, %v2446
      %2448 = vmatmul.f32.gmra.mxu0 %v242
      %v2449 = vpop.f32.mrf.mxu0
      %v2450 = vadd.f32 0.0, %v2449
      %2451 = vdwg.mxu0
      %2452 = vmatpush.msra.mxu0 0.0
      %2453 = vmatpush.msra.mxu0 0.0
      %2454 = vmatpush.msra.mxu0 0.0
      %2455 = vmatpush.msra.mxu0 0.0
      %2456 = vmatpush.msra.mxu0 0.0
      %2457 = vmatpush.msra.mxu0 0.0
      %2458 = vmatpush.msra.mxu0 0.0
      %2459 = vmatpush.msra.mxu0 0.0
      %2460 = vmatpush.msra.mxu0 0.0
      %2461 = vmatpush.msra.mxu0 0.0
      %2462 = vmatpush.msra.mxu0 0.0
      %2463 = vmatpush.msra.mxu0 0.0
      %2464 = vmatpush.msra.mxu0 0.0
      %2465 = vmatpush.msra.mxu0 0.0
      %2466 = vmatpush.msra.mxu0 %v2137
      %2467 = vmatpush.msra.mxu0 %v2050
      %2468 = vmatmul.f32.gmra.mxu0 %v239
      %v2469 = vpop.f32.mrf.mxu0
      %v2470 = vadd.f32 0.0, %v2469
      %2471 = vmatmul.f32.gmra.mxu0 %v242
      %v2472 = vpop.f32.mrf.mxu0
      %v2473 = vadd.f32 0.0, %v2472
      %2474 = vdwg.mxu0
      %2475 = vmatpush.msra.mxu0 0.0
      %2476 = vmatpush.msra.mxu0 0.0
      %2477 = vmatpush.msra.mxu0 0.0
      %2478 = vmatpush.msra.mxu0 0.0
      %2479 = vmatpush.msra.mxu0 0.0
      %2480 = vmatpush.msra.mxu0 0.0
      %2481 = vmatpush.msra.mxu0 0.0
      %2482 = vmatpush.msra.mxu0 0.0
      %2483 = vmatpush.msra.mxu0 0.0
      %2484 = vmatpush.msra.mxu0 0.0
      %2485 = vmatpush.msra.mxu0 0.0
      %2486 = vmatpush.msra.mxu0 0.0
      %2487 = vmatpush.msra.mxu0 0.0
      %2488 = vmatpush.msra.mxu0 0.0
      %2489 = vmatpush.msra.mxu0 %v2140
      %2490 = vmatpush.msra.mxu0 %v2051
      %2491 = vmatmul.f32.gmra.mxu0 %v239
      %v2492 = vpop.f32.mrf.mxu0
      %v2493 = vadd.f32 0.0, %v2492
      %2494 = vmatmul.f32.gmra.mxu0 %v242
      %v2495 = vpop.f32.mrf.mxu0
      %v2496 = vadd.f32 0.0, %v2495
      %2497 = vdwg.mxu0
      %2498 = vmatpush.msra.mxu0 0.0
      %2499 = vmatpush.msra.mxu0 0.0
      %2500 = vmatpush.msra.mxu0 0.0
      %2501 = vmatpush.msra.mxu0 0.0
      %2502 = vmatpush.msra.mxu0 0.0
      %2503 = vmatpush.msra.mxu0 0.0
      %2504 = vmatpush.msra.mxu0 0.0
      %2505 = vmatpush.msra.mxu0 0.0
      %2506 = vmatpush.msra.mxu0 0.0
      %2507 = vmatpush.msra.mxu0 0.0
      %2508 = vmatpush.msra.mxu0 0.0
      %2509 = vmatpush.msra.mxu0 0.0
      %2510 = vmatpush.msra.mxu0 0.0
      %2511 = vmatpush.msra.mxu0 0.0
      %2512 = vmatpush.msra.mxu0 %v2143
      %2513 = vmatpush.msra.mxu0 %v2052
      %2514 = vmatmul.f32.gmra.mxu0 %v239
      %v2515 = vpop.f32.mrf.mxu0
      %v2516 = vadd.f32 0.0, %v2515
      %2517 = vmatmul.f32.gmra.mxu0 %v242
      %v2518 = vpop.f32.mrf.mxu0
      %v2519 = vadd.f32 0.0, %v2518
      %2520 = vdwg.mxu0
      %2521 = vmatpush.msra.mxu0 0.0
      %2522 = vmatpush.msra.mxu0 0.0
      %2523 = vmatpush.msra.mxu0 0.0
      %2524 = vmatpush.msra.mxu0 0.0
      %2525 = vmatpush.msra.mxu0 0.0
      %2526 = vmatpush.msra.mxu0 0.0
      %2527 = vmatpush.msra.mxu0 0.0
      %2528 = vmatpush.msra.mxu0 0.0
      %2529 = vmatpush.msra.mxu0 0.0
      %2530 = vmatpush.msra.mxu0 0.0
      %2531 = vmatpush.msra.mxu0 0.0
      %2532 = vmatpush.msra.mxu0 0.0
      %2533 = vmatpush.msra.mxu0 0.0
      %2534 = vmatpush.msra.mxu0 0.0
      %2535 = vmatpush.msra.mxu0 %v2146
      %2536 = vmatpush.msra.mxu0 %v2053
      %2537 = vmatmul.f32.gmra.mxu0 %v239
      %v2538 = vpop.f32.mrf.mxu0
      %v2539 = vadd.f32 0.0, %v2538
      %2540 = vmatmul.f32.gmra.mxu0 %v242
      %v2541 = vpop.f32.mrf.mxu0
      %v2542 = vadd.f32 0.0, %v2541
      %2543 = vdwg.mxu0
      %2544 = vmatpush.msra.mxu0 0.0
      %2545 = vmatpush.msra.mxu0 0.0
      %2546 = vmatpush.msra.mxu0 0.0
      %2547 = vmatpush.msra.mxu0 0.0
      %2548 = vmatpush.msra.mxu0 0.0
      %2549 = vmatpush.msra.mxu0 0.0
      %2550 = vmatpush.msra.mxu0 0.0
      %2551 = vmatpush.msra.mxu0 0.0
      %2552 = vmatpush.msra.mxu0 0.0
      %2553 = vmatpush.msra.mxu0 0.0
      %2554 = vmatpush.msra.mxu0 0.0
      %2555 = vmatpush.msra.mxu0 0.0
      %2556 = vmatpush.msra.mxu0 0.0
      %2557 = vmatpush.msra.mxu0 0.0
      %2558 = vmatpush.msra.mxu0 %v2149
      %2559 = vmatpush.msra.mxu0 %v2054
      %2560 = vmatmul.f32.gmra.mxu0 %v239
      %v2561 = vpop.f32.mrf.mxu0
      %v2562 = vadd.f32 0.0, %v2561
      %2563 = vmatmul.f32.gmra.mxu0 %v242
      %v2564 = vpop.f32.mrf.mxu0
      %v2565 = vadd.f32 0.0, %v2564
      %2566 = vdwg.mxu0
      %2567 = vmatpush.msra.mxu0 0.0
      %2568 = vmatpush.msra.mxu0 0.0
      %2569 = vmatpush.msra.mxu0 0.0
      %2570 = vmatpush.msra.mxu0 0.0
      %2571 = vmatpush.msra.mxu0 0.0
      %2572 = vmatpush.msra.mxu0 0.0
      %2573 = vmatpush.msra.mxu0 0.0
      %2574 = vmatpush.msra.mxu0 0.0
      %2575 = vmatpush.msra.mxu0 0.0
      %2576 = vmatpush.msra.mxu0 0.0
      %2577 = vmatpush.msra.mxu0 0.0
      %2578 = vmatpush.msra.mxu0 0.0
      %2579 = vmatpush.msra.mxu0 0.0
      %2580 = vmatpush.msra.mxu0 0.0
      %2581 = vmatpush.msra.mxu0 %v2152
      %2582 = vmatpush.msra.mxu0 %v2055
      %2583 = vmatmul.f32.gmra.mxu0 %v239
      %v2584 = vpop.f32.mrf.mxu0
      %v2585 = vadd.f32 0.0, %v2584
      %2586 = vmatmul.f32.gmra.mxu0 %v242
      %v2587 = vpop.f32.mrf.mxu0
      %v2588 = vadd.f32 0.0, %v2587
      %2589 = vdwg.mxu0
      %2590 = vmatpush.msra.mxu0 0.0
      %2591 = vmatpush.msra.mxu0 0.0
      %2592 = vmatpush.msra.mxu0 0.0
      %2593 = vmatpush.msra.mxu0 0.0
      %2594 = vmatpush.msra.mxu0 0.0
      %2595 = vmatpush.msra.mxu0 0.0
      %2596 = vmatpush.msra.mxu0 0.0
      %2597 = vmatpush.msra.mxu0 0.0
      %2598 = vmatpush.msra.mxu0 0.0
      %2599 = vmatpush.msra.mxu0 0.0
      %2600 = vmatpush.msra.mxu0 0.0
      %2601 = vmatpush.msra.mxu0 0.0
      %2602 = vmatpush.msra.mxu0 0.0
      %2603 = vmatpush.msra.mxu0 0.0
      %2604 = vmatpush.msra.mxu0 %v2155
      %2605 = vmatpush.msra.mxu0 %v2056
      %2606 = vmatmul.f32.gmra.mxu0 %v239
      %v2607 = vpop.f32.mrf.mxu0
      %v2608 = vadd.f32 0.0, %v2607
      %2609 = vmatmul.f32.gmra.mxu0 %v242
      %v2610 = vpop.f32.mrf.mxu0
      %v2611 = vadd.f32 0.0, %v2610
      %2612 = vdwg.mxu0
      %2613 = vmatpush.msra.mxu0 0.0
      %2614 = vmatpush.msra.mxu0 0.0
      %2615 = vmatpush.msra.mxu0 0.0
      %2616 = vmatpush.msra.mxu0 0.0
      %2617 = vmatpush.msra.mxu0 0.0
      %2618 = vmatpush.msra.mxu0 0.0
      %2619 = vmatpush.msra.mxu0 0.0
      %2620 = vmatpush.msra.mxu0 0.0
      %2621 = vmatpush.msra.mxu0 0.0
      %2622 = vmatpush.msra.mxu0 0.0
      %2623 = vmatpush.msra.mxu0 0.0
      %2624 = vmatpush.msra.mxu0 0.0
      %2625 = vmatpush.msra.mxu0 0.0
      %2626 = vmatpush.msra.mxu0 0.0
      %2627 = vmatpush.msra.mxu0 %v2158
      %2628 = vmatpush.msra.mxu0 %v2057
      %2629 = vmatmul.f32.gmra.mxu0 %v239
      %v2630 = vpop.f32.mrf.mxu0
      %v2631 = vadd.f32 0.0, %v2630
      %2632 = vmatmul.f32.gmra.mxu0 %v242
      %v2633 = vpop.f32.mrf.mxu0
      %v2634 = vadd.f32 0.0, %v2633
      %2635 = vdwg.mxu0
      %2636 = vmatpush.msra.mxu0 0.0
      %2637 = vmatpush.msra.mxu0 0.0
      %2638 = vmatpush.msra.mxu0 0.0
      %2639 = vmatpush.msra.mxu0 0.0
      %2640 = vmatpush.msra.mxu0 0.0
      %2641 = vmatpush.msra.mxu0 0.0
      %2642 = vmatpush.msra.mxu0 0.0
      %2643 = vmatpush.msra.mxu0 0.0
      %2644 = vmatpush.msra.mxu0 0.0
      %2645 = vmatpush.msra.mxu0 0.0
      %2646 = vmatpush.msra.mxu0 0.0
      %2647 = vmatpush.msra.mxu0 0.0
      %2648 = vmatpush.msra.mxu0 0.0
      %2649 = vmatpush.msra.mxu0 0.0
      %2650 = vmatpush.msra.mxu0 %v2161
      %2651 = vmatpush.msra.mxu0 %v2058
      %2652 = vmatmul.f32.gmra.mxu0 %v239
      %v2653 = vpop.f32.mrf.mxu0
      %v2654 = vadd.f32 0.0, %v2653
      %2655 = vmatmul.f32.gmra.mxu0 %v242
      %v2656 = vpop.f32.mrf.mxu0
      %v2657 = vadd.f32 0.0, %v2656
      %2658 = vdwg.mxu0
      %2659 = vmatpush.msra.mxu0 0.0
      %2660 = vmatpush.msra.mxu0 0.0
      %2661 = vmatpush.msra.mxu0 0.0
      %2662 = vmatpush.msra.mxu0 0.0
      %2663 = vmatpush.msra.mxu0 0.0
      %2664 = vmatpush.msra.mxu0 0.0
      %2665 = vmatpush.msra.mxu0 0.0
      %2666 = vmatpush.msra.mxu0 0.0
      %2667 = vmatpush.msra.mxu0 0.0
      %2668 = vmatpush.msra.mxu0 0.0
      %2669 = vmatpush.msra.mxu0 0.0
      %2670 = vmatpush.msra.mxu0 0.0
      %2671 = vmatpush.msra.mxu0 0.0
      %2672 = vmatpush.msra.mxu0 0.0
      %2673 = vmatpush.msra.mxu0 %v2164
      %2674 = vmatpush.msra.mxu0 %v2059
      %2675 = vmatmul.f32.gmra.mxu0 %v239
      %v2676 = vpop.f32.mrf.mxu0
      %v2677 = vadd.f32 0.0, %v2676
      %2678 = vmatmul.f32.gmra.mxu0 %v242
      %v2679 = vpop.f32.mrf.mxu0
      %v2680 = vadd.f32 0.0, %v2679
      %2681 = vdwg.mxu0
      %2682 = vmatpush.msra.mxu0 0.0
      %2683 = vmatpush.msra.mxu0 0.0
      %2684 = vmatpush.msra.mxu0 0.0
      %2685 = vmatpush.msra.mxu0 0.0
      %2686 = vmatpush.msra.mxu0 0.0
      %2687 = vmatpush.msra.mxu0 0.0
      %2688 = vmatpush.msra.mxu0 0.0
      %2689 = vmatpush.msra.mxu0 0.0
      %2690 = vmatpush.msra.mxu0 0.0
      %2691 = vmatpush.msra.mxu0 0.0
      %2692 = vmatpush.msra.mxu0 0.0
      %2693 = vmatpush.msra.mxu0 0.0
      %2694 = vmatpush.msra.mxu0 0.0
      %2695 = vmatpush.msra.mxu0 0.0
      %2696 = vmatpush.msra.mxu0 %v2167
      %2697 = vmatpush.msra.mxu0 %v2060
      %2698 = vmatmul.f32.gmra.mxu0 %v239
      %v2699 = vpop.f32.mrf.mxu0
      %v2700 = vadd.f32 0.0, %v2699
      %2701 = vmatmul.f32.gmra.mxu0 %v242
      %v2702 = vpop.f32.mrf.mxu0
      %v2703 = vadd.f32 0.0, %v2702
      %2704 = vdwg.mxu0
      %2705 = vmatpush.msra.mxu0 0.0
      %2706 = vmatpush.msra.mxu0 0.0
      %2707 = vmatpush.msra.mxu0 0.0
      %2708 = vmatpush.msra.mxu0 0.0
      %2709 = vmatpush.msra.mxu0 0.0
      %2710 = vmatpush.msra.mxu0 0.0
      %2711 = vmatpush.msra.mxu0 0.0
      %2712 = vmatpush.msra.mxu0 0.0
      %2713 = vmatpush.msra.mxu0 0.0
      %2714 = vmatpush.msra.mxu0 0.0
      %2715 = vmatpush.msra.mxu0 0.0
      %2716 = vmatpush.msra.mxu0 0.0
      %2717 = vmatpush.msra.mxu0 0.0
      %2718 = vmatpush.msra.mxu0 0.0
      %2719 = vmatpush.msra.mxu0 %v2170
      %2720 = vmatpush.msra.mxu0 %v2061
      %2721 = vmatmul.f32.gmra.mxu0 %v239
      %v2722 = vpop.f32.mrf.mxu0
      %v2723 = vadd.f32 0.0, %v2722
      %2724 = vmatmul.f32.gmra.mxu0 %v242
      %v2725 = vpop.f32.mrf.mxu0
      %v2726 = vadd.f32 0.0, %v2725
      %2727 = vdwg.mxu0
      %2728 = vmatpush.msra.mxu0 0.0
      %2729 = vmatpush.msra.mxu0 0.0
      %2730 = vmatpush.msra.mxu0 0.0
      %2731 = vmatpush.msra.mxu0 0.0
      %2732 = vmatpush.msra.mxu0 0.0
      %2733 = vmatpush.msra.mxu0 0.0
      %2734 = vmatpush.msra.mxu0 0.0
      %2735 = vmatpush.msra.mxu0 0.0
      %2736 = vmatpush.msra.mxu0 0.0
      %2737 = vmatpush.msra.mxu0 0.0
      %2738 = vmatpush.msra.mxu0 0.0
      %2739 = vmatpush.msra.mxu0 0.0
      %2740 = vmatpush.msra.mxu0 0.0
      %2741 = vmatpush.msra.mxu0 0.0
      %2742 = vmatpush.msra.mxu0 %v2173
      %2743 = vmatpush.msra.mxu0 %v2062
      %2744 = vmatmul.f32.gmra.mxu0 %v239
      %v2745 = vpop.f32.mrf.mxu0
      %v2746 = vadd.f32 0.0, %v2745
      %2747 = vmatmul.f32.gmra.mxu0 %v242
      %v2748 = vpop.f32.mrf.mxu0
      %v2749 = vadd.f32 0.0, %v2748
      %2750 = vdwg.mxu0
      %2751 = vmatpush.msra.mxu0 0.0
      %2752 = vmatpush.msra.mxu0 0.0
      %2753 = vmatpush.msra.mxu0 0.0
      %2754 = vmatpush.msra.mxu0 0.0
      %2755 = vmatpush.msra.mxu0 0.0
      %2756 = vmatpush.msra.mxu0 0.0
      %2757 = vmatpush.msra.mxu0 0.0
      %2758 = vmatpush.msra.mxu0 0.0
      %2759 = vmatpush.msra.mxu0 0.0
      %2760 = vmatpush.msra.mxu0 0.0
      %2761 = vmatpush.msra.mxu0 0.0
      %2762 = vmatpush.msra.mxu0 0.0
      %2763 = vmatpush.msra.mxu0 0.0
      %2764 = vmatpush.msra.mxu0 0.0
      %2765 = vmatpush.msra.mxu0 %v2176
      %2766 = vmatpush.msra.mxu0 %v2063
      %2767 = vmatmul.f32.gmra.mxu0 %v239
      %v2768 = vpop.f32.mrf.mxu0
      %v2769 = vadd.f32 0.0, %v2768
      %2770 = vmatmul.f32.gmra.mxu0 %v242
      %v2771 = vpop.f32.mrf.mxu0
      %v2772 = vadd.f32 0.0, %v2771
      %2773 = vdwg.mxu0
      %2774 = vmatpush.msra.mxu0 0.0
      %2775 = vmatpush.msra.mxu0 0.0
      %2776 = vmatpush.msra.mxu0 0.0
      %2777 = vmatpush.msra.mxu0 0.0
      %2778 = vmatpush.msra.mxu0 0.0
      %2779 = vmatpush.msra.mxu0 0.0
      %2780 = vmatpush.msra.mxu0 0.0
      %2781 = vmatpush.msra.mxu0 0.0
      %2782 = vmatpush.msra.mxu0 0.0
      %2783 = vmatpush.msra.mxu0 0.0
      %2784 = vmatpush.msra.mxu0 0.0
      %2785 = vmatpush.msra.mxu0 0.0
      %2786 = vmatpush.msra.mxu0 0.0
      %2787 = vmatpush.msra.mxu0 0.0
      %2788 = vmatpush.msra.mxu0 %v2179
      %2789 = vmatpush.msra.mxu0 %v2064
      %2790 = vmatmul.f32.gmra.mxu0 %v239
      %v2791 = vpop.f32.mrf.mxu0
      %v2792 = vadd.f32 0.0, %v2791
      %2793 = vmatmul.f32.gmra.mxu0 %v242
      %v2794 = vpop.f32.mrf.mxu0
      %v2795 = vadd.f32 0.0, %v2794
      %2796 = vdwg.mxu0
      %2797 = vmatpush.msra.mxu0 0.0
      %2798 = vmatpush.msra.mxu0 0.0
      %2799 = vmatpush.msra.mxu0 0.0
      %2800 = vmatpush.msra.mxu0 0.0
      %2801 = vmatpush.msra.mxu0 0.0
      %2802 = vmatpush.msra.mxu0 0.0
      %2803 = vmatpush.msra.mxu0 0.0
      %2804 = vmatpush.msra.mxu0 0.0
      %2805 = vmatpush.msra.mxu0 0.0
      %2806 = vmatpush.msra.mxu0 0.0
      %2807 = vmatpush.msra.mxu0 0.0
      %2808 = vmatpush.msra.mxu0 0.0
      %2809 = vmatpush.msra.mxu0 0.0
      %2810 = vmatpush.msra.mxu0 0.0
      %2811 = vmatpush.msra.mxu0 %v2182
      %2812 = vmatpush.msra.mxu0 %v2065
      %2813 = vmatmul.f32.gmra.mxu0 %v239
      %v2814 = vpop.f32.mrf.mxu0
      %v2815 = vadd.f32 0.0, %v2814
      %2816 = vmatmul.f32.gmra.mxu0 %v242
      %v2817 = vpop.f32.mrf.mxu0
      %v2818 = vadd.f32 0.0, %v2817
      %2819 = vdwg.mxu0
      %2820 = vmatpush.msra.mxu0 0.0
      %2821 = vmatpush.msra.mxu0 0.0
      %2822 = vmatpush.msra.mxu0 0.0
      %2823 = vmatpush.msra.mxu0 0.0
      %2824 = vmatpush.msra.mxu0 0.0
      %2825 = vmatpush.msra.mxu0 0.0
      %2826 = vmatpush.msra.mxu0 0.0
      %2827 = vmatpush.msra.mxu0 0.0
      %2828 = vmatpush.msra.mxu0 0.0
      %2829 = vmatpush.msra.mxu0 0.0
      %2830 = vmatpush.msra.mxu0 0.0
      %2831 = vmatpush.msra.mxu0 0.0
      %2832 = vmatpush.msra.mxu0 0.0
      %2833 = vmatpush.msra.mxu0 0.0
      %2834 = vmatpush.msra.mxu0 %v2185
      %2835 = vmatpush.msra.mxu0 %v2066
      %2836 = vmatmul.f32.gmra.mxu0 %v239
      %v2837 = vpop.f32.mrf.mxu0
      %v2838 = vadd.f32 0.0, %v2837
      %2839 = vmatmul.f32.gmra.mxu0 %v242
      %v2840 = vpop.f32.mrf.mxu0
      %v2841 = vadd.f32 0.0, %v2840
      %2842 = vdwg.mxu0
      %2843 = vmatpush.msra.mxu0 0.0
      %2844 = vmatpush.msra.mxu0 0.0
      %2845 = vmatpush.msra.mxu0 0.0
      %2846 = vmatpush.msra.mxu0 0.0
      %2847 = vmatpush.msra.mxu0 0.0
      %2848 = vmatpush.msra.mxu0 0.0
      %2849 = vmatpush.msra.mxu0 0.0
      %2850 = vmatpush.msra.mxu0 0.0
      %2851 = vmatpush.msra.mxu0 0.0
      %2852 = vmatpush.msra.mxu0 0.0
      %2853 = vmatpush.msra.mxu0 0.0
      %2854 = vmatpush.msra.mxu0 0.0
      %2855 = vmatpush.msra.mxu0 0.0
      %2856 = vmatpush.msra.mxu0 0.0
      %2857 = vmatpush.msra.mxu0 %v2188
      %2858 = vmatpush.msra.mxu0 %v2067
      %2859 = vmatmul.f32.gmra.mxu0 %v239
      %v2860 = vpop.f32.mrf.mxu0
      %v2861 = vadd.f32 0.0, %v2860
      %2862 = vmatmul.f32.gmra.mxu0 %v242
      %v2863 = vpop.f32.mrf.mxu0
      %v2864 = vadd.f32 0.0, %v2863
      %2865 = vdwg.mxu0
      %2866 = vmatpush.msra.mxu0 0.0
      %2867 = vmatpush.msra.mxu0 0.0
      %2868 = vmatpush.msra.mxu0 0.0
      %2869 = vmatpush.msra.mxu0 0.0
      %2870 = vmatpush.msra.mxu0 0.0
      %2871 = vmatpush.msra.mxu0 0.0
      %2872 = vmatpush.msra.mxu0 0.0
      %2873 = vmatpush.msra.mxu0 0.0
      %2874 = vmatpush.msra.mxu0 0.0
      %2875 = vmatpush.msra.mxu0 0.0
      %2876 = vmatpush.msra.mxu0 0.0
      %2877 = vmatpush.msra.mxu0 0.0
      %2878 = vmatpush.msra.mxu0 0.0
      %2879 = vmatpush.msra.mxu0 0.0
      %2880 = vmatpush.msra.mxu0 %v2191
      %2881 = vmatpush.msra.mxu0 %v2068
      %2882 = vmatmul.f32.gmra.mxu0 %v239
      %v2883 = vpop.f32.mrf.mxu0
      %v2884 = vadd.f32 0.0, %v2883
      %2885 = vmatmul.f32.gmra.mxu0 %v242
      %v2886 = vpop.f32.mrf.mxu0
      %v2887 = vadd.f32 0.0, %v2886
      %2888 = vdwg.mxu0
      %2889 = vmatpush.msra.mxu0 0.0
      %2890 = vmatpush.msra.mxu0 0.0
      %2891 = vmatpush.msra.mxu0 0.0
      %2892 = vmatpush.msra.mxu0 0.0
      %2893 = vmatpush.msra.mxu0 0.0
      %2894 = vmatpush.msra.mxu0 0.0
      %2895 = vmatpush.msra.mxu0 0.0
      %2896 = vmatpush.msra.mxu0 0.0
      %2897 = vmatpush.msra.mxu0 0.0
      %2898 = vmatpush.msra.mxu0 0.0
      %2899 = vmatpush.msra.mxu0 0.0
      %2900 = vmatpush.msra.mxu0 0.0
      %2901 = vmatpush.msra.mxu0 0.0
      %2902 = vmatpush.msra.mxu0 0.0
      %2903 = vmatpush.msra.mxu0 %v2194
      %2904 = vmatpush.msra.mxu0 %v2069
      %2905 = vmatmul.f32.gmra.mxu0 %v239
      %v2906 = vpop.f32.mrf.mxu0
      %v2907 = vadd.f32 0.0, %v2906
      %2908 = vmatmul.f32.gmra.mxu0 %v242
      %v2909 = vpop.f32.mrf.mxu0
      %v2910 = vadd.f32 0.0, %v2909
      %2911 = vdwg.mxu0
      %2912 = vmatpush.msra.mxu0 0.0
      %2913 = vmatpush.msra.mxu0 0.0
      %2914 = vmatpush.msra.mxu0 0.0
      %2915 = vmatpush.msra.mxu0 0.0
      %2916 = vmatpush.msra.mxu0 0.0
      %2917 = vmatpush.msra.mxu0 0.0
      %2918 = vmatpush.msra.mxu0 0.0
      %2919 = vmatpush.msra.mxu0 0.0
      %2920 = vmatpush.msra.mxu0 0.0
      %2921 = vmatpush.msra.mxu0 0.0
      %2922 = vmatpush.msra.mxu0 0.0
      %2923 = vmatpush.msra.mxu0 0.0
      %2924 = vmatpush.msra.mxu0 0.0
      %2925 = vmatpush.msra.mxu0 0.0
      %2926 = vmatpush.msra.mxu0 %v2197
      %2927 = vmatpush.msra.mxu0 %v2070
      %2928 = vmatmul.f32.gmra.mxu0 %v239
      %v2929 = vpop.f32.mrf.mxu0
      %v2930 = vadd.f32 0.0, %v2929
      %2931 = vmatmul.f32.gmra.mxu0 %v242
      %v2932 = vpop.f32.mrf.mxu0
      %v2933 = vadd.f32 0.0, %v2932
      %2934 = vdwg.mxu0
      %v2935 = vmax.f32 %v1974, %v2217
      %v2936 = vmax.f32 %v1975, %v2240
      %v2937 = vmax.f32 %v1976, %v2263
      %v2938 = vmax.f32 %v1977, %v2286
      %v2939 = vmax.f32 %v1978, %v2309
      %v2940 = vmax.f32 %v1979, %v2332
      %v2941 = vmax.f32 %v1980, %v2355
      %v2942 = vmax.f32 %v1981, %v2378
      %v2943 = vmax.f32 %v1982, %v2401
      %v2944 = vmax.f32 %v1983, %v2424
      %v2945 = vmax.f32 %v1984, %v2447
      %v2946 = vmax.f32 %v1985, %v2470
      %v2947 = vmax.f32 %v1986, %v2493
      %v2948 = vmax.f32 %v1987, %v2516
      %v2949 = vmax.f32 %v1988, %v2539
      %v2950 = vmax.f32 %v1989, %v2562
      %v2951 = vmax.f32 %v1990, %v2585
      %v2952 = vmax.f32 %v1991, %v2608
      %v2953 = vmax.f32 %v1992, %v2631
      %v2954 = vmax.f32 %v1993, %v2654
      %v2955 = vmax.f32 %v1994, %v2677
      %v2956 = vmax.f32 %v1995, %v2700
      %v2957 = vmax.f32 %v1996, %v2723
      %v2958 = vmax.f32 %v1997, %v2746
      %v2959 = vmax.f32 %v1998, %v2769
      %v2960 = vmax.f32 %v1999, %v2792
      %v2961 = vmax.f32 %v2000, %v2815
      %v2962 = vmax.f32 %v2001, %v2838
      %v2963 = vmax.f32 %v2002, %v2861
      %v2964 = vmax.f32 %v2003, %v2884
      %v2965 = vmax.f32 %v2004, %v2907
      %v2966 = vmax.f32 %v2005, %v2930
      %v2967 = vmax.f32 %v2006, %v2220
      %v2968 = vmax.f32 %v2007, %v2243
      %v2969 = vmax.f32 %v2008, %v2266
      %v2970 = vmax.f32 %v2009, %v2289
      %v2971 = vmax.f32 %v2010, %v2312
      %v2972 = vmax.f32 %v2011, %v2335
      %v2973 = vmax.f32 %v2012, %v2358
      %v2974 = vmax.f32 %v2013, %v2381
      %v2975 = vmax.f32 %v2014, %v2404
      %v2976 = vmax.f32 %v2015, %v2427
      %v2977 = vmax.f32 %v2016, %v2450
      %v2978 = vmax.f32 %v2017, %v2473
      %v2979 = vmax.f32 %v2018, %v2496
      %v2980 = vmax.f32 %v2019, %v2519
      %v2981 = vmax.f32 %v2020, %v2542
      %v2982 = vmax.f32 %v2021, %v2565
      %v2983 = vmax.f32 %v2022, %v2588
      %v2984 = vmax.f32 %v2023, %v2611
      %v2985 = vmax.f32 %v2024, %v2634
      %v2986 = vmax.f32 %v2025, %v2657
      %v2987 = vmax.f32 %v2026, %v2680
      %v2988 = vmax.f32 %v2027, %v2703
      %v2989 = vmax.f32 %v2028, %v2726
      %v2990 = vmax.f32 %v2029, %v2749
      %v2991 = vmax.f32 %v2030, %v2772
      %v2992 = vmax.f32 %v2031, %v2795
      %v2993 = vmax.f32 %v2032, %v2818
      %v2994 = vmax.f32 %v2033, %v2841
      %v2995 = vmax.f32 %v2034, %v2864
      %v2996 = vmax.f32 %v2035, %v2887
      %v2997 = vmax.f32 %v2036, %v2910
      %v2998 = vmax.f32 %v2037, %v2933
      %s2999 = scalar_lea.vmem %s165, 1536
      %v3000 = vld [vmem:[%s2999] sm:$0xff]
      %v3001 = vld [vmem:[%s2999 + $0x8] sm:$0xff]
      %v3002 = vld [vmem:[%s2999 + $0x10] sm:$0xff]
      %v3003 = vld [vmem:[%s2999 + $0x18] sm:$0xff]
      %v3004 = vld [vmem:[%s2999 + $0x20] sm:$0xff]
      %v3005 = vld [vmem:[%s2999 + $0x28] sm:$0xff]
      %v3006 = vld [vmem:[%s2999 + $0x30] sm:$0xff]
      %v3007 = vld [vmem:[%s2999 + $0x38] sm:$0xff]
      %v3008 = vld [vmem:[%s2999 + $0x40] sm:$0xff]
      %v3009 = vld [vmem:[%s2999 + $0x48] sm:$0xff]
      %v3010 = vld [vmem:[%s2999 + $0x50] sm:$0xff]
      %v3011 = vld [vmem:[%s2999 + $0x58] sm:$0xff]
      %v3012 = vld [vmem:[%s2999 + $0x60] sm:$0xff]
      %v3013 = vld [vmem:[%s2999 + $0x68] sm:$0xff]
      %v3014 = vld [vmem:[%s2999 + $0x70] sm:$0xff]
      %v3015 = vld [vmem:[%s2999 + $0x78] sm:$0xff]
      %v3016 = vld [vmem:[%s2999 + $0x80] sm:$0xff]
      %v3017 = vld [vmem:[%s2999 + $0x88] sm:$0xff]
      %v3018 = vld [vmem:[%s2999 + $0x90] sm:$0xff]
      %v3019 = vld [vmem:[%s2999 + $0x98] sm:$0xff]
      %v3020 = vld [vmem:[%s2999 + $0xa0] sm:$0xff]
      %v3021 = vld [vmem:[%s2999 + $0xa8] sm:$0xff]
      %v3022 = vld [vmem:[%s2999 + $0xb0] sm:$0xff]
      %v3023 = vld [vmem:[%s2999 + $0xb8] sm:$0xff]
      %v3024 = vld [vmem:[%s2999 + $0xc0] sm:$0xff]
      %v3025 = vld [vmem:[%s2999 + $0xc8] sm:$0xff]
      %v3026 = vld [vmem:[%s2999 + $0xd0] sm:$0xff]
      %v3027 = vld [vmem:[%s2999 + $0xd8] sm:$0xff]
      %v3028 = vld [vmem:[%s2999 + $0xe0] sm:$0xff]
      %v3029 = vld [vmem:[%s2999 + $0xe8] sm:$0xff]
      %v3030 = vld [vmem:[%s2999 + $0xf0] sm:$0xff]
      %v3031 = vld [vmem:[%s2999 + $0xf8] sm:$0xff]
      %v3032 = vld [vmem:[%s2999 + $0x100] sm:$0x1]
      %v3033 = vld [vmem:[%s2999 + $0x108] sm:$0x1]
      %v3034 = vld [vmem:[%s2999 + $0x110] sm:$0x1]
      %v3035 = vld [vmem:[%s2999 + $0x118] sm:$0x1]
      %v3036 = vld [vmem:[%s2999 + $0x120] sm:$0x1]
      %v3037 = vld [vmem:[%s2999 + $0x128] sm:$0x1]
      %v3038 = vld [vmem:[%s2999 + $0x130] sm:$0x1]
      %v3039 = vld [vmem:[%s2999 + $0x138] sm:$0x1]
      %v3040 = vld [vmem:[%s2999 + $0x140] sm:$0x1]
      %v3041 = vld [vmem:[%s2999 + $0x148] sm:$0x1]
      %v3042 = vld [vmem:[%s2999 + $0x150] sm:$0x1]
      %v3043 = vld [vmem:[%s2999 + $0x158] sm:$0x1]
      %v3044 = vld [vmem:[%s2999 + $0x160] sm:$0x1]
      %v3045 = vld [vmem:[%s2999 + $0x168] sm:$0x1]
      %v3046 = vld [vmem:[%s2999 + $0x170] sm:$0x1]
      %v3047 = vld [vmem:[%s2999 + $0x178] sm:$0x1]
      %v3048 = vld [vmem:[%s2999 + $0x180] sm:$0x1]
      %v3049 = vld [vmem:[%s2999 + $0x188] sm:$0x1]
      %v3050 = vld [vmem:[%s2999 + $0x190] sm:$0x1]
      %v3051 = vld [vmem:[%s2999 + $0x198] sm:$0x1]
      %v3052 = vld [vmem:[%s2999 + $0x1a0] sm:$0x1]
      %v3053 = vld [vmem:[%s2999 + $0x1a8] sm:$0x1]
      %v3054 = vld [vmem:[%s2999 + $0x1b0] sm:$0x1]
      %v3055 = vld [vmem:[%s2999 + $0x1b8] sm:$0x1]
      %v3056 = vld [vmem:[%s2999 + $0x1c0] sm:$0x1]
      %v3057 = vld [vmem:[%s2999 + $0x1c8] sm:$0x1]
      %v3058 = vld [vmem:[%s2999 + $0x1d0] sm:$0x1]
      %v3059 = vld [vmem:[%s2999 + $0x1d8] sm:$0x1]
      %v3060 = vld [vmem:[%s2999 + $0x1e0] sm:$0x1]
      %v3061 = vld [vmem:[%s2999 + $0x1e8] sm:$0x1]
      %v3062 = vld [vmem:[%s2999 + $0x1f0] sm:$0x1]
      %v3063 = vld [vmem:[%s2999 + $0x1f8] sm:$0x1]
      %v3065 = vsel %vm244, %v3032, 0
      %v3068 = vsel %vm244, %v3033, 0
      %v3071 = vsel %vm244, %v3034, 0
      %v3074 = vsel %vm244, %v3035, 0
      %v3077 = vsel %vm244, %v3036, 0
      %v3080 = vsel %vm244, %v3037, 0
      %v3083 = vsel %vm244, %v3038, 0
      %v3086 = vsel %vm244, %v3039, 0
      %v3089 = vsel %vm244, %v3040, 0
      %v3092 = vsel %vm244, %v3041, 0
      %v3095 = vsel %vm244, %v3042, 0
      %v3098 = vsel %vm244, %v3043, 0
      %v3101 = vsel %vm244, %v3044, 0
      %v3104 = vsel %vm244, %v3045, 0
      %v3107 = vsel %vm244, %v3046, 0
      %v3110 = vsel %vm244, %v3047, 0
      %v3113 = vsel %vm244, %v3048, 0
      %v3116 = vsel %vm244, %v3049, 0
      %v3119 = vsel %vm244, %v3050, 0
      %v3122 = vsel %vm244, %v3051, 0
      %v3125 = vsel %vm244, %v3052, 0
      %v3128 = vsel %vm244, %v3053, 0
      %v3131 = vsel %vm244, %v3054, 0
      %v3134 = vsel %vm244, %v3055, 0
      %v3137 = vsel %vm244, %v3056, 0
      %v3140 = vsel %vm244, %v3057, 0
      %v3143 = vsel %vm244, %v3058, 0
      %v3146 = vsel %vm244, %v3059, 0
      %v3149 = vsel %vm244, %v3060, 0
      %v3152 = vsel %vm244, %v3061, 0
      %v3155 = vsel %vm244, %v3062, 0
      %v3158 = vsel %vm244, %v3063, 0
      %3160 = vmatpush.msra.mxu0 0.0
      %3161 = vmatpush.msra.mxu0 0.0
      %3162 = vmatpush.msra.mxu0 0.0
      %3163 = vmatpush.msra.mxu0 0.0
      %3164 = vmatpush.msra.mxu0 0.0
      %3165 = vmatpush.msra.mxu0 0.0
      %3166 = vmatpush.msra.mxu0 0.0
      %3167 = vmatpush.msra.mxu0 0.0
      %3168 = vmatpush.msra.mxu0 0.0
      %3169 = vmatpush.msra.mxu0 0.0
      %3170 = vmatpush.msra.mxu0 0.0
      %3171 = vmatpush.msra.mxu0 0.0
      %3172 = vmatpush.msra.mxu0 0.0
      %3173 = vmatpush.msra.mxu0 0.0
      %3174 = vmatpush.msra.mxu0 %v3065
      %3175 = vmatpush.msra.mxu0 %v3000
      %3176 = vmatmul.f32.gmra.mxu0 %v239
      %v3177 = vpop.f32.mrf.mxu0
      %v3178 = vadd.f32 0.0, %v3177
      %3179 = vmatmul.f32.gmra.mxu0 %v242
      %v3180 = vpop.f32.mrf.mxu0
      %v3181 = vadd.f32 0.0, %v3180
      %3182 = vdwg.mxu0
      %3183 = vmatpush.msra.mxu0 0.0
      %3184 = vmatpush.msra.mxu0 0.0
      %3185 = vmatpush.msra.mxu0 0.0
      %3186 = vmatpush.msra.mxu0 0.0
      %3187 = vmatpush.msra.mxu0 0.0
      %3188 = vmatpush.msra.mxu0 0.0
      %3189 = vmatpush.msra.mxu0 0.0
      %3190 = vmatpush.msra.mxu0 0.0
      %3191 = vmatpush.msra.mxu0 0.0
      %3192 = vmatpush.msra.mxu0 0.0
      %3193 = vmatpush.msra.mxu0 0.0
      %3194 = vmatpush.msra.mxu0 0.0
      %3195 = vmatpush.msra.mxu0 0.0
      %3196 = vmatpush.msra.mxu0 0.0
      %3197 = vmatpush.msra.mxu0 %v3068
      %3198 = vmatpush.msra.mxu0 %v3001
      %3199 = vmatmul.f32.gmra.mxu0 %v239
      %v3200 = vpop.f32.mrf.mxu0
      %v3201 = vadd.f32 0.0, %v3200
      %3202 = vmatmul.f32.gmra.mxu0 %v242
      %v3203 = vpop.f32.mrf.mxu0
      %v3204 = vadd.f32 0.0, %v3203
      %3205 = vdwg.mxu0
      %3206 = vmatpush.msra.mxu0 0.0
      %3207 = vmatpush.msra.mxu0 0.0
      %3208 = vmatpush.msra.mxu0 0.0
      %3209 = vmatpush.msra.mxu0 0.0
      %3210 = vmatpush.msra.mxu0 0.0
      %3211 = vmatpush.msra.mxu0 0.0
      %3212 = vmatpush.msra.mxu0 0.0
      %3213 = vmatpush.msra.mxu0 0.0
      %3214 = vmatpush.msra.mxu0 0.0
      %3215 = vmatpush.msra.mxu0 0.0
      %3216 = vmatpush.msra.mxu0 0.0
      %3217 = vmatpush.msra.mxu0 0.0
      %3218 = vmatpush.msra.mxu0 0.0
      %3219 = vmatpush.msra.mxu0 0.0
      %3220 = vmatpush.msra.mxu0 %v3071
      %3221 = vmatpush.msra.mxu0 %v3002
      %3222 = vmatmul.f32.gmra.mxu0 %v239
      %v3223 = vpop.f32.mrf.mxu0
      %v3224 = vadd.f32 0.0, %v3223
      %3225 = vmatmul.f32.gmra.mxu0 %v242
      %v3226 = vpop.f32.mrf.mxu0
      %v3227 = vadd.f32 0.0, %v3226
      %3228 = vdwg.mxu0
      %3229 = vmatpush.msra.mxu0 0.0
      %3230 = vmatpush.msra.mxu0 0.0
      %3231 = vmatpush.msra.mxu0 0.0
      %3232 = vmatpush.msra.mxu0 0.0
      %3233 = vmatpush.msra.mxu0 0.0
      %3234 = vmatpush.msra.mxu0 0.0
      %3235 = vmatpush.msra.mxu0 0.0
      %3236 = vmatpush.msra.mxu0 0.0
      %3237 = vmatpush.msra.mxu0 0.0
      %3238 = vmatpush.msra.mxu0 0.0
      %3239 = vmatpush.msra.mxu0 0.0
      %3240 = vmatpush.msra.mxu0 0.0
      %3241 = vmatpush.msra.mxu0 0.0
      %3242 = vmatpush.msra.mxu0 0.0
      %3243 = vmatpush.msra.mxu0 %v3074
      %3244 = vmatpush.msra.mxu0 %v3003
      %3245 = vmatmul.f32.gmra.mxu0 %v239
      %v3246 = vpop.f32.mrf.mxu0
      %v3247 = vadd.f32 0.0, %v3246
      %3248 = vmatmul.f32.gmra.mxu0 %v242
      %v3249 = vpop.f32.mrf.mxu0
      %v3250 = vadd.f32 0.0, %v3249
      %3251 = vdwg.mxu0
      %3252 = vmatpush.msra.mxu0 0.0
      %3253 = vmatpush.msra.mxu0 0.0
      %3254 = vmatpush.msra.mxu0 0.0
      %3255 = vmatpush.msra.mxu0 0.0
      %3256 = vmatpush.msra.mxu0 0.0
      %3257 = vmatpush.msra.mxu0 0.0
      %3258 = vmatpush.msra.mxu0 0.0
      %3259 = vmatpush.msra.mxu0 0.0
      %3260 = vmatpush.msra.mxu0 0.0
      %3261 = vmatpush.msra.mxu0 0.0
      %3262 = vmatpush.msra.mxu0 0.0
      %3263 = vmatpush.msra.mxu0 0.0
      %3264 = vmatpush.msra.mxu0 0.0
      %3265 = vmatpush.msra.mxu0 0.0
      %3266 = vmatpush.msra.mxu0 %v3077
      %3267 = vmatpush.msra.mxu0 %v3004
      %3268 = vmatmul.f32.gmra.mxu0 %v239
      %v3269 = vpop.f32.mrf.mxu0
      %v3270 = vadd.f32 0.0, %v3269
      %3271 = vmatmul.f32.gmra.mxu0 %v242
      %v3272 = vpop.f32.mrf.mxu0
      %v3273 = vadd.f32 0.0, %v3272
      %3274 = vdwg.mxu0
      %3275 = vmatpush.msra.mxu0 0.0
      %3276 = vmatpush.msra.mxu0 0.0
      %3277 = vmatpush.msra.mxu0 0.0
      %3278 = vmatpush.msra.mxu0 0.0
      %3279 = vmatpush.msra.mxu0 0.0
      %3280 = vmatpush.msra.mxu0 0.0
      %3281 = vmatpush.msra.mxu0 0.0
      %3282 = vmatpush.msra.mxu0 0.0
      %3283 = vmatpush.msra.mxu0 0.0
      %3284 = vmatpush.msra.mxu0 0.0
      %3285 = vmatpush.msra.mxu0 0.0
      %3286 = vmatpush.msra.mxu0 0.0
      %3287 = vmatpush.msra.mxu0 0.0
      %3288 = vmatpush.msra.mxu0 0.0
      %3289 = vmatpush.msra.mxu0 %v3080
      %3290 = vmatpush.msra.mxu0 %v3005
      %3291 = vmatmul.f32.gmra.mxu0 %v239
      %v3292 = vpop.f32.mrf.mxu0
      %v3293 = vadd.f32 0.0, %v3292
      %3294 = vmatmul.f32.gmra.mxu0 %v242
      %v3295 = vpop.f32.mrf.mxu0
      %v3296 = vadd.f32 0.0, %v3295
      %3297 = vdwg.mxu0
      %3298 = vmatpush.msra.mxu0 0.0
      %3299 = vmatpush.msra.mxu0 0.0
      %3300 = vmatpush.msra.mxu0 0.0
      %3301 = vmatpush.msra.mxu0 0.0
      %3302 = vmatpush.msra.mxu0 0.0
      %3303 = vmatpush.msra.mxu0 0.0
      %3304 = vmatpush.msra.mxu0 0.0
      %3305 = vmatpush.msra.mxu0 0.0
      %3306 = vmatpush.msra.mxu0 0.0
      %3307 = vmatpush.msra.mxu0 0.0
      %3308 = vmatpush.msra.mxu0 0.0
      %3309 = vmatpush.msra.mxu0 0.0
      %3310 = vmatpush.msra.mxu0 0.0
      %3311 = vmatpush.msra.mxu0 0.0
      %3312 = vmatpush.msra.mxu0 %v3083
      %3313 = vmatpush.msra.mxu0 %v3006
      %3314 = vmatmul.f32.gmra.mxu0 %v239
      %v3315 = vpop.f32.mrf.mxu0
      %v3316 = vadd.f32 0.0, %v3315
      %3317 = vmatmul.f32.gmra.mxu0 %v242
      %v3318 = vpop.f32.mrf.mxu0
      %v3319 = vadd.f32 0.0, %v3318
      %3320 = vdwg.mxu0
      %3321 = vmatpush.msra.mxu0 0.0
      %3322 = vmatpush.msra.mxu0 0.0
      %3323 = vmatpush.msra.mxu0 0.0
      %3324 = vmatpush.msra.mxu0 0.0
      %3325 = vmatpush.msra.mxu0 0.0
      %3326 = vmatpush.msra.mxu0 0.0
      %3327 = vmatpush.msra.mxu0 0.0
      %3328 = vmatpush.msra.mxu0 0.0
      %3329 = vmatpush.msra.mxu0 0.0
      %3330 = vmatpush.msra.mxu0 0.0
      %3331 = vmatpush.msra.mxu0 0.0
      %3332 = vmatpush.msra.mxu0 0.0
      %3333 = vmatpush.msra.mxu0 0.0
      %3334 = vmatpush.msra.mxu0 0.0
      %3335 = vmatpush.msra.mxu0 %v3086
      %3336 = vmatpush.msra.mxu0 %v3007
      %3337 = vmatmul.f32.gmra.mxu0 %v239
      %v3338 = vpop.f32.mrf.mxu0
      %v3339 = vadd.f32 0.0, %v3338
      %3340 = vmatmul.f32.gmra.mxu0 %v242
      %v3341 = vpop.f32.mrf.mxu0
      %v3342 = vadd.f32 0.0, %v3341
      %3343 = vdwg.mxu0
      %3344 = vmatpush.msra.mxu0 0.0
      %3345 = vmatpush.msra.mxu0 0.0
      %3346 = vmatpush.msra.mxu0 0.0
      %3347 = vmatpush.msra.mxu0 0.0
      %3348 = vmatpush.msra.mxu0 0.0
      %3349 = vmatpush.msra.mxu0 0.0
      %3350 = vmatpush.msra.mxu0 0.0
      %3351 = vmatpush.msra.mxu0 0.0
      %3352 = vmatpush.msra.mxu0 0.0
      %3353 = vmatpush.msra.mxu0 0.0
      %3354 = vmatpush.msra.mxu0 0.0
      %3355 = vmatpush.msra.mxu0 0.0
      %3356 = vmatpush.msra.mxu0 0.0
      %3357 = vmatpush.msra.mxu0 0.0
      %3358 = vmatpush.msra.mxu0 %v3089
      %3359 = vmatpush.msra.mxu0 %v3008
      %3360 = vmatmul.f32.gmra.mxu0 %v239
      %v3361 = vpop.f32.mrf.mxu0
      %v3362 = vadd.f32 0.0, %v3361
      %3363 = vmatmul.f32.gmra.mxu0 %v242
      %v3364 = vpop.f32.mrf.mxu0
      %v3365 = vadd.f32 0.0, %v3364
      %3366 = vdwg.mxu0
      %3367 = vmatpush.msra.mxu0 0.0
      %3368 = vmatpush.msra.mxu0 0.0
      %3369 = vmatpush.msra.mxu0 0.0
      %3370 = vmatpush.msra.mxu0 0.0
      %3371 = vmatpush.msra.mxu0 0.0
      %3372 = vmatpush.msra.mxu0 0.0
      %3373 = vmatpush.msra.mxu0 0.0
      %3374 = vmatpush.msra.mxu0 0.0
      %3375 = vmatpush.msra.mxu0 0.0
      %3376 = vmatpush.msra.mxu0 0.0
      %3377 = vmatpush.msra.mxu0 0.0
      %3378 = vmatpush.msra.mxu0 0.0
      %3379 = vmatpush.msra.mxu0 0.0
      %3380 = vmatpush.msra.mxu0 0.0
      %3381 = vmatpush.msra.mxu0 %v3092
      %3382 = vmatpush.msra.mxu0 %v3009
      %3383 = vmatmul.f32.gmra.mxu0 %v239
      %v3384 = vpop.f32.mrf.mxu0
      %v3385 = vadd.f32 0.0, %v3384
      %3386 = vmatmul.f32.gmra.mxu0 %v242
      %v3387 = vpop.f32.mrf.mxu0
      %v3388 = vadd.f32 0.0, %v3387
      %3389 = vdwg.mxu0
      %3390 = vmatpush.msra.mxu0 0.0
      %3391 = vmatpush.msra.mxu0 0.0
      %3392 = vmatpush.msra.mxu0 0.0
      %3393 = vmatpush.msra.mxu0 0.0
      %3394 = vmatpush.msra.mxu0 0.0
      %3395 = vmatpush.msra.mxu0 0.0
      %3396 = vmatpush.msra.mxu0 0.0
      %3397 = vmatpush.msra.mxu0 0.0
      %3398 = vmatpush.msra.mxu0 0.0
      %3399 = vmatpush.msra.mxu0 0.0
      %3400 = vmatpush.msra.mxu0 0.0
      %3401 = vmatpush.msra.mxu0 0.0
      %3402 = vmatpush.msra.mxu0 0.0
      %3403 = vmatpush.msra.mxu0 0.0
      %3404 = vmatpush.msra.mxu0 %v3095
      %3405 = vmatpush.msra.mxu0 %v3010
      %3406 = vmatmul.f32.gmra.mxu0 %v239
      %v3407 = vpop.f32.mrf.mxu0
      %v3408 = vadd.f32 0.0, %v3407
      %3409 = vmatmul.f32.gmra.mxu0 %v242
      %v3410 = vpop.f32.mrf.mxu0
      %v3411 = vadd.f32 0.0, %v3410
      %3412 = vdwg.mxu0
      %3413 = vmatpush.msra.mxu0 0.0
      %3414 = vmatpush.msra.mxu0 0.0
      %3415 = vmatpush.msra.mxu0 0.0
      %3416 = vmatpush.msra.mxu0 0.0
      %3417 = vmatpush.msra.mxu0 0.0
      %3418 = vmatpush.msra.mxu0 0.0
      %3419 = vmatpush.msra.mxu0 0.0
      %3420 = vmatpush.msra.mxu0 0.0
      %3421 = vmatpush.msra.mxu0 0.0
      %3422 = vmatpush.msra.mxu0 0.0
      %3423 = vmatpush.msra.mxu0 0.0
      %3424 = vmatpush.msra.mxu0 0.0
      %3425 = vmatpush.msra.mxu0 0.0
      %3426 = vmatpush.msra.mxu0 0.0
      %3427 = vmatpush.msra.mxu0 %v3098
      %3428 = vmatpush.msra.mxu0 %v3011
      %3429 = vmatmul.f32.gmra.mxu0 %v239
      %v3430 = vpop.f32.mrf.mxu0
      %v3431 = vadd.f32 0.0, %v3430
      %3432 = vmatmul.f32.gmra.mxu0 %v242
      %v3433 = vpop.f32.mrf.mxu0
      %v3434 = vadd.f32 0.0, %v3433
      %3435 = vdwg.mxu0
      %3436 = vmatpush.msra.mxu0 0.0
      %3437 = vmatpush.msra.mxu0 0.0
      %3438 = vmatpush.msra.mxu0 0.0
      %3439 = vmatpush.msra.mxu0 0.0
      %3440 = vmatpush.msra.mxu0 0.0
      %3441 = vmatpush.msra.mxu0 0.0
      %3442 = vmatpush.msra.mxu0 0.0
      %3443 = vmatpush.msra.mxu0 0.0
      %3444 = vmatpush.msra.mxu0 0.0
      %3445 = vmatpush.msra.mxu0 0.0
      %3446 = vmatpush.msra.mxu0 0.0
      %3447 = vmatpush.msra.mxu0 0.0
      %3448 = vmatpush.msra.mxu0 0.0
      %3449 = vmatpush.msra.mxu0 0.0
      %3450 = vmatpush.msra.mxu0 %v3101
      %3451 = vmatpush.msra.mxu0 %v3012
      %3452 = vmatmul.f32.gmra.mxu0 %v239
      %v3453 = vpop.f32.mrf.mxu0
      %v3454 = vadd.f32 0.0, %v3453
      %3455 = vmatmul.f32.gmra.mxu0 %v242
      %v3456 = vpop.f32.mrf.mxu0
      %v3457 = vadd.f32 0.0, %v3456
      %3458 = vdwg.mxu0
      %3459 = vmatpush.msra.mxu0 0.0
      %3460 = vmatpush.msra.mxu0 0.0
      %3461 = vmatpush.msra.mxu0 0.0
      %3462 = vmatpush.msra.mxu0 0.0
      %3463 = vmatpush.msra.mxu0 0.0
      %3464 = vmatpush.msra.mxu0 0.0
      %3465 = vmatpush.msra.mxu0 0.0
      %3466 = vmatpush.msra.mxu0 0.0
      %3467 = vmatpush.msra.mxu0 0.0
      %3468 = vmatpush.msra.mxu0 0.0
      %3469 = vmatpush.msra.mxu0 0.0
      %3470 = vmatpush.msra.mxu0 0.0
      %3471 = vmatpush.msra.mxu0 0.0
      %3472 = vmatpush.msra.mxu0 0.0
      %3473 = vmatpush.msra.mxu0 %v3104
      %3474 = vmatpush.msra.mxu0 %v3013
      %3475 = vmatmul.f32.gmra.mxu0 %v239
      %v3476 = vpop.f32.mrf.mxu0
      %v3477 = vadd.f32 0.0, %v3476
      %3478 = vmatmul.f32.gmra.mxu0 %v242
      %v3479 = vpop.f32.mrf.mxu0
      %v3480 = vadd.f32 0.0, %v3479
      %3481 = vdwg.mxu0
      %3482 = vmatpush.msra.mxu0 0.0
      %3483 = vmatpush.msra.mxu0 0.0
      %3484 = vmatpush.msra.mxu0 0.0
      %3485 = vmatpush.msra.mxu0 0.0
      %3486 = vmatpush.msra.mxu0 0.0
      %3487 = vmatpush.msra.mxu0 0.0
      %3488 = vmatpush.msra.mxu0 0.0
      %3489 = vmatpush.msra.mxu0 0.0
      %3490 = vmatpush.msra.mxu0 0.0
      %3491 = vmatpush.msra.mxu0 0.0
      %3492 = vmatpush.msra.mxu0 0.0
      %3493 = vmatpush.msra.mxu0 0.0
      %3494 = vmatpush.msra.mxu0 0.0
      %3495 = vmatpush.msra.mxu0 0.0
      %3496 = vmatpush.msra.mxu0 %v3107
      %3497 = vmatpush.msra.mxu0 %v3014
      %3498 = vmatmul.f32.gmra.mxu0 %v239
      %v3499 = vpop.f32.mrf.mxu0
      %v3500 = vadd.f32 0.0, %v3499
      %3501 = vmatmul.f32.gmra.mxu0 %v242
      %v3502 = vpop.f32.mrf.mxu0
      %v3503 = vadd.f32 0.0, %v3502
      %3504 = vdwg.mxu0
      %3505 = vmatpush.msra.mxu0 0.0
      %3506 = vmatpush.msra.mxu0 0.0
      %3507 = vmatpush.msra.mxu0 0.0
      %3508 = vmatpush.msra.mxu0 0.0
      %3509 = vmatpush.msra.mxu0 0.0
      %3510 = vmatpush.msra.mxu0 0.0
      %3511 = vmatpush.msra.mxu0 0.0
      %3512 = vmatpush.msra.mxu0 0.0
      %3513 = vmatpush.msra.mxu0 0.0
      %3514 = vmatpush.msra.mxu0 0.0
      %3515 = vmatpush.msra.mxu0 0.0
      %3516 = vmatpush.msra.mxu0 0.0
      %3517 = vmatpush.msra.mxu0 0.0
      %3518 = vmatpush.msra.mxu0 0.0
      %3519 = vmatpush.msra.mxu0 %v3110
      %3520 = vmatpush.msra.mxu0 %v3015
      %3521 = vmatmul.f32.gmra.mxu0 %v239
      %v3522 = vpop.f32.mrf.mxu0
      %v3523 = vadd.f32 0.0, %v3522
      %3524 = vmatmul.f32.gmra.mxu0 %v242
      %v3525 = vpop.f32.mrf.mxu0
      %v3526 = vadd.f32 0.0, %v3525
      %3527 = vdwg.mxu0
      %3528 = vmatpush.msra.mxu0 0.0
      %3529 = vmatpush.msra.mxu0 0.0
      %3530 = vmatpush.msra.mxu0 0.0
      %3531 = vmatpush.msra.mxu0 0.0
      %3532 = vmatpush.msra.mxu0 0.0
      %3533 = vmatpush.msra.mxu0 0.0
      %3534 = vmatpush.msra.mxu0 0.0
      %3535 = vmatpush.msra.mxu0 0.0
      %3536 = vmatpush.msra.mxu0 0.0
      %3537 = vmatpush.msra.mxu0 0.0
      %3538 = vmatpush.msra.mxu0 0.0
      %3539 = vmatpush.msra.mxu0 0.0
      %3540 = vmatpush.msra.mxu0 0.0
      %3541 = vmatpush.msra.mxu0 0.0
      %3542 = vmatpush.msra.mxu0 %v3113
      %3543 = vmatpush.msra.mxu0 %v3016
      %3544 = vmatmul.f32.gmra.mxu0 %v239
      %v3545 = vpop.f32.mrf.mxu0
      %v3546 = vadd.f32 0.0, %v3545
      %3547 = vmatmul.f32.gmra.mxu0 %v242
      %v3548 = vpop.f32.mrf.mxu0
      %v3549 = vadd.f32 0.0, %v3548
      %3550 = vdwg.mxu0
      %3551 = vmatpush.msra.mxu0 0.0
      %3552 = vmatpush.msra.mxu0 0.0
      %3553 = vmatpush.msra.mxu0 0.0
      %3554 = vmatpush.msra.mxu0 0.0
      %3555 = vmatpush.msra.mxu0 0.0
      %3556 = vmatpush.msra.mxu0 0.0
      %3557 = vmatpush.msra.mxu0 0.0
      %3558 = vmatpush.msra.mxu0 0.0
      %3559 = vmatpush.msra.mxu0 0.0
      %3560 = vmatpush.msra.mxu0 0.0
      %3561 = vmatpush.msra.mxu0 0.0
      %3562 = vmatpush.msra.mxu0 0.0
      %3563 = vmatpush.msra.mxu0 0.0
      %3564 = vmatpush.msra.mxu0 0.0
      %3565 = vmatpush.msra.mxu0 %v3116
      %3566 = vmatpush.msra.mxu0 %v3017
      %3567 = vmatmul.f32.gmra.mxu0 %v239
      %v3568 = vpop.f32.mrf.mxu0
      %v3569 = vadd.f32 0.0, %v3568
      %3570 = vmatmul.f32.gmra.mxu0 %v242
      %v3571 = vpop.f32.mrf.mxu0
      %v3572 = vadd.f32 0.0, %v3571
      %3573 = vdwg.mxu0
      %3574 = vmatpush.msra.mxu0 0.0
      %3575 = vmatpush.msra.mxu0 0.0
      %3576 = vmatpush.msra.mxu0 0.0
      %3577 = vmatpush.msra.mxu0 0.0
      %3578 = vmatpush.msra.mxu0 0.0
      %3579 = vmatpush.msra.mxu0 0.0
      %3580 = vmatpush.msra.mxu0 0.0
      %3581 = vmatpush.msra.mxu0 0.0
      %3582 = vmatpush.msra.mxu0 0.0
      %3583 = vmatpush.msra.mxu0 0.0
      %3584 = vmatpush.msra.mxu0 0.0
      %3585 = vmatpush.msra.mxu0 0.0
      %3586 = vmatpush.msra.mxu0 0.0
      %3587 = vmatpush.msra.mxu0 0.0
      %3588 = vmatpush.msra.mxu0 %v3119
      %3589 = vmatpush.msra.mxu0 %v3018
      %3590 = vmatmul.f32.gmra.mxu0 %v239
      %v3591 = vpop.f32.mrf.mxu0
      %v3592 = vadd.f32 0.0, %v3591
      %3593 = vmatmul.f32.gmra.mxu0 %v242
      %v3594 = vpop.f32.mrf.mxu0
      %v3595 = vadd.f32 0.0, %v3594
      %3596 = vdwg.mxu0
      %3597 = vmatpush.msra.mxu0 0.0
      %3598 = vmatpush.msra.mxu0 0.0
      %3599 = vmatpush.msra.mxu0 0.0
      %3600 = vmatpush.msra.mxu0 0.0
      %3601 = vmatpush.msra.mxu0 0.0
      %3602 = vmatpush.msra.mxu0 0.0
      %3603 = vmatpush.msra.mxu0 0.0
      %3604 = vmatpush.msra.mxu0 0.0
      %3605 = vmatpush.msra.mxu0 0.0
      %3606 = vmatpush.msra.mxu0 0.0
      %3607 = vmatpush.msra.mxu0 0.0
      %3608 = vmatpush.msra.mxu0 0.0
      %3609 = vmatpush.msra.mxu0 0.0
      %3610 = vmatpush.msra.mxu0 0.0
      %3611 = vmatpush.msra.mxu0 %v3122
      %3612 = vmatpush.msra.mxu0 %v3019
      %3613 = vmatmul.f32.gmra.mxu0 %v239
      %v3614 = vpop.f32.mrf.mxu0
      %v3615 = vadd.f32 0.0, %v3614
      %3616 = vmatmul.f32.gmra.mxu0 %v242
      %v3617 = vpop.f32.mrf.mxu0
      %v3618 = vadd.f32 0.0, %v3617
      %3619 = vdwg.mxu0
      %3620 = vmatpush.msra.mxu0 0.0
      %3621 = vmatpush.msra.mxu0 0.0
      %3622 = vmatpush.msra.mxu0 0.0
      %3623 = vmatpush.msra.mxu0 0.0
      %3624 = vmatpush.msra.mxu0 0.0
      %3625 = vmatpush.msra.mxu0 0.0
      %3626 = vmatpush.msra.mxu0 0.0
      %3627 = vmatpush.msra.mxu0 0.0
      %3628 = vmatpush.msra.mxu0 0.0
      %3629 = vmatpush.msra.mxu0 0.0
      %3630 = vmatpush.msra.mxu0 0.0
      %3631 = vmatpush.msra.mxu0 0.0
      %3632 = vmatpush.msra.mxu0 0.0
      %3633 = vmatpush.msra.mxu0 0.0
      %3634 = vmatpush.msra.mxu0 %v3125
      %3635 = vmatpush.msra.mxu0 %v3020
      %3636 = vmatmul.f32.gmra.mxu0 %v239
      %v3637 = vpop.f32.mrf.mxu0
      %v3638 = vadd.f32 0.0, %v3637
      %3639 = vmatmul.f32.gmra.mxu0 %v242
      %v3640 = vpop.f32.mrf.mxu0
      %v3641 = vadd.f32 0.0, %v3640
      %3642 = vdwg.mxu0
      %3643 = vmatpush.msra.mxu0 0.0
      %3644 = vmatpush.msra.mxu0 0.0
      %3645 = vmatpush.msra.mxu0 0.0
      %3646 = vmatpush.msra.mxu0 0.0
      %3647 = vmatpush.msra.mxu0 0.0
      %3648 = vmatpush.msra.mxu0 0.0
      %3649 = vmatpush.msra.mxu0 0.0
      %3650 = vmatpush.msra.mxu0 0.0
      %3651 = vmatpush.msra.mxu0 0.0
      %3652 = vmatpush.msra.mxu0 0.0
      %3653 = vmatpush.msra.mxu0 0.0
      %3654 = vmatpush.msra.mxu0 0.0
      %3655 = vmatpush.msra.mxu0 0.0
      %3656 = vmatpush.msra.mxu0 0.0
      %3657 = vmatpush.msra.mxu0 %v3128
      %3658 = vmatpush.msra.mxu0 %v3021
      %3659 = vmatmul.f32.gmra.mxu0 %v239
      %v3660 = vpop.f32.mrf.mxu0
      %v3661 = vadd.f32 0.0, %v3660
      %3662 = vmatmul.f32.gmra.mxu0 %v242
      %v3663 = vpop.f32.mrf.mxu0
      %v3664 = vadd.f32 0.0, %v3663
      %3665 = vdwg.mxu0
      %3666 = vmatpush.msra.mxu0 0.0
      %3667 = vmatpush.msra.mxu0 0.0
      %3668 = vmatpush.msra.mxu0 0.0
      %3669 = vmatpush.msra.mxu0 0.0
      %3670 = vmatpush.msra.mxu0 0.0
      %3671 = vmatpush.msra.mxu0 0.0
      %3672 = vmatpush.msra.mxu0 0.0
      %3673 = vmatpush.msra.mxu0 0.0
      %3674 = vmatpush.msra.mxu0 0.0
      %3675 = vmatpush.msra.mxu0 0.0
      %3676 = vmatpush.msra.mxu0 0.0
      %3677 = vmatpush.msra.mxu0 0.0
      %3678 = vmatpush.msra.mxu0 0.0
      %3679 = vmatpush.msra.mxu0 0.0
      %3680 = vmatpush.msra.mxu0 %v3131
      %3681 = vmatpush.msra.mxu0 %v3022
      %3682 = vmatmul.f32.gmra.mxu0 %v239
      %v3683 = vpop.f32.mrf.mxu0
      %v3684 = vadd.f32 0.0, %v3683
      %3685 = vmatmul.f32.gmra.mxu0 %v242
      %v3686 = vpop.f32.mrf.mxu0
      %v3687 = vadd.f32 0.0, %v3686
      %3688 = vdwg.mxu0
      %3689 = vmatpush.msra.mxu0 0.0
      %3690 = vmatpush.msra.mxu0 0.0
      %3691 = vmatpush.msra.mxu0 0.0
      %3692 = vmatpush.msra.mxu0 0.0
      %3693 = vmatpush.msra.mxu0 0.0
      %3694 = vmatpush.msra.mxu0 0.0
      %3695 = vmatpush.msra.mxu0 0.0
      %3696 = vmatpush.msra.mxu0 0.0
      %3697 = vmatpush.msra.mxu0 0.0
      %3698 = vmatpush.msra.mxu0 0.0
      %3699 = vmatpush.msra.mxu0 0.0
      %3700 = vmatpush.msra.mxu0 0.0
      %3701 = vmatpush.msra.mxu0 0.0
      %3702 = vmatpush.msra.mxu0 0.0
      %3703 = vmatpush.msra.mxu0 %v3134
      %3704 = vmatpush.msra.mxu0 %v3023
      %3705 = vmatmul.f32.gmra.mxu0 %v239
      %v3706 = vpop.f32.mrf.mxu0
      %v3707 = vadd.f32 0.0, %v3706
      %3708 = vmatmul.f32.gmra.mxu0 %v242
      %v3709 = vpop.f32.mrf.mxu0
      %v3710 = vadd.f32 0.0, %v3709
      %3711 = vdwg.mxu0
      %3712 = vmatpush.msra.mxu0 0.0
      %3713 = vmatpush.msra.mxu0 0.0
      %3714 = vmatpush.msra.mxu0 0.0
      %3715 = vmatpush.msra.mxu0 0.0
      %3716 = vmatpush.msra.mxu0 0.0
      %3717 = vmatpush.msra.mxu0 0.0
      %3718 = vmatpush.msra.mxu0 0.0
      %3719 = vmatpush.msra.mxu0 0.0
      %3720 = vmatpush.msra.mxu0 0.0
      %3721 = vmatpush.msra.mxu0 0.0
      %3722 = vmatpush.msra.mxu0 0.0
      %3723 = vmatpush.msra.mxu0 0.0
      %3724 = vmatpush.msra.mxu0 0.0
      %3725 = vmatpush.msra.mxu0 0.0
      %3726 = vmatpush.msra.mxu0 %v3137
      %3727 = vmatpush.msra.mxu0 %v3024
      %3728 = vmatmul.f32.gmra.mxu0 %v239
      %v3729 = vpop.f32.mrf.mxu0
      %v3730 = vadd.f32 0.0, %v3729
      %3731 = vmatmul.f32.gmra.mxu0 %v242
      %v3732 = vpop.f32.mrf.mxu0
      %v3733 = vadd.f32 0.0, %v3732
      %3734 = vdwg.mxu0
      %3735 = vmatpush.msra.mxu0 0.0
      %3736 = vmatpush.msra.mxu0 0.0
      %3737 = vmatpush.msra.mxu0 0.0
      %3738 = vmatpush.msra.mxu0 0.0
      %3739 = vmatpush.msra.mxu0 0.0
      %3740 = vmatpush.msra.mxu0 0.0
      %3741 = vmatpush.msra.mxu0 0.0
      %3742 = vmatpush.msra.mxu0 0.0
      %3743 = vmatpush.msra.mxu0 0.0
      %3744 = vmatpush.msra.mxu0 0.0
      %3745 = vmatpush.msra.mxu0 0.0
      %3746 = vmatpush.msra.mxu0 0.0
      %3747 = vmatpush.msra.mxu0 0.0
      %3748 = vmatpush.msra.mxu0 0.0
      %3749 = vmatpush.msra.mxu0 %v3140
      %3750 = vmatpush.msra.mxu0 %v3025
      %3751 = vmatmul.f32.gmra.mxu0 %v239
      %v3752 = vpop.f32.mrf.mxu0
      %v3753 = vadd.f32 0.0, %v3752
      %3754 = vmatmul.f32.gmra.mxu0 %v242
      %v3755 = vpop.f32.mrf.mxu0
      %v3756 = vadd.f32 0.0, %v3755
      %3757 = vdwg.mxu0
      %3758 = vmatpush.msra.mxu0 0.0
      %3759 = vmatpush.msra.mxu0 0.0
      %3760 = vmatpush.msra.mxu0 0.0
      %3761 = vmatpush.msra.mxu0 0.0
      %3762 = vmatpush.msra.mxu0 0.0
      %3763 = vmatpush.msra.mxu0 0.0
      %3764 = vmatpush.msra.mxu0 0.0
      %3765 = vmatpush.msra.mxu0 0.0
      %3766 = vmatpush.msra.mxu0 0.0
      %3767 = vmatpush.msra.mxu0 0.0
      %3768 = vmatpush.msra.mxu0 0.0
      %3769 = vmatpush.msra.mxu0 0.0
      %3770 = vmatpush.msra.mxu0 0.0
      %3771 = vmatpush.msra.mxu0 0.0
      %3772 = vmatpush.msra.mxu0 %v3143
      %3773 = vmatpush.msra.mxu0 %v3026
      %3774 = vmatmul.f32.gmra.mxu0 %v239
      %v3775 = vpop.f32.mrf.mxu0
      %v3776 = vadd.f32 0.0, %v3775
      %3777 = vmatmul.f32.gmra.mxu0 %v242
      %v3778 = vpop.f32.mrf.mxu0
      %v3779 = vadd.f32 0.0, %v3778
      %3780 = vdwg.mxu0
      %3781 = vmatpush.msra.mxu0 0.0
      %3782 = vmatpush.msra.mxu0 0.0
      %3783 = vmatpush.msra.mxu0 0.0
      %3784 = vmatpush.msra.mxu0 0.0
      %3785 = vmatpush.msra.mxu0 0.0
      %3786 = vmatpush.msra.mxu0 0.0
      %3787 = vmatpush.msra.mxu0 0.0
      %3788 = vmatpush.msra.mxu0 0.0
      %3789 = vmatpush.msra.mxu0 0.0
      %3790 = vmatpush.msra.mxu0 0.0
      %3791 = vmatpush.msra.mxu0 0.0
      %3792 = vmatpush.msra.mxu0 0.0
      %3793 = vmatpush.msra.mxu0 0.0
      %3794 = vmatpush.msra.mxu0 0.0
      %3795 = vmatpush.msra.mxu0 %v3146
      %3796 = vmatpush.msra.mxu0 %v3027
      %3797 = vmatmul.f32.gmra.mxu0 %v239
      %v3798 = vpop.f32.mrf.mxu0
      %v3799 = vadd.f32 0.0, %v3798
      %3800 = vmatmul.f32.gmra.mxu0 %v242
      %v3801 = vpop.f32.mrf.mxu0
      %v3802 = vadd.f32 0.0, %v3801
      %3803 = vdwg.mxu0
      %3804 = vmatpush.msra.mxu0 0.0
      %3805 = vmatpush.msra.mxu0 0.0
      %3806 = vmatpush.msra.mxu0 0.0
      %3807 = vmatpush.msra.mxu0 0.0
      %3808 = vmatpush.msra.mxu0 0.0
      %3809 = vmatpush.msra.mxu0 0.0
      %3810 = vmatpush.msra.mxu0 0.0
      %3811 = vmatpush.msra.mxu0 0.0
      %3812 = vmatpush.msra.mxu0 0.0
      %3813 = vmatpush.msra.mxu0 0.0
      %3814 = vmatpush.msra.mxu0 0.0
      %3815 = vmatpush.msra.mxu0 0.0
      %3816 = vmatpush.msra.mxu0 0.0
      %3817 = vmatpush.msra.mxu0 0.0
      %3818 = vmatpush.msra.mxu0 %v3149
      %3819 = vmatpush.msra.mxu0 %v3028
      %3820 = vmatmul.f32.gmra.mxu0 %v239
      %v3821 = vpop.f32.mrf.mxu0
      %v3822 = vadd.f32 0.0, %v3821
      %3823 = vmatmul.f32.gmra.mxu0 %v242
      %v3824 = vpop.f32.mrf.mxu0
      %v3825 = vadd.f32 0.0, %v3824
      %3826 = vdwg.mxu0
      %3827 = vmatpush.msra.mxu0 0.0
      %3828 = vmatpush.msra.mxu0 0.0
      %3829 = vmatpush.msra.mxu0 0.0
      %3830 = vmatpush.msra.mxu0 0.0
      %3831 = vmatpush.msra.mxu0 0.0
      %3832 = vmatpush.msra.mxu0 0.0
      %3833 = vmatpush.msra.mxu0 0.0
      %3834 = vmatpush.msra.mxu0 0.0
      %3835 = vmatpush.msra.mxu0 0.0
      %3836 = vmatpush.msra.mxu0 0.0
      %3837 = vmatpush.msra.mxu0 0.0
      %3838 = vmatpush.msra.mxu0 0.0
      %3839 = vmatpush.msra.mxu0 0.0
      %3840 = vmatpush.msra.mxu0 0.0
      %3841 = vmatpush.msra.mxu0 %v3152
      %3842 = vmatpush.msra.mxu0 %v3029
      %3843 = vmatmul.f32.gmra.mxu0 %v239
      %v3844 = vpop.f32.mrf.mxu0
      %v3845 = vadd.f32 0.0, %v3844
      %3846 = vmatmul.f32.gmra.mxu0 %v242
      %v3847 = vpop.f32.mrf.mxu0
      %v3848 = vadd.f32 0.0, %v3847
      %3849 = vdwg.mxu0
      %3850 = vmatpush.msra.mxu0 0.0
      %3851 = vmatpush.msra.mxu0 0.0
      %3852 = vmatpush.msra.mxu0 0.0
      %3853 = vmatpush.msra.mxu0 0.0
      %3854 = vmatpush.msra.mxu0 0.0
      %3855 = vmatpush.msra.mxu0 0.0
      %3856 = vmatpush.msra.mxu0 0.0
      %3857 = vmatpush.msra.mxu0 0.0
      %3858 = vmatpush.msra.mxu0 0.0
      %3859 = vmatpush.msra.mxu0 0.0
      %3860 = vmatpush.msra.mxu0 0.0
      %3861 = vmatpush.msra.mxu0 0.0
      %3862 = vmatpush.msra.mxu0 0.0
      %3863 = vmatpush.msra.mxu0 0.0
      %3864 = vmatpush.msra.mxu0 %v3155
      %3865 = vmatpush.msra.mxu0 %v3030
      %3866 = vmatmul.f32.gmra.mxu0 %v239
      %v3867 = vpop.f32.mrf.mxu0
      %v3868 = vadd.f32 0.0, %v3867
      %3869 = vmatmul.f32.gmra.mxu0 %v242
      %v3870 = vpop.f32.mrf.mxu0
      %v3871 = vadd.f32 0.0, %v3870
      %3872 = vdwg.mxu0
      %3873 = vmatpush.msra.mxu0 0.0
      %3874 = vmatpush.msra.mxu0 0.0
      %3875 = vmatpush.msra.mxu0 0.0
      %3876 = vmatpush.msra.mxu0 0.0
      %3877 = vmatpush.msra.mxu0 0.0
      %3878 = vmatpush.msra.mxu0 0.0
      %3879 = vmatpush.msra.mxu0 0.0
      %3880 = vmatpush.msra.mxu0 0.0
      %3881 = vmatpush.msra.mxu0 0.0
      %3882 = vmatpush.msra.mxu0 0.0
      %3883 = vmatpush.msra.mxu0 0.0
      %3884 = vmatpush.msra.mxu0 0.0
      %3885 = vmatpush.msra.mxu0 0.0
      %3886 = vmatpush.msra.mxu0 0.0
      %3887 = vmatpush.msra.mxu0 %v3158
      %3888 = vmatpush.msra.mxu0 %v3031
      %3889 = vmatmul.f32.gmra.mxu0 %v239
      %v3890 = vpop.f32.mrf.mxu0
      %v3891 = vadd.f32 0.0, %v3890
      %3892 = vmatmul.f32.gmra.mxu0 %v242
      %v3893 = vpop.f32.mrf.mxu0
      %v3894 = vadd.f32 0.0, %v3893
      %3895 = vdwg.mxu0
      %v3896 = vmax.f32 %v2935, %v3178
      %v3897 = vmax.f32 %v2936, %v3201
      %v3898 = vmax.f32 %v2937, %v3224
      %v3899 = vmax.f32 %v2938, %v3247
      %v3900 = vmax.f32 %v2939, %v3270
      %v3901 = vmax.f32 %v2940, %v3293
      %v3902 = vmax.f32 %v2941, %v3316
      %v3903 = vmax.f32 %v2942, %v3339
      %v3904 = vmax.f32 %v2943, %v3362
      %v3905 = vmax.f32 %v2944, %v3385
      %v3906 = vmax.f32 %v2945, %v3408
      %v3907 = vmax.f32 %v2946, %v3431
      %v3908 = vmax.f32 %v2947, %v3454
      %v3909 = vmax.f32 %v2948, %v3477
      %v3910 = vmax.f32 %v2949, %v3500
      %v3911 = vmax.f32 %v2950, %v3523
      %v3912 = vmax.f32 %v2951, %v3546
      %v3913 = vmax.f32 %v2952, %v3569
      %v3914 = vmax.f32 %v2953, %v3592
      %v3915 = vmax.f32 %v2954, %v3615
      %v3916 = vmax.f32 %v2955, %v3638
      %v3917 = vmax.f32 %v2956, %v3661
      %v3918 = vmax.f32 %v2957, %v3684
      %v3919 = vmax.f32 %v2958, %v3707
      %v3920 = vmax.f32 %v2959, %v3730
      %v3921 = vmax.f32 %v2960, %v3753
      %v3922 = vmax.f32 %v2961, %v3776
      %v3923 = vmax.f32 %v2962, %v3799
      %v3924 = vmax.f32 %v2963, %v3822
      %v3925 = vmax.f32 %v2964, %v3845
      %v3926 = vmax.f32 %v2965, %v3868
      %v3927 = vmax.f32 %v2966, %v3891
      %v3928 = vmax.f32 %v2967, %v3181
      %v3929 = vmax.f32 %v2968, %v3204
      %v3930 = vmax.f32 %v2969, %v3227
      %v3931 = vmax.f32 %v2970, %v3250
      %v3932 = vmax.f32 %v2971, %v3273
      %v3933 = vmax.f32 %v2972, %v3296
      %v3934 = vmax.f32 %v2973, %v3319
      %v3935 = vmax.f32 %v2974, %v3342
      %v3936 = vmax.f32 %v2975, %v3365
      %v3937 = vmax.f32 %v2976, %v3388
      %v3938 = vmax.f32 %v2977, %v3411
      %v3939 = vmax.f32 %v2978, %v3434
      %v3940 = vmax.f32 %v2979, %v3457
      %v3941 = vmax.f32 %v2980, %v3480
      %v3942 = vmax.f32 %v2981, %v3503
      %v3943 = vmax.f32 %v2982, %v3526
      %v3944 = vmax.f32 %v2983, %v3549
      %v3945 = vmax.f32 %v2984, %v3572
      %v3946 = vmax.f32 %v2985, %v3595
      %v3947 = vmax.f32 %v2986, %v3618
      %v3948 = vmax.f32 %v2987, %v3641
      %v3949 = vmax.f32 %v2988, %v3664
      %v3950 = vmax.f32 %v2989, %v3687
      %v3951 = vmax.f32 %v2990, %v3710
      %v3952 = vmax.f32 %v2991, %v3733
      %v3953 = vmax.f32 %v2992, %v3756
      %v3954 = vmax.f32 %v2993, %v3779
      %v3955 = vmax.f32 %v2994, %v3802
      %v3956 = vmax.f32 %v2995, %v3825
      %v3957 = vmax.f32 %v2996, %v3848
      %v3958 = vmax.f32 %v2997, %v3871
      %v3959 = vmax.f32 %v2998, %v3894
      %v3960 = vld [vmem:[%s2] sm:$0xff]
      %v3961 = vld [vmem:[%s2 + $0x8] sm:$0xff]
      %3963 = vset.pattern.permute.xlu0 0
      %3964 = vperm.xlu0 %3963, %v3960
      %v3965 = vpop.permute.xlu0 %3964
      %3968 = vset.pattern.permute.xlu0 0
      %3969 = vperm.xlu0 %3968, %v3961
      %v3970 = vpop.permute.xlu0 %3969
      %v3972 = vadd.f32 %v3896, %v3965
      %v3973 = vadd.f32 %v3897, %v3965
      %v3974 = vadd.f32 %v3898, %v3965
      %v3975 = vadd.f32 %v3899, %v3965
      %v3976 = vadd.f32 %v3900, %v3965
      %v3977 = vadd.f32 %v3901, %v3965
      %v3978 = vadd.f32 %v3902, %v3965
      %v3979 = vadd.f32 %v3903, %v3965
      %v3980 = vadd.f32 %v3904, %v3965
      %v3981 = vadd.f32 %v3905, %v3965
      %v3982 = vadd.f32 %v3906, %v3965
      %v3983 = vadd.f32 %v3907, %v3965
      %v3984 = vadd.f32 %v3908, %v3965
      %v3985 = vadd.f32 %v3909, %v3965
      %v3986 = vadd.f32 %v3910, %v3965
      %v3987 = vadd.f32 %v3911, %v3965
      %v3988 = vadd.f32 %v3912, %v3965
      %v3989 = vadd.f32 %v3913, %v3965
      %v3990 = vadd.f32 %v3914, %v3965
      %v3991 = vadd.f32 %v3915, %v3965
      %v3992 = vadd.f32 %v3916, %v3965
      %v3993 = vadd.f32 %v3917, %v3965
      %v3994 = vadd.f32 %v3918, %v3965
      %v3995 = vadd.f32 %v3919, %v3965
      %v3996 = vadd.f32 %v3920, %v3965
      %v3997 = vadd.f32 %v3921, %v3965
      %v3998 = vadd.f32 %v3922, %v3965
      %v3999 = vadd.f32 %v3923, %v3965
      %v4000 = vadd.f32 %v3924, %v3965
      %v4001 = vadd.f32 %v3925, %v3965
      %v4002 = vadd.f32 %v3926, %v3965
      %v4003 = vadd.f32 %v3927, %v3965
      %v4004 = vadd.f32 %v3928, %v3970
      %v4005 = vadd.f32 %v3929, %v3970
      %v4006 = vadd.f32 %v3930, %v3970
      %v4007 = vadd.f32 %v3931, %v3970
      %v4008 = vadd.f32 %v3932, %v3970
      %v4009 = vadd.f32 %v3933, %v3970
      %v4010 = vadd.f32 %v3934, %v3970
      %v4011 = vadd.f32 %v3935, %v3970
      %v4012 = vadd.f32 %v3936, %v3970
      %v4013 = vadd.f32 %v3937, %v3970
      %v4014 = vadd.f32 %v3938, %v3970
      %v4015 = vadd.f32 %v3939, %v3970
      %v4016 = vadd.f32 %v3940, %v3970
      %v4017 = vadd.f32 %v3941, %v3970
      %v4018 = vadd.f32 %v3942, %v3970
      %v4019 = vadd.f32 %v3943, %v3970
      %v4020 = vadd.f32 %v3944, %v3970
      %v4021 = vadd.f32 %v3945, %v3970
      %v4022 = vadd.f32 %v3946, %v3970
      %v4023 = vadd.f32 %v3947, %v3970
      %v4024 = vadd.f32 %v3948, %v3970
      %v4025 = vadd.f32 %v3949, %v3970
      %v4026 = vadd.f32 %v3950, %v3970
      %v4027 = vadd.f32 %v3951, %v3970
      %v4028 = vadd.f32 %v3952, %v3970
      %v4029 = vadd.f32 %v3953, %v3970
      %v4030 = vadd.f32 %v3954, %v3970
      %v4031 = vadd.f32 %v3955, %v3970
      %v4032 = vadd.f32 %v3956, %v3970
      %v4033 = vadd.f32 %v3957, %v3970
      %v4034 = vadd.f32 %v3958, %v3970
      %v4035 = vadd.f32 %v3959, %v3970
      %v4036 = vmax.f32 %v3972, 0.0
      %v4037 = vmax.f32 %v3973, 0.0
      %v4038 = vmax.f32 %v3974, 0.0
      %v4039 = vmax.f32 %v3975, 0.0
      %v4040 = vmax.f32 %v3976, 0.0
      %v4041 = vmax.f32 %v3977, 0.0
      %v4042 = vmax.f32 %v3978, 0.0
      %v4043 = vmax.f32 %v3979, 0.0
      %v4044 = vmax.f32 %v3980, 0.0
      %v4045 = vmax.f32 %v3981, 0.0
      %v4046 = vmax.f32 %v3982, 0.0
      %v4047 = vmax.f32 %v3983, 0.0
      %v4048 = vmax.f32 %v3984, 0.0
      %v4049 = vmax.f32 %v3985, 0.0
      %v4050 = vmax.f32 %v3986, 0.0
      %v4051 = vmax.f32 %v3987, 0.0
      %v4052 = vmax.f32 %v3988, 0.0
      %v4053 = vmax.f32 %v3989, 0.0
      %v4054 = vmax.f32 %v3990, 0.0
      %v4055 = vmax.f32 %v3991, 0.0
      %v4056 = vmax.f32 %v3992, 0.0
      %v4057 = vmax.f32 %v3993, 0.0
      %v4058 = vmax.f32 %v3994, 0.0
      %v4059 = vmax.f32 %v3995, 0.0
      %v4060 = vmax.f32 %v3996, 0.0
      %v4061 = vmax.f32 %v3997, 0.0
      %v4062 = vmax.f32 %v3998, 0.0
      %v4063 = vmax.f32 %v3999, 0.0
      %v4064 = vmax.f32 %v4000, 0.0
      %v4065 = vmax.f32 %v4001, 0.0
      %v4066 = vmax.f32 %v4002, 0.0
      %v4067 = vmax.f32 %v4003, 0.0
      %v4068 = vmax.f32 %v4004, 0.0
      %v4069 = vmax.f32 %v4005, 0.0
      %v4070 = vmax.f32 %v4006, 0.0
      %v4071 = vmax.f32 %v4007, 0.0
      %v4072 = vmax.f32 %v4008, 0.0
      %v4073 = vmax.f32 %v4009, 0.0
      %v4074 = vmax.f32 %v4010, 0.0
      %v4075 = vmax.f32 %v4011, 0.0
      %v4076 = vmax.f32 %v4012, 0.0
      %v4077 = vmax.f32 %v4013, 0.0
      %v4078 = vmax.f32 %v4014, 0.0
      %v4079 = vmax.f32 %v4015, 0.0
      %v4080 = vmax.f32 %v4016, 0.0
      %v4081 = vmax.f32 %v4017, 0.0
      %v4082 = vmax.f32 %v4018, 0.0
      %v4083 = vmax.f32 %v4019, 0.0
      %v4084 = vmax.f32 %v4020, 0.0
      %v4085 = vmax.f32 %v4021, 0.0
      %v4086 = vmax.f32 %v4022, 0.0
      %v4087 = vmax.f32 %v4023, 0.0
      %v4088 = vmax.f32 %v4024, 0.0
      %v4089 = vmax.f32 %v4025, 0.0
      %v4090 = vmax.f32 %v4026, 0.0
      %v4091 = vmax.f32 %v4027, 0.0
      %v4092 = vmax.f32 %v4028, 0.0
      %v4093 = vmax.f32 %v4029, 0.0
      %v4094 = vmax.f32 %v4030, 0.0
      %v4095 = vmax.f32 %v4031, 0.0
      %v4096 = vmax.f32 %v4032, 0.0
      %v4097 = vmax.f32 %v4033, 0.0
      %v4098 = vmax.f32 %v4034, 0.0
      %v4099 = vmax.f32 %v4035, 0.0
      %4100 = vst [vmem:[%s170] sm:$0xff] %v4036
      %4101 = vst [vmem:[%s170 + $0x8] sm:$0xff] %v4037
      %4102 = vst [vmem:[%s170 + $0x10] sm:$0xff] %v4038
      %4103 = vst [vmem:[%s170 + $0x18] sm:$0xff] %v4039
      %4104 = vst [vmem:[%s170 + $0x20] sm:$0xff] %v4040
      %4105 = vst [vmem:[%s170 + $0x28] sm:$0xff] %v4041
      %4106 = vst [vmem:[%s170 + $0x30] sm:$0xff] %v4042
      %4107 = vst [vmem:[%s170 + $0x38] sm:$0xff] %v4043
      %4108 = vst [vmem:[%s170 + $0x40] sm:$0xff] %v4044
      %4109 = vst [vmem:[%s170 + $0x48] sm:$0xff] %v4045
      %4110 = vst [vmem:[%s170 + $0x50] sm:$0xff] %v4046
      %4111 = vst [vmem:[%s170 + $0x58] sm:$0xff] %v4047
      %4112 = vst [vmem:[%s170 + $0x60] sm:$0xff] %v4048
      %4113 = vst [vmem:[%s170 + $0x68] sm:$0xff] %v4049
      %4114 = vst [vmem:[%s170 + $0x70] sm:$0xff] %v4050
      %4115 = vst [vmem:[%s170 + $0x78] sm:$0xff] %v4051
      %4116 = vst [vmem:[%s170 + $0x80] sm:$0xff] %v4052
      %4117 = vst [vmem:[%s170 + $0x88] sm:$0xff] %v4053
      %4118 = vst [vmem:[%s170 + $0x90] sm:$0xff] %v4054
      %4119 = vst [vmem:[%s170 + $0x98] sm:$0xff] %v4055
      %4120 = vst [vmem:[%s170 + $0xa0] sm:$0xff] %v4056
      %4121 = vst [vmem:[%s170 + $0xa8] sm:$0xff] %v4057
      %4122 = vst [vmem:[%s170 + $0xb0] sm:$0xff] %v4058
      %4123 = vst [vmem:[%s170 + $0xb8] sm:$0xff] %v4059
      %4124 = vst [vmem:[%s170 + $0xc0] sm:$0xff] %v4060
      %4125 = vst [vmem:[%s170 + $0xc8] sm:$0xff] %v4061
      %4126 = vst [vmem:[%s170 + $0xd0] sm:$0xff] %v4062
      %4127 = vst [vmem:[%s170 + $0xd8] sm:$0xff] %v4063
      %4128 = vst [vmem:[%s170 + $0xe0] sm:$0xff] %v4064
      %4129 = vst [vmem:[%s170 + $0xe8] sm:$0xff] %v4065
      %4130 = vst [vmem:[%s170 + $0xf0] sm:$0xff] %v4066
      %4131 = vst [vmem:[%s170 + $0xf8] sm:$0xff] %v4067
      %4132 = vst [vmem:[%s170 + $0x100] sm:$0xff] %v4068
      %4133 = vst [vmem:[%s170 + $0x108] sm:$0xff] %v4069
      %4134 = vst [vmem:[%s170 + $0x110] sm:$0xff] %v4070
      %4135 = vst [vmem:[%s170 + $0x118] sm:$0xff] %v4071
      %4136 = vst [vmem:[%s170 + $0x120] sm:$0xff] %v4072
      %4137 = vst [vmem:[%s170 + $0x128] sm:$0xff] %v4073
      %4138 = vst [vmem:[%s170 + $0x130] sm:$0xff] %v4074
      %4139 = vst [vmem:[%s170 + $0x138] sm:$0xff] %v4075
      %4140 = vst [vmem:[%s170 + $0x140] sm:$0xff] %v4076
      %4141 = vst [vmem:[%s170 + $0x148] sm:$0xff] %v4077
      %4142 = vst [vmem:[%s170 + $0x150] sm:$0xff] %v4078
      %4143 = vst [vmem:[%s170 + $0x158] sm:$0xff] %v4079
      %4144 = vst [vmem:[%s170 + $0x160] sm:$0xff] %v4080
      %4145 = vst [vmem:[%s170 + $0x168] sm:$0xff] %v4081
      %4146 = vst [vmem:[%s170 + $0x170] sm:$0xff] %v4082
      %4147 = vst [vmem:[%s170 + $0x178] sm:$0xff] %v4083
      %4148 = vst [vmem:[%s170 + $0x180] sm:$0xff] %v4084
      %4149 = vst [vmem:[%s170 + $0x188] sm:$0xff] %v4085
      %4150 = vst [vmem:[%s170 + $0x190] sm:$0xff] %v4086
      %4151 = vst [vmem:[%s170 + $0x198] sm:$0xff] %v4087
      %4152 = vst [vmem:[%s170 + $0x1a0] sm:$0xff] %v4088
      %4153 = vst [vmem:[%s170 + $0x1a8] sm:$0xff] %v4089
      %4154 = vst [vmem:[%s170 + $0x1b0] sm:$0xff] %v4090
      %4155 = vst [vmem:[%s170 + $0x1b8] sm:$0xff] %v4091
      %4156 = vst [vmem:[%s170 + $0x1c0] sm:$0xff] %v4092
      %4157 = vst [vmem:[%s170 + $0x1c8] sm:$0xff] %v4093
      %4158 = vst [vmem:[%s170 + $0x1d0] sm:$0xff] %v4094
      %4159 = vst [vmem:[%s170 + $0x1d8] sm:$0xff] %v4095
      %4160 = vst [vmem:[%s170 + $0x1e0] sm:$0xff] %v4096
      %4161 = vst [vmem:[%s170 + $0x1e8] sm:$0xff] %v4097
      %4162 = vst [vmem:[%s170 + $0x1f0] sm:$0xff] %v4098
      %4163 = vst [vmem:[%s170 + $0x1f8] sm:$0xff] %v4099
      %p4164 = scmp.lt.s32.totalorder %s14, 1
      %s4165 = scalar_select %p4164, %s14, 1
      %s4166 = smul.addr %s4165, 64
      %s4167 = smul.addr %s4166, 8
      %s4168 = scalar_lea.vmem %s3, %s4167
      // Predicated region
      $region33: #{simple_cnn_forward.3} parent=31 // pred_check
        %p4169 = pneg %p100
      $region34: #{simple_cnn_forward.3} parent=31 // pred_check_branch
        %4171 = sbr.rel (%p4169) target = $region36
      $region35: #{simple_cnn_forward.3} parent=31 // pred_region
        _
      $region36: #{simple_cnn_forward.3} parent=31 // pred_fallthru
        _
    $region32: #{simple_cnn_forward.3} parent=5 // pred_fallthru
      _
    %p4172 = scmp.le.s32.totalorder 2, %s9
    // Predicated region
    $region37: #{simple_cnn_forward.3} parent=5 // pred_check
      %p4173 = pneg %p4172
    $region38: #{simple_cnn_forward.3} parent=5 // pred_check_branch
      %4175 = sbr.rel (%p4173) target = $region40
    $region39: #{simple_cnn_forward.3} parent=5 // pred_region
      %s4176 = ssub.s32 %s9, 2
      // Predicated region
      $region41: #{simple_cnn_forward.3} parent=39 // pred_check
        %p4177 = pneg %p106
      $region42: #{simple_cnn_forward.3} parent=39 // pred_check_branch
        %4179 = sbr.rel (%p4177) target = $region44
      $region43: #{simple_cnn_forward.3} parent=39 // pred_region
        %p4180 = scmp.lt.s32.totalorder %s15, 1
        %s4181 = scalar_select %p4180, %s15, 1
        %s4182 = smul.addr %s4181, 64
        %s4183 = smul.addr %s4182, 8
        %s4184 = scalar_lea.vmem %s3, %s4183
      $region44: #{simple_cnn_forward.3} parent=39 // pred_fallthru
        _
    $region40: #{simple_cnn_forward.3} parent=5 // pred_fallthru
      _
  $region6: #{simple_cnn_forward.3} parent=0 // loop_footer
    %s13 = sadd.s32 1, %s9
  $region7: #{simple_cnn_forward.3} parent=0 // loop_footer_branch
    %8 = sbr.rel target = $region3
  $region8: #{simple_cnn_forward.3} parent=0 // loop_exit
    _

// kernel: simple_cnn_forward.4
$region0: #{simple_cnn_forward.4}
  #allocation0 [shape = 'u32[]', space=smem, size = 0x4, offset = 0x4, fixed_abs, tag = 'smem constant byte address 0x4 - core index']
  #allocation1 [shape = 'u32[72,128]{1,0:T(1,128)}', space=vmem, size = 0x9000, scoped, tag = 'internal scratch']
  %s0 = inlined_call_operand.vmem [shape: f32[2,4,144,1024], index: 0, kind: input, shape index: {}]
  %s1 = inlined_call_operand.vmem [shape: f32[32,144], index: 1, kind: input, shape index: {}]
  %s2 = inlined_call_operand.vmem [shape: f32[32,1], index: 2, kind: input, shape index: {}]
  %s3 = inlined_call_operand.vmem [shape: f32[2,32,1024], index: 3, kind: output, shape index: {}]
  %s4 = sld [smem:[#allocation0]]
  $region45: #{simple_cnn_forward.4} parent=0
    _
  %s6 = ssub.s32 1, %s4
  %s7 = scalar_select 0, %s6, %s4
  loop: start=0, step=1, limit=4
  $region2: #{simple_cnn_forward.4} parent=0 // loop_pre_header
    _
  $region3: #{simple_cnn_forward.4} parent=0 // loop_header
    %s9 = sphi 0, %s13
    %p10 = scmp.ge.s32.totalorder %s9, 4
    %s19 = sphi 0, %s21
    %s22 = sphi 0, %s19
    %s23 = sphi 0, %s22
    %s39 = sphi 0, %s23
    %s43 = sphi 0, %s43
    %s45 = sphi 0, %s43
    %s46 = sphi 0, %s45
    %s60 = sphi 0, %s46
    %s64 = sphi 0, %s64
    %s66 = sphi 0, %s64
    %s67 = sphi 0, %s66
    %s81 = sphi 0, %s67
    %s87 = sphi 0, %s89
    %s90 = sphi 0, %s87
    %s91 = sphi 0, %s90
    %s107 = sphi 0, %s91
  $region4: #{simple_cnn_forward.4} parent=0 // loop_header_branch
    %12 = sbr.rel (%p10) target = $region8
  $region5: #{simple_cnn_forward.4} parent=0 // loop_body
    %s14 = ssub.s32 %s9, 1
    %s15 = ssub.s32 %s9, 2
    %s16 = sadd.s32 %s9, 1
    %s17 = ssub.s32 %s9, %s16
    %p18 = scmp.eq.s32.totalorder %s17, 0
    %s20 = sadd.s32 %s19, 1
    %s21 = scalar_select %p18, %s19, %s20
    %p24 = pneg %p18
    %p25 = scmp.eq.s32.totalorder %s9, 1
    %p26 = por %p24, %p25
    %p27 = scmp.ne.s32.totalorder %s19, %s22
    %p28 = scmp.eq.s32.totalorder %s9, 0
    %p29 = por %p27, %p28
    %p30 = scmp.ne.s32.totalorder %s19, %s22
    %p31 = scmp.eq.s32.totalorder %s14, 1
    %p32 = por %p30, %p31
    %p33 = scmp.ne.s32.totalorder %s22, %s23
    %p34 = scmp.eq.s32.totalorder %s14, 0
    %p35 = por %p33, %p34
    %p36 = scmp.ne.s32.totalorder %s22, %s23
    %p37 = scmp.eq.s32.totalorder %s15, 1
    %p38 = por %p36, %p37
    %p40 = scmp.ne.s32.totalorder %s23, %s39
    %p41 = scmp.eq.s32.totalorder %s15, 0
    %p42 = por %p40, %p41
    %s44 = sadd.s32 %s43, 1
    %p47 = scmp.eq.s32.totalorder %s9, 1
    %p48 = scmp.ne.s32.totalorder %s43, %s45
    %p49 = scmp.eq.s32.totalorder %s9, 0
    %p50 = por %p48, %p49
    %p51 = scmp.ne.s32.totalorder %s43, %s45
    %p52 = scmp.eq.s32.totalorder %s14, 1
    %p53 = por %p51, %p52
    %p54 = scmp.ne.s32.totalorder %s45, %s46
    %p55 = scmp.eq.s32.totalorder %s14, 0
    %p56 = por %p54, %p55
    %p57 = scmp.ne.s32.totalorder %s45, %s46
    %p58 = scmp.eq.s32.totalorder %s15, 1
    %p59 = por %p57, %p58
    %p61 = scmp.ne.s32.totalorder %s46, %s60
    %p62 = scmp.eq.s32.totalorder %s15, 0
    %p63 = por %p61, %p62
    %s65 = sadd.s32 %s64, 1
    %p68 = scmp.eq.s32.totalorder %s9, 1
    %p69 = scmp.ne.s32.totalorder %s64, %s66
    %p70 = scmp.eq.s32.totalorder %s9, 0
    %p71 = por %p69, %p70
    %p72 = scmp.ne.s32.totalorder %s64, %s66
    %p73 = scmp.eq.s32.totalorder %s14, 1
    %p74 = por %p72, %p73
    %p75 = scmp.ne.s32.totalorder %s66, %s67
    %p76 = scmp.eq.s32.totalorder %s14, 0
    %p77 = por %p75, %p76
    %p78 = scmp.ne.s32.totalorder %s66, %s67
    %p79 = scmp.eq.s32.totalorder %s15, 1
    %p80 = por %p78, %p79
    %p82 = scmp.ne.s32.totalorder %s67, %s81
    %p83 = scmp.eq.s32.totalorder %s15, 0
    %p84 = por %p82, %p83
    %s85 = ssub.s32 %s9, %s16
    %p86 = scmp.eq.s32.totalorder %s85, 0
    %s88 = sadd.s32 %s87, 1
    %s89 = scalar_select %p86, %s87, %s88
    %p92 = pneg %p86
    %p93 = scmp.eq.s32.totalorder %s9, 1
    %p94 = por %p92, %p93
    %p95 = scmp.ne.s32.totalorder %s87, %s90
    %p96 = scmp.eq.s32.totalorder %s9, 0
    %p97 = por %p95, %p96
    %p98 = scmp.ne.s32.totalorder %s87, %s90
    %p99 = scmp.eq.s32.totalorder %s14, 1
    %p100 = por %p98, %p99
    %p101 = scmp.ne.s32.totalorder %s90, %s91
    %p102 = scmp.eq.s32.totalorder %s14, 0
    %p103 = por %p101, %p102
    %p104 = scmp.ne.s32.totalorder %s90, %s91
    %p105 = scmp.eq.s32.totalorder %s15, 1
    %p106 = por %p104, %p105
    %p108 = scmp.ne.s32.totalorder %s91, %s107
    %p109 = scmp.eq.s32.totalorder %s15, 0
    %p110 = por %p108, %p109
    %p111 = scmp.le.s32.totalorder 1, %s9
    %p112 = scmp.lt.s32.totalorder %s9, 3
    %p113 = pnand %p111, %p112
    %p114 = pneg %p113
    // Predicated region
    $region9: #{simple_cnn_forward.4} parent=5 // pred_check
      _
    $region10: #{simple_cnn_forward.4} parent=5 // pred_check_branch
      %116 = sbr.rel (%p113) target = $region12
    $region11: #{simple_cnn_forward.4} parent=5 // pred_region
      %s117 = ssub.s32 %s9, 1
      // Predicated region
      $region13: #{simple_cnn_forward.4} parent=11 // pred_check
        %p118 = pneg %p56
      $region14: #{simple_cnn_forward.4} parent=11 // pred_check_branch
        %120 = sbr.rel (%p118) target = $region16
      $region15: #{simple_cnn_forward.4} parent=11 // pred_region
        _
      $region16: #{simple_cnn_forward.4} parent=11 // pred_fallthru
        _
      // Predicated region
      $region17: #{simple_cnn_forward.4} parent=11 // pred_check
        %p121 = pneg %p77
      $region18: #{simple_cnn_forward.4} parent=11 // pred_check_branch
        %123 = sbr.rel (%p121) target = $region20
      $region19: #{simple_cnn_forward.4} parent=11 // pred_region
        _
      $region20: #{simple_cnn_forward.4} parent=11 // pred_fallthru
        _
    $region12: #{simple_cnn_forward.4} parent=5 // pred_fallthru
      _
    %p124 = scmp.lt.s32.totalorder %s9, 2
    // Predicated region
    $region21: #{simple_cnn_forward.4} parent=5 // pred_check
      %p125 = pneg %p124
    $region22: #{simple_cnn_forward.4} parent=5 // pred_check_branch
      %127 = sbr.rel (%p125) target = $region24
    $region23: #{simple_cnn_forward.4} parent=5 // pred_region
      // Predicated region
      $region25: #{simple_cnn_forward.4} parent=23 // pred_check
        %p128 = pneg %p29
      $region26: #{simple_cnn_forward.4} parent=23 // pred_check_branch
        %130 = sbr.rel (%p128) target = $region28
      $region27: #{simple_cnn_forward.4} parent=23 // pred_region
        %p131 = scmp.lt.s32.totalorder %s9, 1
        %s132 = scalar_select %p131, %s9, 1
        %s133 = smul.addr %s132, 576
        %s134 = smul.addr %s133, 8
        %s135 = scalar_lea.vmem %s0, %s134
      $region28: #{simple_cnn_forward.4} parent=23 // pred_fallthru
        _
    $region24: #{simple_cnn_forward.4} parent=5 // pred_fallthru
      _
    %p136 = scmp.le.s32.totalorder 1, %s9
    %p137 = scmp.lt.s32.totalorder %s9, 3
    %p138 = pnand %p136, %p137
    %p139 = pneg %p138
    // Predicated region
    $region29: #{simple_cnn_forward.4} parent=5 // pred_check
      _
    $region30: #{simple_cnn_forward.4} parent=5 // pred_check_branch
      %141 = sbr.rel (%p138) target = $region32
    $region31: #{simple_cnn_forward.4} parent=5 // pred_region
      %s142 = ssub.s32 %s9, 1
      %p143 = scmp.lt.s32.totalorder %s14, 1
      %s144 = scalar_select %p143, %s14, 1
      %s145 = smul.addr %s144, 576
      %s146 = smul.addr %s145, 8
      %s147 = scalar_lea.vmem %s0, %s146
      %p148 = pneg %p35
      %p149 = pneg %p32
      %p150 = pneg %p56
      %p151 = pneg %p53
      %p152 = pneg %p77
      %p153 = pneg %p74
      %p154 = pneg %p103
      %p155 = pneg %p100
      %p156 = scmp.lt.s32.totalorder %s14, 1
      %s157 = scalar_select %p156, %s14, 1
      %s158 = smul.addr %s157, 32
      %s159 = smul.addr %s158, 8
      %s160 = scalar_lea.vmem %s3, %s159
      %p161 = scmp.lt.s32.totalorder %s14, 1
      %s162 = scalar_select %p161, %s14, 1
      %s163 = smul.addr %s162, 576
      %s164 = smul.addr %s163, 8
      %s165 = scalar_lea.vmem %s0, %s164
      %p166 = scmp.lt.s32.totalorder %s14, 1
      %s167 = scalar_select %p166, %s14, 1
      %s168 = smul.addr %s167, 32
      %s169 = smul.addr %s168, 8
      %s170 = scalar_lea.vmem %s3, %s169
      %v171 = vld [vmem:[%s1] sm:$0xff]
      %v172 = vld [vmem:[%s1 + $0x8] sm:$0xff]
      %v173 = vld [vmem:[%s1 + $0x10] sm:$0xff]
      %v174 = vld [vmem:[%s1 + $0x18] sm:$0xff]
      %v175 = vld [vmem:[%s1 + $0x20] sm:$0xff]
      %v176 = vld [vmem:[%s1 + $0x28] sm:$0xff]
      %v177 = vld [vmem:[%s1 + $0x30] sm:$0xff]
      %v178 = vld [vmem:[%s1 + $0x38] sm:$0xff]
      %v179 = vld [vmem:[%s165] sm:$0xff]
      %v180 = vld [vmem:[%s165 + $0x8] sm:$0xff]
      %v181 = vld [vmem:[%s165 + $0x10] sm:$0xff]
      %v182 = vld [vmem:[%s165 + $0x18] sm:$0xff]
      %v183 = vld [vmem:[%s165 + $0x20] sm:$0xff]
      %v184 = vld [vmem:[%s165 + $0x28] sm:$0xff]
      %v185 = vld [vmem:[%s165 + $0x30] sm:$0xff]
      %v186 = vld [vmem:[%s165 + $0x38] sm:$0xff]
      %v187 = vld [vmem:[%s165 + $0x40] sm:$0xff]
      %v188 = vld [vmem:[%s165 + $0x48] sm:$0xff]
      %v189 = vld [vmem:[%s165 + $0x50] sm:$0xff]
      %v190 = vld [vmem:[%s165 + $0x58] sm:$0xff]
      %v191 = vld [vmem:[%s165 + $0x60] sm:$0xff]
      %v192 = vld [vmem:[%s165 + $0x68] sm:$0xff]
      %v193 = vld [vmem:[%s165 + $0x70] sm:$0xff]
      %v194 = vld [vmem:[%s165 + $0x78] sm:$0xff]
      %v195 = vld [vmem:[%s165 + $0x80] sm:$0xff]
      %v196 = vld [vmem:[%s165 + $0x88] sm:$0xff]
      %v197 = vld [vmem:[%s165 + $0x90] sm:$0xff]
      %v198 = vld [vmem:[%s165 + $0x98] sm:$0xff]
      %v199 = vld [vmem:[%s165 + $0xa0] sm:$0xff]
      %v200 = vld [vmem:[%s165 + $0xa8] sm:$0xff]
      %v201 = vld [vmem:[%s165 + $0xb0] sm:$0xff]
      %v202 = vld [vmem:[%s165 + $0xb8] sm:$0xff]
      %v203 = vld [vmem:[%s165 + $0xc0] sm:$0xff]
      %v204 = vld [vmem:[%s165 + $0xc8] sm:$0xff]
      %v205 = vld [vmem:[%s165 + $0xd0] sm:$0xff]
      %v206 = vld [vmem:[%s165 + $0xd8] sm:$0xff]
      %v207 = vld [vmem:[%s165 + $0xe0] sm:$0xff]
      %v208 = vld [vmem:[%s165 + $0xe8] sm:$0xff]
      %v209 = vld [vmem:[%s165 + $0xf0] sm:$0xff]
      %v210 = vld [vmem:[%s165 + $0xf8] sm:$0xff]
      %v211 = vld [vmem:[%s165 + $0x100] sm:$0xff]
      %v212 = vld [vmem:[%s165 + $0x108] sm:$0xff]
      %v213 = vld [vmem:[%s165 + $0x110] sm:$0xff]
      %v214 = vld [vmem:[%s165 + $0x118] sm:$0xff]
      %v215 = vld [vmem:[%s165 + $0x120] sm:$0xff]
      %v216 = vld [vmem:[%s165 + $0x128] sm:$0xff]
      %v217 = vld [vmem:[%s165 + $0x130] sm:$0xff]
      %v218 = vld [vmem:[%s165 + $0x138] sm:$0xff]
      %v219 = vld [vmem:[%s165 + $0x140] sm:$0xff]
      %v220 = vld [vmem:[%s165 + $0x148] sm:$0xff]
      %v221 = vld [vmem:[%s165 + $0x150] sm:$0xff]
      %v222 = vld [vmem:[%s165 + $0x158] sm:$0xff]
      %v223 = vld [vmem:[%s165 + $0x160] sm:$0xff]
      %v224 = vld [vmem:[%s165 + $0x168] sm:$0xff]
      %v225 = vld [vmem:[%s165 + $0x170] sm:$0xff]
      %v226 = vld [vmem:[%s165 + $0x178] sm:$0xff]
      %v227 = vld [vmem:[%s165 + $0x180] sm:$0xff]
      %v228 = vld [vmem:[%s165 + $0x188] sm:$0xff]
      %v229 = vld [vmem:[%s165 + $0x190] sm:$0xff]
      %v230 = vld [vmem:[%s165 + $0x198] sm:$0xff]
      %v231 = vld [vmem:[%s165 + $0x1a0] sm:$0xff]
      %v232 = vld [vmem:[%s165 + $0x1a8] sm:$0xff]
      %v233 = vld [vmem:[%s165 + $0x1b0] sm:$0xff]
      %v234 = vld [vmem:[%s165 + $0x1b8] sm:$0xff]
      %v235 = vld [vmem:[%s165 + $0x1c0] sm:$0xff]
      %v236 = vld [vmem:[%s165 + $0x1c8] sm:$0xff]
      %v237 = vld [vmem:[%s165 + $0x1d0] sm:$0xff]
      %v238 = vld [vmem:[%s165 + $0x1d8] sm:$0xff]
      %v239 = vld [vmem:[%s165 + $0x1e0] sm:$0xff]
      %v240 = vld [vmem:[%s165 + $0x1e8] sm:$0xff]
      %v241 = vld [vmem:[%s165 + $0x1f0] sm:$0xff]
      %v242 = vld [vmem:[%s165 + $0x1f8] sm:$0xff]
      %v243 = vld [vmem:[%s165 + $0x200] sm:$0xff]
      %v244 = vld [vmem:[%s165 + $0x208] sm:$0xff]
      %v245 = vld [vmem:[%s165 + $0x210] sm:$0xff]
      %v246 = vld [vmem:[%s165 + $0x218] sm:$0xff]
      %v247 = vld [vmem:[%s165 + $0x220] sm:$0xff]
      %v248 = vld [vmem:[%s165 + $0x228] sm:$0xff]
      %v249 = vld [vmem:[%s165 + $0x230] sm:$0xff]
      %v250 = vld [vmem:[%s165 + $0x238] sm:$0xff]
      %v251 = vld [vmem:[%s165 + $0x240] sm:$0xff]
      %v252 = vld [vmem:[%s165 + $0x248] sm:$0xff]
      %v253 = vld [vmem:[%s165 + $0x250] sm:$0xff]
      %v254 = vld [vmem:[%s165 + $0x258] sm:$0xff]
      %v255 = vld [vmem:[%s165 + $0x260] sm:$0xff]
      %v256 = vld [vmem:[%s165 + $0x268] sm:$0xff]
      %v257 = vld [vmem:[%s165 + $0x270] sm:$0xff]
      %v258 = vld [vmem:[%s165 + $0x278] sm:$0xff]
      %v259 = vld [vmem:[%s165 + $0x280] sm:$0xff]
      %v260 = vld [vmem:[%s165 + $0x288] sm:$0xff]
      %v261 = vld [vmem:[%s165 + $0x290] sm:$0xff]
      %v262 = vld [vmem:[%s165 + $0x298] sm:$0xff]
      %v263 = vld [vmem:[%s165 + $0x2a0] sm:$0xff]
      %v264 = vld [vmem:[%s165 + $0x2a8] sm:$0xff]
      %v265 = vld [vmem:[%s165 + $0x2b0] sm:$0xff]
      %v266 = vld [vmem:[%s165 + $0x2b8] sm:$0xff]
      %v267 = vld [vmem:[%s165 + $0x2c0] sm:$0xff]
      %v268 = vld [vmem:[%s165 + $0x2c8] sm:$0xff]
      %v269 = vld [vmem:[%s165 + $0x2d0] sm:$0xff]
      %v270 = vld [vmem:[%s165 + $0x2d8] sm:$0xff]
      %v271 = vld [vmem:[%s165 + $0x2e0] sm:$0xff]
      %v272 = vld [vmem:[%s165 + $0x2e8] sm:$0xff]
      %v273 = vld [vmem:[%s165 + $0x2f0] sm:$0xff]
      %v274 = vld [vmem:[%s165 + $0x2f8] sm:$0xff]
      %v275 = vld [vmem:[%s165 + $0x300] sm:$0xff]
      %v276 = vld [vmem:[%s165 + $0x308] sm:$0xff]
      %v277 = vld [vmem:[%s165 + $0x310] sm:$0xff]
      %v278 = vld [vmem:[%s165 + $0x318] sm:$0xff]
      %v279 = vld [vmem:[%s165 + $0x320] sm:$0xff]
      %v280 = vld [vmem:[%s165 + $0x328] sm:$0xff]
      %v281 = vld [vmem:[%s165 + $0x330] sm:$0xff]
      %v282 = vld [vmem:[%s165 + $0x338] sm:$0xff]
      %v283 = vld [vmem:[%s165 + $0x340] sm:$0xff]
      %v284 = vld [vmem:[%s165 + $0x348] sm:$0xff]
      %v285 = vld [vmem:[%s165 + $0x350] sm:$0xff]
      %v286 = vld [vmem:[%s165 + $0x358] sm:$0xff]
      %v287 = vld [vmem:[%s165 + $0x360] sm:$0xff]
      %v288 = vld [vmem:[%s165 + $0x368] sm:$0xff]
      %v289 = vld [vmem:[%s165 + $0x370] sm:$0xff]
      %v290 = vld [vmem:[%s165 + $0x378] sm:$0xff]
      %v291 = vld [vmem:[%s165 + $0x380] sm:$0xff]
      %v292 = vld [vmem:[%s165 + $0x388] sm:$0xff]
      %v293 = vld [vmem:[%s165 + $0x390] sm:$0xff]
      %v294 = vld [vmem:[%s165 + $0x398] sm:$0xff]
      %v295 = vld [vmem:[%s165 + $0x3a0] sm:$0xff]
      %v296 = vld [vmem:[%s165 + $0x3a8] sm:$0xff]
      %v297 = vld [vmem:[%s165 + $0x3b0] sm:$0xff]
      %v298 = vld [vmem:[%s165 + $0x3b8] sm:$0xff]
      %v299 = vld [vmem:[%s165 + $0x3c0] sm:$0xff]
      %v300 = vld [vmem:[%s165 + $0x3c8] sm:$0xff]
      %v301 = vld [vmem:[%s165 + $0x3d0] sm:$0xff]
      %v302 = vld [vmem:[%s165 + $0x3d8] sm:$0xff]
      %v303 = vld [vmem:[%s165 + $0x3e0] sm:$0xff]
      %v304 = vld [vmem:[%s165 + $0x3e8] sm:$0xff]
      %v305 = vld [vmem:[%s165 + $0x3f0] sm:$0xff]
      %v306 = vld [vmem:[%s165 + $0x3f8] sm:$0xff]
      %v307 = vld [vmem:[%s165 + $0x400] sm:$0xff]
      %v308 = vld [vmem:[%s165 + $0x408] sm:$0xff]
      %v309 = vld [vmem:[%s165 + $0x410] sm:$0xff]
      %v310 = vld [vmem:[%s165 + $0x418] sm:$0xff]
      %v311 = vld [vmem:[%s165 + $0x420] sm:$0xff]
      %v312 = vld [vmem:[%s165 + $0x428] sm:$0xff]
      %v313 = vld [vmem:[%s165 + $0x430] sm:$0xff]
      %v314 = vld [vmem:[%s165 + $0x438] sm:$0xff]
      %v315 = vld [vmem:[%s165 + $0x440] sm:$0xff]
      %v316 = vld [vmem:[%s165 + $0x448] sm:$0xff]
      %v317 = vld [vmem:[%s165 + $0x450] sm:$0xff]
      %v318 = vld [vmem:[%s165 + $0x458] sm:$0xff]
      %v319 = vld [vmem:[%s165 + $0x460] sm:$0xff]
      %v320 = vld [vmem:[%s165 + $0x468] sm:$0xff]
      %v321 = vld [vmem:[%s165 + $0x470] sm:$0xff]
      %v322 = vld [vmem:[%s165 + $0x478] sm:$0xff]
      %vm323 = vcmask 130048
      %v325 = vsel %vm323, %v172, 0
      %v328 = vsel %vm323, %v174, 0
      %v331 = vsel %vm323, %v176, 0
      %v334 = vsel %vm323, %v178, 0
      %336 = vmatpush.msra.mxu0 %v299
      %337 = vmatpush.msra.mxu0 %v291
      %338 = vmatpush.msra.mxu0 %v283
      %339 = vmatpush.msra.mxu0 %v275
      %340 = vmatpush.msra.mxu0 %v267
      %341 = vmatpush.msra.mxu0 %v259
      %342 = vmatpush.msra.mxu0 %v251
      %343 = vmatpush.msra.mxu0 %v243
      %344 = vmatpush.msra.mxu0 %v235
      %345 = vmatpush.msra.mxu0 %v227
      %346 = vmatpush.msra.mxu0 %v219
      %347 = vmatpush.msra.mxu0 %v211
      %348 = vmatpush.msra.mxu0 %v203
      %349 = vmatpush.msra.mxu0 %v195
      %350 = vmatpush.msra.mxu0 %v187
      %351 = vmatpush.msra.mxu0 %v179
      %352 = vmatmul.f32.gmra.mxu0 %v171
      %v353 = vpop.f32.mrf.mxu0
      %v354 = vadd.f32 0.0, %v353
      %355 = vmatmul.f32.gmra.mxu0 %v173
      %v356 = vpop.f32.mrf.mxu0
      %v357 = vadd.f32 0.0, %v356
      %358 = vmatmul.f32.gmra.mxu0 %v175
      %v359 = vpop.f32.mrf.mxu0
      %v360 = vadd.f32 0.0, %v359
      %361 = vmatmul.f32.gmra.mxu0 %v177
      %v362 = vpop.f32.mrf.mxu0
      %v363 = vadd.f32 0.0, %v362
      %364 = vdwg.mxu0
      %365 = vmatpush.msra.mxu0 0.0
      %366 = vmatpush.msra.mxu0 0.0
      %367 = vmatpush.msra.mxu0 0.0
      %368 = vmatpush.msra.mxu0 0.0
      %369 = vmatpush.msra.mxu0 0.0
      %370 = vmatpush.msra.mxu0 0.0
      %371 = vmatpush.msra.mxu0 0.0
      %372 = vmatpush.msra.mxu0 0.0
      %373 = vmatpush.msra.mxu0 0.0
      %374 = vmatpush.msra.mxu0 0.0
      %375 = vmatpush.msra.mxu0 0.0
      %376 = vmatpush.msra.mxu0 0.0
      %377 = vmatpush.msra.mxu0 0.0
      %378 = vmatpush.msra.mxu0 0.0
      %379 = vmatpush.msra.mxu0 %v315
      %380 = vmatpush.msra.mxu0 %v307
      %381 = vmatmul.f32.gmra.mxu0 %v325
      %v382 = vpop.f32.mrf.mxu0
      %v383 = vadd.f32 %v354, %v382
      %384 = vmatmul.f32.gmra.mxu0 %v328
      %v385 = vpop.f32.mrf.mxu0
      %v386 = vadd.f32 %v357, %v385
      %387 = vmatmul.f32.gmra.mxu0 %v331
      %v388 = vpop.f32.mrf.mxu0
      %v389 = vadd.f32 %v360, %v388
      %390 = vmatmul.f32.gmra.mxu0 %v334
      %v391 = vpop.f32.mrf.mxu0
      %v392 = vadd.f32 %v363, %v391
      %393 = vdwg.mxu0
      %394 = vmatpush.msra.mxu0 %v300
      %395 = vmatpush.msra.mxu0 %v292
      %396 = vmatpush.msra.mxu0 %v284
      %397 = vmatpush.msra.mxu0 %v276
      %398 = vmatpush.msra.mxu0 %v268
      %399 = vmatpush.msra.mxu0 %v260
      %400 = vmatpush.msra.mxu0 %v252
      %401 = vmatpush.msra.mxu0 %v244
      %402 = vmatpush.msra.mxu0 %v236
      %403 = vmatpush.msra.mxu0 %v228
      %404 = vmatpush.msra.mxu0 %v220
      %405 = vmatpush.msra.mxu0 %v212
      %406 = vmatpush.msra.mxu0 %v204
      %407 = vmatpush.msra.mxu0 %v196
      %408 = vmatpush.msra.mxu0 %v188
      %409 = vmatpush.msra.mxu0 %v180
      %410 = vmatmul.f32.gmra.mxu0 %v171
      %v411 = vpop.f32.mrf.mxu0
      %v412 = vadd.f32 0.0, %v411
      %413 = vmatmul.f32.gmra.mxu0 %v173
      %v414 = vpop.f32.mrf.mxu0
      %v415 = vadd.f32 0.0, %v414
      %416 = vmatmul.f32.gmra.mxu0 %v175
      %v417 = vpop.f32.mrf.mxu0
      %v418 = vadd.f32 0.0, %v417
      %419 = vmatmul.f32.gmra.mxu0 %v177
      %v420 = vpop.f32.mrf.mxu0
      %v421 = vadd.f32 0.0, %v420
      %422 = vdwg.mxu0
      %423 = vmatpush.msra.mxu0 0.0
      %424 = vmatpush.msra.mxu0 0.0
      %425 = vmatpush.msra.mxu0 0.0
      %426 = vmatpush.msra.mxu0 0.0
      %427 = vmatpush.msra.mxu0 0.0
      %428 = vmatpush.msra.mxu0 0.0
      %429 = vmatpush.msra.mxu0 0.0
      %430 = vmatpush.msra.mxu0 0.0
      %431 = vmatpush.msra.mxu0 0.0
      %432 = vmatpush.msra.mxu0 0.0
      %433 = vmatpush.msra.mxu0 0.0
      %434 = vmatpush.msra.mxu0 0.0
      %435 = vmatpush.msra.mxu0 0.0
      %436 = vmatpush.msra.mxu0 0.0
      %437 = vmatpush.msra.mxu0 %v316
      %438 = vmatpush.msra.mxu0 %v308
      %439 = vmatmul.f32.gmra.mxu0 %v325
      %v440 = vpop.f32.mrf.mxu0
      %v441 = vadd.f32 %v412, %v440
      %442 = vmatmul.f32.gmra.mxu0 %v328
      %v443 = vpop.f32.mrf.mxu0
      %v444 = vadd.f32 %v415, %v443
      %445 = vmatmul.f32.gmra.mxu0 %v331
      %v446 = vpop.f32.mrf.mxu0
      %v447 = vadd.f32 %v418, %v446
      %448 = vmatmul.f32.gmra.mxu0 %v334
      %v449 = vpop.f32.mrf.mxu0
      %v450 = vadd.f32 %v421, %v449
      %451 = vdwg.mxu0
      %452 = vmatpush.msra.mxu0 %v301
      %453 = vmatpush.msra.mxu0 %v293
      %454 = vmatpush.msra.mxu0 %v285
      %455 = vmatpush.msra.mxu0 %v277
      %456 = vmatpush.msra.mxu0 %v269
      %457 = vmatpush.msra.mxu0 %v261
      %458 = vmatpush.msra.mxu0 %v253
      %459 = vmatpush.msra.mxu0 %v245
      %460 = vmatpush.msra.mxu0 %v237
      %461 = vmatpush.msra.mxu0 %v229
      %462 = vmatpush.msra.mxu0 %v221
      %463 = vmatpush.msra.mxu0 %v213
      %464 = vmatpush.msra.mxu0 %v205
      %465 = vmatpush.msra.mxu0 %v197
      %466 = vmatpush.msra.mxu0 %v189
      %467 = vmatpush.msra.mxu0 %v181
      %468 = vmatmul.f32.gmra.mxu0 %v171
      %v469 = vpop.f32.mrf.mxu0
      %v470 = vadd.f32 0.0, %v469
      %471 = vmatmul.f32.gmra.mxu0 %v173
      %v472 = vpop.f32.mrf.mxu0
      %v473 = vadd.f32 0.0, %v472
      %474 = vmatmul.f32.gmra.mxu0 %v175
      %v475 = vpop.f32.mrf.mxu0
      %v476 = vadd.f32 0.0, %v475
      %477 = vmatmul.f32.gmra.mxu0 %v177
      %v478 = vpop.f32.mrf.mxu0
      %v479 = vadd.f32 0.0, %v478
      %480 = vdwg.mxu0
      %481 = vmatpush.msra.mxu0 0.0
      %482 = vmatpush.msra.mxu0 0.0
      %483 = vmatpush.msra.mxu0 0.0
      %484 = vmatpush.msra.mxu0 0.0
      %485 = vmatpush.msra.mxu0 0.0
      %486 = vmatpush.msra.mxu0 0.0
      %487 = vmatpush.msra.mxu0 0.0
      %488 = vmatpush.msra.mxu0 0.0
      %489 = vmatpush.msra.mxu0 0.0
      %490 = vmatpush.msra.mxu0 0.0
      %491 = vmatpush.msra.mxu0 0.0
      %492 = vmatpush.msra.mxu0 0.0
      %493 = vmatpush.msra.mxu0 0.0
      %494 = vmatpush.msra.mxu0 0.0
      %495 = vmatpush.msra.mxu0 %v317
      %496 = vmatpush.msra.mxu0 %v309
      %497 = vmatmul.f32.gmra.mxu0 %v325
      %v498 = vpop.f32.mrf.mxu0
      %v499 = vadd.f32 %v470, %v498
      %500 = vmatmul.f32.gmra.mxu0 %v328
      %v501 = vpop.f32.mrf.mxu0
      %v502 = vadd.f32 %v473, %v501
      %503 = vmatmul.f32.gmra.mxu0 %v331
      %v504 = vpop.f32.mrf.mxu0
      %v505 = vadd.f32 %v476, %v504
      %506 = vmatmul.f32.gmra.mxu0 %v334
      %v507 = vpop.f32.mrf.mxu0
      %v508 = vadd.f32 %v479, %v507
      %509 = vdwg.mxu0
      %510 = vmatpush.msra.mxu0 %v302
      %511 = vmatpush.msra.mxu0 %v294
      %512 = vmatpush.msra.mxu0 %v286
      %513 = vmatpush.msra.mxu0 %v278
      %514 = vmatpush.msra.mxu0 %v270
      %515 = vmatpush.msra.mxu0 %v262
      %516 = vmatpush.msra.mxu0 %v254
      %517 = vmatpush.msra.mxu0 %v246
      %518 = vmatpush.msra.mxu0 %v238
      %519 = vmatpush.msra.mxu0 %v230
      %520 = vmatpush.msra.mxu0 %v222
      %521 = vmatpush.msra.mxu0 %v214
      %522 = vmatpush.msra.mxu0 %v206
      %523 = vmatpush.msra.mxu0 %v198
      %524 = vmatpush.msra.mxu0 %v190
      %525 = vmatpush.msra.mxu0 %v182
      %526 = vmatmul.f32.gmra.mxu0 %v171
      %v527 = vpop.f32.mrf.mxu0
      %v528 = vadd.f32 0.0, %v527
      %529 = vmatmul.f32.gmra.mxu0 %v173
      %v530 = vpop.f32.mrf.mxu0
      %v531 = vadd.f32 0.0, %v530
      %532 = vmatmul.f32.gmra.mxu0 %v175
      %v533 = vpop.f32.mrf.mxu0
      %v534 = vadd.f32 0.0, %v533
      %535 = vmatmul.f32.gmra.mxu0 %v177
      %v536 = vpop.f32.mrf.mxu0
      %v537 = vadd.f32 0.0, %v536
      %538 = vdwg.mxu0
      %539 = vmatpush.msra.mxu0 0.0
      %540 = vmatpush.msra.mxu0 0.0
      %541 = vmatpush.msra.mxu0 0.0
      %542 = vmatpush.msra.mxu0 0.0
      %543 = vmatpush.msra.mxu0 0.0
      %544 = vmatpush.msra.mxu0 0.0
      %545 = vmatpush.msra.mxu0 0.0
      %546 = vmatpush.msra.mxu0 0.0
      %547 = vmatpush.msra.mxu0 0.0
      %548 = vmatpush.msra.mxu0 0.0
      %549 = vmatpush.msra.mxu0 0.0
      %550 = vmatpush.msra.mxu0 0.0
      %551 = vmatpush.msra.mxu0 0.0
      %552 = vmatpush.msra.mxu0 0.0
      %553 = vmatpush.msra.mxu0 %v318
      %554 = vmatpush.msra.mxu0 %v310
      %555 = vmatmul.f32.gmra.mxu0 %v325
      %v556 = vpop.f32.mrf.mxu0
      %v557 = vadd.f32 %v528, %v556
      %558 = vmatmul.f32.gmra.mxu0 %v328
      %v559 = vpop.f32.mrf.mxu0
      %v560 = vadd.f32 %v531, %v559
      %561 = vmatmul.f32.gmra.mxu0 %v331
      %v562 = vpop.f32.mrf.mxu0
      %v563 = vadd.f32 %v534, %v562
      %564 = vmatmul.f32.gmra.mxu0 %v334
      %v565 = vpop.f32.mrf.mxu0
      %v566 = vadd.f32 %v537, %v565
      %567 = vdwg.mxu0
      %568 = vmatpush.msra.mxu0 %v303
      %569 = vmatpush.msra.mxu0 %v295
      %570 = vmatpush.msra.mxu0 %v287
      %571 = vmatpush.msra.mxu0 %v279
      %572 = vmatpush.msra.mxu0 %v271
      %573 = vmatpush.msra.mxu0 %v263
      %574 = vmatpush.msra.mxu0 %v255
      %575 = vmatpush.msra.mxu0 %v247
      %576 = vmatpush.msra.mxu0 %v239
      %577 = vmatpush.msra.mxu0 %v231
      %578 = vmatpush.msra.mxu0 %v223
      %579 = vmatpush.msra.mxu0 %v215
      %580 = vmatpush.msra.mxu0 %v207
      %581 = vmatpush.msra.mxu0 %v199
      %582 = vmatpush.msra.mxu0 %v191
      %583 = vmatpush.msra.mxu0 %v183
      %584 = vmatmul.f32.gmra.mxu0 %v171
      %v585 = vpop.f32.mrf.mxu0
      %v586 = vadd.f32 0.0, %v585
      %587 = vmatmul.f32.gmra.mxu0 %v173
      %v588 = vpop.f32.mrf.mxu0
      %v589 = vadd.f32 0.0, %v588
      %590 = vmatmul.f32.gmra.mxu0 %v175
      %v591 = vpop.f32.mrf.mxu0
      %v592 = vadd.f32 0.0, %v591
      %593 = vmatmul.f32.gmra.mxu0 %v177
      %v594 = vpop.f32.mrf.mxu0
      %v595 = vadd.f32 0.0, %v594
      %596 = vdwg.mxu0
      %597 = vmatpush.msra.mxu0 0.0
      %598 = vmatpush.msra.mxu0 0.0
      %599 = vmatpush.msra.mxu0 0.0
      %600 = vmatpush.msra.mxu0 0.0
      %601 = vmatpush.msra.mxu0 0.0
      %602 = vmatpush.msra.mxu0 0.0
      %603 = vmatpush.msra.mxu0 0.0
      %604 = vmatpush.msra.mxu0 0.0
      %605 = vmatpush.msra.mxu0 0.0
      %606 = vmatpush.msra.mxu0 0.0
      %607 = vmatpush.msra.mxu0 0.0
      %608 = vmatpush.msra.mxu0 0.0
      %609 = vmatpush.msra.mxu0 0.0
      %610 = vmatpush.msra.mxu0 0.0
      %611 = vmatpush.msra.mxu0 %v319
      %612 = vmatpush.msra.mxu0 %v311
      %613 = vmatmul.f32.gmra.mxu0 %v325
      %v614 = vpop.f32.mrf.mxu0
      %v615 = vadd.f32 %v586, %v614
      %616 = vmatmul.f32.gmra.mxu0 %v328
      %v617 = vpop.f32.mrf.mxu0
      %v618 = vadd.f32 %v589, %v617
      %619 = vmatmul.f32.gmra.mxu0 %v331
      %v620 = vpop.f32.mrf.mxu0
      %v621 = vadd.f32 %v592, %v620
      %622 = vmatmul.f32.gmra.mxu0 %v334
      %v623 = vpop.f32.mrf.mxu0
      %v624 = vadd.f32 %v595, %v623
      %625 = vdwg.mxu0
      %626 = vmatpush.msra.mxu0 %v304
      %627 = vmatpush.msra.mxu0 %v296
      %628 = vmatpush.msra.mxu0 %v288
      %629 = vmatpush.msra.mxu0 %v280
      %630 = vmatpush.msra.mxu0 %v272
      %631 = vmatpush.msra.mxu0 %v264
      %632 = vmatpush.msra.mxu0 %v256
      %633 = vmatpush.msra.mxu0 %v248
      %634 = vmatpush.msra.mxu0 %v240
      %635 = vmatpush.msra.mxu0 %v232
      %636 = vmatpush.msra.mxu0 %v224
      %637 = vmatpush.msra.mxu0 %v216
      %638 = vmatpush.msra.mxu0 %v208
      %639 = vmatpush.msra.mxu0 %v200
      %640 = vmatpush.msra.mxu0 %v192
      %641 = vmatpush.msra.mxu0 %v184
      %642 = vmatmul.f32.gmra.mxu0 %v171
      %v643 = vpop.f32.mrf.mxu0
      %v644 = vadd.f32 0.0, %v643
      %645 = vmatmul.f32.gmra.mxu0 %v173
      %v646 = vpop.f32.mrf.mxu0
      %v647 = vadd.f32 0.0, %v646
      %648 = vmatmul.f32.gmra.mxu0 %v175
      %v649 = vpop.f32.mrf.mxu0
      %v650 = vadd.f32 0.0, %v649
      %651 = vmatmul.f32.gmra.mxu0 %v177
      %v652 = vpop.f32.mrf.mxu0
      %v653 = vadd.f32 0.0, %v652
      %654 = vdwg.mxu0
      %655 = vmatpush.msra.mxu0 0.0
      %656 = vmatpush.msra.mxu0 0.0
      %657 = vmatpush.msra.mxu0 0.0
      %658 = vmatpush.msra.mxu0 0.0
      %659 = vmatpush.msra.mxu0 0.0
      %660 = vmatpush.msra.mxu0 0.0
      %661 = vmatpush.msra.mxu0 0.0
      %662 = vmatpush.msra.mxu0 0.0
      %663 = vmatpush.msra.mxu0 0.0
      %664 = vmatpush.msra.mxu0 0.0
      %665 = vmatpush.msra.mxu0 0.0
      %666 = vmatpush.msra.mxu0 0.0
      %667 = vmatpush.msra.mxu0 0.0
      %668 = vmatpush.msra.mxu0 0.0
      %669 = vmatpush.msra.mxu0 %v320
      %670 = vmatpush.msra.mxu0 %v312
      %671 = vmatmul.f32.gmra.mxu0 %v325
      %v672 = vpop.f32.mrf.mxu0
      %v673 = vadd.f32 %v644, %v672
      %674 = vmatmul.f32.gmra.mxu0 %v328
      %v675 = vpop.f32.mrf.mxu0
      %v676 = vadd.f32 %v647, %v675
      %677 = vmatmul.f32.gmra.mxu0 %v331
      %v678 = vpop.f32.mrf.mxu0
      %v679 = vadd.f32 %v650, %v678
      %680 = vmatmul.f32.gmra.mxu0 %v334
      %v681 = vpop.f32.mrf.mxu0
      %v682 = vadd.f32 %v653, %v681
      %683 = vdwg.mxu0
      %684 = vmatpush.msra.mxu0 %v305
      %685 = vmatpush.msra.mxu0 %v297
      %686 = vmatpush.msra.mxu0 %v289
      %687 = vmatpush.msra.mxu0 %v281
      %688 = vmatpush.msra.mxu0 %v273
      %689 = vmatpush.msra.mxu0 %v265
      %690 = vmatpush.msra.mxu0 %v257
      %691 = vmatpush.msra.mxu0 %v249
      %692 = vmatpush.msra.mxu0 %v241
      %693 = vmatpush.msra.mxu0 %v233
      %694 = vmatpush.msra.mxu0 %v225
      %695 = vmatpush.msra.mxu0 %v217
      %696 = vmatpush.msra.mxu0 %v209
      %697 = vmatpush.msra.mxu0 %v201
      %698 = vmatpush.msra.mxu0 %v193
      %699 = vmatpush.msra.mxu0 %v185
      %700 = vmatmul.f32.gmra.mxu0 %v171
      %v701 = vpop.f32.mrf.mxu0
      %v702 = vadd.f32 0.0, %v701
      %703 = vmatmul.f32.gmra.mxu0 %v173
      %v704 = vpop.f32.mrf.mxu0
      %v705 = vadd.f32 0.0, %v704
      %706 = vmatmul.f32.gmra.mxu0 %v175
      %v707 = vpop.f32.mrf.mxu0
      %v708 = vadd.f32 0.0, %v707
      %709 = vmatmul.f32.gmra.mxu0 %v177
      %v710 = vpop.f32.mrf.mxu0
      %v711 = vadd.f32 0.0, %v710
      %712 = vdwg.mxu0
      %713 = vmatpush.msra.mxu0 0.0
      %714 = vmatpush.msra.mxu0 0.0
      %715 = vmatpush.msra.mxu0 0.0
      %716 = vmatpush.msra.mxu0 0.0
      %717 = vmatpush.msra.mxu0 0.0
      %718 = vmatpush.msra.mxu0 0.0
      %719 = vmatpush.msra.mxu0 0.0
      %720 = vmatpush.msra.mxu0 0.0
      %721 = vmatpush.msra.mxu0 0.0
      %722 = vmatpush.msra.mxu0 0.0
      %723 = vmatpush.msra.mxu0 0.0
      %724 = vmatpush.msra.mxu0 0.0
      %725 = vmatpush.msra.mxu0 0.0
      %726 = vmatpush.msra.mxu0 0.0
      %727 = vmatpush.msra.mxu0 %v321
      %728 = vmatpush.msra.mxu0 %v313
      %729 = vmatmul.f32.gmra.mxu0 %v325
      %v730 = vpop.f32.mrf.mxu0
      %v731 = vadd.f32 %v702, %v730
      %732 = vmatmul.f32.gmra.mxu0 %v328
      %v733 = vpop.f32.mrf.mxu0
      %v734 = vadd.f32 %v705, %v733
      %735 = vmatmul.f32.gmra.mxu0 %v331
      %v736 = vpop.f32.mrf.mxu0
      %v737 = vadd.f32 %v708, %v736
      %738 = vmatmul.f32.gmra.mxu0 %v334
      %v739 = vpop.f32.mrf.mxu0
      %v740 = vadd.f32 %v711, %v739
      %741 = vdwg.mxu0
      %742 = vmatpush.msra.mxu0 %v306
      %743 = vmatpush.msra.mxu0 %v298
      %744 = vmatpush.msra.mxu0 %v290
      %745 = vmatpush.msra.mxu0 %v282
      %746 = vmatpush.msra.mxu0 %v274
      %747 = vmatpush.msra.mxu0 %v266
      %748 = vmatpush.msra.mxu0 %v258
      %749 = vmatpush.msra.mxu0 %v250
      %750 = vmatpush.msra.mxu0 %v242
      %751 = vmatpush.msra.mxu0 %v234
      %752 = vmatpush.msra.mxu0 %v226
      %753 = vmatpush.msra.mxu0 %v218
      %754 = vmatpush.msra.mxu0 %v210
      %755 = vmatpush.msra.mxu0 %v202
      %756 = vmatpush.msra.mxu0 %v194
      %757 = vmatpush.msra.mxu0 %v186
      %758 = vmatmul.f32.gmra.mxu0 %v171
      %v759 = vpop.f32.mrf.mxu0
      %v760 = vadd.f32 0.0, %v759
      %761 = vmatmul.f32.gmra.mxu0 %v173
      %v762 = vpop.f32.mrf.mxu0
      %v763 = vadd.f32 0.0, %v762
      %764 = vmatmul.f32.gmra.mxu0 %v175
      %v765 = vpop.f32.mrf.mxu0
      %v766 = vadd.f32 0.0, %v765
      %767 = vmatmul.f32.gmra.mxu0 %v177
      %v768 = vpop.f32.mrf.mxu0
      %v769 = vadd.f32 0.0, %v768
      %770 = vdwg.mxu0
      %771 = vmatpush.msra.mxu0 0.0
      %772 = vmatpush.msra.mxu0 0.0
      %773 = vmatpush.msra.mxu0 0.0
      %774 = vmatpush.msra.mxu0 0.0
      %775 = vmatpush.msra.mxu0 0.0
      %776 = vmatpush.msra.mxu0 0.0
      %777 = vmatpush.msra.mxu0 0.0
      %778 = vmatpush.msra.mxu0 0.0
      %779 = vmatpush.msra.mxu0 0.0
      %780 = vmatpush.msra.mxu0 0.0
      %781 = vmatpush.msra.mxu0 0.0
      %782 = vmatpush.msra.mxu0 0.0
      %783 = vmatpush.msra.mxu0 0.0
      %784 = vmatpush.msra.mxu0 0.0
      %785 = vmatpush.msra.mxu0 %v322
      %786 = vmatpush.msra.mxu0 %v314
      %787 = vmatmul.f32.gmra.mxu0 %v325
      %v788 = vpop.f32.mrf.mxu0
      %v789 = vadd.f32 %v760, %v788
      %790 = vmatmul.f32.gmra.mxu0 %v328
      %v791 = vpop.f32.mrf.mxu0
      %v792 = vadd.f32 %v763, %v791
      %793 = vmatmul.f32.gmra.mxu0 %v331
      %v794 = vpop.f32.mrf.mxu0
      %v795 = vadd.f32 %v766, %v794
      %796 = vmatmul.f32.gmra.mxu0 %v334
      %v797 = vpop.f32.mrf.mxu0
      %v798 = vadd.f32 %v769, %v797
      %799 = vdwg.mxu0
      %s800 = scalar_lea.vmem %s165, 1152
      %v801 = vld [vmem:[%s800] sm:$0xff]
      %v802 = vld [vmem:[%s800 + $0x8] sm:$0xff]
      %v803 = vld [vmem:[%s800 + $0x10] sm:$0xff]
      %v804 = vld [vmem:[%s800 + $0x18] sm:$0xff]
      %v805 = vld [vmem:[%s800 + $0x20] sm:$0xff]
      %v806 = vld [vmem:[%s800 + $0x28] sm:$0xff]
      %v807 = vld [vmem:[%s800 + $0x30] sm:$0xff]
      %v808 = vld [vmem:[%s800 + $0x38] sm:$0xff]
      %v809 = vld [vmem:[%s800 + $0x40] sm:$0xff]
      %v810 = vld [vmem:[%s800 + $0x48] sm:$0xff]
      %v811 = vld [vmem:[%s800 + $0x50] sm:$0xff]
      %v812 = vld [vmem:[%s800 + $0x58] sm:$0xff]
      %v813 = vld [vmem:[%s800 + $0x60] sm:$0xff]
      %v814 = vld [vmem:[%s800 + $0x68] sm:$0xff]
      %v815 = vld [vmem:[%s800 + $0x70] sm:$0xff]
      %v816 = vld [vmem:[%s800 + $0x78] sm:$0xff]
      %v817 = vld [vmem:[%s800 + $0x80] sm:$0xff]
      %v818 = vld [vmem:[%s800 + $0x88] sm:$0xff]
      %v819 = vld [vmem:[%s800 + $0x90] sm:$0xff]
      %v820 = vld [vmem:[%s800 + $0x98] sm:$0xff]
      %v821 = vld [vmem:[%s800 + $0xa0] sm:$0xff]
      %v822 = vld [vmem:[%s800 + $0xa8] sm:$0xff]
      %v823 = vld [vmem:[%s800 + $0xb0] sm:$0xff]
      %v824 = vld [vmem:[%s800 + $0xb8] sm:$0xff]
      %v825 = vld [vmem:[%s800 + $0xc0] sm:$0xff]
      %v826 = vld [vmem:[%s800 + $0xc8] sm:$0xff]
      %v827 = vld [vmem:[%s800 + $0xd0] sm:$0xff]
      %v828 = vld [vmem:[%s800 + $0xd8] sm:$0xff]
      %v829 = vld [vmem:[%s800 + $0xe0] sm:$0xff]
      %v830 = vld [vmem:[%s800 + $0xe8] sm:$0xff]
      %v831 = vld [vmem:[%s800 + $0xf0] sm:$0xff]
      %v832 = vld [vmem:[%s800 + $0xf8] sm:$0xff]
      %v833 = vld [vmem:[%s800 + $0x100] sm:$0xff]
      %v834 = vld [vmem:[%s800 + $0x108] sm:$0xff]
      %v835 = vld [vmem:[%s800 + $0x110] sm:$0xff]
      %v836 = vld [vmem:[%s800 + $0x118] sm:$0xff]
      %v837 = vld [vmem:[%s800 + $0x120] sm:$0xff]
      %v838 = vld [vmem:[%s800 + $0x128] sm:$0xff]
      %v839 = vld [vmem:[%s800 + $0x130] sm:$0xff]
      %v840 = vld [vmem:[%s800 + $0x138] sm:$0xff]
      %v841 = vld [vmem:[%s800 + $0x140] sm:$0xff]
      %v842 = vld [vmem:[%s800 + $0x148] sm:$0xff]
      %v843 = vld [vmem:[%s800 + $0x150] sm:$0xff]
      %v844 = vld [vmem:[%s800 + $0x158] sm:$0xff]
      %v845 = vld [vmem:[%s800 + $0x160] sm:$0xff]
      %v846 = vld [vmem:[%s800 + $0x168] sm:$0xff]
      %v847 = vld [vmem:[%s800 + $0x170] sm:$0xff]
      %v848 = vld [vmem:[%s800 + $0x178] sm:$0xff]
      %v849 = vld [vmem:[%s800 + $0x180] sm:$0xff]
      %v850 = vld [vmem:[%s800 + $0x188] sm:$0xff]
      %v851 = vld [vmem:[%s800 + $0x190] sm:$0xff]
      %v852 = vld [vmem:[%s800 + $0x198] sm:$0xff]
      %v853 = vld [vmem:[%s800 + $0x1a0] sm:$0xff]
      %v854 = vld [vmem:[%s800 + $0x1a8] sm:$0xff]
      %v855 = vld [vmem:[%s800 + $0x1b0] sm:$0xff]
      %v856 = vld [vmem:[%s800 + $0x1b8] sm:$0xff]
      %v857 = vld [vmem:[%s800 + $0x1c0] sm:$0xff]
      %v858 = vld [vmem:[%s800 + $0x1c8] sm:$0xff]
      %v859 = vld [vmem:[%s800 + $0x1d0] sm:$0xff]
      %v860 = vld [vmem:[%s800 + $0x1d8] sm:$0xff]
      %v861 = vld [vmem:[%s800 + $0x1e0] sm:$0xff]
      %v862 = vld [vmem:[%s800 + $0x1e8] sm:$0xff]
      %v863 = vld [vmem:[%s800 + $0x1f0] sm:$0xff]
      %v864 = vld [vmem:[%s800 + $0x1f8] sm:$0xff]
      %v865 = vld [vmem:[%s800 + $0x200] sm:$0xff]
      %v866 = vld [vmem:[%s800 + $0x208] sm:$0xff]
      %v867 = vld [vmem:[%s800 + $0x210] sm:$0xff]
      %v868 = vld [vmem:[%s800 + $0x218] sm:$0xff]
      %v869 = vld [vmem:[%s800 + $0x220] sm:$0xff]
      %v870 = vld [vmem:[%s800 + $0x228] sm:$0xff]
      %v871 = vld [vmem:[%s800 + $0x230] sm:$0xff]
      %v872 = vld [vmem:[%s800 + $0x238] sm:$0xff]
      %v873 = vld [vmem:[%s800 + $0x240] sm:$0xff]
      %v874 = vld [vmem:[%s800 + $0x248] sm:$0xff]
      %v875 = vld [vmem:[%s800 + $0x250] sm:$0xff]
      %v876 = vld [vmem:[%s800 + $0x258] sm:$0xff]
      %v877 = vld [vmem:[%s800 + $0x260] sm:$0xff]
      %v878 = vld [vmem:[%s800 + $0x268] sm:$0xff]
      %v879 = vld [vmem:[%s800 + $0x270] sm:$0xff]
      %v880 = vld [vmem:[%s800 + $0x278] sm:$0xff]
      %v881 = vld [vmem:[%s800 + $0x280] sm:$0xff]
      %v882 = vld [vmem:[%s800 + $0x288] sm:$0xff]
      %v883 = vld [vmem:[%s800 + $0x290] sm:$0xff]
      %v884 = vld [vmem:[%s800 + $0x298] sm:$0xff]
      %v885 = vld [vmem:[%s800 + $0x2a0] sm:$0xff]
      %v886 = vld [vmem:[%s800 + $0x2a8] sm:$0xff]
      %v887 = vld [vmem:[%s800 + $0x2b0] sm:$0xff]
      %v888 = vld [vmem:[%s800 + $0x2b8] sm:$0xff]
      %v889 = vld [vmem:[%s800 + $0x2c0] sm:$0xff]
      %v890 = vld [vmem:[%s800 + $0x2c8] sm:$0xff]
      %v891 = vld [vmem:[%s800 + $0x2d0] sm:$0xff]
      %v892 = vld [vmem:[%s800 + $0x2d8] sm:$0xff]
      %v893 = vld [vmem:[%s800 + $0x2e0] sm:$0xff]
      %v894 = vld [vmem:[%s800 + $0x2e8] sm:$0xff]
      %v895 = vld [vmem:[%s800 + $0x2f0] sm:$0xff]
      %v896 = vld [vmem:[%s800 + $0x2f8] sm:$0xff]
      %v897 = vld [vmem:[%s800 + $0x300] sm:$0xff]
      %v898 = vld [vmem:[%s800 + $0x308] sm:$0xff]
      %v899 = vld [vmem:[%s800 + $0x310] sm:$0xff]
      %v900 = vld [vmem:[%s800 + $0x318] sm:$0xff]
      %v901 = vld [vmem:[%s800 + $0x320] sm:$0xff]
      %v902 = vld [vmem:[%s800 + $0x328] sm:$0xff]
      %v903 = vld [vmem:[%s800 + $0x330] sm:$0xff]
      %v904 = vld [vmem:[%s800 + $0x338] sm:$0xff]
      %v905 = vld [vmem:[%s800 + $0x340] sm:$0xff]
      %v906 = vld [vmem:[%s800 + $0x348] sm:$0xff]
      %v907 = vld [vmem:[%s800 + $0x350] sm:$0xff]
      %v908 = vld [vmem:[%s800 + $0x358] sm:$0xff]
      %v909 = vld [vmem:[%s800 + $0x360] sm:$0xff]
      %v910 = vld [vmem:[%s800 + $0x368] sm:$0xff]
      %v911 = vld [vmem:[%s800 + $0x370] sm:$0xff]
      %v912 = vld [vmem:[%s800 + $0x378] sm:$0xff]
      %v913 = vld [vmem:[%s800 + $0x380] sm:$0xff]
      %v914 = vld [vmem:[%s800 + $0x388] sm:$0xff]
      %v915 = vld [vmem:[%s800 + $0x390] sm:$0xff]
      %v916 = vld [vmem:[%s800 + $0x398] sm:$0xff]
      %v917 = vld [vmem:[%s800 + $0x3a0] sm:$0xff]
      %v918 = vld [vmem:[%s800 + $0x3a8] sm:$0xff]
      %v919 = vld [vmem:[%s800 + $0x3b0] sm:$0xff]
      %v920 = vld [vmem:[%s800 + $0x3b8] sm:$0xff]
      %v921 = vld [vmem:[%s800 + $0x3c0] sm:$0xff]
      %v922 = vld [vmem:[%s800 + $0x3c8] sm:$0xff]
      %v923 = vld [vmem:[%s800 + $0x3d0] sm:$0xff]
      %v924 = vld [vmem:[%s800 + $0x3d8] sm:$0xff]
      %v925 = vld [vmem:[%s800 + $0x3e0] sm:$0xff]
      %v926 = vld [vmem:[%s800 + $0x3e8] sm:$0xff]
      %v927 = vld [vmem:[%s800 + $0x3f0] sm:$0xff]
      %v928 = vld [vmem:[%s800 + $0x3f8] sm:$0xff]
      %v929 = vld [vmem:[%s800 + $0x400] sm:$0xff]
      %v930 = vld [vmem:[%s800 + $0x408] sm:$0xff]
      %v931 = vld [vmem:[%s800 + $0x410] sm:$0xff]
      %v932 = vld [vmem:[%s800 + $0x418] sm:$0xff]
      %v933 = vld [vmem:[%s800 + $0x420] sm:$0xff]
      %v934 = vld [vmem:[%s800 + $0x428] sm:$0xff]
      %v935 = vld [vmem:[%s800 + $0x430] sm:$0xff]
      %v936 = vld [vmem:[%s800 + $0x438] sm:$0xff]
      %v937 = vld [vmem:[%s800 + $0x440] sm:$0xff]
      %v938 = vld [vmem:[%s800 + $0x448] sm:$0xff]
      %v939 = vld [vmem:[%s800 + $0x450] sm:$0xff]
      %v940 = vld [vmem:[%s800 + $0x458] sm:$0xff]
      %v941 = vld [vmem:[%s800 + $0x460] sm:$0xff]
      %v942 = vld [vmem:[%s800 + $0x468] sm:$0xff]
      %v943 = vld [vmem:[%s800 + $0x470] sm:$0xff]
      %v944 = vld [vmem:[%s800 + $0x478] sm:$0xff]
      %945 = vmatpush.msra.mxu0 %v921
      %946 = vmatpush.msra.mxu0 %v913
      %947 = vmatpush.msra.mxu0 %v905
      %948 = vmatpush.msra.mxu0 %v897
      %949 = vmatpush.msra.mxu0 %v889
      %950 = vmatpush.msra.mxu0 %v881
      %951 = vmatpush.msra.mxu0 %v873
      %952 = vmatpush.msra.mxu0 %v865
      %953 = vmatpush.msra.mxu0 %v857
      %954 = vmatpush.msra.mxu0 %v849
      %955 = vmatpush.msra.mxu0 %v841
      %956 = vmatpush.msra.mxu0 %v833
      %957 = vmatpush.msra.mxu0 %v825
      %958 = vmatpush.msra.mxu0 %v817
      %959 = vmatpush.msra.mxu0 %v809
      %960 = vmatpush.msra.mxu0 %v801
      %961 = vmatmul.f32.gmra.mxu0 %v171
      %v962 = vpop.f32.mrf.mxu0
      %v963 = vadd.f32 0.0, %v962
      %964 = vmatmul.f32.gmra.mxu0 %v173
      %v965 = vpop.f32.mrf.mxu0
      %v966 = vadd.f32 0.0, %v965
      %967 = vmatmul.f32.gmra.mxu0 %v175
      %v968 = vpop.f32.mrf.mxu0
      %v969 = vadd.f32 0.0, %v968
      %970 = vmatmul.f32.gmra.mxu0 %v177
      %v971 = vpop.f32.mrf.mxu0
      %v972 = vadd.f32 0.0, %v971
      %973 = vdwg.mxu0
      %974 = vmatpush.msra.mxu0 0.0
      %975 = vmatpush.msra.mxu0 0.0
      %976 = vmatpush.msra.mxu0 0.0
      %977 = vmatpush.msra.mxu0 0.0
      %978 = vmatpush.msra.mxu0 0.0
      %979 = vmatpush.msra.mxu0 0.0
      %980 = vmatpush.msra.mxu0 0.0
      %981 = vmatpush.msra.mxu0 0.0
      %982 = vmatpush.msra.mxu0 0.0
      %983 = vmatpush.msra.mxu0 0.0
      %984 = vmatpush.msra.mxu0 0.0
      %985 = vmatpush.msra.mxu0 0.0
      %986 = vmatpush.msra.mxu0 0.0
      %987 = vmatpush.msra.mxu0 0.0
      %988 = vmatpush.msra.mxu0 %v937
      %989 = vmatpush.msra.mxu0 %v929
      %990 = vmatmul.f32.gmra.mxu0 %v325
      %v991 = vpop.f32.mrf.mxu0
      %v992 = vadd.f32 %v963, %v991
      %993 = vmatmul.f32.gmra.mxu0 %v328
      %v994 = vpop.f32.mrf.mxu0
      %v995 = vadd.f32 %v966, %v994
      %996 = vmatmul.f32.gmra.mxu0 %v331
      %v997 = vpop.f32.mrf.mxu0
      %v998 = vadd.f32 %v969, %v997
      %999 = vmatmul.f32.gmra.mxu0 %v334
      %v1000 = vpop.f32.mrf.mxu0
      %v1001 = vadd.f32 %v972, %v1000
      %1002 = vdwg.mxu0
      %1003 = vmatpush.msra.mxu0 %v922
      %1004 = vmatpush.msra.mxu0 %v914
      %1005 = vmatpush.msra.mxu0 %v906
      %1006 = vmatpush.msra.mxu0 %v898
      %1007 = vmatpush.msra.mxu0 %v890
      %1008 = vmatpush.msra.mxu0 %v882
      %1009 = vmatpush.msra.mxu0 %v874
      %1010 = vmatpush.msra.mxu0 %v866
      %1011 = vmatpush.msra.mxu0 %v858
      %1012 = vmatpush.msra.mxu0 %v850
      %1013 = vmatpush.msra.mxu0 %v842
      %1014 = vmatpush.msra.mxu0 %v834
      %1015 = vmatpush.msra.mxu0 %v826
      %1016 = vmatpush.msra.mxu0 %v818
      %1017 = vmatpush.msra.mxu0 %v810
      %1018 = vmatpush.msra.mxu0 %v802
      %1019 = vmatmul.f32.gmra.mxu0 %v171
      %v1020 = vpop.f32.mrf.mxu0
      %v1021 = vadd.f32 0.0, %v1020
      %1022 = vmatmul.f32.gmra.mxu0 %v173
      %v1023 = vpop.f32.mrf.mxu0
      %v1024 = vadd.f32 0.0, %v1023
      %1025 = vmatmul.f32.gmra.mxu0 %v175
      %v1026 = vpop.f32.mrf.mxu0
      %v1027 = vadd.f32 0.0, %v1026
      %1028 = vmatmul.f32.gmra.mxu0 %v177
      %v1029 = vpop.f32.mrf.mxu0
      %v1030 = vadd.f32 0.0, %v1029
      %1031 = vdwg.mxu0
      %1032 = vmatpush.msra.mxu0 0.0
      %1033 = vmatpush.msra.mxu0 0.0
      %1034 = vmatpush.msra.mxu0 0.0
      %1035 = vmatpush.msra.mxu0 0.0
      %1036 = vmatpush.msra.mxu0 0.0
      %1037 = vmatpush.msra.mxu0 0.0
      %1038 = vmatpush.msra.mxu0 0.0
      %1039 = vmatpush.msra.mxu0 0.0
      %1040 = vmatpush.msra.mxu0 0.0
      %1041 = vmatpush.msra.mxu0 0.0
      %1042 = vmatpush.msra.mxu0 0.0
      %1043 = vmatpush.msra.mxu0 0.0
      %1044 = vmatpush.msra.mxu0 0.0
      %1045 = vmatpush.msra.mxu0 0.0
      %1046 = vmatpush.msra.mxu0 %v938
      %1047 = vmatpush.msra.mxu0 %v930
      %1048 = vmatmul.f32.gmra.mxu0 %v325
      %v1049 = vpop.f32.mrf.mxu0
      %v1050 = vadd.f32 %v1021, %v1049
      %1051 = vmatmul.f32.gmra.mxu0 %v328
      %v1052 = vpop.f32.mrf.mxu0
      %v1053 = vadd.f32 %v1024, %v1052
      %1054 = vmatmul.f32.gmra.mxu0 %v331
      %v1055 = vpop.f32.mrf.mxu0
      %v1056 = vadd.f32 %v1027, %v1055
      %1057 = vmatmul.f32.gmra.mxu0 %v334
      %v1058 = vpop.f32.mrf.mxu0
      %v1059 = vadd.f32 %v1030, %v1058
      %1060 = vdwg.mxu0
      %1061 = vmatpush.msra.mxu0 %v923
      %1062 = vmatpush.msra.mxu0 %v915
      %1063 = vmatpush.msra.mxu0 %v907
      %1064 = vmatpush.msra.mxu0 %v899
      %1065 = vmatpush.msra.mxu0 %v891
      %1066 = vmatpush.msra.mxu0 %v883
      %1067 = vmatpush.msra.mxu0 %v875
      %1068 = vmatpush.msra.mxu0 %v867
      %1069 = vmatpush.msra.mxu0 %v859
      %1070 = vmatpush.msra.mxu0 %v851
      %1071 = vmatpush.msra.mxu0 %v843
      %1072 = vmatpush.msra.mxu0 %v835
      %1073 = vmatpush.msra.mxu0 %v827
      %1074 = vmatpush.msra.mxu0 %v819
      %1075 = vmatpush.msra.mxu0 %v811
      %1076 = vmatpush.msra.mxu0 %v803
      %1077 = vmatmul.f32.gmra.mxu0 %v171
      %v1078 = vpop.f32.mrf.mxu0
      %v1079 = vadd.f32 0.0, %v1078
      %1080 = vmatmul.f32.gmra.mxu0 %v173
      %v1081 = vpop.f32.mrf.mxu0
      %v1082 = vadd.f32 0.0, %v1081
      %1083 = vmatmul.f32.gmra.mxu0 %v175
      %v1084 = vpop.f32.mrf.mxu0
      %v1085 = vadd.f32 0.0, %v1084
      %1086 = vmatmul.f32.gmra.mxu0 %v177
      %v1087 = vpop.f32.mrf.mxu0
      %v1088 = vadd.f32 0.0, %v1087
      %1089 = vdwg.mxu0
      %1090 = vmatpush.msra.mxu0 0.0
      %1091 = vmatpush.msra.mxu0 0.0
      %1092 = vmatpush.msra.mxu0 0.0
      %1093 = vmatpush.msra.mxu0 0.0
      %1094 = vmatpush.msra.mxu0 0.0
      %1095 = vmatpush.msra.mxu0 0.0
      %1096 = vmatpush.msra.mxu0 0.0
      %1097 = vmatpush.msra.mxu0 0.0
      %1098 = vmatpush.msra.mxu0 0.0
      %1099 = vmatpush.msra.mxu0 0.0
      %1100 = vmatpush.msra.mxu0 0.0
      %1101 = vmatpush.msra.mxu0 0.0
      %1102 = vmatpush.msra.mxu0 0.0
      %1103 = vmatpush.msra.mxu0 0.0
      %1104 = vmatpush.msra.mxu0 %v939
      %1105 = vmatpush.msra.mxu0 %v931
      %1106 = vmatmul.f32.gmra.mxu0 %v325
      %v1107 = vpop.f32.mrf.mxu0
      %v1108 = vadd.f32 %v1079, %v1107
      %1109 = vmatmul.f32.gmra.mxu0 %v328
      %v1110 = vpop.f32.mrf.mxu0
      %v1111 = vadd.f32 %v1082, %v1110
      %1112 = vmatmul.f32.gmra.mxu0 %v331
      %v1113 = vpop.f32.mrf.mxu0
      %v1114 = vadd.f32 %v1085, %v1113
      %1115 = vmatmul.f32.gmra.mxu0 %v334
      %v1116 = vpop.f32.mrf.mxu0
      %v1117 = vadd.f32 %v1088, %v1116
      %1118 = vdwg.mxu0
      %1119 = vmatpush.msra.mxu0 %v924
      %1120 = vmatpush.msra.mxu0 %v916
      %1121 = vmatpush.msra.mxu0 %v908
      %1122 = vmatpush.msra.mxu0 %v900
      %1123 = vmatpush.msra.mxu0 %v892
      %1124 = vmatpush.msra.mxu0 %v884
      %1125 = vmatpush.msra.mxu0 %v876
      %1126 = vmatpush.msra.mxu0 %v868
      %1127 = vmatpush.msra.mxu0 %v860
      %1128 = vmatpush.msra.mxu0 %v852
      %1129 = vmatpush.msra.mxu0 %v844
      %1130 = vmatpush.msra.mxu0 %v836
      %1131 = vmatpush.msra.mxu0 %v828
      %1132 = vmatpush.msra.mxu0 %v820
      %1133 = vmatpush.msra.mxu0 %v812
      %1134 = vmatpush.msra.mxu0 %v804
      %1135 = vmatmul.f32.gmra.mxu0 %v171
      %v1136 = vpop.f32.mrf.mxu0
      %v1137 = vadd.f32 0.0, %v1136
      %1138 = vmatmul.f32.gmra.mxu0 %v173
      %v1139 = vpop.f32.mrf.mxu0
      %v1140 = vadd.f32 0.0, %v1139
      %1141 = vmatmul.f32.gmra.mxu0 %v175
      %v1142 = vpop.f32.mrf.mxu0
      %v1143 = vadd.f32 0.0, %v1142
      %1144 = vmatmul.f32.gmra.mxu0 %v177
      %v1145 = vpop.f32.mrf.mxu0
      %v1146 = vadd.f32 0.0, %v1145
      %1147 = vdwg.mxu0
      %1148 = vmatpush.msra.mxu0 0.0
      %1149 = vmatpush.msra.mxu0 0.0
      %1150 = vmatpush.msra.mxu0 0.0
      %1151 = vmatpush.msra.mxu0 0.0
      %1152 = vmatpush.msra.mxu0 0.0
      %1153 = vmatpush.msra.mxu0 0.0
      %1154 = vmatpush.msra.mxu0 0.0
      %1155 = vmatpush.msra.mxu0 0.0
      %1156 = vmatpush.msra.mxu0 0.0
      %1157 = vmatpush.msra.mxu0 0.0
      %1158 = vmatpush.msra.mxu0 0.0
      %1159 = vmatpush.msra.mxu0 0.0
      %1160 = vmatpush.msra.mxu0 0.0
      %1161 = vmatpush.msra.mxu0 0.0
      %1162 = vmatpush.msra.mxu0 %v940
      %1163 = vmatpush.msra.mxu0 %v932
      %1164 = vmatmul.f32.gmra.mxu0 %v325
      %v1165 = vpop.f32.mrf.mxu0
      %v1166 = vadd.f32 %v1137, %v1165
      %1167 = vmatmul.f32.gmra.mxu0 %v328
      %v1168 = vpop.f32.mrf.mxu0
      %v1169 = vadd.f32 %v1140, %v1168
      %1170 = vmatmul.f32.gmra.mxu0 %v331
      %v1171 = vpop.f32.mrf.mxu0
      %v1172 = vadd.f32 %v1143, %v1171
      %1173 = vmatmul.f32.gmra.mxu0 %v334
      %v1174 = vpop.f32.mrf.mxu0
      %v1175 = vadd.f32 %v1146, %v1174
      %1176 = vdwg.mxu0
      %1177 = vmatpush.msra.mxu0 %v925
      %1178 = vmatpush.msra.mxu0 %v917
      %1179 = vmatpush.msra.mxu0 %v909
      %1180 = vmatpush.msra.mxu0 %v901
      %1181 = vmatpush.msra.mxu0 %v893
      %1182 = vmatpush.msra.mxu0 %v885
      %1183 = vmatpush.msra.mxu0 %v877
      %1184 = vmatpush.msra.mxu0 %v869
      %1185 = vmatpush.msra.mxu0 %v861
      %1186 = vmatpush.msra.mxu0 %v853
      %1187 = vmatpush.msra.mxu0 %v845
      %1188 = vmatpush.msra.mxu0 %v837
      %1189 = vmatpush.msra.mxu0 %v829
      %1190 = vmatpush.msra.mxu0 %v821
      %1191 = vmatpush.msra.mxu0 %v813
      %1192 = vmatpush.msra.mxu0 %v805
      %1193 = vmatmul.f32.gmra.mxu0 %v171
      %v1194 = vpop.f32.mrf.mxu0
      %v1195 = vadd.f32 0.0, %v1194
      %1196 = vmatmul.f32.gmra.mxu0 %v173
      %v1197 = vpop.f32.mrf.mxu0
      %v1198 = vadd.f32 0.0, %v1197
      %1199 = vmatmul.f32.gmra.mxu0 %v175
      %v1200 = vpop.f32.mrf.mxu0
      %v1201 = vadd.f32 0.0, %v1200
      %1202 = vmatmul.f32.gmra.mxu0 %v177
      %v1203 = vpop.f32.mrf.mxu0
      %v1204 = vadd.f32 0.0, %v1203
      %1205 = vdwg.mxu0
      %1206 = vmatpush.msra.mxu0 0.0
      %1207 = vmatpush.msra.mxu0 0.0
      %1208 = vmatpush.msra.mxu0 0.0
      %1209 = vmatpush.msra.mxu0 0.0
      %1210 = vmatpush.msra.mxu0 0.0
      %1211 = vmatpush.msra.mxu0 0.0
      %1212 = vmatpush.msra.mxu0 0.0
      %1213 = vmatpush.msra.mxu0 0.0
      %1214 = vmatpush.msra.mxu0 0.0
      %1215 = vmatpush.msra.mxu0 0.0
      %1216 = vmatpush.msra.mxu0 0.0
      %1217 = vmatpush.msra.mxu0 0.0
      %1218 = vmatpush.msra.mxu0 0.0
      %1219 = vmatpush.msra.mxu0 0.0
      %1220 = vmatpush.msra.mxu0 %v941
      %1221 = vmatpush.msra.mxu0 %v933
      %1222 = vmatmul.f32.gmra.mxu0 %v325
      %v1223 = vpop.f32.mrf.mxu0
      %v1224 = vadd.f32 %v1195, %v1223
      %1225 = vmatmul.f32.gmra.mxu0 %v328
      %v1226 = vpop.f32.mrf.mxu0
      %v1227 = vadd.f32 %v1198, %v1226
      %1228 = vmatmul.f32.gmra.mxu0 %v331
      %v1229 = vpop.f32.mrf.mxu0
      %v1230 = vadd.f32 %v1201, %v1229
      %1231 = vmatmul.f32.gmra.mxu0 %v334
      %v1232 = vpop.f32.mrf.mxu0
      %v1233 = vadd.f32 %v1204, %v1232
      %1234 = vdwg.mxu0
      %1235 = vmatpush.msra.mxu0 %v926
      %1236 = vmatpush.msra.mxu0 %v918
      %1237 = vmatpush.msra.mxu0 %v910
      %1238 = vmatpush.msra.mxu0 %v902
      %1239 = vmatpush.msra.mxu0 %v894
      %1240 = vmatpush.msra.mxu0 %v886
      %1241 = vmatpush.msra.mxu0 %v878
      %1242 = vmatpush.msra.mxu0 %v870
      %1243 = vmatpush.msra.mxu0 %v862
      %1244 = vmatpush.msra.mxu0 %v854
      %1245 = vmatpush.msra.mxu0 %v846
      %1246 = vmatpush.msra.mxu0 %v838
      %1247 = vmatpush.msra.mxu0 %v830
      %1248 = vmatpush.msra.mxu0 %v822
      %1249 = vmatpush.msra.mxu0 %v814
      %1250 = vmatpush.msra.mxu0 %v806
      %1251 = vmatmul.f32.gmra.mxu0 %v171
      %v1252 = vpop.f32.mrf.mxu0
      %v1253 = vadd.f32 0.0, %v1252
      %1254 = vmatmul.f32.gmra.mxu0 %v173
      %v1255 = vpop.f32.mrf.mxu0
      %v1256 = vadd.f32 0.0, %v1255
      %1257 = vmatmul.f32.gmra.mxu0 %v175
      %v1258 = vpop.f32.mrf.mxu0
      %v1259 = vadd.f32 0.0, %v1258
      %1260 = vmatmul.f32.gmra.mxu0 %v177
      %v1261 = vpop.f32.mrf.mxu0
      %v1262 = vadd.f32 0.0, %v1261
      %1263 = vdwg.mxu0
      %1264 = vmatpush.msra.mxu0 0.0
      %1265 = vmatpush.msra.mxu0 0.0
      %1266 = vmatpush.msra.mxu0 0.0
      %1267 = vmatpush.msra.mxu0 0.0
      %1268 = vmatpush.msra.mxu0 0.0
      %1269 = vmatpush.msra.mxu0 0.0
      %1270 = vmatpush.msra.mxu0 0.0
      %1271 = vmatpush.msra.mxu0 0.0
      %1272 = vmatpush.msra.mxu0 0.0
      %1273 = vmatpush.msra.mxu0 0.0
      %1274 = vmatpush.msra.mxu0 0.0
      %1275 = vmatpush.msra.mxu0 0.0
      %1276 = vmatpush.msra.mxu0 0.0
      %1277 = vmatpush.msra.mxu0 0.0
      %1278 = vmatpush.msra.mxu0 %v942
      %1279 = vmatpush.msra.mxu0 %v934
      %1280 = vmatmul.f32.gmra.mxu0 %v325
      %v1281 = vpop.f32.mrf.mxu0
      %v1282 = vadd.f32 %v1253, %v1281
      %1283 = vmatmul.f32.gmra.mxu0 %v328
      %v1284 = vpop.f32.mrf.mxu0
      %v1285 = vadd.f32 %v1256, %v1284
      %1286 = vmatmul.f32.gmra.mxu0 %v331
      %v1287 = vpop.f32.mrf.mxu0
      %v1288 = vadd.f32 %v1259, %v1287
      %1289 = vmatmul.f32.gmra.mxu0 %v334
      %v1290 = vpop.f32.mrf.mxu0
      %v1291 = vadd.f32 %v1262, %v1290
      %1292 = vdwg.mxu0
      %1293 = vmatpush.msra.mxu0 %v927
      %1294 = vmatpush.msra.mxu0 %v919
      %1295 = vmatpush.msra.mxu0 %v911
      %1296 = vmatpush.msra.mxu0 %v903
      %1297 = vmatpush.msra.mxu0 %v895
      %1298 = vmatpush.msra.mxu0 %v887
      %1299 = vmatpush.msra.mxu0 %v879
      %1300 = vmatpush.msra.mxu0 %v871
      %1301 = vmatpush.msra.mxu0 %v863
      %1302 = vmatpush.msra.mxu0 %v855
      %1303 = vmatpush.msra.mxu0 %v847
      %1304 = vmatpush.msra.mxu0 %v839
      %1305 = vmatpush.msra.mxu0 %v831
      %1306 = vmatpush.msra.mxu0 %v823
      %1307 = vmatpush.msra.mxu0 %v815
      %1308 = vmatpush.msra.mxu0 %v807
      %1309 = vmatmul.f32.gmra.mxu0 %v171
      %v1310 = vpop.f32.mrf.mxu0
      %v1311 = vadd.f32 0.0, %v1310
      %1312 = vmatmul.f32.gmra.mxu0 %v173
      %v1313 = vpop.f32.mrf.mxu0
      %v1314 = vadd.f32 0.0, %v1313
      %1315 = vmatmul.f32.gmra.mxu0 %v175
      %v1316 = vpop.f32.mrf.mxu0
      %v1317 = vadd.f32 0.0, %v1316
      %1318 = vmatmul.f32.gmra.mxu0 %v177
      %v1319 = vpop.f32.mrf.mxu0
      %v1320 = vadd.f32 0.0, %v1319
      %1321 = vdwg.mxu0
      %1322 = vmatpush.msra.mxu0 0.0
      %1323 = vmatpush.msra.mxu0 0.0
      %1324 = vmatpush.msra.mxu0 0.0
      %1325 = vmatpush.msra.mxu0 0.0
      %1326 = vmatpush.msra.mxu0 0.0
      %1327 = vmatpush.msra.mxu0 0.0
      %1328 = vmatpush.msra.mxu0 0.0
      %1329 = vmatpush.msra.mxu0 0.0
      %1330 = vmatpush.msra.mxu0 0.0
      %1331 = vmatpush.msra.mxu0 0.0
      %1332 = vmatpush.msra.mxu0 0.0
      %1333 = vmatpush.msra.mxu0 0.0
      %1334 = vmatpush.msra.mxu0 0.0
      %1335 = vmatpush.msra.mxu0 0.0
      %1336 = vmatpush.msra.mxu0 %v943
      %1337 = vmatpush.msra.mxu0 %v935
      %1338 = vmatmul.f32.gmra.mxu0 %v325
      %v1339 = vpop.f32.mrf.mxu0
      %v1340 = vadd.f32 %v1311, %v1339
      %1341 = vmatmul.f32.gmra.mxu0 %v328
      %v1342 = vpop.f32.mrf.mxu0
      %v1343 = vadd.f32 %v1314, %v1342
      %1344 = vmatmul.f32.gmra.mxu0 %v331
      %v1345 = vpop.f32.mrf.mxu0
      %v1346 = vadd.f32 %v1317, %v1345
      %1347 = vmatmul.f32.gmra.mxu0 %v334
      %v1348 = vpop.f32.mrf.mxu0
      %v1349 = vadd.f32 %v1320, %v1348
      %1350 = vdwg.mxu0
      %1351 = vmatpush.msra.mxu0 %v928
      %1352 = vmatpush.msra.mxu0 %v920
      %1353 = vmatpush.msra.mxu0 %v912
      %1354 = vmatpush.msra.mxu0 %v904
      %1355 = vmatpush.msra.mxu0 %v896
      %1356 = vmatpush.msra.mxu0 %v888
      %1357 = vmatpush.msra.mxu0 %v880
      %1358 = vmatpush.msra.mxu0 %v872
      %1359 = vmatpush.msra.mxu0 %v864
      %1360 = vmatpush.msra.mxu0 %v856
      %1361 = vmatpush.msra.mxu0 %v848
      %1362 = vmatpush.msra.mxu0 %v840
      %1363 = vmatpush.msra.mxu0 %v832
      %1364 = vmatpush.msra.mxu0 %v824
      %1365 = vmatpush.msra.mxu0 %v816
      %1366 = vmatpush.msra.mxu0 %v808
      %1367 = vmatmul.f32.gmra.mxu0 %v171
      %v1368 = vpop.f32.mrf.mxu0
      %v1369 = vadd.f32 0.0, %v1368
      %1370 = vmatmul.f32.gmra.mxu0 %v173
      %v1371 = vpop.f32.mrf.mxu0
      %v1372 = vadd.f32 0.0, %v1371
      %1373 = vmatmul.f32.gmra.mxu0 %v175
      %v1374 = vpop.f32.mrf.mxu0
      %v1375 = vadd.f32 0.0, %v1374
      %1376 = vmatmul.f32.gmra.mxu0 %v177
      %v1377 = vpop.f32.mrf.mxu0
      %v1378 = vadd.f32 0.0, %v1377
      %1379 = vdwg.mxu0
      %1380 = vmatpush.msra.mxu0 0.0
      %1381 = vmatpush.msra.mxu0 0.0
      %1382 = vmatpush.msra.mxu0 0.0
      %1383 = vmatpush.msra.mxu0 0.0
      %1384 = vmatpush.msra.mxu0 0.0
      %1385 = vmatpush.msra.mxu0 0.0
      %1386 = vmatpush.msra.mxu0 0.0
      %1387 = vmatpush.msra.mxu0 0.0
      %1388 = vmatpush.msra.mxu0 0.0
      %1389 = vmatpush.msra.mxu0 0.0
      %1390 = vmatpush.msra.mxu0 0.0
      %1391 = vmatpush.msra.mxu0 0.0
      %1392 = vmatpush.msra.mxu0 0.0
      %1393 = vmatpush.msra.mxu0 0.0
      %1394 = vmatpush.msra.mxu0 %v944
      %1395 = vmatpush.msra.mxu0 %v936
      %1396 = vmatmul.f32.gmra.mxu0 %v325
      %v1397 = vpop.f32.mrf.mxu0
      %v1398 = vadd.f32 %v1369, %v1397
      %1399 = vmatmul.f32.gmra.mxu0 %v328
      %v1400 = vpop.f32.mrf.mxu0
      %v1401 = vadd.f32 %v1372, %v1400
      %1402 = vmatmul.f32.gmra.mxu0 %v331
      %v1403 = vpop.f32.mrf.mxu0
      %v1404 = vadd.f32 %v1375, %v1403
      %1405 = vmatmul.f32.gmra.mxu0 %v334
      %v1406 = vpop.f32.mrf.mxu0
      %v1407 = vadd.f32 %v1378, %v1406
      %1408 = vdwg.mxu0
      %v1409 = vmax.f32 %v383, %v992
      %v1410 = vmax.f32 %v441, %v1050
      %v1411 = vmax.f32 %v499, %v1108
      %v1412 = vmax.f32 %v557, %v1166
      %v1413 = vmax.f32 %v615, %v1224
      %v1414 = vmax.f32 %v673, %v1282
      %v1415 = vmax.f32 %v731, %v1340
      %v1416 = vmax.f32 %v789, %v1398
      %v1417 = vmax.f32 %v386, %v995
      %v1418 = vmax.f32 %v444, %v1053
      %v1419 = vmax.f32 %v502, %v1111
      %v1420 = vmax.f32 %v560, %v1169
      %v1421 = vmax.f32 %v618, %v1227
      %v1422 = vmax.f32 %v676, %v1285
      %v1423 = vmax.f32 %v734, %v1343
      %v1424 = vmax.f32 %v792, %v1401
      %v1425 = vmax.f32 %v389, %v998
      %v1426 = vmax.f32 %v447, %v1056
      %v1427 = vmax.f32 %v505, %v1114
      %v1428 = vmax.f32 %v563, %v1172
      %v1429 = vmax.f32 %v621, %v1230
      %v1430 = vmax.f32 %v679, %v1288
      %v1431 = vmax.f32 %v737, %v1346
      %v1432 = vmax.f32 %v795, %v1404
      %v1433 = vmax.f32 %v392, %v1001
      %v1434 = vmax.f32 %v450, %v1059
      %v1435 = vmax.f32 %v508, %v1117
      %v1436 = vmax.f32 %v566, %v1175
      %v1437 = vmax.f32 %v624, %v1233
      %v1438 = vmax.f32 %v682, %v1291
      %v1439 = vmax.f32 %v740, %v1349
      %v1440 = vmax.f32 %v798, %v1407
      %s1441 = scalar_lea.vmem %s165, 2304
      %v1442 = vld [vmem:[%s1441] sm:$0xff]
      %v1443 = vld [vmem:[%s1441 + $0x8] sm:$0xff]
      %v1444 = vld [vmem:[%s1441 + $0x10] sm:$0xff]
      %v1445 = vld [vmem:[%s1441 + $0x18] sm:$0xff]
      %v1446 = vld [vmem:[%s1441 + $0x20] sm:$0xff]
      %v1447 = vld [vmem:[%s1441 + $0x28] sm:$0xff]
      %v1448 = vld [vmem:[%s1441 + $0x30] sm:$0xff]
      %v1449 = vld [vmem:[%s1441 + $0x38] sm:$0xff]
      %v1450 = vld [vmem:[%s1441 + $0x40] sm:$0xff]
      %v1451 = vld [vmem:[%s1441 + $0x48] sm:$0xff]
      %v1452 = vld [vmem:[%s1441 + $0x50] sm:$0xff]
      %v1453 = vld [vmem:[%s1441 + $0x58] sm:$0xff]
      %v1454 = vld [vmem:[%s1441 + $0x60] sm:$0xff]
      %v1455 = vld [vmem:[%s1441 + $0x68] sm:$0xff]
      %v1456 = vld [vmem:[%s1441 + $0x70] sm:$0xff]
      %v1457 = vld [vmem:[%s1441 + $0x78] sm:$0xff]
      %v1458 = vld [vmem:[%s1441 + $0x80] sm:$0xff]
      %v1459 = vld [vmem:[%s1441 + $0x88] sm:$0xff]
      %v1460 = vld [vmem:[%s1441 + $0x90] sm:$0xff]
      %v1461 = vld [vmem:[%s1441 + $0x98] sm:$0xff]
      %v1462 = vld [vmem:[%s1441 + $0xa0] sm:$0xff]
      %v1463 = vld [vmem:[%s1441 + $0xa8] sm:$0xff]
      %v1464 = vld [vmem:[%s1441 + $0xb0] sm:$0xff]
      %v1465 = vld [vmem:[%s1441 + $0xb8] sm:$0xff]
      %v1466 = vld [vmem:[%s1441 + $0xc0] sm:$0xff]
      %v1467 = vld [vmem:[%s1441 + $0xc8] sm:$0xff]
      %v1468 = vld [vmem:[%s1441 + $0xd0] sm:$0xff]
      %v1469 = vld [vmem:[%s1441 + $0xd8] sm:$0xff]
      %v1470 = vld [vmem:[%s1441 + $0xe0] sm:$0xff]
      %v1471 = vld [vmem:[%s1441 + $0xe8] sm:$0xff]
      %v1472 = vld [vmem:[%s1441 + $0xf0] sm:$0xff]
      %v1473 = vld [vmem:[%s1441 + $0xf8] sm:$0xff]
      %v1474 = vld [vmem:[%s1441 + $0x100] sm:$0xff]
      %v1475 = vld [vmem:[%s1441 + $0x108] sm:$0xff]
      %v1476 = vld [vmem:[%s1441 + $0x110] sm:$0xff]
      %v1477 = vld [vmem:[%s1441 + $0x118] sm:$0xff]
      %v1478 = vld [vmem:[%s1441 + $0x120] sm:$0xff]
      %v1479 = vld [vmem:[%s1441 + $0x128] sm:$0xff]
      %v1480 = vld [vmem:[%s1441 + $0x130] sm:$0xff]
      %v1481 = vld [vmem:[%s1441 + $0x138] sm:$0xff]
      %v1482 = vld [vmem:[%s1441 + $0x140] sm:$0xff]
      %v1483 = vld [vmem:[%s1441 + $0x148] sm:$0xff]
      %v1484 = vld [vmem:[%s1441 + $0x150] sm:$0xff]
      %v1485 = vld [vmem:[%s1441 + $0x158] sm:$0xff]
      %v1486 = vld [vmem:[%s1441 + $0x160] sm:$0xff]
      %v1487 = vld [vmem:[%s1441 + $0x168] sm:$0xff]
      %v1488 = vld [vmem:[%s1441 + $0x170] sm:$0xff]
      %v1489 = vld [vmem:[%s1441 + $0x178] sm:$0xff]
      %v1490 = vld [vmem:[%s1441 + $0x180] sm:$0xff]
      %v1491 = vld [vmem:[%s1441 + $0x188] sm:$0xff]
      %v1492 = vld [vmem:[%s1441 + $0x190] sm:$0xff]
      %v1493 = vld [vmem:[%s1441 + $0x198] sm:$0xff]
      %v1494 = vld [vmem:[%s1441 + $0x1a0] sm:$0xff]
      %v1495 = vld [vmem:[%s1441 + $0x1a8] sm:$0xff]
      %v1496 = vld [vmem:[%s1441 + $0x1b0] sm:$0xff]
      %v1497 = vld [vmem:[%s1441 + $0x1b8] sm:$0xff]
      %v1498 = vld [vmem:[%s1441 + $0x1c0] sm:$0xff]
      %v1499 = vld [vmem:[%s1441 + $0x1c8] sm:$0xff]
      %v1500 = vld [vmem:[%s1441 + $0x1d0] sm:$0xff]
      %v1501 = vld [vmem:[%s1441 + $0x1d8] sm:$0xff]
      %v1502 = vld [vmem:[%s1441 + $0x1e0] sm:$0xff]
      %v1503 = vld [vmem:[%s1441 + $0x1e8] sm:$0xff]
      %v1504 = vld [vmem:[%s1441 + $0x1f0] sm:$0xff]
      %v1505 = vld [vmem:[%s1441 + $0x1f8] sm:$0xff]
      %v1506 = vld [vmem:[%s1441 + $0x200] sm:$0xff]
      %v1507 = vld [vmem:[%s1441 + $0x208] sm:$0xff]
      %v1508 = vld [vmem:[%s1441 + $0x210] sm:$0xff]
      %v1509 = vld [vmem:[%s1441 + $0x218] sm:$0xff]
      %v1510 = vld [vmem:[%s1441 + $0x220] sm:$0xff]
      %v1511 = vld [vmem:[%s1441 + $0x228] sm:$0xff]
      %v1512 = vld [vmem:[%s1441 + $0x230] sm:$0xff]
      %v1513 = vld [vmem:[%s1441 + $0x238] sm:$0xff]
      %v1514 = vld [vmem:[%s1441 + $0x240] sm:$0xff]
      %v1515 = vld [vmem:[%s1441 + $0x248] sm:$0xff]
      %v1516 = vld [vmem:[%s1441 + $0x250] sm:$0xff]
      %v1517 = vld [vmem:[%s1441 + $0x258] sm:$0xff]
      %v1518 = vld [vmem:[%s1441 + $0x260] sm:$0xff]
      %v1519 = vld [vmem:[%s1441 + $0x268] sm:$0xff]
      %v1520 = vld [vmem:[%s1441 + $0x270] sm:$0xff]
      %v1521 = vld [vmem:[%s1441 + $0x278] sm:$0xff]
      %v1522 = vld [vmem:[%s1441 + $0x280] sm:$0xff]
      %v1523 = vld [vmem:[%s1441 + $0x288] sm:$0xff]
      %v1524 = vld [vmem:[%s1441 + $0x290] sm:$0xff]
      %v1525 = vld [vmem:[%s1441 + $0x298] sm:$0xff]
      %v1526 = vld [vmem:[%s1441 + $0x2a0] sm:$0xff]
      %v1527 = vld [vmem:[%s1441 + $0x2a8] sm:$0xff]
      %v1528 = vld [vmem:[%s1441 + $0x2b0] sm:$0xff]
      %v1529 = vld [vmem:[%s1441 + $0x2b8] sm:$0xff]
      %v1530 = vld [vmem:[%s1441 + $0x2c0] sm:$0xff]
      %v1531 = vld [vmem:[%s1441 + $0x2c8] sm:$0xff]
      %v1532 = vld [vmem:[%s1441 + $0x2d0] sm:$0xff]
      %v1533 = vld [vmem:[%s1441 + $0x2d8] sm:$0xff]
      %v1534 = vld [vmem:[%s1441 + $0x2e0] sm:$0xff]
      %v1535 = vld [vmem:[%s1441 + $0x2e8] sm:$0xff]
      %v1536 = vld [vmem:[%s1441 + $0x2f0] sm:$0xff]
      %v1537 = vld [vmem:[%s1441 + $0x2f8] sm:$0xff]
      %v1538 = vld [vmem:[%s1441 + $0x300] sm:$0xff]
      %v1539 = vld [vmem:[%s1441 + $0x308] sm:$0xff]
      %v1540 = vld [vmem:[%s1441 + $0x310] sm:$0xff]
      %v1541 = vld [vmem:[%s1441 + $0x318] sm:$0xff]
      %v1542 = vld [vmem:[%s1441 + $0x320] sm:$0xff]
      %v1543 = vld [vmem:[%s1441 + $0x328] sm:$0xff]
      %v1544 = vld [vmem:[%s1441 + $0x330] sm:$0xff]
      %v1545 = vld [vmem:[%s1441 + $0x338] sm:$0xff]
      %v1546 = vld [vmem:[%s1441 + $0x340] sm:$0xff]
      %v1547 = vld [vmem:[%s1441 + $0x348] sm:$0xff]
      %v1548 = vld [vmem:[%s1441 + $0x350] sm:$0xff]
      %v1549 = vld [vmem:[%s1441 + $0x358] sm:$0xff]
      %v1550 = vld [vmem:[%s1441 + $0x360] sm:$0xff]
      %v1551 = vld [vmem:[%s1441 + $0x368] sm:$0xff]
      %v1552 = vld [vmem:[%s1441 + $0x370] sm:$0xff]
      %v1553 = vld [vmem:[%s1441 + $0x378] sm:$0xff]
      %v1554 = vld [vmem:[%s1441 + $0x380] sm:$0xff]
      %v1555 = vld [vmem:[%s1441 + $0x388] sm:$0xff]
      %v1556 = vld [vmem:[%s1441 + $0x390] sm:$0xff]
      %v1557 = vld [vmem:[%s1441 + $0x398] sm:$0xff]
      %v1558 = vld [vmem:[%s1441 + $0x3a0] sm:$0xff]
      %v1559 = vld [vmem:[%s1441 + $0x3a8] sm:$0xff]
      %v1560 = vld [vmem:[%s1441 + $0x3b0] sm:$0xff]
      %v1561 = vld [vmem:[%s1441 + $0x3b8] sm:$0xff]
      %v1562 = vld [vmem:[%s1441 + $0x3c0] sm:$0xff]
      %v1563 = vld [vmem:[%s1441 + $0x3c8] sm:$0xff]
      %v1564 = vld [vmem:[%s1441 + $0x3d0] sm:$0xff]
      %v1565 = vld [vmem:[%s1441 + $0x3d8] sm:$0xff]
      %v1566 = vld [vmem:[%s1441 + $0x3e0] sm:$0xff]
      %v1567 = vld [vmem:[%s1441 + $0x3e8] sm:$0xff]
      %v1568 = vld [vmem:[%s1441 + $0x3f0] sm:$0xff]
      %v1569 = vld [vmem:[%s1441 + $0x3f8] sm:$0xff]
      %v1570 = vld [vmem:[%s1441 + $0x400] sm:$0xff]
      %v1571 = vld [vmem:[%s1441 + $0x408] sm:$0xff]
      %v1572 = vld [vmem:[%s1441 + $0x410] sm:$0xff]
      %v1573 = vld [vmem:[%s1441 + $0x418] sm:$0xff]
      %v1574 = vld [vmem:[%s1441 + $0x420] sm:$0xff]
      %v1575 = vld [vmem:[%s1441 + $0x428] sm:$0xff]
      %v1576 = vld [vmem:[%s1441 + $0x430] sm:$0xff]
      %v1577 = vld [vmem:[%s1441 + $0x438] sm:$0xff]
      %v1578 = vld [vmem:[%s1441 + $0x440] sm:$0xff]
      %v1579 = vld [vmem:[%s1441 + $0x448] sm:$0xff]
      %v1580 = vld [vmem:[%s1441 + $0x450] sm:$0xff]
      %v1581 = vld [vmem:[%s1441 + $0x458] sm:$0xff]
      %v1582 = vld [vmem:[%s1441 + $0x460] sm:$0xff]
      %v1583 = vld [vmem:[%s1441 + $0x468] sm:$0xff]
      %v1584 = vld [vmem:[%s1441 + $0x470] sm:$0xff]
      %v1585 = vld [vmem:[%s1441 + $0x478] sm:$0xff]
      %1586 = vmatpush.msra.mxu0 %v1562
      %1587 = vmatpush.msra.mxu0 %v1554
      %1588 = vmatpush.msra.mxu0 %v1546
      %1589 = vmatpush.msra.mxu0 %v1538
      %1590 = vmatpush.msra.mxu0 %v1530
      %1591 = vmatpush.msra.mxu0 %v1522
      %1592 = vmatpush.msra.mxu0 %v1514
      %1593 = vmatpush.msra.mxu0 %v1506
      %1594 = vmatpush.msra.mxu0 %v1498
      %1595 = vmatpush.msra.mxu0 %v1490
      %1596 = vmatpush.msra.mxu0 %v1482
      %1597 = vmatpush.msra.mxu0 %v1474
      %1598 = vmatpush.msra.mxu0 %v1466
      %1599 = vmatpush.msra.mxu0 %v1458
      %1600 = vmatpush.msra.mxu0 %v1450
      %1601 = vmatpush.msra.mxu0 %v1442
      %1602 = vmatmul.f32.gmra.mxu0 %v171
      %v1603 = vpop.f32.mrf.mxu0
      %v1604 = vadd.f32 0.0, %v1603
      %1605 = vmatmul.f32.gmra.mxu0 %v173
      %v1606 = vpop.f32.mrf.mxu0
      %v1607 = vadd.f32 0.0, %v1606
      %1608 = vmatmul.f32.gmra.mxu0 %v175
      %v1609 = vpop.f32.mrf.mxu0
      %v1610 = vadd.f32 0.0, %v1609
      %1611 = vmatmul.f32.gmra.mxu0 %v177
      %v1612 = vpop.f32.mrf.mxu0
      %v1613 = vadd.f32 0.0, %v1612
      %1614 = vdwg.mxu0
      %1615 = vmatpush.msra.mxu0 0.0
      %1616 = vmatpush.msra.mxu0 0.0
      %1617 = vmatpush.msra.mxu0 0.0
      %1618 = vmatpush.msra.mxu0 0.0
      %1619 = vmatpush.msra.mxu0 0.0
      %1620 = vmatpush.msra.mxu0 0.0
      %1621 = vmatpush.msra.mxu0 0.0
      %1622 = vmatpush.msra.mxu0 0.0
      %1623 = vmatpush.msra.mxu0 0.0
      %1624 = vmatpush.msra.mxu0 0.0
      %1625 = vmatpush.msra.mxu0 0.0
      %1626 = vmatpush.msra.mxu0 0.0
      %1627 = vmatpush.msra.mxu0 0.0
      %1628 = vmatpush.msra.mxu0 0.0
      %1629 = vmatpush.msra.mxu0 %v1578
      %1630 = vmatpush.msra.mxu0 %v1570
      %1631 = vmatmul.f32.gmra.mxu0 %v325
      %v1632 = vpop.f32.mrf.mxu0
      %v1633 = vadd.f32 %v1604, %v1632
      %1634 = vmatmul.f32.gmra.mxu0 %v328
      %v1635 = vpop.f32.mrf.mxu0
      %v1636 = vadd.f32 %v1607, %v1635
      %1637 = vmatmul.f32.gmra.mxu0 %v331
      %v1638 = vpop.f32.mrf.mxu0
      %v1639 = vadd.f32 %v1610, %v1638
      %1640 = vmatmul.f32.gmra.mxu0 %v334
      %v1641 = vpop.f32.mrf.mxu0
      %v1642 = vadd.f32 %v1613, %v1641
      %1643 = vdwg.mxu0
      %1644 = vmatpush.msra.mxu0 %v1563
      %1645 = vmatpush.msra.mxu0 %v1555
      %1646 = vmatpush.msra.mxu0 %v1547
      %1647 = vmatpush.msra.mxu0 %v1539
      %1648 = vmatpush.msra.mxu0 %v1531
      %1649 = vmatpush.msra.mxu0 %v1523
      %1650 = vmatpush.msra.mxu0 %v1515
      %1651 = vmatpush.msra.mxu0 %v1507
      %1652 = vmatpush.msra.mxu0 %v1499
      %1653 = vmatpush.msra.mxu0 %v1491
      %1654 = vmatpush.msra.mxu0 %v1483
      %1655 = vmatpush.msra.mxu0 %v1475
      %1656 = vmatpush.msra.mxu0 %v1467
      %1657 = vmatpush.msra.mxu0 %v1459
      %1658 = vmatpush.msra.mxu0 %v1451
      %1659 = vmatpush.msra.mxu0 %v1443
      %1660 = vmatmul.f32.gmra.mxu0 %v171
      %v1661 = vpop.f32.mrf.mxu0
      %v1662 = vadd.f32 0.0, %v1661
      %1663 = vmatmul.f32.gmra.mxu0 %v173
      %v1664 = vpop.f32.mrf.mxu0
      %v1665 = vadd.f32 0.0, %v1664
      %1666 = vmatmul.f32.gmra.mxu0 %v175
      %v1667 = vpop.f32.mrf.mxu0
      %v1668 = vadd.f32 0.0, %v1667
      %1669 = vmatmul.f32.gmra.mxu0 %v177
      %v1670 = vpop.f32.mrf.mxu0
      %v1671 = vadd.f32 0.0, %v1670
      %1672 = vdwg.mxu0
      %1673 = vmatpush.msra.mxu0 0.0
      %1674 = vmatpush.msra.mxu0 0.0
      %1675 = vmatpush.msra.mxu0 0.0
      %1676 = vmatpush.msra.mxu0 0.0
      %1677 = vmatpush.msra.mxu0 0.0
      %1678 = vmatpush.msra.mxu0 0.0
      %1679 = vmatpush.msra.mxu0 0.0
      %1680 = vmatpush.msra.mxu0 0.0
      %1681 = vmatpush.msra.mxu0 0.0
      %1682 = vmatpush.msra.mxu0 0.0
      %1683 = vmatpush.msra.mxu0 0.0
      %1684 = vmatpush.msra.mxu0 0.0
      %1685 = vmatpush.msra.mxu0 0.0
      %1686 = vmatpush.msra.mxu0 0.0
      %1687 = vmatpush.msra.mxu0 %v1579
      %1688 = vmatpush.msra.mxu0 %v1571
      %1689 = vmatmul.f32.gmra.mxu0 %v325
      %v1690 = vpop.f32.mrf.mxu0
      %v1691 = vadd.f32 %v1662, %v1690
      %1692 = vmatmul.f32.gmra.mxu0 %v328
      %v1693 = vpop.f32.mrf.mxu0
      %v1694 = vadd.f32 %v1665, %v1693
      %1695 = vmatmul.f32.gmra.mxu0 %v331
      %v1696 = vpop.f32.mrf.mxu0
      %v1697 = vadd.f32 %v1668, %v1696
      %1698 = vmatmul.f32.gmra.mxu0 %v334
      %v1699 = vpop.f32.mrf.mxu0
      %v1700 = vadd.f32 %v1671, %v1699
      %1701 = vdwg.mxu0
      %1702 = vmatpush.msra.mxu0 %v1564
      %1703 = vmatpush.msra.mxu0 %v1556
      %1704 = vmatpush.msra.mxu0 %v1548
      %1705 = vmatpush.msra.mxu0 %v1540
      %1706 = vmatpush.msra.mxu0 %v1532
      %1707 = vmatpush.msra.mxu0 %v1524
      %1708 = vmatpush.msra.mxu0 %v1516
      %1709 = vmatpush.msra.mxu0 %v1508
      %1710 = vmatpush.msra.mxu0 %v1500
      %1711 = vmatpush.msra.mxu0 %v1492
      %1712 = vmatpush.msra.mxu0 %v1484
      %1713 = vmatpush.msra.mxu0 %v1476
      %1714 = vmatpush.msra.mxu0 %v1468
      %1715 = vmatpush.msra.mxu0 %v1460
      %1716 = vmatpush.msra.mxu0 %v1452
      %1717 = vmatpush.msra.mxu0 %v1444
      %1718 = vmatmul.f32.gmra.mxu0 %v171
      %v1719 = vpop.f32.mrf.mxu0
      %v1720 = vadd.f32 0.0, %v1719
      %1721 = vmatmul.f32.gmra.mxu0 %v173
      %v1722 = vpop.f32.mrf.mxu0
      %v1723 = vadd.f32 0.0, %v1722
      %1724 = vmatmul.f32.gmra.mxu0 %v175
      %v1725 = vpop.f32.mrf.mxu0
      %v1726 = vadd.f32 0.0, %v1725
      %1727 = vmatmul.f32.gmra.mxu0 %v177
      %v1728 = vpop.f32.mrf.mxu0
      %v1729 = vadd.f32 0.0, %v1728
      %1730 = vdwg.mxu0
      %1731 = vmatpush.msra.mxu0 0.0
      %1732 = vmatpush.msra.mxu0 0.0
      %1733 = vmatpush.msra.mxu0 0.0
      %1734 = vmatpush.msra.mxu0 0.0
      %1735 = vmatpush.msra.mxu0 0.0
      %1736 = vmatpush.msra.mxu0 0.0
      %1737 = vmatpush.msra.mxu0 0.0
      %1738 = vmatpush.msra.mxu0 0.0
      %1739 = vmatpush.msra.mxu0 0.0
      %1740 = vmatpush.msra.mxu0 0.0
      %1741 = vmatpush.msra.mxu0 0.0
      %1742 = vmatpush.msra.mxu0 0.0
      %1743 = vmatpush.msra.mxu0 0.0
      %1744 = vmatpush.msra.mxu0 0.0
      %1745 = vmatpush.msra.mxu0 %v1580
      %1746 = vmatpush.msra.mxu0 %v1572
      %1747 = vmatmul.f32.gmra.mxu0 %v325
      %v1748 = vpop.f32.mrf.mxu0
      %v1749 = vadd.f32 %v1720, %v1748
      %1750 = vmatmul.f32.gmra.mxu0 %v328
      %v1751 = vpop.f32.mrf.mxu0
      %v1752 = vadd.f32 %v1723, %v1751
      %1753 = vmatmul.f32.gmra.mxu0 %v331
      %v1754 = vpop.f32.mrf.mxu0
      %v1755 = vadd.f32 %v1726, %v1754
      %1756 = vmatmul.f32.gmra.mxu0 %v334
      %v1757 = vpop.f32.mrf.mxu0
      %v1758 = vadd.f32 %v1729, %v1757
      %1759 = vdwg.mxu0
      %1760 = vmatpush.msra.mxu0 %v1565
      %1761 = vmatpush.msra.mxu0 %v1557
      %1762 = vmatpush.msra.mxu0 %v1549
      %1763 = vmatpush.msra.mxu0 %v1541
      %1764 = vmatpush.msra.mxu0 %v1533
      %1765 = vmatpush.msra.mxu0 %v1525
      %1766 = vmatpush.msra.mxu0 %v1517
      %1767 = vmatpush.msra.mxu0 %v1509
      %1768 = vmatpush.msra.mxu0 %v1501
      %1769 = vmatpush.msra.mxu0 %v1493
      %1770 = vmatpush.msra.mxu0 %v1485
      %1771 = vmatpush.msra.mxu0 %v1477
      %1772 = vmatpush.msra.mxu0 %v1469
      %1773 = vmatpush.msra.mxu0 %v1461
      %1774 = vmatpush.msra.mxu0 %v1453
      %1775 = vmatpush.msra.mxu0 %v1445
      %1776 = vmatmul.f32.gmra.mxu0 %v171
      %v1777 = vpop.f32.mrf.mxu0
      %v1778 = vadd.f32 0.0, %v1777
      %1779 = vmatmul.f32.gmra.mxu0 %v173
      %v1780 = vpop.f32.mrf.mxu0
      %v1781 = vadd.f32 0.0, %v1780
      %1782 = vmatmul.f32.gmra.mxu0 %v175
      %v1783 = vpop.f32.mrf.mxu0
      %v1784 = vadd.f32 0.0, %v1783
      %1785 = vmatmul.f32.gmra.mxu0 %v177
      %v1786 = vpop.f32.mrf.mxu0
      %v1787 = vadd.f32 0.0, %v1786
      %1788 = vdwg.mxu0
      %1789 = vmatpush.msra.mxu0 0.0
      %1790 = vmatpush.msra.mxu0 0.0
      %1791 = vmatpush.msra.mxu0 0.0
      %1792 = vmatpush.msra.mxu0 0.0
      %1793 = vmatpush.msra.mxu0 0.0
      %1794 = vmatpush.msra.mxu0 0.0
      %1795 = vmatpush.msra.mxu0 0.0
      %1796 = vmatpush.msra.mxu0 0.0
      %1797 = vmatpush.msra.mxu0 0.0
      %1798 = vmatpush.msra.mxu0 0.0
      %1799 = vmatpush.msra.mxu0 0.0
      %1800 = vmatpush.msra.mxu0 0.0
      %1801 = vmatpush.msra.mxu0 0.0
      %1802 = vmatpush.msra.mxu0 0.0
      %1803 = vmatpush.msra.mxu0 %v1581
      %1804 = vmatpush.msra.mxu0 %v1573
      %1805 = vmatmul.f32.gmra.mxu0 %v325
      %v1806 = vpop.f32.mrf.mxu0
      %v1807 = vadd.f32 %v1778, %v1806
      %1808 = vmatmul.f32.gmra.mxu0 %v328
      %v1809 = vpop.f32.mrf.mxu0
      %v1810 = vadd.f32 %v1781, %v1809
      %1811 = vmatmul.f32.gmra.mxu0 %v331
      %v1812 = vpop.f32.mrf.mxu0
      %v1813 = vadd.f32 %v1784, %v1812
      %1814 = vmatmul.f32.gmra.mxu0 %v334
      %v1815 = vpop.f32.mrf.mxu0
      %v1816 = vadd.f32 %v1787, %v1815
      %1817 = vdwg.mxu0
      %1818 = vmatpush.msra.mxu0 %v1566
      %1819 = vmatpush.msra.mxu0 %v1558
      %1820 = vmatpush.msra.mxu0 %v1550
      %1821 = vmatpush.msra.mxu0 %v1542
      %1822 = vmatpush.msra.mxu0 %v1534
      %1823 = vmatpush.msra.mxu0 %v1526
      %1824 = vmatpush.msra.mxu0 %v1518
      %1825 = vmatpush.msra.mxu0 %v1510
      %1826 = vmatpush.msra.mxu0 %v1502
      %1827 = vmatpush.msra.mxu0 %v1494
      %1828 = vmatpush.msra.mxu0 %v1486
      %1829 = vmatpush.msra.mxu0 %v1478
      %1830 = vmatpush.msra.mxu0 %v1470
      %1831 = vmatpush.msra.mxu0 %v1462
      %1832 = vmatpush.msra.mxu0 %v1454
      %1833 = vmatpush.msra.mxu0 %v1446
      %1834 = vmatmul.f32.gmra.mxu0 %v171
      %v1835 = vpop.f32.mrf.mxu0
      %v1836 = vadd.f32 0.0, %v1835
      %1837 = vmatmul.f32.gmra.mxu0 %v173
      %v1838 = vpop.f32.mrf.mxu0
      %v1839 = vadd.f32 0.0, %v1838
      %1840 = vmatmul.f32.gmra.mxu0 %v175
      %v1841 = vpop.f32.mrf.mxu0
      %v1842 = vadd.f32 0.0, %v1841
      %1843 = vmatmul.f32.gmra.mxu0 %v177
      %v1844 = vpop.f32.mrf.mxu0
      %v1845 = vadd.f32 0.0, %v1844
      %1846 = vdwg.mxu0
      %1847 = vmatpush.msra.mxu0 0.0
      %1848 = vmatpush.msra.mxu0 0.0
      %1849 = vmatpush.msra.mxu0 0.0
      %1850 = vmatpush.msra.mxu0 0.0
      %1851 = vmatpush.msra.mxu0 0.0
      %1852 = vmatpush.msra.mxu0 0.0
      %1853 = vmatpush.msra.mxu0 0.0
      %1854 = vmatpush.msra.mxu0 0.0
      %1855 = vmatpush.msra.mxu0 0.0
      %1856 = vmatpush.msra.mxu0 0.0
      %1857 = vmatpush.msra.mxu0 0.0
      %1858 = vmatpush.msra.mxu0 0.0
      %1859 = vmatpush.msra.mxu0 0.0
      %1860 = vmatpush.msra.mxu0 0.0
      %1861 = vmatpush.msra.mxu0 %v1582
      %1862 = vmatpush.msra.mxu0 %v1574
      %1863 = vmatmul.f32.gmra.mxu0 %v325
      %v1864 = vpop.f32.mrf.mxu0
      %v1865 = vadd.f32 %v1836, %v1864
      %1866 = vmatmul.f32.gmra.mxu0 %v328
      %v1867 = vpop.f32.mrf.mxu0
      %v1868 = vadd.f32 %v1839, %v1867
      %1869 = vmatmul.f32.gmra.mxu0 %v331
      %v1870 = vpop.f32.mrf.mxu0
      %v1871 = vadd.f32 %v1842, %v1870
      %1872 = vmatmul.f32.gmra.mxu0 %v334
      %v1873 = vpop.f32.mrf.mxu0
      %v1874 = vadd.f32 %v1845, %v1873
      %1875 = vdwg.mxu0
      %1876 = vmatpush.msra.mxu0 %v1567
      %1877 = vmatpush.msra.mxu0 %v1559
      %1878 = vmatpush.msra.mxu0 %v1551
      %1879 = vmatpush.msra.mxu0 %v1543
      %1880 = vmatpush.msra.mxu0 %v1535
      %1881 = vmatpush.msra.mxu0 %v1527
      %1882 = vmatpush.msra.mxu0 %v1519
      %1883 = vmatpush.msra.mxu0 %v1511
      %1884 = vmatpush.msra.mxu0 %v1503
      %1885 = vmatpush.msra.mxu0 %v1495
      %1886 = vmatpush.msra.mxu0 %v1487
      %1887 = vmatpush.msra.mxu0 %v1479
      %1888 = vmatpush.msra.mxu0 %v1471
      %1889 = vmatpush.msra.mxu0 %v1463
      %1890 = vmatpush.msra.mxu0 %v1455
      %1891 = vmatpush.msra.mxu0 %v1447
      %1892 = vmatmul.f32.gmra.mxu0 %v171
      %v1893 = vpop.f32.mrf.mxu0
      %v1894 = vadd.f32 0.0, %v1893
      %1895 = vmatmul.f32.gmra.mxu0 %v173
      %v1896 = vpop.f32.mrf.mxu0
      %v1897 = vadd.f32 0.0, %v1896
      %1898 = vmatmul.f32.gmra.mxu0 %v175
      %v1899 = vpop.f32.mrf.mxu0
      %v1900 = vadd.f32 0.0, %v1899
      %1901 = vmatmul.f32.gmra.mxu0 %v177
      %v1902 = vpop.f32.mrf.mxu0
      %v1903 = vadd.f32 0.0, %v1902
      %1904 = vdwg.mxu0
      %1905 = vmatpush.msra.mxu0 0.0
      %1906 = vmatpush.msra.mxu0 0.0
      %1907 = vmatpush.msra.mxu0 0.0
      %1908 = vmatpush.msra.mxu0 0.0
      %1909 = vmatpush.msra.mxu0 0.0
      %1910 = vmatpush.msra.mxu0 0.0
      %1911 = vmatpush.msra.mxu0 0.0
      %1912 = vmatpush.msra.mxu0 0.0
      %1913 = vmatpush.msra.mxu0 0.0
      %1914 = vmatpush.msra.mxu0 0.0
      %1915 = vmatpush.msra.mxu0 0.0
      %1916 = vmatpush.msra.mxu0 0.0
      %1917 = vmatpush.msra.mxu0 0.0
      %1918 = vmatpush.msra.mxu0 0.0
      %1919 = vmatpush.msra.mxu0 %v1583
      %1920 = vmatpush.msra.mxu0 %v1575
      %1921 = vmatmul.f32.gmra.mxu0 %v325
      %v1922 = vpop.f32.mrf.mxu0
      %v1923 = vadd.f32 %v1894, %v1922
      %1924 = vmatmul.f32.gmra.mxu0 %v328
      %v1925 = vpop.f32.mrf.mxu0
      %v1926 = vadd.f32 %v1897, %v1925
      %1927 = vmatmul.f32.gmra.mxu0 %v331
      %v1928 = vpop.f32.mrf.mxu0
      %v1929 = vadd.f32 %v1900, %v1928
      %1930 = vmatmul.f32.gmra.mxu0 %v334
      %v1931 = vpop.f32.mrf.mxu0
      %v1932 = vadd.f32 %v1903, %v1931
      %1933 = vdwg.mxu0
      %1934 = vmatpush.msra.mxu0 %v1568
      %1935 = vmatpush.msra.mxu0 %v1560
      %1936 = vmatpush.msra.mxu0 %v1552
      %1937 = vmatpush.msra.mxu0 %v1544
      %1938 = vmatpush.msra.mxu0 %v1536
      %1939 = vmatpush.msra.mxu0 %v1528
      %1940 = vmatpush.msra.mxu0 %v1520
      %1941 = vmatpush.msra.mxu0 %v1512
      %1942 = vmatpush.msra.mxu0 %v1504
      %1943 = vmatpush.msra.mxu0 %v1496
      %1944 = vmatpush.msra.mxu0 %v1488
      %1945 = vmatpush.msra.mxu0 %v1480
      %1946 = vmatpush.msra.mxu0 %v1472
      %1947 = vmatpush.msra.mxu0 %v1464
      %1948 = vmatpush.msra.mxu0 %v1456
      %1949 = vmatpush.msra.mxu0 %v1448
      %1950 = vmatmul.f32.gmra.mxu0 %v171
      %v1951 = vpop.f32.mrf.mxu0
      %v1952 = vadd.f32 0.0, %v1951
      %1953 = vmatmul.f32.gmra.mxu0 %v173
      %v1954 = vpop.f32.mrf.mxu0
      %v1955 = vadd.f32 0.0, %v1954
      %1956 = vmatmul.f32.gmra.mxu0 %v175
      %v1957 = vpop.f32.mrf.mxu0
      %v1958 = vadd.f32 0.0, %v1957
      %1959 = vmatmul.f32.gmra.mxu0 %v177
      %v1960 = vpop.f32.mrf.mxu0
      %v1961 = vadd.f32 0.0, %v1960
      %1962 = vdwg.mxu0
      %1963 = vmatpush.msra.mxu0 0.0
      %1964 = vmatpush.msra.mxu0 0.0
      %1965 = vmatpush.msra.mxu0 0.0
      %1966 = vmatpush.msra.mxu0 0.0
      %1967 = vmatpush.msra.mxu0 0.0
      %1968 = vmatpush.msra.mxu0 0.0
      %1969 = vmatpush.msra.mxu0 0.0
      %1970 = vmatpush.msra.mxu0 0.0
      %1971 = vmatpush.msra.mxu0 0.0
      %1972 = vmatpush.msra.mxu0 0.0
      %1973 = vmatpush.msra.mxu0 0.0
      %1974 = vmatpush.msra.mxu0 0.0
      %1975 = vmatpush.msra.mxu0 0.0
      %1976 = vmatpush.msra.mxu0 0.0
      %1977 = vmatpush.msra.mxu0 %v1584
      %1978 = vmatpush.msra.mxu0 %v1576
      %1979 = vmatmul.f32.gmra.mxu0 %v325
      %v1980 = vpop.f32.mrf.mxu0
      %v1981 = vadd.f32 %v1952, %v1980
      %1982 = vmatmul.f32.gmra.mxu0 %v328
      %v1983 = vpop.f32.mrf.mxu0
      %v1984 = vadd.f32 %v1955, %v1983
      %1985 = vmatmul.f32.gmra.mxu0 %v331
      %v1986 = vpop.f32.mrf.mxu0
      %v1987 = vadd.f32 %v1958, %v1986
      %1988 = vmatmul.f32.gmra.mxu0 %v334
      %v1989 = vpop.f32.mrf.mxu0
      %v1990 = vadd.f32 %v1961, %v1989
      %1991 = vdwg.mxu0
      %1992 = vmatpush.msra.mxu0 %v1569
      %1993 = vmatpush.msra.mxu0 %v1561
      %1994 = vmatpush.msra.mxu0 %v1553
      %1995 = vmatpush.msra.mxu0 %v1545
      %1996 = vmatpush.msra.mxu0 %v1537
      %1997 = vmatpush.msra.mxu0 %v1529
      %1998 = vmatpush.msra.mxu0 %v1521
      %1999 = vmatpush.msra.mxu0 %v1513
      %2000 = vmatpush.msra.mxu0 %v1505
      %2001 = vmatpush.msra.mxu0 %v1497
      %2002 = vmatpush.msra.mxu0 %v1489
      %2003 = vmatpush.msra.mxu0 %v1481
      %2004 = vmatpush.msra.mxu0 %v1473
      %2005 = vmatpush.msra.mxu0 %v1465
      %2006 = vmatpush.msra.mxu0 %v1457
      %2007 = vmatpush.msra.mxu0 %v1449
      %2008 = vmatmul.f32.gmra.mxu0 %v171
      %v2009 = vpop.f32.mrf.mxu0
      %v2010 = vadd.f32 0.0, %v2009
      %2011 = vmatmul.f32.gmra.mxu0 %v173
      %v2012 = vpop.f32.mrf.mxu0
      %v2013 = vadd.f32 0.0, %v2012
      %2014 = vmatmul.f32.gmra.mxu0 %v175
      %v2015 = vpop.f32.mrf.mxu0
      %v2016 = vadd.f32 0.0, %v2015
      %2017 = vmatmul.f32.gmra.mxu0 %v177
      %v2018 = vpop.f32.mrf.mxu0
      %v2019 = vadd.f32 0.0, %v2018
      %2020 = vdwg.mxu0
      %2021 = vmatpush.msra.mxu0 0.0
      %2022 = vmatpush.msra.mxu0 0.0
      %2023 = vmatpush.msra.mxu0 0.0
      %2024 = vmatpush.msra.mxu0 0.0
      %2025 = vmatpush.msra.mxu0 0.0
      %2026 = vmatpush.msra.mxu0 0.0
      %2027 = vmatpush.msra.mxu0 0.0
      %2028 = vmatpush.msra.mxu0 0.0
      %2029 = vmatpush.msra.mxu0 0.0
      %2030 = vmatpush.msra.mxu0 0.0
      %2031 = vmatpush.msra.mxu0 0.0
      %2032 = vmatpush.msra.mxu0 0.0
      %2033 = vmatpush.msra.mxu0 0.0
      %2034 = vmatpush.msra.mxu0 0.0
      %2035 = vmatpush.msra.mxu0 %v1585
      %2036 = vmatpush.msra.mxu0 %v1577
      %2037 = vmatmul.f32.gmra.mxu0 %v325
      %v2038 = vpop.f32.mrf.mxu0
      %v2039 = vadd.f32 %v2010, %v2038
      %2040 = vmatmul.f32.gmra.mxu0 %v328
      %v2041 = vpop.f32.mrf.mxu0
      %v2042 = vadd.f32 %v2013, %v2041
      %2043 = vmatmul.f32.gmra.mxu0 %v331
      %v2044 = vpop.f32.mrf.mxu0
      %v2045 = vadd.f32 %v2016, %v2044
      %2046 = vmatmul.f32.gmra.mxu0 %v334
      %v2047 = vpop.f32.mrf.mxu0
      %v2048 = vadd.f32 %v2019, %v2047
      %2049 = vdwg.mxu0
      %v2050 = vmax.f32 %v1409, %v1633
      %v2051 = vmax.f32 %v1410, %v1691
      %v2052 = vmax.f32 %v1411, %v1749
      %v2053 = vmax.f32 %v1412, %v1807
      %v2054 = vmax.f32 %v1413, %v1865
      %v2055 = vmax.f32 %v1414, %v1923
      %v2056 = vmax.f32 %v1415, %v1981
      %v2057 = vmax.f32 %v1416, %v2039
      %v2058 = vmax.f32 %v1417, %v1636
      %v2059 = vmax.f32 %v1418, %v1694
      %v2060 = vmax.f32 %v1419, %v1752
      %v2061 = vmax.f32 %v1420, %v1810
      %v2062 = vmax.f32 %v1421, %v1868
      %v2063 = vmax.f32 %v1422, %v1926
      %v2064 = vmax.f32 %v1423, %v1984
      %v2065 = vmax.f32 %v1424, %v2042
      %v2066 = vmax.f32 %v1425, %v1639
      %v2067 = vmax.f32 %v1426, %v1697
      %v2068 = vmax.f32 %v1427, %v1755
      %v2069 = vmax.f32 %v1428, %v1813
      %v2070 = vmax.f32 %v1429, %v1871
      %v2071 = vmax.f32 %v1430, %v1929
      %v2072 = vmax.f32 %v1431, %v1987
      %v2073 = vmax.f32 %v1432, %v2045
      %v2074 = vmax.f32 %v1433, %v1642
      %v2075 = vmax.f32 %v1434, %v1700
      %v2076 = vmax.f32 %v1435, %v1758
      %v2077 = vmax.f32 %v1436, %v1816
      %v2078 = vmax.f32 %v1437, %v1874
      %v2079 = vmax.f32 %v1438, %v1932
      %v2080 = vmax.f32 %v1439, %v1990
      %v2081 = vmax.f32 %v1440, %v2048
      %s2082 = scalar_lea.vmem %s165, 3456
      %v2083 = vld [vmem:[%s2082] sm:$0xff]
      %v2084 = vld [vmem:[%s2082 + $0x8] sm:$0xff]
      %v2085 = vld [vmem:[%s2082 + $0x10] sm:$0xff]
      %v2086 = vld [vmem:[%s2082 + $0x18] sm:$0xff]
      %v2087 = vld [vmem:[%s2082 + $0x20] sm:$0xff]
      %v2088 = vld [vmem:[%s2082 + $0x28] sm:$0xff]
      %v2089 = vld [vmem:[%s2082 + $0x30] sm:$0xff]
      %v2090 = vld [vmem:[%s2082 + $0x38] sm:$0xff]
      %v2091 = vld [vmem:[%s2082 + $0x40] sm:$0xff]
      %v2092 = vld [vmem:[%s2082 + $0x48] sm:$0xff]
      %v2093 = vld [vmem:[%s2082 + $0x50] sm:$0xff]
      %v2094 = vld [vmem:[%s2082 + $0x58] sm:$0xff]
      %v2095 = vld [vmem:[%s2082 + $0x60] sm:$0xff]
      %v2096 = vld [vmem:[%s2082 + $0x68] sm:$0xff]
      %v2097 = vld [vmem:[%s2082 + $0x70] sm:$0xff]
      %v2098 = vld [vmem:[%s2082 + $0x78] sm:$0xff]
      %v2099 = vld [vmem:[%s2082 + $0x80] sm:$0xff]
      %v2100 = vld [vmem:[%s2082 + $0x88] sm:$0xff]
      %v2101 = vld [vmem:[%s2082 + $0x90] sm:$0xff]
      %v2102 = vld [vmem:[%s2082 + $0x98] sm:$0xff]
      %v2103 = vld [vmem:[%s2082 + $0xa0] sm:$0xff]
      %v2104 = vld [vmem:[%s2082 + $0xa8] sm:$0xff]
      %v2105 = vld [vmem:[%s2082 + $0xb0] sm:$0xff]
      %v2106 = vld [vmem:[%s2082 + $0xb8] sm:$0xff]
      %v2107 = vld [vmem:[%s2082 + $0xc0] sm:$0xff]
      %v2108 = vld [vmem:[%s2082 + $0xc8] sm:$0xff]
      %v2109 = vld [vmem:[%s2082 + $0xd0] sm:$0xff]
      %v2110 = vld [vmem:[%s2082 + $0xd8] sm:$0xff]
      %v2111 = vld [vmem:[%s2082 + $0xe0] sm:$0xff]
      %v2112 = vld [vmem:[%s2082 + $0xe8] sm:$0xff]
      %v2113 = vld [vmem:[%s2082 + $0xf0] sm:$0xff]
      %v2114 = vld [vmem:[%s2082 + $0xf8] sm:$0xff]
      %v2115 = vld [vmem:[%s2082 + $0x100] sm:$0xff]
      %v2116 = vld [vmem:[%s2082 + $0x108] sm:$0xff]
      %v2117 = vld [vmem:[%s2082 + $0x110] sm:$0xff]
      %v2118 = vld [vmem:[%s2082 + $0x118] sm:$0xff]
      %v2119 = vld [vmem:[%s2082 + $0x120] sm:$0xff]
      %v2120 = vld [vmem:[%s2082 + $0x128] sm:$0xff]
      %v2121 = vld [vmem:[%s2082 + $0x130] sm:$0xff]
      %v2122 = vld [vmem:[%s2082 + $0x138] sm:$0xff]
      %v2123 = vld [vmem:[%s2082 + $0x140] sm:$0xff]
      %v2124 = vld [vmem:[%s2082 + $0x148] sm:$0xff]
      %v2125 = vld [vmem:[%s2082 + $0x150] sm:$0xff]
      %v2126 = vld [vmem:[%s2082 + $0x158] sm:$0xff]
      %v2127 = vld [vmem:[%s2082 + $0x160] sm:$0xff]
      %v2128 = vld [vmem:[%s2082 + $0x168] sm:$0xff]
      %v2129 = vld [vmem:[%s2082 + $0x170] sm:$0xff]
      %v2130 = vld [vmem:[%s2082 + $0x178] sm:$0xff]
      %v2131 = vld [vmem:[%s2082 + $0x180] sm:$0xff]
      %v2132 = vld [vmem:[%s2082 + $0x188] sm:$0xff]
      %v2133 = vld [vmem:[%s2082 + $0x190] sm:$0xff]
      %v2134 = vld [vmem:[%s2082 + $0x198] sm:$0xff]
      %v2135 = vld [vmem:[%s2082 + $0x1a0] sm:$0xff]
      %v2136 = vld [vmem:[%s2082 + $0x1a8] sm:$0xff]
      %v2137 = vld [vmem:[%s2082 + $0x1b0] sm:$0xff]
      %v2138 = vld [vmem:[%s2082 + $0x1b8] sm:$0xff]
      %v2139 = vld [vmem:[%s2082 + $0x1c0] sm:$0xff]
      %v2140 = vld [vmem:[%s2082 + $0x1c8] sm:$0xff]
      %v2141 = vld [vmem:[%s2082 + $0x1d0] sm:$0xff]
      %v2142 = vld [vmem:[%s2082 + $0x1d8] sm:$0xff]
      %v2143 = vld [vmem:[%s2082 + $0x1e0] sm:$0xff]
      %v2144 = vld [vmem:[%s2082 + $0x1e8] sm:$0xff]
      %v2145 = vld [vmem:[%s2082 + $0x1f0] sm:$0xff]
      %v2146 = vld [vmem:[%s2082 + $0x1f8] sm:$0xff]
      %v2147 = vld [vmem:[%s2082 + $0x200] sm:$0xff]
      %v2148 = vld [vmem:[%s2082 + $0x208] sm:$0xff]
      %v2149 = vld [vmem:[%s2082 + $0x210] sm:$0xff]
      %v2150 = vld [vmem:[%s2082 + $0x218] sm:$0xff]
      %v2151 = vld [vmem:[%s2082 + $0x220] sm:$0xff]
      %v2152 = vld [vmem:[%s2082 + $0x228] sm:$0xff]
      %v2153 = vld [vmem:[%s2082 + $0x230] sm:$0xff]
      %v2154 = vld [vmem:[%s2082 + $0x238] sm:$0xff]
      %v2155 = vld [vmem:[%s2082 + $0x240] sm:$0xff]
      %v2156 = vld [vmem:[%s2082 + $0x248] sm:$0xff]
      %v2157 = vld [vmem:[%s2082 + $0x250] sm:$0xff]
      %v2158 = vld [vmem:[%s2082 + $0x258] sm:$0xff]
      %v2159 = vld [vmem:[%s2082 + $0x260] sm:$0xff]
      %v2160 = vld [vmem:[%s2082 + $0x268] sm:$0xff]
      %v2161 = vld [vmem:[%s2082 + $0x270] sm:$0xff]
      %v2162 = vld [vmem:[%s2082 + $0x278] sm:$0xff]
      %v2163 = vld [vmem:[%s2082 + $0x280] sm:$0xff]
      %v2164 = vld [vmem:[%s2082 + $0x288] sm:$0xff]
      %v2165 = vld [vmem:[%s2082 + $0x290] sm:$0xff]
      %v2166 = vld [vmem:[%s2082 + $0x298] sm:$0xff]
      %v2167 = vld [vmem:[%s2082 + $0x2a0] sm:$0xff]
      %v2168 = vld [vmem:[%s2082 + $0x2a8] sm:$0xff]
      %v2169 = vld [vmem:[%s2082 + $0x2b0] sm:$0xff]
      %v2170 = vld [vmem:[%s2082 + $0x2b8] sm:$0xff]
      %v2171 = vld [vmem:[%s2082 + $0x2c0] sm:$0xff]
      %v2172 = vld [vmem:[%s2082 + $0x2c8] sm:$0xff]
      %v2173 = vld [vmem:[%s2082 + $0x2d0] sm:$0xff]
      %v2174 = vld [vmem:[%s2082 + $0x2d8] sm:$0xff]
      %v2175 = vld [vmem:[%s2082 + $0x2e0] sm:$0xff]
      %v2176 = vld [vmem:[%s2082 + $0x2e8] sm:$0xff]
      %v2177 = vld [vmem:[%s2082 + $0x2f0] sm:$0xff]
      %v2178 = vld [vmem:[%s2082 + $0x2f8] sm:$0xff]
      %v2179 = vld [vmem:[%s2082 + $0x300] sm:$0xff]
      %v2180 = vld [vmem:[%s2082 + $0x308] sm:$0xff]
      %v2181 = vld [vmem:[%s2082 + $0x310] sm:$0xff]
      %v2182 = vld [vmem:[%s2082 + $0x318] sm:$0xff]
      %v2183 = vld [vmem:[%s2082 + $0x320] sm:$0xff]
      %v2184 = vld [vmem:[%s2082 + $0x328] sm:$0xff]
      %v2185 = vld [vmem:[%s2082 + $0x330] sm:$0xff]
      %v2186 = vld [vmem:[%s2082 + $0x338] sm:$0xff]
      %v2187 = vld [vmem:[%s2082 + $0x340] sm:$0xff]
      %v2188 = vld [vmem:[%s2082 + $0x348] sm:$0xff]
      %v2189 = vld [vmem:[%s2082 + $0x350] sm:$0xff]
      %v2190 = vld [vmem:[%s2082 + $0x358] sm:$0xff]
      %v2191 = vld [vmem:[%s2082 + $0x360] sm:$0xff]
      %v2192 = vld [vmem:[%s2082 + $0x368] sm:$0xff]
      %v2193 = vld [vmem:[%s2082 + $0x370] sm:$0xff]
      %v2194 = vld [vmem:[%s2082 + $0x378] sm:$0xff]
      %v2195 = vld [vmem:[%s2082 + $0x380] sm:$0xff]
      %v2196 = vld [vmem:[%s2082 + $0x388] sm:$0xff]
      %v2197 = vld [vmem:[%s2082 + $0x390] sm:$0xff]
      %v2198 = vld [vmem:[%s2082 + $0x398] sm:$0xff]
      %v2199 = vld [vmem:[%s2082 + $0x3a0] sm:$0xff]
      %v2200 = vld [vmem:[%s2082 + $0x3a8] sm:$0xff]
      %v2201 = vld [vmem:[%s2082 + $0x3b0] sm:$0xff]
      %v2202 = vld [vmem:[%s2082 + $0x3b8] sm:$0xff]
      %v2203 = vld [vmem:[%s2082 + $0x3c0] sm:$0xff]
      %v2204 = vld [vmem:[%s2082 + $0x3c8] sm:$0xff]
      %v2205 = vld [vmem:[%s2082 + $0x3d0] sm:$0xff]
      %v2206 = vld [vmem:[%s2082 + $0x3d8] sm:$0xff]
      %v2207 = vld [vmem:[%s2082 + $0x3e0] sm:$0xff]
      %v2208 = vld [vmem:[%s2082 + $0x3e8] sm:$0xff]
      %v2209 = vld [vmem:[%s2082 + $0x3f0] sm:$0xff]
      %v2210 = vld [vmem:[%s2082 + $0x3f8] sm:$0xff]
      %v2211 = vld [vmem:[%s2082 + $0x400] sm:$0xff]
      %v2212 = vld [vmem:[%s2082 + $0x408] sm:$0xff]
      %v2213 = vld [vmem:[%s2082 + $0x410] sm:$0xff]
      %v2214 = vld [vmem:[%s2082 + $0x418] sm:$0xff]
      %v2215 = vld [vmem:[%s2082 + $0x420] sm:$0xff]
      %v2216 = vld [vmem:[%s2082 + $0x428] sm:$0xff]
      %v2217 = vld [vmem:[%s2082 + $0x430] sm:$0xff]
      %v2218 = vld [vmem:[%s2082 + $0x438] sm:$0xff]
      %v2219 = vld [vmem:[%s2082 + $0x440] sm:$0xff]
      %v2220 = vld [vmem:[%s2082 + $0x448] sm:$0xff]
      %v2221 = vld [vmem:[%s2082 + $0x450] sm:$0xff]
      %v2222 = vld [vmem:[%s2082 + $0x458] sm:$0xff]
      %v2223 = vld [vmem:[%s2082 + $0x460] sm:$0xff]
      %v2224 = vld [vmem:[%s2082 + $0x468] sm:$0xff]
      %v2225 = vld [vmem:[%s2082 + $0x470] sm:$0xff]
      %v2226 = vld [vmem:[%s2082 + $0x478] sm:$0xff]
      %2227 = vmatpush.msra.mxu0 %v2203
      %2228 = vmatpush.msra.mxu0 %v2195
      %2229 = vmatpush.msra.mxu0 %v2187
      %2230 = vmatpush.msra.mxu0 %v2179
      %2231 = vmatpush.msra.mxu0 %v2171
      %2232 = vmatpush.msra.mxu0 %v2163
      %2233 = vmatpush.msra.mxu0 %v2155
      %2234 = vmatpush.msra.mxu0 %v2147
      %2235 = vmatpush.msra.mxu0 %v2139
      %2236 = vmatpush.msra.mxu0 %v2131
      %2237 = vmatpush.msra.mxu0 %v2123
      %2238 = vmatpush.msra.mxu0 %v2115
      %2239 = vmatpush.msra.mxu0 %v2107
      %2240 = vmatpush.msra.mxu0 %v2099
      %2241 = vmatpush.msra.mxu0 %v2091
      %2242 = vmatpush.msra.mxu0 %v2083
      %2243 = vmatmul.f32.gmra.mxu0 %v171
      %v2244 = vpop.f32.mrf.mxu0
      %v2245 = vadd.f32 0.0, %v2244
      %2246 = vmatmul.f32.gmra.mxu0 %v173
      %v2247 = vpop.f32.mrf.mxu0
      %v2248 = vadd.f32 0.0, %v2247
      %2249 = vmatmul.f32.gmra.mxu0 %v175
      %v2250 = vpop.f32.mrf.mxu0
      %v2251 = vadd.f32 0.0, %v2250
      %2252 = vmatmul.f32.gmra.mxu0 %v177
      %v2253 = vpop.f32.mrf.mxu0
      %v2254 = vadd.f32 0.0, %v2253
      %2255 = vdwg.mxu0
      %2256 = vmatpush.msra.mxu0 0.0
      %2257 = vmatpush.msra.mxu0 0.0
      %2258 = vmatpush.msra.mxu0 0.0
      %2259 = vmatpush.msra.mxu0 0.0
      %2260 = vmatpush.msra.mxu0 0.0
      %2261 = vmatpush.msra.mxu0 0.0
      %2262 = vmatpush.msra.mxu0 0.0
      %2263 = vmatpush.msra.mxu0 0.0
      %2264 = vmatpush.msra.mxu0 0.0
      %2265 = vmatpush.msra.mxu0 0.0
      %2266 = vmatpush.msra.mxu0 0.0
      %2267 = vmatpush.msra.mxu0 0.0
      %2268 = vmatpush.msra.mxu0 0.0
      %2269 = vmatpush.msra.mxu0 0.0
      %2270 = vmatpush.msra.mxu0 %v2219
      %2271 = vmatpush.msra.mxu0 %v2211
      %2272 = vmatmul.f32.gmra.mxu0 %v325
      %v2273 = vpop.f32.mrf.mxu0
      %v2274 = vadd.f32 %v2245, %v2273
      %2275 = vmatmul.f32.gmra.mxu0 %v328
      %v2276 = vpop.f32.mrf.mxu0
      %v2277 = vadd.f32 %v2248, %v2276
      %2278 = vmatmul.f32.gmra.mxu0 %v331
      %v2279 = vpop.f32.mrf.mxu0
      %v2280 = vadd.f32 %v2251, %v2279
      %2281 = vmatmul.f32.gmra.mxu0 %v334
      %v2282 = vpop.f32.mrf.mxu0
      %v2283 = vadd.f32 %v2254, %v2282
      %2284 = vdwg.mxu0
      %2285 = vmatpush.msra.mxu0 %v2204
      %2286 = vmatpush.msra.mxu0 %v2196
      %2287 = vmatpush.msra.mxu0 %v2188
      %2288 = vmatpush.msra.mxu0 %v2180
      %2289 = vmatpush.msra.mxu0 %v2172
      %2290 = vmatpush.msra.mxu0 %v2164
      %2291 = vmatpush.msra.mxu0 %v2156
      %2292 = vmatpush.msra.mxu0 %v2148
      %2293 = vmatpush.msra.mxu0 %v2140
      %2294 = vmatpush.msra.mxu0 %v2132
      %2295 = vmatpush.msra.mxu0 %v2124
      %2296 = vmatpush.msra.mxu0 %v2116
      %2297 = vmatpush.msra.mxu0 %v2108
      %2298 = vmatpush.msra.mxu0 %v2100
      %2299 = vmatpush.msra.mxu0 %v2092
      %2300 = vmatpush.msra.mxu0 %v2084
      %2301 = vmatmul.f32.gmra.mxu0 %v171
      %v2302 = vpop.f32.mrf.mxu0
      %v2303 = vadd.f32 0.0, %v2302
      %2304 = vmatmul.f32.gmra.mxu0 %v173
      %v2305 = vpop.f32.mrf.mxu0
      %v2306 = vadd.f32 0.0, %v2305
      %2307 = vmatmul.f32.gmra.mxu0 %v175
      %v2308 = vpop.f32.mrf.mxu0
      %v2309 = vadd.f32 0.0, %v2308
      %2310 = vmatmul.f32.gmra.mxu0 %v177
      %v2311 = vpop.f32.mrf.mxu0
      %v2312 = vadd.f32 0.0, %v2311
      %2313 = vdwg.mxu0
      %2314 = vmatpush.msra.mxu0 0.0
      %2315 = vmatpush.msra.mxu0 0.0
      %2316 = vmatpush.msra.mxu0 0.0
      %2317 = vmatpush.msra.mxu0 0.0
      %2318 = vmatpush.msra.mxu0 0.0
      %2319 = vmatpush.msra.mxu0 0.0
      %2320 = vmatpush.msra.mxu0 0.0
      %2321 = vmatpush.msra.mxu0 0.0
      %2322 = vmatpush.msra.mxu0 0.0
      %2323 = vmatpush.msra.mxu0 0.0
      %2324 = vmatpush.msra.mxu0 0.0
      %2325 = vmatpush.msra.mxu0 0.0
      %2326 = vmatpush.msra.mxu0 0.0
      %2327 = vmatpush.msra.mxu0 0.0
      %2328 = vmatpush.msra.mxu0 %v2220
      %2329 = vmatpush.msra.mxu0 %v2212
      %2330 = vmatmul.f32.gmra.mxu0 %v325
      %v2331 = vpop.f32.mrf.mxu0
      %v2332 = vadd.f32 %v2303, %v2331
      %2333 = vmatmul.f32.gmra.mxu0 %v328
      %v2334 = vpop.f32.mrf.mxu0
      %v2335 = vadd.f32 %v2306, %v2334
      %2336 = vmatmul.f32.gmra.mxu0 %v331
      %v2337 = vpop.f32.mrf.mxu0
      %v2338 = vadd.f32 %v2309, %v2337
      %2339 = vmatmul.f32.gmra.mxu0 %v334
      %v2340 = vpop.f32.mrf.mxu0
      %v2341 = vadd.f32 %v2312, %v2340
      %2342 = vdwg.mxu0
      %2343 = vmatpush.msra.mxu0 %v2205
      %2344 = vmatpush.msra.mxu0 %v2197
      %2345 = vmatpush.msra.mxu0 %v2189
      %2346 = vmatpush.msra.mxu0 %v2181
      %2347 = vmatpush.msra.mxu0 %v2173
      %2348 = vmatpush.msra.mxu0 %v2165
      %2349 = vmatpush.msra.mxu0 %v2157
      %2350 = vmatpush.msra.mxu0 %v2149
      %2351 = vmatpush.msra.mxu0 %v2141
      %2352 = vmatpush.msra.mxu0 %v2133
      %2353 = vmatpush.msra.mxu0 %v2125
      %2354 = vmatpush.msra.mxu0 %v2117
      %2355 = vmatpush.msra.mxu0 %v2109
      %2356 = vmatpush.msra.mxu0 %v2101
      %2357 = vmatpush.msra.mxu0 %v2093
      %2358 = vmatpush.msra.mxu0 %v2085
      %2359 = vmatmul.f32.gmra.mxu0 %v171
      %v2360 = vpop.f32.mrf.mxu0
      %v2361 = vadd.f32 0.0, %v2360
      %2362 = vmatmul.f32.gmra.mxu0 %v173
      %v2363 = vpop.f32.mrf.mxu0
      %v2364 = vadd.f32 0.0, %v2363
      %2365 = vmatmul.f32.gmra.mxu0 %v175
      %v2366 = vpop.f32.mrf.mxu0
      %v2367 = vadd.f32 0.0, %v2366
      %2368 = vmatmul.f32.gmra.mxu0 %v177
      %v2369 = vpop.f32.mrf.mxu0
      %v2370 = vadd.f32 0.0, %v2369
      %2371 = vdwg.mxu0
      %2372 = vmatpush.msra.mxu0 0.0
      %2373 = vmatpush.msra.mxu0 0.0
      %2374 = vmatpush.msra.mxu0 0.0
      %2375 = vmatpush.msra.mxu0 0.0
      %2376 = vmatpush.msra.mxu0 0.0
      %2377 = vmatpush.msra.mxu0 0.0
      %2378 = vmatpush.msra.mxu0 0.0
      %2379 = vmatpush.msra.mxu0 0.0
      %2380 = vmatpush.msra.mxu0 0.0
      %2381 = vmatpush.msra.mxu0 0.0
      %2382 = vmatpush.msra.mxu0 0.0
      %2383 = vmatpush.msra.mxu0 0.0
      %2384 = vmatpush.msra.mxu0 0.0
      %2385 = vmatpush.msra.mxu0 0.0
      %2386 = vmatpush.msra.mxu0 %v2221
      %2387 = vmatpush.msra.mxu0 %v2213
      %2388 = vmatmul.f32.gmra.mxu0 %v325
      %v2389 = vpop.f32.mrf.mxu0
      %v2390 = vadd.f32 %v2361, %v2389
      %2391 = vmatmul.f32.gmra.mxu0 %v328
      %v2392 = vpop.f32.mrf.mxu0
      %v2393 = vadd.f32 %v2364, %v2392
      %2394 = vmatmul.f32.gmra.mxu0 %v331
      %v2395 = vpop.f32.mrf.mxu0
      %v2396 = vadd.f32 %v2367, %v2395
      %2397 = vmatmul.f32.gmra.mxu0 %v334
      %v2398 = vpop.f32.mrf.mxu0
      %v2399 = vadd.f32 %v2370, %v2398
      %2400 = vdwg.mxu0
      %2401 = vmatpush.msra.mxu0 %v2206
      %2402 = vmatpush.msra.mxu0 %v2198
      %2403 = vmatpush.msra.mxu0 %v2190
      %2404 = vmatpush.msra.mxu0 %v2182
      %2405 = vmatpush.msra.mxu0 %v2174
      %2406 = vmatpush.msra.mxu0 %v2166
      %2407 = vmatpush.msra.mxu0 %v2158
      %2408 = vmatpush.msra.mxu0 %v2150
      %2409 = vmatpush.msra.mxu0 %v2142
      %2410 = vmatpush.msra.mxu0 %v2134
      %2411 = vmatpush.msra.mxu0 %v2126
      %2412 = vmatpush.msra.mxu0 %v2118
      %2413 = vmatpush.msra.mxu0 %v2110
      %2414 = vmatpush.msra.mxu0 %v2102
      %2415 = vmatpush.msra.mxu0 %v2094
      %2416 = vmatpush.msra.mxu0 %v2086
      %2417 = vmatmul.f32.gmra.mxu0 %v171
      %v2418 = vpop.f32.mrf.mxu0
      %v2419 = vadd.f32 0.0, %v2418
      %2420 = vmatmul.f32.gmra.mxu0 %v173
      %v2421 = vpop.f32.mrf.mxu0
      %v2422 = vadd.f32 0.0, %v2421
      %2423 = vmatmul.f32.gmra.mxu0 %v175
      %v2424 = vpop.f32.mrf.mxu0
      %v2425 = vadd.f32 0.0, %v2424
      %2426 = vmatmul.f32.gmra.mxu0 %v177
      %v2427 = vpop.f32.mrf.mxu0
      %v2428 = vadd.f32 0.0, %v2427
      %2429 = vdwg.mxu0
      %2430 = vmatpush.msra.mxu0 0.0
      %2431 = vmatpush.msra.mxu0 0.0
      %2432 = vmatpush.msra.mxu0 0.0
      %2433 = vmatpush.msra.mxu0 0.0
      %2434 = vmatpush.msra.mxu0 0.0
      %2435 = vmatpush.msra.mxu0 0.0
      %2436 = vmatpush.msra.mxu0 0.0
      %2437 = vmatpush.msra.mxu0 0.0
      %2438 = vmatpush.msra.mxu0 0.0
      %2439 = vmatpush.msra.mxu0 0.0
      %2440 = vmatpush.msra.mxu0 0.0
      %2441 = vmatpush.msra.mxu0 0.0
      %2442 = vmatpush.msra.mxu0 0.0
      %2443 = vmatpush.msra.mxu0 0.0
      %2444 = vmatpush.msra.mxu0 %v2222
      %2445 = vmatpush.msra.mxu0 %v2214
      %2446 = vmatmul.f32.gmra.mxu0 %v325
      %v2447 = vpop.f32.mrf.mxu0
      %v2448 = vadd.f32 %v2419, %v2447
      %2449 = vmatmul.f32.gmra.mxu0 %v328
      %v2450 = vpop.f32.mrf.mxu0
      %v2451 = vadd.f32 %v2422, %v2450
      %2452 = vmatmul.f32.gmra.mxu0 %v331
      %v2453 = vpop.f32.mrf.mxu0
      %v2454 = vadd.f32 %v2425, %v2453
      %2455 = vmatmul.f32.gmra.mxu0 %v334
      %v2456 = vpop.f32.mrf.mxu0
      %v2457 = vadd.f32 %v2428, %v2456
      %2458 = vdwg.mxu0
      %2459 = vmatpush.msra.mxu0 %v2207
      %2460 = vmatpush.msra.mxu0 %v2199
      %2461 = vmatpush.msra.mxu0 %v2191
      %2462 = vmatpush.msra.mxu0 %v2183
      %2463 = vmatpush.msra.mxu0 %v2175
      %2464 = vmatpush.msra.mxu0 %v2167
      %2465 = vmatpush.msra.mxu0 %v2159
      %2466 = vmatpush.msra.mxu0 %v2151
      %2467 = vmatpush.msra.mxu0 %v2143
      %2468 = vmatpush.msra.mxu0 %v2135
      %2469 = vmatpush.msra.mxu0 %v2127
      %2470 = vmatpush.msra.mxu0 %v2119
      %2471 = vmatpush.msra.mxu0 %v2111
      %2472 = vmatpush.msra.mxu0 %v2103
      %2473 = vmatpush.msra.mxu0 %v2095
      %2474 = vmatpush.msra.mxu0 %v2087
      %2475 = vmatmul.f32.gmra.mxu0 %v171
      %v2476 = vpop.f32.mrf.mxu0
      %v2477 = vadd.f32 0.0, %v2476
      %2478 = vmatmul.f32.gmra.mxu0 %v173
      %v2479 = vpop.f32.mrf.mxu0
      %v2480 = vadd.f32 0.0, %v2479
      %2481 = vmatmul.f32.gmra.mxu0 %v175
      %v2482 = vpop.f32.mrf.mxu0
      %v2483 = vadd.f32 0.0, %v2482
      %2484 = vmatmul.f32.gmra.mxu0 %v177
      %v2485 = vpop.f32.mrf.mxu0
      %v2486 = vadd.f32 0.0, %v2485
      %2487 = vdwg.mxu0
      %2488 = vmatpush.msra.mxu0 0.0
      %2489 = vmatpush.msra.mxu0 0.0
      %2490 = vmatpush.msra.mxu0 0.0
      %2491 = vmatpush.msra.mxu0 0.0
      %2492 = vmatpush.msra.mxu0 0.0
      %2493 = vmatpush.msra.mxu0 0.0
      %2494 = vmatpush.msra.mxu0 0.0
      %2495 = vmatpush.msra.mxu0 0.0
      %2496 = vmatpush.msra.mxu0 0.0
      %2497 = vmatpush.msra.mxu0 0.0
      %2498 = vmatpush.msra.mxu0 0.0
      %2499 = vmatpush.msra.mxu0 0.0
      %2500 = vmatpush.msra.mxu0 0.0
      %2501 = vmatpush.msra.mxu0 0.0
      %2502 = vmatpush.msra.mxu0 %v2223
      %2503 = vmatpush.msra.mxu0 %v2215
      %2504 = vmatmul.f32.gmra.mxu0 %v325
      %v2505 = vpop.f32.mrf.mxu0
      %v2506 = vadd.f32 %v2477, %v2505
      %2507 = vmatmul.f32.gmra.mxu0 %v328
      %v2508 = vpop.f32.mrf.mxu0
      %v2509 = vadd.f32 %v2480, %v2508
      %2510 = vmatmul.f32.gmra.mxu0 %v331
      %v2511 = vpop.f32.mrf.mxu0
      %v2512 = vadd.f32 %v2483, %v2511
      %2513 = vmatmul.f32.gmra.mxu0 %v334
      %v2514 = vpop.f32.mrf.mxu0
      %v2515 = vadd.f32 %v2486, %v2514
      %2516 = vdwg.mxu0
      %2517 = vmatpush.msra.mxu0 %v2208
      %2518 = vmatpush.msra.mxu0 %v2200
      %2519 = vmatpush.msra.mxu0 %v2192
      %2520 = vmatpush.msra.mxu0 %v2184
      %2521 = vmatpush.msra.mxu0 %v2176
      %2522 = vmatpush.msra.mxu0 %v2168
      %2523 = vmatpush.msra.mxu0 %v2160
      %2524 = vmatpush.msra.mxu0 %v2152
      %2525 = vmatpush.msra.mxu0 %v2144
      %2526 = vmatpush.msra.mxu0 %v2136
      %2527 = vmatpush.msra.mxu0 %v2128
      %2528 = vmatpush.msra.mxu0 %v2120
      %2529 = vmatpush.msra.mxu0 %v2112
      %2530 = vmatpush.msra.mxu0 %v2104
      %2531 = vmatpush.msra.mxu0 %v2096
      %2532 = vmatpush.msra.mxu0 %v2088
      %2533 = vmatmul.f32.gmra.mxu0 %v171
      %v2534 = vpop.f32.mrf.mxu0
      %v2535 = vadd.f32 0.0, %v2534
      %2536 = vmatmul.f32.gmra.mxu0 %v173
      %v2537 = vpop.f32.mrf.mxu0
      %v2538 = vadd.f32 0.0, %v2537
      %2539 = vmatmul.f32.gmra.mxu0 %v175
      %v2540 = vpop.f32.mrf.mxu0
      %v2541 = vadd.f32 0.0, %v2540
      %2542 = vmatmul.f32.gmra.mxu0 %v177
      %v2543 = vpop.f32.mrf.mxu0
      %v2544 = vadd.f32 0.0, %v2543
      %2545 = vdwg.mxu0
      %2546 = vmatpush.msra.mxu0 0.0
      %2547 = vmatpush.msra.mxu0 0.0
      %2548 = vmatpush.msra.mxu0 0.0
      %2549 = vmatpush.msra.mxu0 0.0
      %2550 = vmatpush.msra.mxu0 0.0
      %2551 = vmatpush.msra.mxu0 0.0
      %2552 = vmatpush.msra.mxu0 0.0
      %2553 = vmatpush.msra.mxu0 0.0
      %2554 = vmatpush.msra.mxu0 0.0
      %2555 = vmatpush.msra.mxu0 0.0
      %2556 = vmatpush.msra.mxu0 0.0
      %2557 = vmatpush.msra.mxu0 0.0
      %2558 = vmatpush.msra.mxu0 0.0
      %2559 = vmatpush.msra.mxu0 0.0
      %2560 = vmatpush.msra.mxu0 %v2224
      %2561 = vmatpush.msra.mxu0 %v2216
      %2562 = vmatmul.f32.gmra.mxu0 %v325
      %v2563 = vpop.f32.mrf.mxu0
      %v2564 = vadd.f32 %v2535, %v2563
      %2565 = vmatmul.f32.gmra.mxu0 %v328
      %v2566 = vpop.f32.mrf.mxu0
      %v2567 = vadd.f32 %v2538, %v2566
      %2568 = vmatmul.f32.gmra.mxu0 %v331
      %v2569 = vpop.f32.mrf.mxu0
      %v2570 = vadd.f32 %v2541, %v2569
      %2571 = vmatmul.f32.gmra.mxu0 %v334
      %v2572 = vpop.f32.mrf.mxu0
      %v2573 = vadd.f32 %v2544, %v2572
      %2574 = vdwg.mxu0
      %2575 = vmatpush.msra.mxu0 %v2209
      %2576 = vmatpush.msra.mxu0 %v2201
      %2577 = vmatpush.msra.mxu0 %v2193
      %2578 = vmatpush.msra.mxu0 %v2185
      %2579 = vmatpush.msra.mxu0 %v2177
      %2580 = vmatpush.msra.mxu0 %v2169
      %2581 = vmatpush.msra.mxu0 %v2161
      %2582 = vmatpush.msra.mxu0 %v2153
      %2583 = vmatpush.msra.mxu0 %v2145
      %2584 = vmatpush.msra.mxu0 %v2137
      %2585 = vmatpush.msra.mxu0 %v2129
      %2586 = vmatpush.msra.mxu0 %v2121
      %2587 = vmatpush.msra.mxu0 %v2113
      %2588 = vmatpush.msra.mxu0 %v2105
      %2589 = vmatpush.msra.mxu0 %v2097
      %2590 = vmatpush.msra.mxu0 %v2089
      %2591 = vmatmul.f32.gmra.mxu0 %v171
      %v2592 = vpop.f32.mrf.mxu0
      %v2593 = vadd.f32 0.0, %v2592
      %2594 = vmatmul.f32.gmra.mxu0 %v173
      %v2595 = vpop.f32.mrf.mxu0
      %v2596 = vadd.f32 0.0, %v2595
      %2597 = vmatmul.f32.gmra.mxu0 %v175
      %v2598 = vpop.f32.mrf.mxu0
      %v2599 = vadd.f32 0.0, %v2598
      %2600 = vmatmul.f32.gmra.mxu0 %v177
      %v2601 = vpop.f32.mrf.mxu0
      %v2602 = vadd.f32 0.0, %v2601
      %2603 = vdwg.mxu0
      %2604 = vmatpush.msra.mxu0 0.0
      %2605 = vmatpush.msra.mxu0 0.0
      %2606 = vmatpush.msra.mxu0 0.0
      %2607 = vmatpush.msra.mxu0 0.0
      %2608 = vmatpush.msra.mxu0 0.0
      %2609 = vmatpush.msra.mxu0 0.0
      %2610 = vmatpush.msra.mxu0 0.0
      %2611 = vmatpush.msra.mxu0 0.0
      %2612 = vmatpush.msra.mxu0 0.0
      %2613 = vmatpush.msra.mxu0 0.0
      %2614 = vmatpush.msra.mxu0 0.0
      %2615 = vmatpush.msra.mxu0 0.0
      %2616 = vmatpush.msra.mxu0 0.0
      %2617 = vmatpush.msra.mxu0 0.0
      %2618 = vmatpush.msra.mxu0 %v2225
      %2619 = vmatpush.msra.mxu0 %v2217
      %2620 = vmatmul.f32.gmra.mxu0 %v325
      %v2621 = vpop.f32.mrf.mxu0
      %v2622 = vadd.f32 %v2593, %v2621
      %2623 = vmatmul.f32.gmra.mxu0 %v328
      %v2624 = vpop.f32.mrf.mxu0
      %v2625 = vadd.f32 %v2596, %v2624
      %2626 = vmatmul.f32.gmra.mxu0 %v331
      %v2627 = vpop.f32.mrf.mxu0
      %v2628 = vadd.f32 %v2599, %v2627
      %2629 = vmatmul.f32.gmra.mxu0 %v334
      %v2630 = vpop.f32.mrf.mxu0
      %v2631 = vadd.f32 %v2602, %v2630
      %2632 = vdwg.mxu0
      %2633 = vmatpush.msra.mxu0 %v2210
      %2634 = vmatpush.msra.mxu0 %v2202
      %2635 = vmatpush.msra.mxu0 %v2194
      %2636 = vmatpush.msra.mxu0 %v2186
      %2637 = vmatpush.msra.mxu0 %v2178
      %2638 = vmatpush.msra.mxu0 %v2170
      %2639 = vmatpush.msra.mxu0 %v2162
      %2640 = vmatpush.msra.mxu0 %v2154
      %2641 = vmatpush.msra.mxu0 %v2146
      %2642 = vmatpush.msra.mxu0 %v2138
      %2643 = vmatpush.msra.mxu0 %v2130
      %2644 = vmatpush.msra.mxu0 %v2122
      %2645 = vmatpush.msra.mxu0 %v2114
      %2646 = vmatpush.msra.mxu0 %v2106
      %2647 = vmatpush.msra.mxu0 %v2098
      %2648 = vmatpush.msra.mxu0 %v2090
      %2649 = vmatmul.f32.gmra.mxu0 %v171
      %v2650 = vpop.f32.mrf.mxu0
      %v2651 = vadd.f32 0.0, %v2650
      %2652 = vmatmul.f32.gmra.mxu0 %v173
      %v2653 = vpop.f32.mrf.mxu0
      %v2654 = vadd.f32 0.0, %v2653
      %2655 = vmatmul.f32.gmra.mxu0 %v175
      %v2656 = vpop.f32.mrf.mxu0
      %v2657 = vadd.f32 0.0, %v2656
      %2658 = vmatmul.f32.gmra.mxu0 %v177
      %v2659 = vpop.f32.mrf.mxu0
      %v2660 = vadd.f32 0.0, %v2659
      %2661 = vdwg.mxu0
      %2662 = vmatpush.msra.mxu0 0.0
      %2663 = vmatpush.msra.mxu0 0.0
      %2664 = vmatpush.msra.mxu0 0.0
      %2665 = vmatpush.msra.mxu0 0.0
      %2666 = vmatpush.msra.mxu0 0.0
      %2667 = vmatpush.msra.mxu0 0.0
      %2668 = vmatpush.msra.mxu0 0.0
      %2669 = vmatpush.msra.mxu0 0.0
      %2670 = vmatpush.msra.mxu0 0.0
      %2671 = vmatpush.msra.mxu0 0.0
      %2672 = vmatpush.msra.mxu0 0.0
      %2673 = vmatpush.msra.mxu0 0.0
      %2674 = vmatpush.msra.mxu0 0.0
      %2675 = vmatpush.msra.mxu0 0.0
      %2676 = vmatpush.msra.mxu0 %v2226
      %2677 = vmatpush.msra.mxu0 %v2218
      %2678 = vmatmul.f32.gmra.mxu0 %v325
      %v2679 = vpop.f32.mrf.mxu0
      %v2680 = vadd.f32 %v2651, %v2679
      %2681 = vmatmul.f32.gmra.mxu0 %v328
      %v2682 = vpop.f32.mrf.mxu0
      %v2683 = vadd.f32 %v2654, %v2682
      %2684 = vmatmul.f32.gmra.mxu0 %v331
      %v2685 = vpop.f32.mrf.mxu0
      %v2686 = vadd.f32 %v2657, %v2685
      %2687 = vmatmul.f32.gmra.mxu0 %v334
      %v2688 = vpop.f32.mrf.mxu0
      %v2689 = vadd.f32 %v2660, %v2688
      %2690 = vdwg.mxu0
      %v2691 = vmax.f32 %v2050, %v2274
      %v2692 = vmax.f32 %v2051, %v2332
      %v2693 = vmax.f32 %v2052, %v2390
      %v2694 = vmax.f32 %v2053, %v2448
      %v2695 = vmax.f32 %v2054, %v2506
      %v2696 = vmax.f32 %v2055, %v2564
      %v2697 = vmax.f32 %v2056, %v2622
      %v2698 = vmax.f32 %v2057, %v2680
      %v2699 = vmax.f32 %v2058, %v2277
      %v2700 = vmax.f32 %v2059, %v2335
      %v2701 = vmax.f32 %v2060, %v2393
      %v2702 = vmax.f32 %v2061, %v2451
      %v2703 = vmax.f32 %v2062, %v2509
      %v2704 = vmax.f32 %v2063, %v2567
      %v2705 = vmax.f32 %v2064, %v2625
      %v2706 = vmax.f32 %v2065, %v2683
      %v2707 = vmax.f32 %v2066, %v2280
      %v2708 = vmax.f32 %v2067, %v2338
      %v2709 = vmax.f32 %v2068, %v2396
      %v2710 = vmax.f32 %v2069, %v2454
      %v2711 = vmax.f32 %v2070, %v2512
      %v2712 = vmax.f32 %v2071, %v2570
      %v2713 = vmax.f32 %v2072, %v2628
      %v2714 = vmax.f32 %v2073, %v2686
      %v2715 = vmax.f32 %v2074, %v2283
      %v2716 = vmax.f32 %v2075, %v2341
      %v2717 = vmax.f32 %v2076, %v2399
      %v2718 = vmax.f32 %v2077, %v2457
      %v2719 = vmax.f32 %v2078, %v2515
      %v2720 = vmax.f32 %v2079, %v2573
      %v2721 = vmax.f32 %v2080, %v2631
      %v2722 = vmax.f32 %v2081, %v2689
      %v2723 = vld [vmem:[%s2] sm:$0xff]
      %v2724 = vld [vmem:[%s2 + $0x8] sm:$0xff]
      %v2725 = vld [vmem:[%s2 + $0x10] sm:$0xff]
      %v2726 = vld [vmem:[%s2 + $0x18] sm:$0xff]
      %2728 = vset.pattern.permute.xlu0 0
      %2729 = vperm.xlu0 %2728, %v2723
      %v2730 = vpop.permute.xlu0 %2729
      %2733 = vset.pattern.permute.xlu0 0
      %2734 = vperm.xlu0 %2733, %v2724
      %v2735 = vpop.permute.xlu0 %2734
      %2738 = vset.pattern.permute.xlu0 0
      %2739 = vperm.xlu0 %2738, %v2725
      %v2740 = vpop.permute.xlu0 %2739
      %2743 = vset.pattern.permute.xlu0 0
      %2744 = vperm.xlu0 %2743, %v2726
      %v2745 = vpop.permute.xlu0 %2744
      %v2747 = vadd.f32 %v2691, %v2730
      %v2748 = vadd.f32 %v2692, %v2730
      %v2749 = vadd.f32 %v2693, %v2730
      %v2750 = vadd.f32 %v2694, %v2730
      %v2751 = vadd.f32 %v2695, %v2730
      %v2752 = vadd.f32 %v2696, %v2730
      %v2753 = vadd.f32 %v2697, %v2730
      %v2754 = vadd.f32 %v2698, %v2730
      %v2755 = vadd.f32 %v2699, %v2735
      %v2756 = vadd.f32 %v2700, %v2735
      %v2757 = vadd.f32 %v2701, %v2735
      %v2758 = vadd.f32 %v2702, %v2735
      %v2759 = vadd.f32 %v2703, %v2735
      %v2760 = vadd.f32 %v2704, %v2735
      %v2761 = vadd.f32 %v2705, %v2735
      %v2762 = vadd.f32 %v2706, %v2735
      %v2763 = vadd.f32 %v2707, %v2740
      %v2764 = vadd.f32 %v2708, %v2740
      %v2765 = vadd.f32 %v2709, %v2740
      %v2766 = vadd.f32 %v2710, %v2740
      %v2767 = vadd.f32 %v2711, %v2740
      %v2768 = vadd.f32 %v2712, %v2740
      %v2769 = vadd.f32 %v2713, %v2740
      %v2770 = vadd.f32 %v2714, %v2740
      %v2771 = vadd.f32 %v2715, %v2745
      %v2772 = vadd.f32 %v2716, %v2745
      %v2773 = vadd.f32 %v2717, %v2745
      %v2774 = vadd.f32 %v2718, %v2745
      %v2775 = vadd.f32 %v2719, %v2745
      %v2776 = vadd.f32 %v2720, %v2745
      %v2777 = vadd.f32 %v2721, %v2745
      %v2778 = vadd.f32 %v2722, %v2745
      %v2779 = vmax.f32 %v2747, 0.0
      %v2780 = vmax.f32 %v2748, 0.0
      %v2781 = vmax.f32 %v2749, 0.0
      %v2782 = vmax.f32 %v2750, 0.0
      %v2783 = vmax.f32 %v2751, 0.0
      %v2784 = vmax.f32 %v2752, 0.0
      %v2785 = vmax.f32 %v2753, 0.0
      %v2786 = vmax.f32 %v2754, 0.0
      %v2787 = vmax.f32 %v2755, 0.0
      %v2788 = vmax.f32 %v2756, 0.0
      %v2789 = vmax.f32 %v2757, 0.0
      %v2790 = vmax.f32 %v2758, 0.0
      %v2791 = vmax.f32 %v2759, 0.0
      %v2792 = vmax.f32 %v2760, 0.0
      %v2793 = vmax.f32 %v2761, 0.0
      %v2794 = vmax.f32 %v2762, 0.0
      %v2795 = vmax.f32 %v2763, 0.0
      %v2796 = vmax.f32 %v2764, 0.0
      %v2797 = vmax.f32 %v2765, 0.0
      %v2798 = vmax.f32 %v2766, 0.0
      %v2799 = vmax.f32 %v2767, 0.0
      %v2800 = vmax.f32 %v2768, 0.0
      %v2801 = vmax.f32 %v2769, 0.0
      %v2802 = vmax.f32 %v2770, 0.0
      %v2803 = vmax.f32 %v2771, 0.0
      %v2804 = vmax.f32 %v2772, 0.0
      %v2805 = vmax.f32 %v2773, 0.0
      %v2806 = vmax.f32 %v2774, 0.0
      %v2807 = vmax.f32 %v2775, 0.0
      %v2808 = vmax.f32 %v2776, 0.0
      %v2809 = vmax.f32 %v2777, 0.0
      %v2810 = vmax.f32 %v2778, 0.0
      %2811 = vst [vmem:[%s170] sm:$0xff] %v2779
      %2812 = vst [vmem:[%s170 + $0x8] sm:$0xff] %v2780
      %2813 = vst [vmem:[%s170 + $0x10] sm:$0xff] %v2781
      %2814 = vst [vmem:[%s170 + $0x18] sm:$0xff] %v2782
      %2815 = vst [vmem:[%s170 + $0x20] sm:$0xff] %v2783
      %2816 = vst [vmem:[%s170 + $0x28] sm:$0xff] %v2784
      %2817 = vst [vmem:[%s170 + $0x30] sm:$0xff] %v2785
      %2818 = vst [vmem:[%s170 + $0x38] sm:$0xff] %v2786
      %2819 = vst [vmem:[%s170 + $0x40] sm:$0xff] %v2787
      %2820 = vst [vmem:[%s170 + $0x48] sm:$0xff] %v2788
      %2821 = vst [vmem:[%s170 + $0x50] sm:$0xff] %v2789
      %2822 = vst [vmem:[%s170 + $0x58] sm:$0xff] %v2790
      %2823 = vst [vmem:[%s170 + $0x60] sm:$0xff] %v2791
      %2824 = vst [vmem:[%s170 + $0x68] sm:$0xff] %v2792
      %2825 = vst [vmem:[%s170 + $0x70] sm:$0xff] %v2793
      %2826 = vst [vmem:[%s170 + $0x78] sm:$0xff] %v2794
      %2827 = vst [vmem:[%s170 + $0x80] sm:$0xff] %v2795
      %2828 = vst [vmem:[%s170 + $0x88] sm:$0xff] %v2796
      %2829 = vst [vmem:[%s170 + $0x90] sm:$0xff] %v2797
      %2830 = vst [vmem:[%s170 + $0x98] sm:$0xff] %v2798
      %2831 = vst [vmem:[%s170 + $0xa0] sm:$0xff] %v2799
      %2832 = vst [vmem:[%s170 + $0xa8] sm:$0xff] %v2800
      %2833 = vst [vmem:[%s170 + $0xb0] sm:$0xff] %v2801
      %2834 = vst [vmem:[%s170 + $0xb8] sm:$0xff] %v2802
      %2835 = vst [vmem:[%s170 + $0xc0] sm:$0xff] %v2803
      %2836 = vst [vmem:[%s170 + $0xc8] sm:$0xff] %v2804
      %2837 = vst [vmem:[%s170 + $0xd0] sm:$0xff] %v2805
      %2838 = vst [vmem:[%s170 + $0xd8] sm:$0xff] %v2806
      %2839 = vst [vmem:[%s170 + $0xe0] sm:$0xff] %v2807
      %2840 = vst [vmem:[%s170 + $0xe8] sm:$0xff] %v2808
      %2841 = vst [vmem:[%s170 + $0xf0] sm:$0xff] %v2809
      %2842 = vst [vmem:[%s170 + $0xf8] sm:$0xff] %v2810
      %p2843 = scmp.lt.s32.totalorder %s14, 1
      %s2844 = scalar_select %p2843, %s14, 1
      %s2845 = smul.addr %s2844, 32
      %s2846 = smul.addr %s2845, 8
      %s2847 = scalar_lea.vmem %s3, %s2846
      // Predicated region
      $region33: #{simple_cnn_forward.4} parent=31 // pred_check
        %p2848 = pneg %p100
      $region34: #{simple_cnn_forward.4} parent=31 // pred_check_branch
        %2850 = sbr.rel (%p2848) target = $region36
      $region35: #{simple_cnn_forward.4} parent=31 // pred_region
        _
      $region36: #{simple_cnn_forward.4} parent=31 // pred_fallthru
        _
    $region32: #{simple_cnn_forward.4} parent=5 // pred_fallthru
      _
    %p2851 = scmp.le.s32.totalorder 2, %s9
    // Predicated region
    $region37: #{simple_cnn_forward.4} parent=5 // pred_check
      %p2852 = pneg %p2851
    $region38: #{simple_cnn_forward.4} parent=5 // pred_check_branch
      %2854 = sbr.rel (%p2852) target = $region40
    $region39: #{simple_cnn_forward.4} parent=5 // pred_region
      %s2855 = ssub.s32 %s9, 2
      // Predicated region
      $region41: #{simple_cnn_forward.4} parent=39 // pred_check
        %p2856 = pneg %p106
      $region42: #{simple_cnn_forward.4} parent=39 // pred_check_branch
        %2858 = sbr.rel (%p2856) target = $region44
      $region43: #{simple_cnn_forward.4} parent=39 // pred_region
        %p2859 = scmp.lt.s32.totalorder %s15, 1
        %s2860 = scalar_select %p2859, %s15, 1
        %s2861 = smul.addr %s2860, 32
        %s2862 = smul.addr %s2861, 8
        %s2863 = scalar_lea.vmem %s3, %s2862
      $region44: #{simple_cnn_forward.4} parent=39 // pred_fallthru
        _
    $region40: #{simple_cnn_forward.4} parent=5 // pred_fallthru
      _
  $region6: #{simple_cnn_forward.4} parent=0 // loop_footer
    %s13 = sadd.s32 1, %s9
  $region7: #{simple_cnn_forward.4} parent=0 // loop_footer_branch
    %8 = sbr.rel target = $region3
  $region8: #{simple_cnn_forward.4} parent=0 // loop_exit
    _

// kernel: simple_cnn_forward.5
$region0: #{simple_cnn_forward.5}
  #allocation0 [shape = 'u32[]', space=smem, size = 0x4, offset = 0x4, fixed_abs, tag = 'smem constant byte address 0x4 - core index']
  #allocation1 [shape = 'u32[72,128]{1,0:T(1,128)}', space=vmem, size = 0x9000, scoped, tag = 'internal scratch']
  #allocation2 [shape = 'f32[2,128]{1,0:T(2,128)}', space=vmem, size = 0x400, scoped, tag = 'scratch operand']
  %s0 = inlined_call_operand.vmem [shape: f32[2,32768], index: 0, kind: input, shape index: {}]
  %s1 = inlined_call_operand.vmem [shape: f32[32768,128], index: 1, kind: input, shape index: {}]
  %s2 = inlined_call_operand.vmem [shape: f32[1,128], index: 2, kind: input, shape index: {}]
  %s3 = inlined_call_operand.vmem [shape: f32[128,10], index: 3, kind: input, shape index: {}]
  %s4 = inlined_call_operand.vmem [shape: f32[1,10], index: 4, kind: input, shape index: {}]
  %s5 = inlined_call_operand.hbm [shape: f32[2,10], index: 5, kind: output, shape index: {}]
  %s6 = sld [smem:[#allocation0]]
  $region61: #{simple_cnn_forward.5} parent=0
    _
  %s8 = ssub.s32 1, %s6
  %s9 = scalar_select 0, %s8, %s6
  $region1: #{simple_cnn_forward.5} parent=0
    #allocation3 [shape = 'u8[1024]{0}', space=vmem, size = 0x400, scoped, tag = 'output window, operand 0, single buffered']
    #allocation4 [shape = 's32[2]{0}', space=sflag, size = 0x8, scoped, tag = 'scoped memory for simple_cnn_forward.5']
    %10 = vsyncpa [#allocation4], 0
    loop: start=0, step=1, limit=6
    $region2: #{simple_cnn_forward.5} parent=1 // loop_pre_header
      _
    $region3: #{simple_cnn_forward.5} parent=1 // loop_header
      %s12 = sphi 0, %s16
      %p13 = scmp.ge.s32.totalorder %s12, 6
      %s22 = sphi 0, %s24
      %s25 = sphi 0, %s22
      %s26 = sphi 0, %s25
      %s42 = sphi 0, %s26
      %s48 = sphi 0, %s50
      %s51 = sphi 0, %s48
      %s52 = sphi 0, %s51
      %s68 = sphi 0, %s52
      %s72 = sphi 0, %s72
      %s74 = sphi 0, %s72
      %s75 = sphi 0, %s74
      %s89 = sphi 0, %s75
      %s93 = sphi 0, %s93
      %s95 = sphi 0, %s93
      %s96 = sphi 0, %s95
      %s110 = sphi 0, %s96
      %s114 = sphi 0, %s114
      %s116 = sphi 0, %s114
      %s117 = sphi 0, %s116
      %s131 = sphi 0, %s117
      %s135 = sphi 0, %s135
      %s137 = sphi 0, %s135
      %s138 = sphi 0, %s137
      %s152 = sphi 0, %s138
    $region4: #{simple_cnn_forward.5} parent=1 // loop_header_branch
      %15 = sbr.rel (%p13) target = $region8
    $region5: #{simple_cnn_forward.5} parent=1 // loop_body
      %s17 = ssub.s32 %s12, 1
      %s18 = ssub.s32 %s12, 2
      %s19 = sadd.s32 %s12, 1
      %s20 = ssub.s32 %s12, %s19
      %p21 = scmp.eq.s32.totalorder %s20, 0
      %s23 = sadd.s32 %s22, 1
      %s24 = scalar_select %p21, %s22, %s23
      %p27 = pneg %p21
      %p28 = scmp.eq.s32.totalorder %s12, 3
      %p29 = por %p27, %p28
      %p30 = scmp.ne.s32.totalorder %s22, %s25
      %p31 = scmp.eq.s32.totalorder %s12, 0
      %p32 = por %p30, %p31
      %p33 = scmp.ne.s32.totalorder %s22, %s25
      %p34 = scmp.eq.s32.totalorder %s17, 3
      %p35 = por %p33, %p34
      %p36 = scmp.ne.s32.totalorder %s25, %s26
      %p37 = scmp.eq.s32.totalorder %s17, 0
      %p38 = por %p36, %p37
      %p39 = scmp.ne.s32.totalorder %s25, %s26
      %p40 = scmp.eq.s32.totalorder %s18, 3
      %p41 = por %p39, %p40
      %p43 = scmp.ne.s32.totalorder %s26, %s42
      %p44 = scmp.eq.s32.totalorder %s18, 0
      %p45 = por %p43, %p44
      %s46 = ssub.s32 %s12, %s19
      %p47 = scmp.eq.s32.totalorder %s46, 0
      %s49 = sadd.s32 %s48, 1
      %s50 = scalar_select %p47, %s48, %s49
      %p53 = pneg %p47
      %p54 = scmp.eq.s32.totalorder %s12, 3
      %p55 = por %p53, %p54
      %p56 = scmp.ne.s32.totalorder %s48, %s51
      %p57 = scmp.eq.s32.totalorder %s12, 0
      %p58 = por %p56, %p57
      %p59 = scmp.ne.s32.totalorder %s48, %s51
      %p60 = scmp.eq.s32.totalorder %s17, 3
      %p61 = por %p59, %p60
      %p62 = scmp.ne.s32.totalorder %s51, %s52
      %p63 = scmp.eq.s32.totalorder %s17, 0
      %p64 = por %p62, %p63
      %p65 = scmp.ne.s32.totalorder %s51, %s52
      %p66 = scmp.eq.s32.totalorder %s18, 3
      %p67 = por %p65, %p66
      %p69 = scmp.ne.s32.totalorder %s52, %s68
      %p70 = scmp.eq.s32.totalorder %s18, 0
      %p71 = por %p69, %p70
      %s73 = sadd.s32 %s72, 1
      %p76 = scmp.eq.s32.totalorder %s12, 3
      %p77 = scmp.ne.s32.totalorder %s72, %s74
      %p78 = scmp.eq.s32.totalorder %s12, 0
      %p79 = por %p77, %p78
      %p80 = scmp.ne.s32.totalorder %s72, %s74
      %p81 = scmp.eq.s32.totalorder %s17, 3
      %p82 = por %p80, %p81
      %p83 = scmp.ne.s32.totalorder %s74, %s75
      %p84 = scmp.eq.s32.totalorder %s17, 0
      %p85 = por %p83, %p84
      %p86 = scmp.ne.s32.totalorder %s74, %s75
      %p87 = scmp.eq.s32.totalorder %s18, 3
      %p88 = por %p86, %p87
      %p90 = scmp.ne.s32.totalorder %s75, %s89
      %p91 = scmp.eq.s32.totalorder %s18, 0
      %p92 = por %p90, %p91
      %s94 = sadd.s32 %s93, 1
      %p97 = scmp.eq.s32.totalorder %s12, 3
      %p98 = scmp.ne.s32.totalorder %s93, %s95
      %p99 = scmp.eq.s32.totalorder %s12, 0
      %p100 = por %p98, %p99
      %p101 = scmp.ne.s32.totalorder %s93, %s95
      %p102 = scmp.eq.s32.totalorder %s17, 3
      %p103 = por %p101, %p102
      %p104 = scmp.ne.s32.totalorder %s95, %s96
      %p105 = scmp.eq.s32.totalorder %s17, 0
      %p106 = por %p104, %p105
      %p107 = scmp.ne.s32.totalorder %s95, %s96
      %p108 = scmp.eq.s32.totalorder %s18, 3
      %p109 = por %p107, %p108
      %p111 = scmp.ne.s32.totalorder %s96, %s110
      %p112 = scmp.eq.s32.totalorder %s18, 0
      %p113 = por %p111, %p112
      %s115 = sadd.s32 %s114, 1
      %p118 = scmp.eq.s32.totalorder %s12, 3
      %p119 = scmp.ne.s32.totalorder %s114, %s116
      %p120 = scmp.eq.s32.totalorder %s12, 0
      %p121 = por %p119, %p120
      %p122 = scmp.ne.s32.totalorder %s114, %s116
      %p123 = scmp.eq.s32.totalorder %s17, 3
      %p124 = por %p122, %p123
      %p125 = scmp.ne.s32.totalorder %s116, %s117
      %p126 = scmp.eq.s32.totalorder %s17, 0
      %p127 = por %p125, %p126
      %p128 = scmp.ne.s32.totalorder %s116, %s117
      %p129 = scmp.eq.s32.totalorder %s18, 3
      %p130 = por %p128, %p129
      %p132 = scmp.ne.s32.totalorder %s117, %s131
      %p133 = scmp.eq.s32.totalorder %s18, 0
      %p134 = por %p132, %p133
      %s136 = sadd.s32 %s135, 1
      %p139 = scmp.eq.s32.totalorder %s12, 3
      %p140 = scmp.ne.s32.totalorder %s135, %s137
      %p141 = scmp.eq.s32.totalorder %s12, 0
      %p142 = por %p140, %p141
      %p143 = scmp.ne.s32.totalorder %s135, %s137
      %p144 = scmp.eq.s32.totalorder %s17, 3
      %p145 = por %p143, %p144
      %p146 = scmp.ne.s32.totalorder %s137, %s138
      %p147 = scmp.eq.s32.totalorder %s17, 0
      %p148 = por %p146, %p147
      %p149 = scmp.ne.s32.totalorder %s137, %s138
      %p150 = scmp.eq.s32.totalorder %s18, 3
      %p151 = por %p149, %p150
      %p153 = scmp.ne.s32.totalorder %s138, %s152
      %p154 = scmp.eq.s32.totalorder %s18, 0
      %p155 = por %p153, %p154
      %p156 = scmp.le.s32.totalorder 1, %s12
      %p157 = scmp.lt.s32.totalorder %s12, 5
      %p158 = pnand %p156, %p157
      %p159 = pneg %p158
      // Predicated region
      $region9: #{simple_cnn_forward.5} parent=5 // pred_check
        _
      $region10: #{simple_cnn_forward.5} parent=5 // pred_check_branch
        %161 = sbr.rel (%p158) target = $region12
      $region11: #{simple_cnn_forward.5} parent=5 // pred_region
        %s162 = ssub.s32 %s12, 1
        // Predicated region
        $region13: #{simple_cnn_forward.5} parent=11 // pred_check
          %p163 = pneg %p85
        $region14: #{simple_cnn_forward.5} parent=11 // pred_check_branch
          %165 = sbr.rel (%p163) target = $region16
        $region15: #{simple_cnn_forward.5} parent=11 // pred_region
          _
        $region16: #{simple_cnn_forward.5} parent=11 // pred_fallthru
          _
        // Predicated region
        $region17: #{simple_cnn_forward.5} parent=11 // pred_check
          %p166 = pneg %p106
        $region18: #{simple_cnn_forward.5} parent=11 // pred_check_branch
          %168 = sbr.rel (%p166) target = $region20
        $region19: #{simple_cnn_forward.5} parent=11 // pred_region
          _
        $region20: #{simple_cnn_forward.5} parent=11 // pred_fallthru
          _
        // Predicated region
        $region21: #{simple_cnn_forward.5} parent=11 // pred_check
          %p169 = pneg %p127
        $region22: #{simple_cnn_forward.5} parent=11 // pred_check_branch
          %171 = sbr.rel (%p169) target = $region24
        $region23: #{simple_cnn_forward.5} parent=11 // pred_region
          _
        $region24: #{simple_cnn_forward.5} parent=11 // pred_fallthru
          _
      $region12: #{simple_cnn_forward.5} parent=5 // pred_fallthru
        _
      %p172 = scmp.lt.s32.totalorder %s12, 4
      // Predicated region
      $region25: #{simple_cnn_forward.5} parent=5 // pred_check
        %p173 = pneg %p172
      $region26: #{simple_cnn_forward.5} parent=5 // pred_check_branch
        %175 = sbr.rel (%p173) target = $region28
      $region27: #{simple_cnn_forward.5} parent=5 // pred_region
        // Predicated region
        $region29: #{simple_cnn_forward.5} parent=27 // pred_check
          %p176 = pneg %p32
        $region30: #{simple_cnn_forward.5} parent=27 // pred_check_branch
          %178 = sbr.rel (%p176) target = $region32
        $region31: #{simple_cnn_forward.5} parent=27 // pred_region
          %s179 = smul.u32 64, %s12
          %p180 = scmp.lt.s32.totalorder %s179, 255
          %s181 = scalar_select %p180, %s179, 255
          %s182 = smul.addr %s181, 2
          %s183 = scalar_lea.vmem %s0, %s182
          %s184 = smul.u32 64, %s12
        $region32: #{simple_cnn_forward.5} parent=27 // pred_fallthru
          _
        // Predicated region
        $region33: #{simple_cnn_forward.5} parent=27 // pred_check
          %p185 = pneg %p58
        $region34: #{simple_cnn_forward.5} parent=27 // pred_check_branch
          %187 = sbr.rel (%p185) target = $region36
        $region35: #{simple_cnn_forward.5} parent=27 // pred_region
          %s188 = smul.u32 1024, %s12
          %p189 = scmp.lt.s32.totalorder %s188, 4095
          %s190 = scalar_select %p189, %s188, 4095
          %s191 = smul.addr %s190, 8
          %s192 = scalar_lea.vmem %s1, %s191
          %s193 = smul.u32 1024, %s12
        $region36: #{simple_cnn_forward.5} parent=27 // pred_fallthru
          _
      $region28: #{simple_cnn_forward.5} parent=5 // pred_fallthru
        _
      %p194 = scmp.le.s32.totalorder 1, %s12
      %p195 = scmp.lt.s32.totalorder %s12, 5
      %p196 = pnand %p194, %p195
      %p197 = pneg %p196
      // Predicated region
      $region37: #{simple_cnn_forward.5} parent=5 // pred_check
        _
      $region38: #{simple_cnn_forward.5} parent=5 // pred_check_branch
        %199 = sbr.rel (%p196) target = $region40
      $region39: #{simple_cnn_forward.5} parent=5 // pred_region
        %s200 = ssub.s32 %s12, 1
        %s201 = smul.u32 64, %s17
        %p202 = scmp.lt.s32.totalorder %s201, 255
        %s203 = scalar_select %p202, %s201, 255
        %s204 = smul.addr %s203, 2
        %s205 = scalar_lea.vmem %s0, %s204
        %p206 = pneg %p38
        %p207 = pneg %p35
        %s208 = smul.u32 1024, %s17
        %p209 = scmp.lt.s32.totalorder %s208, 4095
        %s210 = scalar_select %p209, %s208, 4095
        %s211 = smul.addr %s210, 8
        %s212 = scalar_lea.vmem %s1, %s211
        %p213 = pneg %p64
        %p214 = pneg %p61
        %p215 = pneg %p85
        %p216 = pneg %p82
        %p217 = pneg %p106
        %p218 = pneg %p103
        %p219 = pneg %p127
        %p220 = pneg %p124
        %p221 = pneg %p148
        %p222 = pneg %p145
        %s223 = smul.u32 64, %s17
        %p224 = scmp.lt.s32.totalorder %s223, 255
        %s225 = scalar_select %p224, %s223, 255
        %s226 = smul.addr %s225, 2
        %s227 = scalar_lea.vmem %s0, %s226
        %s228 = smul.u32 64, %s17
        %s229 = smul.u32 1024, %s17
        %p230 = scmp.lt.s32.totalorder %s229, 4095
        %s231 = scalar_select %p230, %s229, 4095
        %s232 = smul.addr %s231, 8
        %s233 = scalar_lea.vmem %s1, %s232
        %s234 = smul.u32 1024, %s17
        %p235 = scmp.eq.s32.totalorder %s17, 0
        // Predicated region
        $region41: #{simple_cnn_forward.5} parent=39 // pred_check
          %p236 = pneg %p235
        $region42: #{simple_cnn_forward.5} parent=39 // pred_check_branch
          %238 = sbr.rel (%p236) target = $region44
        $region43: #{simple_cnn_forward.5} parent=39 // pred_region
          %239 = vst [vmem:[#allocation2] sm:$0x3] 0.0
        $region44: #{simple_cnn_forward.5} parent=39 // pred_fallthru
          _
        %v240 = vld [vmem:[#allocation2] sm:$0x3]
        %v241 = vld [vmem:[%s227] sm:$0xff]
        %v242 = vld [vmem:[%s227 + $0x8] sm:$0xff]
        %v243 = vld [vmem:[%s227 + $0x10] sm:$0xff]
        %v244 = vld [vmem:[%s227 + $0x18] sm:$0xff]
        %v245 = vld [vmem:[%s227 + $0x20] sm:$0xff]
        %v246 = vld [vmem:[%s227 + $0x28] sm:$0xff]
        %v247 = vld [vmem:[%s227 + $0x30] sm:$0xff]
        %v248 = vld [vmem:[%s227 + $0x38] sm:$0xff]
        %v249 = vld [vmem:[%s227 + $0x40] sm:$0xff]
        %v250 = vld [vmem:[%s227 + $0x48] sm:$0xff]
        %v251 = vld [vmem:[%s227 + $0x50] sm:$0xff]
        %v252 = vld [vmem:[%s227 + $0x58] sm:$0xff]
        %v253 = vld [vmem:[%s227 + $0x60] sm:$0xff]
        %v254 = vld [vmem:[%s227 + $0x68] sm:$0xff]
        %v255 = vld [vmem:[%s227 + $0x70] sm:$0xff]
        %v256 = vld [vmem:[%s227 + $0x78] sm:$0xff]
        %v257 = vld [vmem:[%s233] sm:$0xff]
        %v258 = vld [vmem:[%s233 + $0x8] sm:$0xff]
        %v259 = vld [vmem:[%s233 + $0x10] sm:$0xff]
        %v260 = vld [vmem:[%s233 + $0x18] sm:$0xff]
        %v261 = vld [vmem:[%s233 + $0x20] sm:$0xff]
        %v262 = vld [vmem:[%s233 + $0x28] sm:$0xff]
        %v263 = vld [vmem:[%s233 + $0x30] sm:$0xff]
        %v264 = vld [vmem:[%s233 + $0x38] sm:$0xff]
        %v265 = vld [vmem:[%s233 + $0x40] sm:$0xff]
        %v266 = vld [vmem:[%s233 + $0x48] sm:$0xff]
        %v267 = vld [vmem:[%s233 + $0x50] sm:$0xff]
        %v268 = vld [vmem:[%s233 + $0x58] sm:$0xff]
        %v269 = vld [vmem:[%s233 + $0x60] sm:$0xff]
        %v270 = vld [vmem:[%s233 + $0x68] sm:$0xff]
        %v271 = vld [vmem:[%s233 + $0x70] sm:$0xff]
        %v272 = vld [vmem:[%s233 + $0x78] sm:$0xff]
        %v273 = vld [vmem:[%s233 + $0x80] sm:$0xff]
        %v274 = vld [vmem:[%s233 + $0x88] sm:$0xff]
        %v275 = vld [vmem:[%s233 + $0x90] sm:$0xff]
        %v276 = vld [vmem:[%s233 + $0x98] sm:$0xff]
        %v277 = vld [vmem:[%s233 + $0xa0] sm:$0xff]
        %v278 = vld [vmem:[%s233 + $0xa8] sm:$0xff]
        %v279 = vld [vmem:[%s233 + $0xb0] sm:$0xff]
        %v280 = vld [vmem:[%s233 + $0xb8] sm:$0xff]
        %v281 = vld [vmem:[%s233 + $0xc0] sm:$0xff]
        %v282 = vld [vmem:[%s233 + $0xc8] sm:$0xff]
        %v283 = vld [vmem:[%s233 + $0xd0] sm:$0xff]
        %v284 = vld [vmem:[%s233 + $0xd8] sm:$0xff]
        %v285 = vld [vmem:[%s233 + $0xe0] sm:$0xff]
        %v286 = vld [vmem:[%s233 + $0xe8] sm:$0xff]
        %v287 = vld [vmem:[%s233 + $0xf0] sm:$0xff]
        %v288 = vld [vmem:[%s233 + $0xf8] sm:$0xff]
        %v289 = vld [vmem:[%s233 + $0x100] sm:$0xff]
        %v290 = vld [vmem:[%s233 + $0x108] sm:$0xff]
        %v291 = vld [vmem:[%s233 + $0x110] sm:$0xff]
        %v292 = vld [vmem:[%s233 + $0x118] sm:$0xff]
        %v293 = vld [vmem:[%s233 + $0x120] sm:$0xff]
        %v294 = vld [vmem:[%s233 + $0x128] sm:$0xff]
        %v295 = vld [vmem:[%s233 + $0x130] sm:$0xff]
        %v296 = vld [vmem:[%s233 + $0x138] sm:$0xff]
        %v297 = vld [vmem:[%s233 + $0x140] sm:$0xff]
        %v298 = vld [vmem:[%s233 + $0x148] sm:$0xff]
        %v299 = vld [vmem:[%s233 + $0x150] sm:$0xff]
        %v300 = vld [vmem:[%s233 + $0x158] sm:$0xff]
        %v301 = vld [vmem:[%s233 + $0x160] sm:$0xff]
        %v302 = vld [vmem:[%s233 + $0x168] sm:$0xff]
        %v303 = vld [vmem:[%s233 + $0x170] sm:$0xff]
        %v304 = vld [vmem:[%s233 + $0x178] sm:$0xff]
        %v305 = vld [vmem:[%s233 + $0x180] sm:$0xff]
        %v306 = vld [vmem:[%s233 + $0x188] sm:$0xff]
        %v307 = vld [vmem:[%s233 + $0x190] sm:$0xff]
        %v308 = vld [vmem:[%s233 + $0x198] sm:$0xff]
        %v309 = vld [vmem:[%s233 + $0x1a0] sm:$0xff]
        %v310 = vld [vmem:[%s233 + $0x1a8] sm:$0xff]
        %v311 = vld [vmem:[%s233 + $0x1b0] sm:$0xff]
        %v312 = vld [vmem:[%s233 + $0x1b8] sm:$0xff]
        %v313 = vld [vmem:[%s233 + $0x1c0] sm:$0xff]
        %v314 = vld [vmem:[%s233 + $0x1c8] sm:$0xff]
        %v315 = vld [vmem:[%s233 + $0x1d0] sm:$0xff]
        %v316 = vld [vmem:[%s233 + $0x1d8] sm:$0xff]
        %v317 = vld [vmem:[%s233 + $0x1e0] sm:$0xff]
        %v318 = vld [vmem:[%s233 + $0x1e8] sm:$0xff]
        %v319 = vld [vmem:[%s233 + $0x1f0] sm:$0xff]
        %v320 = vld [vmem:[%s233 + $0x1f8] sm:$0xff]
        %v321 = vld [vmem:[%s233 + $0x200] sm:$0xff]
        %v322 = vld [vmem:[%s233 + $0x208] sm:$0xff]
        %v323 = vld [vmem:[%s233 + $0x210] sm:$0xff]
        %v324 = vld [vmem:[%s233 + $0x218] sm:$0xff]
        %v325 = vld [vmem:[%s233 + $0x220] sm:$0xff]
        %v326 = vld [vmem:[%s233 + $0x228] sm:$0xff]
        %v327 = vld [vmem:[%s233 + $0x230] sm:$0xff]
        %v328 = vld [vmem:[%s233 + $0x238] sm:$0xff]
        %v329 = vld [vmem:[%s233 + $0x240] sm:$0xff]
        %v330 = vld [vmem:[%s233 + $0x248] sm:$0xff]
        %v331 = vld [vmem:[%s233 + $0x250] sm:$0xff]
        %v332 = vld [vmem:[%s233 + $0x258] sm:$0xff]
        %v333 = vld [vmem:[%s233 + $0x260] sm:$0xff]
        %v334 = vld [vmem:[%s233 + $0x268] sm:$0xff]
        %v335 = vld [vmem:[%s233 + $0x270] sm:$0xff]
        %v336 = vld [vmem:[%s233 + $0x278] sm:$0xff]
        %v337 = vld [vmem:[%s233 + $0x280] sm:$0xff]
        %v338 = vld [vmem:[%s233 + $0x288] sm:$0xff]
        %v339 = vld [vmem:[%s233 + $0x290] sm:$0xff]
        %v340 = vld [vmem:[%s233 + $0x298] sm:$0xff]
        %v341 = vld [vmem:[%s233 + $0x2a0] sm:$0xff]
        %v342 = vld [vmem:[%s233 + $0x2a8] sm:$0xff]
        %v343 = vld [vmem:[%s233 + $0x2b0] sm:$0xff]
        %v344 = vld [vmem:[%s233 + $0x2b8] sm:$0xff]
        %v345 = vld [vmem:[%s233 + $0x2c0] sm:$0xff]
        %v346 = vld [vmem:[%s233 + $0x2c8] sm:$0xff]
        %v347 = vld [vmem:[%s233 + $0x2d0] sm:$0xff]
        %v348 = vld [vmem:[%s233 + $0x2d8] sm:$0xff]
        %v349 = vld [vmem:[%s233 + $0x2e0] sm:$0xff]
        %v350 = vld [vmem:[%s233 + $0x2e8] sm:$0xff]
        %v351 = vld [vmem:[%s233 + $0x2f0] sm:$0xff]
        %v352 = vld [vmem:[%s233 + $0x2f8] sm:$0xff]
        %v353 = vld [vmem:[%s233 + $0x300] sm:$0xff]
        %v354 = vld [vmem:[%s233 + $0x308] sm:$0xff]
        %v355 = vld [vmem:[%s233 + $0x310] sm:$0xff]
        %v356 = vld [vmem:[%s233 + $0x318] sm:$0xff]
        %v357 = vld [vmem:[%s233 + $0x320] sm:$0xff]
        %v358 = vld [vmem:[%s233 + $0x328] sm:$0xff]
        %v359 = vld [vmem:[%s233 + $0x330] sm:$0xff]
        %v360 = vld [vmem:[%s233 + $0x338] sm:$0xff]
        %v361 = vld [vmem:[%s233 + $0x340] sm:$0xff]
        %v362 = vld [vmem:[%s233 + $0x348] sm:$0xff]
        %v363 = vld [vmem:[%s233 + $0x350] sm:$0xff]
        %v364 = vld [vmem:[%s233 + $0x358] sm:$0xff]
        %v365 = vld [vmem:[%s233 + $0x360] sm:$0xff]
        %v366 = vld [vmem:[%s233 + $0x368] sm:$0xff]
        %v367 = vld [vmem:[%s233 + $0x370] sm:$0xff]
        %v368 = vld [vmem:[%s233 + $0x378] sm:$0xff]
        %v369 = vld [vmem:[%s233 + $0x380] sm:$0xff]
        %v370 = vld [vmem:[%s233 + $0x388] sm:$0xff]
        %v371 = vld [vmem:[%s233 + $0x390] sm:$0xff]
        %v372 = vld [vmem:[%s233 + $0x398] sm:$0xff]
        %v373 = vld [vmem:[%s233 + $0x3a0] sm:$0xff]
        %v374 = vld [vmem:[%s233 + $0x3a8] sm:$0xff]
        %v375 = vld [vmem:[%s233 + $0x3b0] sm:$0xff]
        %v376 = vld [vmem:[%s233 + $0x3b8] sm:$0xff]
        %v377 = vld [vmem:[%s233 + $0x3c0] sm:$0xff]
        %v378 = vld [vmem:[%s233 + $0x3c8] sm:$0xff]
        %v379 = vld [vmem:[%s233 + $0x3d0] sm:$0xff]
        %v380 = vld [vmem:[%s233 + $0x3d8] sm:$0xff]
        %v381 = vld [vmem:[%s233 + $0x3e0] sm:$0xff]
        %v382 = vld [vmem:[%s233 + $0x3e8] sm:$0xff]
        %v383 = vld [vmem:[%s233 + $0x3f0] sm:$0xff]
        %v384 = vld [vmem:[%s233 + $0x3f8] sm:$0xff]
        %v385 = vld [vmem:[%s233 + $0x400] sm:$0xff]
        %v386 = vld [vmem:[%s233 + $0x408] sm:$0xff]
        %v387 = vld [vmem:[%s233 + $0x410] sm:$0xff]
        %v388 = vld [vmem:[%s233 + $0x418] sm:$0xff]
        %v389 = vld [vmem:[%s233 + $0x420] sm:$0xff]
        %v390 = vld [vmem:[%s233 + $0x428] sm:$0xff]
        %v391 = vld [vmem:[%s233 + $0x430] sm:$0xff]
        %v392 = vld [vmem:[%s233 + $0x438] sm:$0xff]
        %v393 = vld [vmem:[%s233 + $0x440] sm:$0xff]
        %v394 = vld [vmem:[%s233 + $0x448] sm:$0xff]
        %v395 = vld [vmem:[%s233 + $0x450] sm:$0xff]
        %v396 = vld [vmem:[%s233 + $0x458] sm:$0xff]
        %v397 = vld [vmem:[%s233 + $0x460] sm:$0xff]
        %v398 = vld [vmem:[%s233 + $0x468] sm:$0xff]
        %v399 = vld [vmem:[%s233 + $0x470] sm:$0xff]
        %v400 = vld [vmem:[%s233 + $0x478] sm:$0xff]
        %v401 = vld [vmem:[%s233 + $0x480] sm:$0xff]
        %v402 = vld [vmem:[%s233 + $0x488] sm:$0xff]
        %v403 = vld [vmem:[%s233 + $0x490] sm:$0xff]
        %v404 = vld [vmem:[%s233 + $0x498] sm:$0xff]
        %v405 = vld [vmem:[%s233 + $0x4a0] sm:$0xff]
        %v406 = vld [vmem:[%s233 + $0x4a8] sm:$0xff]
        %v407 = vld [vmem:[%s233 + $0x4b0] sm:$0xff]
        %v408 = vld [vmem:[%s233 + $0x4b8] sm:$0xff]
        %v409 = vld [vmem:[%s233 + $0x4c0] sm:$0xff]
        %v410 = vld [vmem:[%s233 + $0x4c8] sm:$0xff]
        %v411 = vld [vmem:[%s233 + $0x4d0] sm:$0xff]
        %v412 = vld [vmem:[%s233 + $0x4d8] sm:$0xff]
        %v413 = vld [vmem:[%s233 + $0x4e0] sm:$0xff]
        %v414 = vld [vmem:[%s233 + $0x4e8] sm:$0xff]
        %v415 = vld [vmem:[%s233 + $0x4f0] sm:$0xff]
        %v416 = vld [vmem:[%s233 + $0x4f8] sm:$0xff]
        %v417 = vld [vmem:[%s233 + $0x500] sm:$0xff]
        %v418 = vld [vmem:[%s233 + $0x508] sm:$0xff]
        %v419 = vld [vmem:[%s233 + $0x510] sm:$0xff]
        %v420 = vld [vmem:[%s233 + $0x518] sm:$0xff]
        %v421 = vld [vmem:[%s233 + $0x520] sm:$0xff]
        %v422 = vld [vmem:[%s233 + $0x528] sm:$0xff]
        %v423 = vld [vmem:[%s233 + $0x530] sm:$0xff]
        %v424 = vld [vmem:[%s233 + $0x538] sm:$0xff]
        %v425 = vld [vmem:[%s233 + $0x540] sm:$0xff]
        %v426 = vld [vmem:[%s233 + $0x548] sm:$0xff]
        %v427 = vld [vmem:[%s233 + $0x550] sm:$0xff]
        %v428 = vld [vmem:[%s233 + $0x558] sm:$0xff]
        %v429 = vld [vmem:[%s233 + $0x560] sm:$0xff]
        %v430 = vld [vmem:[%s233 + $0x568] sm:$0xff]
        %v431 = vld [vmem:[%s233 + $0x570] sm:$0xff]
        %v432 = vld [vmem:[%s233 + $0x578] sm:$0xff]
        %v433 = vld [vmem:[%s233 + $0x580] sm:$0xff]
        %v434 = vld [vmem:[%s233 + $0x588] sm:$0xff]
        %v435 = vld [vmem:[%s233 + $0x590] sm:$0xff]
        %v436 = vld [vmem:[%s233 + $0x598] sm:$0xff]
        %v437 = vld [vmem:[%s233 + $0x5a0] sm:$0xff]
        %v438 = vld [vmem:[%s233 + $0x5a8] sm:$0xff]
        %v439 = vld [vmem:[%s233 + $0x5b0] sm:$0xff]
        %v440 = vld [vmem:[%s233 + $0x5b8] sm:$0xff]
        %v441 = vld [vmem:[%s233 + $0x5c0] sm:$0xff]
        %v442 = vld [vmem:[%s233 + $0x5c8] sm:$0xff]
        %v443 = vld [vmem:[%s233 + $0x5d0] sm:$0xff]
        %v444 = vld [vmem:[%s233 + $0x5d8] sm:$0xff]
        %v445 = vld [vmem:[%s233 + $0x5e0] sm:$0xff]
        %v446 = vld [vmem:[%s233 + $0x5e8] sm:$0xff]
        %v447 = vld [vmem:[%s233 + $0x5f0] sm:$0xff]
        %v448 = vld [vmem:[%s233 + $0x5f8] sm:$0xff]
        %v449 = vld [vmem:[%s233 + $0x600] sm:$0xff]
        %v450 = vld [vmem:[%s233 + $0x608] sm:$0xff]
        %v451 = vld [vmem:[%s233 + $0x610] sm:$0xff]
        %v452 = vld [vmem:[%s233 + $0x618] sm:$0xff]
        %v453 = vld [vmem:[%s233 + $0x620] sm:$0xff]
        %v454 = vld [vmem:[%s233 + $0x628] sm:$0xff]
        %v455 = vld [vmem:[%s233 + $0x630] sm:$0xff]
        %v456 = vld [vmem:[%s233 + $0x638] sm:$0xff]
        %v457 = vld [vmem:[%s233 + $0x640] sm:$0xff]
        %v458 = vld [vmem:[%s233 + $0x648] sm:$0xff]
        %v459 = vld [vmem:[%s233 + $0x650] sm:$0xff]
        %v460 = vld [vmem:[%s233 + $0x658] sm:$0xff]
        %v461 = vld [vmem:[%s233 + $0x660] sm:$0xff]
        %v462 = vld [vmem:[%s233 + $0x668] sm:$0xff]
        %v463 = vld [vmem:[%s233 + $0x670] sm:$0xff]
        %v464 = vld [vmem:[%s233 + $0x678] sm:$0xff]
        %v465 = vld [vmem:[%s233 + $0x680] sm:$0xff]
        %v466 = vld [vmem:[%s233 + $0x688] sm:$0xff]
        %v467 = vld [vmem:[%s233 + $0x690] sm:$0xff]
        %v468 = vld [vmem:[%s233 + $0x698] sm:$0xff]
        %v469 = vld [vmem:[%s233 + $0x6a0] sm:$0xff]
        %v470 = vld [vmem:[%s233 + $0x6a8] sm:$0xff]
        %v471 = vld [vmem:[%s233 + $0x6b0] sm:$0xff]
        %v472 = vld [vmem:[%s233 + $0x6b8] sm:$0xff]
        %v473 = vld [vmem:[%s233 + $0x6c0] sm:$0xff]
        %v474 = vld [vmem:[%s233 + $0x6c8] sm:$0xff]
        %v475 = vld [vmem:[%s233 + $0x6d0] sm:$0xff]
        %v476 = vld [vmem:[%s233 + $0x6d8] sm:$0xff]
        %v477 = vld [vmem:[%s233 + $0x6e0] sm:$0xff]
        %v478 = vld [vmem:[%s233 + $0x6e8] sm:$0xff]
        %v479 = vld [vmem:[%s233 + $0x6f0] sm:$0xff]
        %v480 = vld [vmem:[%s233 + $0x6f8] sm:$0xff]
        %v481 = vld [vmem:[%s233 + $0x700] sm:$0xff]
        %v482 = vld [vmem:[%s233 + $0x708] sm:$0xff]
        %v483 = vld [vmem:[%s233 + $0x710] sm:$0xff]
        %v484 = vld [vmem:[%s233 + $0x718] sm:$0xff]
        %v485 = vld [vmem:[%s233 + $0x720] sm:$0xff]
        %v486 = vld [vmem:[%s233 + $0x728] sm:$0xff]
        %v487 = vld [vmem:[%s233 + $0x730] sm:$0xff]
        %v488 = vld [vmem:[%s233 + $0x738] sm:$0xff]
        %v489 = vld [vmem:[%s233 + $0x740] sm:$0xff]
        %v490 = vld [vmem:[%s233 + $0x748] sm:$0xff]
        %v491 = vld [vmem:[%s233 + $0x750] sm:$0xff]
        %v492 = vld [vmem:[%s233 + $0x758] sm:$0xff]
        %v493 = vld [vmem:[%s233 + $0x760] sm:$0xff]
        %v494 = vld [vmem:[%s233 + $0x768] sm:$0xff]
        %v495 = vld [vmem:[%s233 + $0x770] sm:$0xff]
        %v496 = vld [vmem:[%s233 + $0x778] sm:$0xff]
        %v497 = vld [vmem:[%s233 + $0x780] sm:$0xff]
        %v498 = vld [vmem:[%s233 + $0x788] sm:$0xff]
        %v499 = vld [vmem:[%s233 + $0x790] sm:$0xff]
        %v500 = vld [vmem:[%s233 + $0x798] sm:$0xff]
        %v501 = vld [vmem:[%s233 + $0x7a0] sm:$0xff]
        %v502 = vld [vmem:[%s233 + $0x7a8] sm:$0xff]
        %v503 = vld [vmem:[%s233 + $0x7b0] sm:$0xff]
        %v504 = vld [vmem:[%s233 + $0x7b8] sm:$0xff]
        %v505 = vld [vmem:[%s233 + $0x7c0] sm:$0xff]
        %v506 = vld [vmem:[%s233 + $0x7c8] sm:$0xff]
        %v507 = vld [vmem:[%s233 + $0x7d0] sm:$0xff]
        %v508 = vld [vmem:[%s233 + $0x7d8] sm:$0xff]
        %v509 = vld [vmem:[%s233 + $0x7e0] sm:$0xff]
        %v510 = vld [vmem:[%s233 + $0x7e8] sm:$0xff]
        %v511 = vld [vmem:[%s233 + $0x7f0] sm:$0xff]
        %v512 = vld [vmem:[%s233 + $0x7f8] sm:$0xff]
        %v513 = vld [vmem:[%s233 + $0x800] sm:$0xff]
        %v514 = vld [vmem:[%s233 + $0x808] sm:$0xff]
        %v515 = vld [vmem:[%s233 + $0x810] sm:$0xff]
        %v516 = vld [vmem:[%s233 + $0x818] sm:$0xff]
        %v517 = vld [vmem:[%s233 + $0x820] sm:$0xff]
        %v518 = vld [vmem:[%s233 + $0x828] sm:$0xff]
        %v519 = vld [vmem:[%s233 + $0x830] sm:$0xff]
        %v520 = vld [vmem:[%s233 + $0x838] sm:$0xff]
        %v521 = vld [vmem:[%s233 + $0x840] sm:$0xff]
        %v522 = vld [vmem:[%s233 + $0x848] sm:$0xff]
        %v523 = vld [vmem:[%s233 + $0x850] sm:$0xff]
        %v524 = vld [vmem:[%s233 + $0x858] sm:$0xff]
        %v525 = vld [vmem:[%s233 + $0x860] sm:$0xff]
        %v526 = vld [vmem:[%s233 + $0x868] sm:$0xff]
        %v527 = vld [vmem:[%s233 + $0x870] sm:$0xff]
        %v528 = vld [vmem:[%s233 + $0x878] sm:$0xff]
        %v529 = vld [vmem:[%s233 + $0x880] sm:$0xff]
        %v530 = vld [vmem:[%s233 + $0x888] sm:$0xff]
        %v531 = vld [vmem:[%s233 + $0x890] sm:$0xff]
        %v532 = vld [vmem:[%s233 + $0x898] sm:$0xff]
        %v533 = vld [vmem:[%s233 + $0x8a0] sm:$0xff]
        %v534 = vld [vmem:[%s233 + $0x8a8] sm:$0xff]
        %v535 = vld [vmem:[%s233 + $0x8b0] sm:$0xff]
        %v536 = vld [vmem:[%s233 + $0x8b8] sm:$0xff]
        %v537 = vld [vmem:[%s233 + $0x8c0] sm:$0xff]
        %v538 = vld [vmem:[%s233 + $0x8c8] sm:$0xff]
        %v539 = vld [vmem:[%s233 + $0x8d0] sm:$0xff]
        %v540 = vld [vmem:[%s233 + $0x8d8] sm:$0xff]
        %v541 = vld [vmem:[%s233 + $0x8e0] sm:$0xff]
        %v542 = vld [vmem:[%s233 + $0x8e8] sm:$0xff]
        %v543 = vld [vmem:[%s233 + $0x8f0] sm:$0xff]
        %v544 = vld [vmem:[%s233 + $0x8f8] sm:$0xff]
        %v545 = vld [vmem:[%s233 + $0x900] sm:$0xff]
        %v546 = vld [vmem:[%s233 + $0x908] sm:$0xff]
        %v547 = vld [vmem:[%s233 + $0x910] sm:$0xff]
        %v548 = vld [vmem:[%s233 + $0x918] sm:$0xff]
        %v549 = vld [vmem:[%s233 + $0x920] sm:$0xff]
        %v550 = vld [vmem:[%s233 + $0x928] sm:$0xff]
        %v551 = vld [vmem:[%s233 + $0x930] sm:$0xff]
        %v552 = vld [vmem:[%s233 + $0x938] sm:$0xff]
        %v553 = vld [vmem:[%s233 + $0x940] sm:$0xff]
        %v554 = vld [vmem:[%s233 + $0x948] sm:$0xff]
        %v555 = vld [vmem:[%s233 + $0x950] sm:$0xff]
        %v556 = vld [vmem:[%s233 + $0x958] sm:$0xff]
        %v557 = vld [vmem:[%s233 + $0x960] sm:$0xff]
        %v558 = vld [vmem:[%s233 + $0x968] sm:$0xff]
        %v559 = vld [vmem:[%s233 + $0x970] sm:$0xff]
        %v560 = vld [vmem:[%s233 + $0x978] sm:$0xff]
        %v561 = vld [vmem:[%s233 + $0x980] sm:$0xff]
        %v562 = vld [vmem:[%s233 + $0x988] sm:$0xff]
        %v563 = vld [vmem:[%s233 + $0x990] sm:$0xff]
        %v564 = vld [vmem:[%s233 + $0x998] sm:$0xff]
        %v565 = vld [vmem:[%s233 + $0x9a0] sm:$0xff]
        %v566 = vld [vmem:[%s233 + $0x9a8] sm:$0xff]
        %v567 = vld [vmem:[%s233 + $0x9b0] sm:$0xff]
        %v568 = vld [vmem:[%s233 + $0x9b8] sm:$0xff]
        %v569 = vld [vmem:[%s233 + $0x9c0] sm:$0xff]
        %v570 = vld [vmem:[%s233 + $0x9c8] sm:$0xff]
        %v571 = vld [vmem:[%s233 + $0x9d0] sm:$0xff]
        %v572 = vld [vmem:[%s233 + $0x9d8] sm:$0xff]
        %v573 = vld [vmem:[%s233 + $0x9e0] sm:$0xff]
        %v574 = vld [vmem:[%s233 + $0x9e8] sm:$0xff]
        %v575 = vld [vmem:[%s233 + $0x9f0] sm:$0xff]
        %v576 = vld [vmem:[%s233 + $0x9f8] sm:$0xff]
        %v577 = vld [vmem:[%s233 + $0xa00] sm:$0xff]
        %v578 = vld [vmem:[%s233 + $0xa08] sm:$0xff]
        %v579 = vld [vmem:[%s233 + $0xa10] sm:$0xff]
        %v580 = vld [vmem:[%s233 + $0xa18] sm:$0xff]
        %v581 = vld [vmem:[%s233 + $0xa20] sm:$0xff]
        %v582 = vld [vmem:[%s233 + $0xa28] sm:$0xff]
        %v583 = vld [vmem:[%s233 + $0xa30] sm:$0xff]
        %v584 = vld [vmem:[%s233 + $0xa38] sm:$0xff]
        %v585 = vld [vmem:[%s233 + $0xa40] sm:$0xff]
        %v586 = vld [vmem:[%s233 + $0xa48] sm:$0xff]
        %v587 = vld [vmem:[%s233 + $0xa50] sm:$0xff]
        %v588 = vld [vmem:[%s233 + $0xa58] sm:$0xff]
        %v589 = vld [vmem:[%s233 + $0xa60] sm:$0xff]
        %v590 = vld [vmem:[%s233 + $0xa68] sm:$0xff]
        %v591 = vld [vmem:[%s233 + $0xa70] sm:$0xff]
        %v592 = vld [vmem:[%s233 + $0xa78] sm:$0xff]
        %v593 = vld [vmem:[%s233 + $0xa80] sm:$0xff]
        %v594 = vld [vmem:[%s233 + $0xa88] sm:$0xff]
        %v595 = vld [vmem:[%s233 + $0xa90] sm:$0xff]
        %v596 = vld [vmem:[%s233 + $0xa98] sm:$0xff]
        %v597 = vld [vmem:[%s233 + $0xaa0] sm:$0xff]
        %v598 = vld [vmem:[%s233 + $0xaa8] sm:$0xff]
        %v599 = vld [vmem:[%s233 + $0xab0] sm:$0xff]
        %v600 = vld [vmem:[%s233 + $0xab8] sm:$0xff]
        %v601 = vld [vmem:[%s233 + $0xac0] sm:$0xff]
        %v602 = vld [vmem:[%s233 + $0xac8] sm:$0xff]
        %v603 = vld [vmem:[%s233 + $0xad0] sm:$0xff]
        %v604 = vld [vmem:[%s233 + $0xad8] sm:$0xff]
        %v605 = vld [vmem:[%s233 + $0xae0] sm:$0xff]
        %v606 = vld [vmem:[%s233 + $0xae8] sm:$0xff]
        %v607 = vld [vmem:[%s233 + $0xaf0] sm:$0xff]
        %v608 = vld [vmem:[%s233 + $0xaf8] sm:$0xff]
        %v609 = vld [vmem:[%s233 + $0xb00] sm:$0xff]
        %v610 = vld [vmem:[%s233 + $0xb08] sm:$0xff]
        %v611 = vld [vmem:[%s233 + $0xb10] sm:$0xff]
        %v612 = vld [vmem:[%s233 + $0xb18] sm:$0xff]
        %v613 = vld [vmem:[%s233 + $0xb20] sm:$0xff]
        %v614 = vld [vmem:[%s233 + $0xb28] sm:$0xff]
        %v615 = vld [vmem:[%s233 + $0xb30] sm:$0xff]
        %v616 = vld [vmem:[%s233 + $0xb38] sm:$0xff]
        %v617 = vld [vmem:[%s233 + $0xb40] sm:$0xff]
        %v618 = vld [vmem:[%s233 + $0xb48] sm:$0xff]
        %v619 = vld [vmem:[%s233 + $0xb50] sm:$0xff]
        %v620 = vld [vmem:[%s233 + $0xb58] sm:$0xff]
        %v621 = vld [vmem:[%s233 + $0xb60] sm:$0xff]
        %v622 = vld [vmem:[%s233 + $0xb68] sm:$0xff]
        %v623 = vld [vmem:[%s233 + $0xb70] sm:$0xff]
        %v624 = vld [vmem:[%s233 + $0xb78] sm:$0xff]
        %v625 = vld [vmem:[%s233 + $0xb80] sm:$0xff]
        %v626 = vld [vmem:[%s233 + $0xb88] sm:$0xff]
        %v627 = vld [vmem:[%s233 + $0xb90] sm:$0xff]
        %v628 = vld [vmem:[%s233 + $0xb98] sm:$0xff]
        %v629 = vld [vmem:[%s233 + $0xba0] sm:$0xff]
        %v630 = vld [vmem:[%s233 + $0xba8] sm:$0xff]
        %v631 = vld [vmem:[%s233 + $0xbb0] sm:$0xff]
        %v632 = vld [vmem:[%s233 + $0xbb8] sm:$0xff]
        %v633 = vld [vmem:[%s233 + $0xbc0] sm:$0xff]
        %v634 = vld [vmem:[%s233 + $0xbc8] sm:$0xff]
        %v635 = vld [vmem:[%s233 + $0xbd0] sm:$0xff]
        %v636 = vld [vmem:[%s233 + $0xbd8] sm:$0xff]
        %v637 = vld [vmem:[%s233 + $0xbe0] sm:$0xff]
        %v638 = vld [vmem:[%s233 + $0xbe8] sm:$0xff]
        %v639 = vld [vmem:[%s233 + $0xbf0] sm:$0xff]
        %v640 = vld [vmem:[%s233 + $0xbf8] sm:$0xff]
        %v641 = vld [vmem:[%s233 + $0xc00] sm:$0xff]
        %v642 = vld [vmem:[%s233 + $0xc08] sm:$0xff]
        %v643 = vld [vmem:[%s233 + $0xc10] sm:$0xff]
        %v644 = vld [vmem:[%s233 + $0xc18] sm:$0xff]
        %v645 = vld [vmem:[%s233 + $0xc20] sm:$0xff]
        %v646 = vld [vmem:[%s233 + $0xc28] sm:$0xff]
        %v647 = vld [vmem:[%s233 + $0xc30] sm:$0xff]
        %v648 = vld [vmem:[%s233 + $0xc38] sm:$0xff]
        %v649 = vld [vmem:[%s233 + $0xc40] sm:$0xff]
        %v650 = vld [vmem:[%s233 + $0xc48] sm:$0xff]
        %v651 = vld [vmem:[%s233 + $0xc50] sm:$0xff]
        %v652 = vld [vmem:[%s233 + $0xc58] sm:$0xff]
        %v653 = vld [vmem:[%s233 + $0xc60] sm:$0xff]
        %v654 = vld [vmem:[%s233 + $0xc68] sm:$0xff]
        %v655 = vld [vmem:[%s233 + $0xc70] sm:$0xff]
        %v656 = vld [vmem:[%s233 + $0xc78] sm:$0xff]
        %v657 = vld [vmem:[%s233 + $0xc80] sm:$0xff]
        %v658 = vld [vmem:[%s233 + $0xc88] sm:$0xff]
        %v659 = vld [vmem:[%s233 + $0xc90] sm:$0xff]
        %v660 = vld [vmem:[%s233 + $0xc98] sm:$0xff]
        %v661 = vld [vmem:[%s233 + $0xca0] sm:$0xff]
        %v662 = vld [vmem:[%s233 + $0xca8] sm:$0xff]
        %v663 = vld [vmem:[%s233 + $0xcb0] sm:$0xff]
        %v664 = vld [vmem:[%s233 + $0xcb8] sm:$0xff]
        %v665 = vld [vmem:[%s233 + $0xcc0] sm:$0xff]
        %v666 = vld [vmem:[%s233 + $0xcc8] sm:$0xff]
        %v667 = vld [vmem:[%s233 + $0xcd0] sm:$0xff]
        %v668 = vld [vmem:[%s233 + $0xcd8] sm:$0xff]
        %v669 = vld [vmem:[%s233 + $0xce0] sm:$0xff]
        %v670 = vld [vmem:[%s233 + $0xce8] sm:$0xff]
        %v671 = vld [vmem:[%s233 + $0xcf0] sm:$0xff]
        %v672 = vld [vmem:[%s233 + $0xcf8] sm:$0xff]
        %v673 = vld [vmem:[%s233 + $0xd00] sm:$0xff]
        %v674 = vld [vmem:[%s233 + $0xd08] sm:$0xff]
        %v675 = vld [vmem:[%s233 + $0xd10] sm:$0xff]
        %v676 = vld [vmem:[%s233 + $0xd18] sm:$0xff]
        %v677 = vld [vmem:[%s233 + $0xd20] sm:$0xff]
        %v678 = vld [vmem:[%s233 + $0xd28] sm:$0xff]
        %v679 = vld [vmem:[%s233 + $0xd30] sm:$0xff]
        %v680 = vld [vmem:[%s233 + $0xd38] sm:$0xff]
        %v681 = vld [vmem:[%s233 + $0xd40] sm:$0xff]
        %v682 = vld [vmem:[%s233 + $0xd48] sm:$0xff]
        %v683 = vld [vmem:[%s233 + $0xd50] sm:$0xff]
        %v684 = vld [vmem:[%s233 + $0xd58] sm:$0xff]
        %v685 = vld [vmem:[%s233 + $0xd60] sm:$0xff]
        %v686 = vld [vmem:[%s233 + $0xd68] sm:$0xff]
        %v687 = vld [vmem:[%s233 + $0xd70] sm:$0xff]
        %v688 = vld [vmem:[%s233 + $0xd78] sm:$0xff]
        %v689 = vld [vmem:[%s233 + $0xd80] sm:$0xff]
        %v690 = vld [vmem:[%s233 + $0xd88] sm:$0xff]
        %v691 = vld [vmem:[%s233 + $0xd90] sm:$0xff]
        %v692 = vld [vmem:[%s233 + $0xd98] sm:$0xff]
        %v693 = vld [vmem:[%s233 + $0xda0] sm:$0xff]
        %v694 = vld [vmem:[%s233 + $0xda8] sm:$0xff]
        %v695 = vld [vmem:[%s233 + $0xdb0] sm:$0xff]
        %v696 = vld [vmem:[%s233 + $0xdb8] sm:$0xff]
        %v697 = vld [vmem:[%s233 + $0xdc0] sm:$0xff]
        %v698 = vld [vmem:[%s233 + $0xdc8] sm:$0xff]
        %v699 = vld [vmem:[%s233 + $0xdd0] sm:$0xff]
        %v700 = vld [vmem:[%s233 + $0xdd8] sm:$0xff]
        %v701 = vld [vmem:[%s233 + $0xde0] sm:$0xff]
        %v702 = vld [vmem:[%s233 + $0xde8] sm:$0xff]
        %v703 = vld [vmem:[%s233 + $0xdf0] sm:$0xff]
        %v704 = vld [vmem:[%s233 + $0xdf8] sm:$0xff]
        %v705 = vld [vmem:[%s233 + $0xe00] sm:$0xff]
        %v706 = vld [vmem:[%s233 + $0xe08] sm:$0xff]
        %v707 = vld [vmem:[%s233 + $0xe10] sm:$0xff]
        %v708 = vld [vmem:[%s233 + $0xe18] sm:$0xff]
        %v709 = vld [vmem:[%s233 + $0xe20] sm:$0xff]
        %v710 = vld [vmem:[%s233 + $0xe28] sm:$0xff]
        %v711 = vld [vmem:[%s233 + $0xe30] sm:$0xff]
        %v712 = vld [vmem:[%s233 + $0xe38] sm:$0xff]
        %v713 = vld [vmem:[%s233 + $0xe40] sm:$0xff]
        %v714 = vld [vmem:[%s233 + $0xe48] sm:$0xff]
        %v715 = vld [vmem:[%s233 + $0xe50] sm:$0xff]
        %v716 = vld [vmem:[%s233 + $0xe58] sm:$0xff]
        %v717 = vld [vmem:[%s233 + $0xe60] sm:$0xff]
        %v718 = vld [vmem:[%s233 + $0xe68] sm:$0xff]
        %v719 = vld [vmem:[%s233 + $0xe70] sm:$0xff]
        %v720 = vld [vmem:[%s233 + $0xe78] sm:$0xff]
        %v721 = vld [vmem:[%s233 + $0xe80] sm:$0xff]
        %v722 = vld [vmem:[%s233 + $0xe88] sm:$0xff]
        %v723 = vld [vmem:[%s233 + $0xe90] sm:$0xff]
        %v724 = vld [vmem:[%s233 + $0xe98] sm:$0xff]
        %v725 = vld [vmem:[%s233 + $0xea0] sm:$0xff]
        %v726 = vld [vmem:[%s233 + $0xea8] sm:$0xff]
        %v727 = vld [vmem:[%s233 + $0xeb0] sm:$0xff]
        %v728 = vld [vmem:[%s233 + $0xeb8] sm:$0xff]
        %v729 = vld [vmem:[%s233 + $0xec0] sm:$0xff]
        %v730 = vld [vmem:[%s233 + $0xec8] sm:$0xff]
        %v731 = vld [vmem:[%s233 + $0xed0] sm:$0xff]
        %v732 = vld [vmem:[%s233 + $0xed8] sm:$0xff]
        %v733 = vld [vmem:[%s233 + $0xee0] sm:$0xff]
        %v734 = vld [vmem:[%s233 + $0xee8] sm:$0xff]
        %v735 = vld [vmem:[%s233 + $0xef0] sm:$0xff]
        %v736 = vld [vmem:[%s233 + $0xef8] sm:$0xff]
        %v737 = vld [vmem:[%s233 + $0xf00] sm:$0xff]
        %v738 = vld [vmem:[%s233 + $0xf08] sm:$0xff]
        %v739 = vld [vmem:[%s233 + $0xf10] sm:$0xff]
        %v740 = vld [vmem:[%s233 + $0xf18] sm:$0xff]
        %v741 = vld [vmem:[%s233 + $0xf20] sm:$0xff]
        %v742 = vld [vmem:[%s233 + $0xf28] sm:$0xff]
        %v743 = vld [vmem:[%s233 + $0xf30] sm:$0xff]
        %v744 = vld [vmem:[%s233 + $0xf38] sm:$0xff]
        %v745 = vld [vmem:[%s233 + $0xf40] sm:$0xff]
        %v746 = vld [vmem:[%s233 + $0xf48] sm:$0xff]
        %v747 = vld [vmem:[%s233 + $0xf50] sm:$0xff]
        %v748 = vld [vmem:[%s233 + $0xf58] sm:$0xff]
        %v749 = vld [vmem:[%s233 + $0xf60] sm:$0xff]
        %v750 = vld [vmem:[%s233 + $0xf68] sm:$0xff]
        %v751 = vld [vmem:[%s233 + $0xf70] sm:$0xff]
        %v752 = vld [vmem:[%s233 + $0xf78] sm:$0xff]
        %v753 = vld [vmem:[%s233 + $0xf80] sm:$0xff]
        %v754 = vld [vmem:[%s233 + $0xf88] sm:$0xff]
        %v755 = vld [vmem:[%s233 + $0xf90] sm:$0xff]
        %v756 = vld [vmem:[%s233 + $0xf98] sm:$0xff]
        %v757 = vld [vmem:[%s233 + $0xfa0] sm:$0xff]
        %v758 = vld [vmem:[%s233 + $0xfa8] sm:$0xff]
        %v759 = vld [vmem:[%s233 + $0xfb0] sm:$0xff]
        %v760 = vld [vmem:[%s233 + $0xfb8] sm:$0xff]
        %v761 = vld [vmem:[%s233 + $0xfc0] sm:$0xff]
        %v762 = vld [vmem:[%s233 + $0xfc8] sm:$0xff]
        %v763 = vld [vmem:[%s233 + $0xfd0] sm:$0xff]
        %v764 = vld [vmem:[%s233 + $0xfd8] sm:$0xff]
        %v765 = vld [vmem:[%s233 + $0xfe0] sm:$0xff]
        %v766 = vld [vmem:[%s233 + $0xfe8] sm:$0xff]
        %v767 = vld [vmem:[%s233 + $0xff0] sm:$0xff]
        %v768 = vld [vmem:[%s233 + $0xff8] sm:$0xff]
        %v769 = vld [vmem:[%s233 + $0x1000] sm:$0xff]
        %v770 = vld [vmem:[%s233 + $0x1008] sm:$0xff]
        %v771 = vld [vmem:[%s233 + $0x1010] sm:$0xff]
        %v772 = vld [vmem:[%s233 + $0x1018] sm:$0xff]
        %v773 = vld [vmem:[%s233 + $0x1020] sm:$0xff]
        %v774 = vld [vmem:[%s233 + $0x1028] sm:$0xff]
        %v775 = vld [vmem:[%s233 + $0x1030] sm:$0xff]
        %v776 = vld [vmem:[%s233 + $0x1038] sm:$0xff]
        %v777 = vld [vmem:[%s233 + $0x1040] sm:$0xff]
        %v778 = vld [vmem:[%s233 + $0x1048] sm:$0xff]
        %v779 = vld [vmem:[%s233 + $0x1050] sm:$0xff]
        %v780 = vld [vmem:[%s233 + $0x1058] sm:$0xff]
        %v781 = vld [vmem:[%s233 + $0x1060] sm:$0xff]
        %v782 = vld [vmem:[%s233 + $0x1068] sm:$0xff]
        %v783 = vld [vmem:[%s233 + $0x1070] sm:$0xff]
        %v784 = vld [vmem:[%s233 + $0x1078] sm:$0xff]
        %v785 = vld [vmem:[%s233 + $0x1080] sm:$0xff]
        %v786 = vld [vmem:[%s233 + $0x1088] sm:$0xff]
        %v787 = vld [vmem:[%s233 + $0x1090] sm:$0xff]
        %v788 = vld [vmem:[%s233 + $0x1098] sm:$0xff]
        %v789 = vld [vmem:[%s233 + $0x10a0] sm:$0xff]
        %v790 = vld [vmem:[%s233 + $0x10a8] sm:$0xff]
        %v791 = vld [vmem:[%s233 + $0x10b0] sm:$0xff]
        %v792 = vld [vmem:[%s233 + $0x10b8] sm:$0xff]
        %v793 = vld [vmem:[%s233 + $0x10c0] sm:$0xff]
        %v794 = vld [vmem:[%s233 + $0x10c8] sm:$0xff]
        %v795 = vld [vmem:[%s233 + $0x10d0] sm:$0xff]
        %v796 = vld [vmem:[%s233 + $0x10d8] sm:$0xff]
        %v797 = vld [vmem:[%s233 + $0x10e0] sm:$0xff]
        %v798 = vld [vmem:[%s233 + $0x10e8] sm:$0xff]
        %v799 = vld [vmem:[%s233 + $0x10f0] sm:$0xff]
        %v800 = vld [vmem:[%s233 + $0x10f8] sm:$0xff]
        %v801 = vld [vmem:[%s233 + $0x1100] sm:$0xff]
        %v802 = vld [vmem:[%s233 + $0x1108] sm:$0xff]
        %v803 = vld [vmem:[%s233 + $0x1110] sm:$0xff]
        %v804 = vld [vmem:[%s233 + $0x1118] sm:$0xff]
        %v805 = vld [vmem:[%s233 + $0x1120] sm:$0xff]
        %v806 = vld [vmem:[%s233 + $0x1128] sm:$0xff]
        %v807 = vld [vmem:[%s233 + $0x1130] sm:$0xff]
        %v808 = vld [vmem:[%s233 + $0x1138] sm:$0xff]
        %v809 = vld [vmem:[%s233 + $0x1140] sm:$0xff]
        %v810 = vld [vmem:[%s233 + $0x1148] sm:$0xff]
        %v811 = vld [vmem:[%s233 + $0x1150] sm:$0xff]
        %v812 = vld [vmem:[%s233 + $0x1158] sm:$0xff]
        %v813 = vld [vmem:[%s233 + $0x1160] sm:$0xff]
        %v814 = vld [vmem:[%s233 + $0x1168] sm:$0xff]
        %v815 = vld [vmem:[%s233 + $0x1170] sm:$0xff]
        %v816 = vld [vmem:[%s233 + $0x1178] sm:$0xff]
        %v817 = vld [vmem:[%s233 + $0x1180] sm:$0xff]
        %v818 = vld [vmem:[%s233 + $0x1188] sm:$0xff]
        %v819 = vld [vmem:[%s233 + $0x1190] sm:$0xff]
        %v820 = vld [vmem:[%s233 + $0x1198] sm:$0xff]
        %v821 = vld [vmem:[%s233 + $0x11a0] sm:$0xff]
        %v822 = vld [vmem:[%s233 + $0x11a8] sm:$0xff]
        %v823 = vld [vmem:[%s233 + $0x11b0] sm:$0xff]
        %v824 = vld [vmem:[%s233 + $0x11b8] sm:$0xff]
        %v825 = vld [vmem:[%s233 + $0x11c0] sm:$0xff]
        %v826 = vld [vmem:[%s233 + $0x11c8] sm:$0xff]
        %v827 = vld [vmem:[%s233 + $0x11d0] sm:$0xff]
        %v828 = vld [vmem:[%s233 + $0x11d8] sm:$0xff]
        %v829 = vld [vmem:[%s233 + $0x11e0] sm:$0xff]
        %v830 = vld [vmem:[%s233 + $0x11e8] sm:$0xff]
        %v831 = vld [vmem:[%s233 + $0x11f0] sm:$0xff]
        %v832 = vld [vmem:[%s233 + $0x11f8] sm:$0xff]
        %v833 = vld [vmem:[%s233 + $0x1200] sm:$0xff]
        %v834 = vld [vmem:[%s233 + $0x1208] sm:$0xff]
        %v835 = vld [vmem:[%s233 + $0x1210] sm:$0xff]
        %v836 = vld [vmem:[%s233 + $0x1218] sm:$0xff]
        %v837 = vld [vmem:[%s233 + $0x1220] sm:$0xff]
        %v838 = vld [vmem:[%s233 + $0x1228] sm:$0xff]
        %v839 = vld [vmem:[%s233 + $0x1230] sm:$0xff]
        %v840 = vld [vmem:[%s233 + $0x1238] sm:$0xff]
        %v841 = vld [vmem:[%s233 + $0x1240] sm:$0xff]
        %v842 = vld [vmem:[%s233 + $0x1248] sm:$0xff]
        %v843 = vld [vmem:[%s233 + $0x1250] sm:$0xff]
        %v844 = vld [vmem:[%s233 + $0x1258] sm:$0xff]
        %v845 = vld [vmem:[%s233 + $0x1260] sm:$0xff]
        %v846 = vld [vmem:[%s233 + $0x1268] sm:$0xff]
        %v847 = vld [vmem:[%s233 + $0x1270] sm:$0xff]
        %v848 = vld [vmem:[%s233 + $0x1278] sm:$0xff]
        %v849 = vld [vmem:[%s233 + $0x1280] sm:$0xff]
        %v850 = vld [vmem:[%s233 + $0x1288] sm:$0xff]
        %v851 = vld [vmem:[%s233 + $0x1290] sm:$0xff]
        %v852 = vld [vmem:[%s233 + $0x1298] sm:$0xff]
        %v853 = vld [vmem:[%s233 + $0x12a0] sm:$0xff]
        %v854 = vld [vmem:[%s233 + $0x12a8] sm:$0xff]
        %v855 = vld [vmem:[%s233 + $0x12b0] sm:$0xff]
        %v856 = vld [vmem:[%s233 + $0x12b8] sm:$0xff]
        %v857 = vld [vmem:[%s233 + $0x12c0] sm:$0xff]
        %v858 = vld [vmem:[%s233 + $0x12c8] sm:$0xff]
        %v859 = vld [vmem:[%s233 + $0x12d0] sm:$0xff]
        %v860 = vld [vmem:[%s233 + $0x12d8] sm:$0xff]
        %v861 = vld [vmem:[%s233 + $0x12e0] sm:$0xff]
        %v862 = vld [vmem:[%s233 + $0x12e8] sm:$0xff]
        %v863 = vld [vmem:[%s233 + $0x12f0] sm:$0xff]
        %v864 = vld [vmem:[%s233 + $0x12f8] sm:$0xff]
        %v865 = vld [vmem:[%s233 + $0x1300] sm:$0xff]
        %v866 = vld [vmem:[%s233 + $0x1308] sm:$0xff]
        %v867 = vld [vmem:[%s233 + $0x1310] sm:$0xff]
        %v868 = vld [vmem:[%s233 + $0x1318] sm:$0xff]
        %v869 = vld [vmem:[%s233 + $0x1320] sm:$0xff]
        %v870 = vld [vmem:[%s233 + $0x1328] sm:$0xff]
        %v871 = vld [vmem:[%s233 + $0x1330] sm:$0xff]
        %v872 = vld [vmem:[%s233 + $0x1338] sm:$0xff]
        %v873 = vld [vmem:[%s233 + $0x1340] sm:$0xff]
        %v874 = vld [vmem:[%s233 + $0x1348] sm:$0xff]
        %v875 = vld [vmem:[%s233 + $0x1350] sm:$0xff]
        %v876 = vld [vmem:[%s233 + $0x1358] sm:$0xff]
        %v877 = vld [vmem:[%s233 + $0x1360] sm:$0xff]
        %v878 = vld [vmem:[%s233 + $0x1368] sm:$0xff]
        %v879 = vld [vmem:[%s233 + $0x1370] sm:$0xff]
        %v880 = vld [vmem:[%s233 + $0x1378] sm:$0xff]
        %v881 = vld [vmem:[%s233 + $0x1380] sm:$0xff]
        %v882 = vld [vmem:[%s233 + $0x1388] sm:$0xff]
        %v883 = vld [vmem:[%s233 + $0x1390] sm:$0xff]
        %v884 = vld [vmem:[%s233 + $0x1398] sm:$0xff]
        %v885 = vld [vmem:[%s233 + $0x13a0] sm:$0xff]
        %v886 = vld [vmem:[%s233 + $0x13a8] sm:$0xff]
        %v887 = vld [vmem:[%s233 + $0x13b0] sm:$0xff]
        %v888 = vld [vmem:[%s233 + $0x13b8] sm:$0xff]
        %v889 = vld [vmem:[%s233 + $0x13c0] sm:$0xff]
        %v890 = vld [vmem:[%s233 + $0x13c8] sm:$0xff]
        %v891 = vld [vmem:[%s233 + $0x13d0] sm:$0xff]
        %v892 = vld [vmem:[%s233 + $0x13d8] sm:$0xff]
        %v893 = vld [vmem:[%s233 + $0x13e0] sm:$0xff]
        %v894 = vld [vmem:[%s233 + $0x13e8] sm:$0xff]
        %v895 = vld [vmem:[%s233 + $0x13f0] sm:$0xff]
        %v896 = vld [vmem:[%s233 + $0x13f8] sm:$0xff]
        %v897 = vld [vmem:[%s233 + $0x1400] sm:$0xff]
        %v898 = vld [vmem:[%s233 + $0x1408] sm:$0xff]
        %v899 = vld [vmem:[%s233 + $0x1410] sm:$0xff]
        %v900 = vld [vmem:[%s233 + $0x1418] sm:$0xff]
        %v901 = vld [vmem:[%s233 + $0x1420] sm:$0xff]
        %v902 = vld [vmem:[%s233 + $0x1428] sm:$0xff]
        %v903 = vld [vmem:[%s233 + $0x1430] sm:$0xff]
        %v904 = vld [vmem:[%s233 + $0x1438] sm:$0xff]
        %v905 = vld [vmem:[%s233 + $0x1440] sm:$0xff]
        %v906 = vld [vmem:[%s233 + $0x1448] sm:$0xff]
        %v907 = vld [vmem:[%s233 + $0x1450] sm:$0xff]
        %v908 = vld [vmem:[%s233 + $0x1458] sm:$0xff]
        %v909 = vld [vmem:[%s233 + $0x1460] sm:$0xff]
        %v910 = vld [vmem:[%s233 + $0x1468] sm:$0xff]
        %v911 = vld [vmem:[%s233 + $0x1470] sm:$0xff]
        %v912 = vld [vmem:[%s233 + $0x1478] sm:$0xff]
        %v913 = vld [vmem:[%s233 + $0x1480] sm:$0xff]
        %v914 = vld [vmem:[%s233 + $0x1488] sm:$0xff]
        %v915 = vld [vmem:[%s233 + $0x1490] sm:$0xff]
        %v916 = vld [vmem:[%s233 + $0x1498] sm:$0xff]
        %v917 = vld [vmem:[%s233 + $0x14a0] sm:$0xff]
        %v918 = vld [vmem:[%s233 + $0x14a8] sm:$0xff]
        %v919 = vld [vmem:[%s233 + $0x14b0] sm:$0xff]
        %v920 = vld [vmem:[%s233 + $0x14b8] sm:$0xff]
        %v921 = vld [vmem:[%s233 + $0x14c0] sm:$0xff]
        %v922 = vld [vmem:[%s233 + $0x14c8] sm:$0xff]
        %v923 = vld [vmem:[%s233 + $0x14d0] sm:$0xff]
        %v924 = vld [vmem:[%s233 + $0x14d8] sm:$0xff]
        %v925 = vld [vmem:[%s233 + $0x14e0] sm:$0xff]
        %v926 = vld [vmem:[%s233 + $0x14e8] sm:$0xff]
        %v927 = vld [vmem:[%s233 + $0x14f0] sm:$0xff]
        %v928 = vld [vmem:[%s233 + $0x14f8] sm:$0xff]
        %v929 = vld [vmem:[%s233 + $0x1500] sm:$0xff]
        %v930 = vld [vmem:[%s233 + $0x1508] sm:$0xff]
        %v931 = vld [vmem:[%s233 + $0x1510] sm:$0xff]
        %v932 = vld [vmem:[%s233 + $0x1518] sm:$0xff]
        %v933 = vld [vmem:[%s233 + $0x1520] sm:$0xff]
        %v934 = vld [vmem:[%s233 + $0x1528] sm:$0xff]
        %v935 = vld [vmem:[%s233 + $0x1530] sm:$0xff]
        %v936 = vld [vmem:[%s233 + $0x1538] sm:$0xff]
        %v937 = vld [vmem:[%s233 + $0x1540] sm:$0xff]
        %v938 = vld [vmem:[%s233 + $0x1548] sm:$0xff]
        %v939 = vld [vmem:[%s233 + $0x1550] sm:$0xff]
        %v940 = vld [vmem:[%s233 + $0x1558] sm:$0xff]
        %v941 = vld [vmem:[%s233 + $0x1560] sm:$0xff]
        %v942 = vld [vmem:[%s233 + $0x1568] sm:$0xff]
        %v943 = vld [vmem:[%s233 + $0x1570] sm:$0xff]
        %v944 = vld [vmem:[%s233 + $0x1578] sm:$0xff]
        %v945 = vld [vmem:[%s233 + $0x1580] sm:$0xff]
        %v946 = vld [vmem:[%s233 + $0x1588] sm:$0xff]
        %v947 = vld [vmem:[%s233 + $0x1590] sm:$0xff]
        %v948 = vld [vmem:[%s233 + $0x1598] sm:$0xff]
        %v949 = vld [vmem:[%s233 + $0x15a0] sm:$0xff]
        %v950 = vld [vmem:[%s233 + $0x15a8] sm:$0xff]
        %v951 = vld [vmem:[%s233 + $0x15b0] sm:$0xff]
        %v952 = vld [vmem:[%s233 + $0x15b8] sm:$0xff]
        %v953 = vld [vmem:[%s233 + $0x15c0] sm:$0xff]
        %v954 = vld [vmem:[%s233 + $0x15c8] sm:$0xff]
        %v955 = vld [vmem:[%s233 + $0x15d0] sm:$0xff]
        %v956 = vld [vmem:[%s233 + $0x15d8] sm:$0xff]
        %v957 = vld [vmem:[%s233 + $0x15e0] sm:$0xff]
        %v958 = vld [vmem:[%s233 + $0x15e8] sm:$0xff]
        %v959 = vld [vmem:[%s233 + $0x15f0] sm:$0xff]
        %v960 = vld [vmem:[%s233 + $0x15f8] sm:$0xff]
        %v961 = vld [vmem:[%s233 + $0x1600] sm:$0xff]
        %v962 = vld [vmem:[%s233 + $0x1608] sm:$0xff]
        %v963 = vld [vmem:[%s233 + $0x1610] sm:$0xff]
        %v964 = vld [vmem:[%s233 + $0x1618] sm:$0xff]
        %v965 = vld [vmem:[%s233 + $0x1620] sm:$0xff]
        %v966 = vld [vmem:[%s233 + $0x1628] sm:$0xff]
        %v967 = vld [vmem:[%s233 + $0x1630] sm:$0xff]
        %v968 = vld [vmem:[%s233 + $0x1638] sm:$0xff]
        %v969 = vld [vmem:[%s233 + $0x1640] sm:$0xff]
        %v970 = vld [vmem:[%s233 + $0x1648] sm:$0xff]
        %v971 = vld [vmem:[%s233 + $0x1650] sm:$0xff]
        %v972 = vld [vmem:[%s233 + $0x1658] sm:$0xff]
        %v973 = vld [vmem:[%s233 + $0x1660] sm:$0xff]
        %v974 = vld [vmem:[%s233 + $0x1668] sm:$0xff]
        %v975 = vld [vmem:[%s233 + $0x1670] sm:$0xff]
        %v976 = vld [vmem:[%s233 + $0x1678] sm:$0xff]
        %v977 = vld [vmem:[%s233 + $0x1680] sm:$0xff]
        %v978 = vld [vmem:[%s233 + $0x1688] sm:$0xff]
        %v979 = vld [vmem:[%s233 + $0x1690] sm:$0xff]
        %v980 = vld [vmem:[%s233 + $0x1698] sm:$0xff]
        %v981 = vld [vmem:[%s233 + $0x16a0] sm:$0xff]
        %v982 = vld [vmem:[%s233 + $0x16a8] sm:$0xff]
        %v983 = vld [vmem:[%s233 + $0x16b0] sm:$0xff]
        %v984 = vld [vmem:[%s233 + $0x16b8] sm:$0xff]
        %v985 = vld [vmem:[%s233 + $0x16c0] sm:$0xff]
        %v986 = vld [vmem:[%s233 + $0x16c8] sm:$0xff]
        %v987 = vld [vmem:[%s233 + $0x16d0] sm:$0xff]
        %v988 = vld [vmem:[%s233 + $0x16d8] sm:$0xff]
        %v989 = vld [vmem:[%s233 + $0x16e0] sm:$0xff]
        %v990 = vld [vmem:[%s233 + $0x16e8] sm:$0xff]
        %v991 = vld [vmem:[%s233 + $0x16f0] sm:$0xff]
        %v992 = vld [vmem:[%s233 + $0x16f8] sm:$0xff]
        %v993 = vld [vmem:[%s233 + $0x1700] sm:$0xff]
        %v994 = vld [vmem:[%s233 + $0x1708] sm:$0xff]
        %v995 = vld [vmem:[%s233 + $0x1710] sm:$0xff]
        %v996 = vld [vmem:[%s233 + $0x1718] sm:$0xff]
        %v997 = vld [vmem:[%s233 + $0x1720] sm:$0xff]
        %v998 = vld [vmem:[%s233 + $0x1728] sm:$0xff]
        %v999 = vld [vmem:[%s233 + $0x1730] sm:$0xff]
        %v1000 = vld [vmem:[%s233 + $0x1738] sm:$0xff]
        %v1001 = vld [vmem:[%s233 + $0x1740] sm:$0xff]
        %v1002 = vld [vmem:[%s233 + $0x1748] sm:$0xff]
        %v1003 = vld [vmem:[%s233 + $0x1750] sm:$0xff]
        %v1004 = vld [vmem:[%s233 + $0x1758] sm:$0xff]
        %v1005 = vld [vmem:[%s233 + $0x1760] sm:$0xff]
        %v1006 = vld [vmem:[%s233 + $0x1768] sm:$0xff]
        %v1007 = vld [vmem:[%s233 + $0x1770] sm:$0xff]
        %v1008 = vld [vmem:[%s233 + $0x1778] sm:$0xff]
        %v1009 = vld [vmem:[%s233 + $0x1780] sm:$0xff]
        %v1010 = vld [vmem:[%s233 + $0x1788] sm:$0xff]
        %v1011 = vld [vmem:[%s233 + $0x1790] sm:$0xff]
        %v1012 = vld [vmem:[%s233 + $0x1798] sm:$0xff]
        %v1013 = vld [vmem:[%s233 + $0x17a0] sm:$0xff]
        %v1014 = vld [vmem:[%s233 + $0x17a8] sm:$0xff]
        %v1015 = vld [vmem:[%s233 + $0x17b0] sm:$0xff]
        %v1016 = vld [vmem:[%s233 + $0x17b8] sm:$0xff]
        %v1017 = vld [vmem:[%s233 + $0x17c0] sm:$0xff]
        %v1018 = vld [vmem:[%s233 + $0x17c8] sm:$0xff]
        %v1019 = vld [vmem:[%s233 + $0x17d0] sm:$0xff]
        %v1020 = vld [vmem:[%s233 + $0x17d8] sm:$0xff]
        %v1021 = vld [vmem:[%s233 + $0x17e0] sm:$0xff]
        %v1022 = vld [vmem:[%s233 + $0x17e8] sm:$0xff]
        %v1023 = vld [vmem:[%s233 + $0x17f0] sm:$0xff]
        %v1024 = vld [vmem:[%s233 + $0x17f8] sm:$0xff]
        %v1025 = vld [vmem:[%s233 + $0x1800] sm:$0xff]
        %v1026 = vld [vmem:[%s233 + $0x1808] sm:$0xff]
        %v1027 = vld [vmem:[%s233 + $0x1810] sm:$0xff]
        %v1028 = vld [vmem:[%s233 + $0x1818] sm:$0xff]
        %v1029 = vld [vmem:[%s233 + $0x1820] sm:$0xff]
        %v1030 = vld [vmem:[%s233 + $0x1828] sm:$0xff]
        %v1031 = vld [vmem:[%s233 + $0x1830] sm:$0xff]
        %v1032 = vld [vmem:[%s233 + $0x1838] sm:$0xff]
        %v1033 = vld [vmem:[%s233 + $0x1840] sm:$0xff]
        %v1034 = vld [vmem:[%s233 + $0x1848] sm:$0xff]
        %v1035 = vld [vmem:[%s233 + $0x1850] sm:$0xff]
        %v1036 = vld [vmem:[%s233 + $0x1858] sm:$0xff]
        %v1037 = vld [vmem:[%s233 + $0x1860] sm:$0xff]
        %v1038 = vld [vmem:[%s233 + $0x1868] sm:$0xff]
        %v1039 = vld [vmem:[%s233 + $0x1870] sm:$0xff]
        %v1040 = vld [vmem:[%s233 + $0x1878] sm:$0xff]
        %v1041 = vld [vmem:[%s233 + $0x1880] sm:$0xff]
        %v1042 = vld [vmem:[%s233 + $0x1888] sm:$0xff]
        %v1043 = vld [vmem:[%s233 + $0x1890] sm:$0xff]
        %v1044 = vld [vmem:[%s233 + $0x1898] sm:$0xff]
        %v1045 = vld [vmem:[%s233 + $0x18a0] sm:$0xff]
        %v1046 = vld [vmem:[%s233 + $0x18a8] sm:$0xff]
        %v1047 = vld [vmem:[%s233 + $0x18b0] sm:$0xff]
        %v1048 = vld [vmem:[%s233 + $0x18b8] sm:$0xff]
        %v1049 = vld [vmem:[%s233 + $0x18c0] sm:$0xff]
        %v1050 = vld [vmem:[%s233 + $0x18c8] sm:$0xff]
        %v1051 = vld [vmem:[%s233 + $0x18d0] sm:$0xff]
        %v1052 = vld [vmem:[%s233 + $0x18d8] sm:$0xff]
        %v1053 = vld [vmem:[%s233 + $0x18e0] sm:$0xff]
        %v1054 = vld [vmem:[%s233 + $0x18e8] sm:$0xff]
        %v1055 = vld [vmem:[%s233 + $0x18f0] sm:$0xff]
        %v1056 = vld [vmem:[%s233 + $0x18f8] sm:$0xff]
        %v1057 = vld [vmem:[%s233 + $0x1900] sm:$0xff]
        %v1058 = vld [vmem:[%s233 + $0x1908] sm:$0xff]
        %v1059 = vld [vmem:[%s233 + $0x1910] sm:$0xff]
        %v1060 = vld [vmem:[%s233 + $0x1918] sm:$0xff]
        %v1061 = vld [vmem:[%s233 + $0x1920] sm:$0xff]
        %v1062 = vld [vmem:[%s233 + $0x1928] sm:$0xff]
        %v1063 = vld [vmem:[%s233 + $0x1930] sm:$0xff]
        %v1064 = vld [vmem:[%s233 + $0x1938] sm:$0xff]
        %v1065 = vld [vmem:[%s233 + $0x1940] sm:$0xff]
        %v1066 = vld [vmem:[%s233 + $0x1948] sm:$0xff]
        %v1067 = vld [vmem:[%s233 + $0x1950] sm:$0xff]
        %v1068 = vld [vmem:[%s233 + $0x1958] sm:$0xff]
        %v1069 = vld [vmem:[%s233 + $0x1960] sm:$0xff]
        %v1070 = vld [vmem:[%s233 + $0x1968] sm:$0xff]
        %v1071 = vld [vmem:[%s233 + $0x1970] sm:$0xff]
        %v1072 = vld [vmem:[%s233 + $0x1978] sm:$0xff]
        %v1073 = vld [vmem:[%s233 + $0x1980] sm:$0xff]
        %v1074 = vld [vmem:[%s233 + $0x1988] sm:$0xff]
        %v1075 = vld [vmem:[%s233 + $0x1990] sm:$0xff]
        %v1076 = vld [vmem:[%s233 + $0x1998] sm:$0xff]
        %v1077 = vld [vmem:[%s233 + $0x19a0] sm:$0xff]
        %v1078 = vld [vmem:[%s233 + $0x19a8] sm:$0xff]
        %v1079 = vld [vmem:[%s233 + $0x19b0] sm:$0xff]
        %v1080 = vld [vmem:[%s233 + $0x19b8] sm:$0xff]
        %v1081 = vld [vmem:[%s233 + $0x19c0] sm:$0xff]
        %v1082 = vld [vmem:[%s233 + $0x19c8] sm:$0xff]
        %v1083 = vld [vmem:[%s233 + $0x19d0] sm:$0xff]
        %v1084 = vld [vmem:[%s233 + $0x19d8] sm:$0xff]
        %v1085 = vld [vmem:[%s233 + $0x19e0] sm:$0xff]
        %v1086 = vld [vmem:[%s233 + $0x19e8] sm:$0xff]
        %v1087 = vld [vmem:[%s233 + $0x19f0] sm:$0xff]
        %v1088 = vld [vmem:[%s233 + $0x19f8] sm:$0xff]
        %v1089 = vld [vmem:[%s233 + $0x1a00] sm:$0xff]
        %v1090 = vld [vmem:[%s233 + $0x1a08] sm:$0xff]
        %v1091 = vld [vmem:[%s233 + $0x1a10] sm:$0xff]
        %v1092 = vld [vmem:[%s233 + $0x1a18] sm:$0xff]
        %v1093 = vld [vmem:[%s233 + $0x1a20] sm:$0xff]
        %v1094 = vld [vmem:[%s233 + $0x1a28] sm:$0xff]
        %v1095 = vld [vmem:[%s233 + $0x1a30] sm:$0xff]
        %v1096 = vld [vmem:[%s233 + $0x1a38] sm:$0xff]
        %v1097 = vld [vmem:[%s233 + $0x1a40] sm:$0xff]
        %v1098 = vld [vmem:[%s233 + $0x1a48] sm:$0xff]
        %v1099 = vld [vmem:[%s233 + $0x1a50] sm:$0xff]
        %v1100 = vld [vmem:[%s233 + $0x1a58] sm:$0xff]
        %v1101 = vld [vmem:[%s233 + $0x1a60] sm:$0xff]
        %v1102 = vld [vmem:[%s233 + $0x1a68] sm:$0xff]
        %v1103 = vld [vmem:[%s233 + $0x1a70] sm:$0xff]
        %v1104 = vld [vmem:[%s233 + $0x1a78] sm:$0xff]
        %v1105 = vld [vmem:[%s233 + $0x1a80] sm:$0xff]
        %v1106 = vld [vmem:[%s233 + $0x1a88] sm:$0xff]
        %v1107 = vld [vmem:[%s233 + $0x1a90] sm:$0xff]
        %v1108 = vld [vmem:[%s233 + $0x1a98] sm:$0xff]
        %v1109 = vld [vmem:[%s233 + $0x1aa0] sm:$0xff]
        %v1110 = vld [vmem:[%s233 + $0x1aa8] sm:$0xff]
        %v1111 = vld [vmem:[%s233 + $0x1ab0] sm:$0xff]
        %v1112 = vld [vmem:[%s233 + $0x1ab8] sm:$0xff]
        %v1113 = vld [vmem:[%s233 + $0x1ac0] sm:$0xff]
        %v1114 = vld [vmem:[%s233 + $0x1ac8] sm:$0xff]
        %v1115 = vld [vmem:[%s233 + $0x1ad0] sm:$0xff]
        %v1116 = vld [vmem:[%s233 + $0x1ad8] sm:$0xff]
        %v1117 = vld [vmem:[%s233 + $0x1ae0] sm:$0xff]
        %v1118 = vld [vmem:[%s233 + $0x1ae8] sm:$0xff]
        %v1119 = vld [vmem:[%s233 + $0x1af0] sm:$0xff]
        %v1120 = vld [vmem:[%s233 + $0x1af8] sm:$0xff]
        %v1121 = vld [vmem:[%s233 + $0x1b00] sm:$0xff]
        %v1122 = vld [vmem:[%s233 + $0x1b08] sm:$0xff]
        %v1123 = vld [vmem:[%s233 + $0x1b10] sm:$0xff]
        %v1124 = vld [vmem:[%s233 + $0x1b18] sm:$0xff]
        %v1125 = vld [vmem:[%s233 + $0x1b20] sm:$0xff]
        %v1126 = vld [vmem:[%s233 + $0x1b28] sm:$0xff]
        %v1127 = vld [vmem:[%s233 + $0x1b30] sm:$0xff]
        %v1128 = vld [vmem:[%s233 + $0x1b38] sm:$0xff]
        %v1129 = vld [vmem:[%s233 + $0x1b40] sm:$0xff]
        %v1130 = vld [vmem:[%s233 + $0x1b48] sm:$0xff]
        %v1131 = vld [vmem:[%s233 + $0x1b50] sm:$0xff]
        %v1132 = vld [vmem:[%s233 + $0x1b58] sm:$0xff]
        %v1133 = vld [vmem:[%s233 + $0x1b60] sm:$0xff]
        %v1134 = vld [vmem:[%s233 + $0x1b68] sm:$0xff]
        %v1135 = vld [vmem:[%s233 + $0x1b70] sm:$0xff]
        %v1136 = vld [vmem:[%s233 + $0x1b78] sm:$0xff]
        %v1137 = vld [vmem:[%s233 + $0x1b80] sm:$0xff]
        %v1138 = vld [vmem:[%s233 + $0x1b88] sm:$0xff]
        %v1139 = vld [vmem:[%s233 + $0x1b90] sm:$0xff]
        %v1140 = vld [vmem:[%s233 + $0x1b98] sm:$0xff]
        %v1141 = vld [vmem:[%s233 + $0x1ba0] sm:$0xff]
        %v1142 = vld [vmem:[%s233 + $0x1ba8] sm:$0xff]
        %v1143 = vld [vmem:[%s233 + $0x1bb0] sm:$0xff]
        %v1144 = vld [vmem:[%s233 + $0x1bb8] sm:$0xff]
        %v1145 = vld [vmem:[%s233 + $0x1bc0] sm:$0xff]
        %v1146 = vld [vmem:[%s233 + $0x1bc8] sm:$0xff]
        %v1147 = vld [vmem:[%s233 + $0x1bd0] sm:$0xff]
        %v1148 = vld [vmem:[%s233 + $0x1bd8] sm:$0xff]
        %v1149 = vld [vmem:[%s233 + $0x1be0] sm:$0xff]
        %v1150 = vld [vmem:[%s233 + $0x1be8] sm:$0xff]
        %v1151 = vld [vmem:[%s233 + $0x1bf0] sm:$0xff]
        %v1152 = vld [vmem:[%s233 + $0x1bf8] sm:$0xff]
        %v1153 = vld [vmem:[%s233 + $0x1c00] sm:$0xff]
        %v1154 = vld [vmem:[%s233 + $0x1c08] sm:$0xff]
        %v1155 = vld [vmem:[%s233 + $0x1c10] sm:$0xff]
        %v1156 = vld [vmem:[%s233 + $0x1c18] sm:$0xff]
        %v1157 = vld [vmem:[%s233 + $0x1c20] sm:$0xff]
        %v1158 = vld [vmem:[%s233 + $0x1c28] sm:$0xff]
        %v1159 = vld [vmem:[%s233 + $0x1c30] sm:$0xff]
        %v1160 = vld [vmem:[%s233 + $0x1c38] sm:$0xff]
        %v1161 = vld [vmem:[%s233 + $0x1c40] sm:$0xff]
        %v1162 = vld [vmem:[%s233 + $0x1c48] sm:$0xff]
        %v1163 = vld [vmem:[%s233 + $0x1c50] sm:$0xff]
        %v1164 = vld [vmem:[%s233 + $0x1c58] sm:$0xff]
        %v1165 = vld [vmem:[%s233 + $0x1c60] sm:$0xff]
        %v1166 = vld [vmem:[%s233 + $0x1c68] sm:$0xff]
        %v1167 = vld [vmem:[%s233 + $0x1c70] sm:$0xff]
        %v1168 = vld [vmem:[%s233 + $0x1c78] sm:$0xff]
        %v1169 = vld [vmem:[%s233 + $0x1c80] sm:$0xff]
        %v1170 = vld [vmem:[%s233 + $0x1c88] sm:$0xff]
        %v1171 = vld [vmem:[%s233 + $0x1c90] sm:$0xff]
        %v1172 = vld [vmem:[%s233 + $0x1c98] sm:$0xff]
        %v1173 = vld [vmem:[%s233 + $0x1ca0] sm:$0xff]
        %v1174 = vld [vmem:[%s233 + $0x1ca8] sm:$0xff]
        %v1175 = vld [vmem:[%s233 + $0x1cb0] sm:$0xff]
        %v1176 = vld [vmem:[%s233 + $0x1cb8] sm:$0xff]
        %v1177 = vld [vmem:[%s233 + $0x1cc0] sm:$0xff]
        %v1178 = vld [vmem:[%s233 + $0x1cc8] sm:$0xff]
        %v1179 = vld [vmem:[%s233 + $0x1cd0] sm:$0xff]
        %v1180 = vld [vmem:[%s233 + $0x1cd8] sm:$0xff]
        %v1181 = vld [vmem:[%s233 + $0x1ce0] sm:$0xff]
        %v1182 = vld [vmem:[%s233 + $0x1ce8] sm:$0xff]
        %v1183 = vld [vmem:[%s233 + $0x1cf0] sm:$0xff]
        %v1184 = vld [vmem:[%s233 + $0x1cf8] sm:$0xff]
        %v1185 = vld [vmem:[%s233 + $0x1d00] sm:$0xff]
        %v1186 = vld [vmem:[%s233 + $0x1d08] sm:$0xff]
        %v1187 = vld [vmem:[%s233 + $0x1d10] sm:$0xff]
        %v1188 = vld [vmem:[%s233 + $0x1d18] sm:$0xff]
        %v1189 = vld [vmem:[%s233 + $0x1d20] sm:$0xff]
        %v1190 = vld [vmem:[%s233 + $0x1d28] sm:$0xff]
        %v1191 = vld [vmem:[%s233 + $0x1d30] sm:$0xff]
        %v1192 = vld [vmem:[%s233 + $0x1d38] sm:$0xff]
        %v1193 = vld [vmem:[%s233 + $0x1d40] sm:$0xff]
        %v1194 = vld [vmem:[%s233 + $0x1d48] sm:$0xff]
        %v1195 = vld [vmem:[%s233 + $0x1d50] sm:$0xff]
        %v1196 = vld [vmem:[%s233 + $0x1d58] sm:$0xff]
        %v1197 = vld [vmem:[%s233 + $0x1d60] sm:$0xff]
        %v1198 = vld [vmem:[%s233 + $0x1d68] sm:$0xff]
        %v1199 = vld [vmem:[%s233 + $0x1d70] sm:$0xff]
        %v1200 = vld [vmem:[%s233 + $0x1d78] sm:$0xff]
        %v1201 = vld [vmem:[%s233 + $0x1d80] sm:$0xff]
        %v1202 = vld [vmem:[%s233 + $0x1d88] sm:$0xff]
        %v1203 = vld [vmem:[%s233 + $0x1d90] sm:$0xff]
        %v1204 = vld [vmem:[%s233 + $0x1d98] sm:$0xff]
        %v1205 = vld [vmem:[%s233 + $0x1da0] sm:$0xff]
        %v1206 = vld [vmem:[%s233 + $0x1da8] sm:$0xff]
        %v1207 = vld [vmem:[%s233 + $0x1db0] sm:$0xff]
        %v1208 = vld [vmem:[%s233 + $0x1db8] sm:$0xff]
        %v1209 = vld [vmem:[%s233 + $0x1dc0] sm:$0xff]
        %v1210 = vld [vmem:[%s233 + $0x1dc8] sm:$0xff]
        %v1211 = vld [vmem:[%s233 + $0x1dd0] sm:$0xff]
        %v1212 = vld [vmem:[%s233 + $0x1dd8] sm:$0xff]
        %v1213 = vld [vmem:[%s233 + $0x1de0] sm:$0xff]
        %v1214 = vld [vmem:[%s233 + $0x1de8] sm:$0xff]
        %v1215 = vld [vmem:[%s233 + $0x1df0] sm:$0xff]
        %v1216 = vld [vmem:[%s233 + $0x1df8] sm:$0xff]
        %v1217 = vld [vmem:[%s233 + $0x1e00] sm:$0xff]
        %v1218 = vld [vmem:[%s233 + $0x1e08] sm:$0xff]
        %v1219 = vld [vmem:[%s233 + $0x1e10] sm:$0xff]
        %v1220 = vld [vmem:[%s233 + $0x1e18] sm:$0xff]
        %v1221 = vld [vmem:[%s233 + $0x1e20] sm:$0xff]
        %v1222 = vld [vmem:[%s233 + $0x1e28] sm:$0xff]
        %v1223 = vld [vmem:[%s233 + $0x1e30] sm:$0xff]
        %v1224 = vld [vmem:[%s233 + $0x1e38] sm:$0xff]
        %v1225 = vld [vmem:[%s233 + $0x1e40] sm:$0xff]
        %v1226 = vld [vmem:[%s233 + $0x1e48] sm:$0xff]
        %v1227 = vld [vmem:[%s233 + $0x1e50] sm:$0xff]
        %v1228 = vld [vmem:[%s233 + $0x1e58] sm:$0xff]
        %v1229 = vld [vmem:[%s233 + $0x1e60] sm:$0xff]
        %v1230 = vld [vmem:[%s233 + $0x1e68] sm:$0xff]
        %v1231 = vld [vmem:[%s233 + $0x1e70] sm:$0xff]
        %v1232 = vld [vmem:[%s233 + $0x1e78] sm:$0xff]
        %v1233 = vld [vmem:[%s233 + $0x1e80] sm:$0xff]
        %v1234 = vld [vmem:[%s233 + $0x1e88] sm:$0xff]
        %v1235 = vld [vmem:[%s233 + $0x1e90] sm:$0xff]
        %v1236 = vld [vmem:[%s233 + $0x1e98] sm:$0xff]
        %v1237 = vld [vmem:[%s233 + $0x1ea0] sm:$0xff]
        %v1238 = vld [vmem:[%s233 + $0x1ea8] sm:$0xff]
        %v1239 = vld [vmem:[%s233 + $0x1eb0] sm:$0xff]
        %v1240 = vld [vmem:[%s233 + $0x1eb8] sm:$0xff]
        %v1241 = vld [vmem:[%s233 + $0x1ec0] sm:$0xff]
        %v1242 = vld [vmem:[%s233 + $0x1ec8] sm:$0xff]
        %v1243 = vld [vmem:[%s233 + $0x1ed0] sm:$0xff]
        %v1244 = vld [vmem:[%s233 + $0x1ed8] sm:$0xff]
        %v1245 = vld [vmem:[%s233 + $0x1ee0] sm:$0xff]
        %v1246 = vld [vmem:[%s233 + $0x1ee8] sm:$0xff]
        %v1247 = vld [vmem:[%s233 + $0x1ef0] sm:$0xff]
        %v1248 = vld [vmem:[%s233 + $0x1ef8] sm:$0xff]
        %v1249 = vld [vmem:[%s233 + $0x1f00] sm:$0xff]
        %v1250 = vld [vmem:[%s233 + $0x1f08] sm:$0xff]
        %v1251 = vld [vmem:[%s233 + $0x1f10] sm:$0xff]
        %v1252 = vld [vmem:[%s233 + $0x1f18] sm:$0xff]
        %v1253 = vld [vmem:[%s233 + $0x1f20] sm:$0xff]
        %v1254 = vld [vmem:[%s233 + $0x1f28] sm:$0xff]
        %v1255 = vld [vmem:[%s233 + $0x1f30] sm:$0xff]
        %v1256 = vld [vmem:[%s233 + $0x1f38] sm:$0xff]
        %v1257 = vld [vmem:[%s233 + $0x1f40] sm:$0xff]
        %v1258 = vld [vmem:[%s233 + $0x1f48] sm:$0xff]
        %v1259 = vld [vmem:[%s233 + $0x1f50] sm:$0xff]
        %v1260 = vld [vmem:[%s233 + $0x1f58] sm:$0xff]
        %v1261 = vld [vmem:[%s233 + $0x1f60] sm:$0xff]
        %v1262 = vld [vmem:[%s233 + $0x1f68] sm:$0xff]
        %v1263 = vld [vmem:[%s233 + $0x1f70] sm:$0xff]
        %v1264 = vld [vmem:[%s233 + $0x1f78] sm:$0xff]
        %v1265 = vld [vmem:[%s233 + $0x1f80] sm:$0xff]
        %v1266 = vld [vmem:[%s233 + $0x1f88] sm:$0xff]
        %v1267 = vld [vmem:[%s233 + $0x1f90] sm:$0xff]
        %v1268 = vld [vmem:[%s233 + $0x1f98] sm:$0xff]
        %v1269 = vld [vmem:[%s233 + $0x1fa0] sm:$0xff]
        %v1270 = vld [vmem:[%s233 + $0x1fa8] sm:$0xff]
        %v1271 = vld [vmem:[%s233 + $0x1fb0] sm:$0xff]
        %v1272 = vld [vmem:[%s233 + $0x1fb8] sm:$0xff]
        %v1273 = vld [vmem:[%s233 + $0x1fc0] sm:$0xff]
        %v1274 = vld [vmem:[%s233 + $0x1fc8] sm:$0xff]
        %v1275 = vld [vmem:[%s233 + $0x1fd0] sm:$0xff]
        %v1276 = vld [vmem:[%s233 + $0x1fd8] sm:$0xff]
        %v1277 = vld [vmem:[%s233 + $0x1fe0] sm:$0xff]
        %v1278 = vld [vmem:[%s233 + $0x1fe8] sm:$0xff]
        %v1279 = vld [vmem:[%s233 + $0x1ff0] sm:$0xff]
        %v1280 = vld [vmem:[%s233 + $0x1ff8] sm:$0xff]
        %1297 = vst [vmem:[#allocation1] ss:$4 sm:$0xff] %v241
        %s1298 = scalar_lea.vmem [#allocation1], 32
        %1299 = vst [vmem:[%s1298] ss:$4 sm:$0xff] %v242
        %v1300 = vld.sshfl [vmem:[#allocation1] sm:$0xff pattern:$0x73625140]
        %v1301 = vld.sshfl [vmem:[#allocation1 + $0x8] sm:$0xff pattern:$0x73625140]
        %v1302 = vld.sshfl [vmem:[#allocation1 + $0x10] sm:$0xff pattern:$0x73625140]
        %v1303 = vld.sshfl [vmem:[#allocation1 + $0x18] sm:$0xff pattern:$0x73625140]
        %v1304 = vld.sshfl [vmem:[#allocation1 + $0x20] sm:$0xff pattern:$0x73625140]
        %v1305 = vld.sshfl [vmem:[#allocation1 + $0x28] sm:$0xff pattern:$0x73625140]
        %v1306 = vld.sshfl [vmem:[#allocation1 + $0x30] sm:$0xff pattern:$0x73625140]
        %v1307 = vld.sshfl [vmem:[#allocation1 + $0x38] sm:$0xff pattern:$0x73625140]
        %1308 = vst [vmem:[#allocation1] ss:$4 sm:$0xff] %v243
        %1309 = vst [vmem:[%s1298] ss:$4 sm:$0xff] %v244
        %v1310 = vld.sshfl [vmem:[#allocation1] sm:$0xff pattern:$0x73625140]
        %v1311 = vld.sshfl [vmem:[#allocation1 + $0x8] sm:$0xff pattern:$0x73625140]
        %v1312 = vld.sshfl [vmem:[#allocation1 + $0x10] sm:$0xff pattern:$0x73625140]
        %v1313 = vld.sshfl [vmem:[#allocation1 + $0x18] sm:$0xff pattern:$0x73625140]
        %v1314 = vld.sshfl [vmem:[#allocation1 + $0x20] sm:$0xff pattern:$0x73625140]
        %v1315 = vld.sshfl [vmem:[#allocation1 + $0x28] sm:$0xff pattern:$0x73625140]
        %v1316 = vld.sshfl [vmem:[#allocation1 + $0x30] sm:$0xff pattern:$0x73625140]
        %v1317 = vld.sshfl [vmem:[#allocation1 + $0x38] sm:$0xff pattern:$0x73625140]
        %1318 = vst [vmem:[#allocation1] ss:$4 sm:$0xff] %v245
        %1319 = vst [vmem:[%s1298] ss:$4 sm:$0xff] %v246
        %v1320 = vld.sshfl [vmem:[#allocation1] sm:$0xff pattern:$0x73625140]
        %v1321 = vld.sshfl [vmem:[#allocation1 + $0x8] sm:$0xff pattern:$0x73625140]
        %v1322 = vld.sshfl [vmem:[#allocation1 + $0x10] sm:$0xff pattern:$0x73625140]
        %v1323 = vld.sshfl [vmem:[#allocation1 + $0x18] sm:$0xff pattern:$0x73625140]
        %v1324 = vld.sshfl [vmem:[#allocation1 + $0x20] sm:$0xff pattern:$0x73625140]
        %v1325 = vld.sshfl [vmem:[#allocation1 + $0x28] sm:$0xff pattern:$0x73625140]
        %v1326 = vld.sshfl [vmem:[#allocation1 + $0x30] sm:$0xff pattern:$0x73625140]
        %v1327 = vld.sshfl [vmem:[#allocation1 + $0x38] sm:$0xff pattern:$0x73625140]
        %1328 = vst [vmem:[#allocation1] ss:$4 sm:$0xff] %v247
        %1329 = vst [vmem:[%s1298] ss:$4 sm:$0xff] %v248
        %v1330 = vld.sshfl [vmem:[#allocation1] sm:$0xff pattern:$0x73625140]
        %v1331 = vld.sshfl [vmem:[#allocation1 + $0x8] sm:$0xff pattern:$0x73625140]
        %v1332 = vld.sshfl [vmem:[#allocation1 + $0x10] sm:$0xff pattern:$0x73625140]
        %v1333 = vld.sshfl [vmem:[#allocation1 + $0x18] sm:$0xff pattern:$0x73625140]
        %v1334 = vld.sshfl [vmem:[#allocation1 + $0x20] sm:$0xff pattern:$0x73625140]
        %v1335 = vld.sshfl [vmem:[#allocation1 + $0x28] sm:$0xff pattern:$0x73625140]
        %v1336 = vld.sshfl [vmem:[#allocation1 + $0x30] sm:$0xff pattern:$0x73625140]
        %v1337 = vld.sshfl [vmem:[#allocation1 + $0x38] sm:$0xff pattern:$0x73625140]
        %1338 = vst [vmem:[#allocation1] ss:$4 sm:$0xff] %v249
        %1339 = vst [vmem:[%s1298] ss:$4 sm:$0xff] %v250
        %v1340 = vld.sshfl [vmem:[#allocation1] sm:$0xff pattern:$0x73625140]
        %v1341 = vld.sshfl [vmem:[#allocation1 + $0x8] sm:$0xff pattern:$0x73625140]
        %v1342 = vld.sshfl [vmem:[#allocation1 + $0x10] sm:$0xff pattern:$0x73625140]
        %v1343 = vld.sshfl [vmem:[#allocation1 + $0x18] sm:$0xff pattern:$0x73625140]
        %v1344 = vld.sshfl [vmem:[#allocation1 + $0x20] sm:$0xff pattern:$0x73625140]
        %v1345 = vld.sshfl [vmem:[#allocation1 + $0x28] sm:$0xff pattern:$0x73625140]
        %v1346 = vld.sshfl [vmem:[#allocation1 + $0x30] sm:$0xff pattern:$0x73625140]
        %v1347 = vld.sshfl [vmem:[#allocation1 + $0x38] sm:$0xff pattern:$0x73625140]
        %1348 = vst [vmem:[#allocation1] ss:$4 sm:$0xff] %v251
        %1349 = vst [vmem:[%s1298] ss:$4 sm:$0xff] %v252
        %v1350 = vld.sshfl [vmem:[#allocation1] sm:$0xff pattern:$0x73625140]
        %v1351 = vld.sshfl [vmem:[#allocation1 + $0x8] sm:$0xff pattern:$0x73625140]
        %v1352 = vld.sshfl [vmem:[#allocation1 + $0x10] sm:$0xff pattern:$0x73625140]
        %v1353 = vld.sshfl [vmem:[#allocation1 + $0x18] sm:$0xff pattern:$0x73625140]
        %v1354 = vld.sshfl [vmem:[#allocation1 + $0x20] sm:$0xff pattern:$0x73625140]
        %v1355 = vld.sshfl [vmem:[#allocation1 + $0x28] sm:$0xff pattern:$0x73625140]
        %v1356 = vld.sshfl [vmem:[#allocation1 + $0x30] sm:$0xff pattern:$0x73625140]
        %v1357 = vld.sshfl [vmem:[#allocation1 + $0x38] sm:$0xff pattern:$0x73625140]
        %1358 = vst [vmem:[#allocation1] ss:$4 sm:$0xff] %v253
        %1359 = vst [vmem:[%s1298] ss:$4 sm:$0xff] %v254
        %v1360 = vld.sshfl [vmem:[#allocation1] sm:$0xff pattern:$0x73625140]
        %v1361 = vld.sshfl [vmem:[#allocation1 + $0x8] sm:$0xff pattern:$0x73625140]
        %v1362 = vld.sshfl [vmem:[#allocation1 + $0x10] sm:$0xff pattern:$0x73625140]
        %v1363 = vld.sshfl [vmem:[#allocation1 + $0x18] sm:$0xff pattern:$0x73625140]
        %v1364 = vld.sshfl [vmem:[#allocation1 + $0x20] sm:$0xff pattern:$0x73625140]
        %v1365 = vld.sshfl [vmem:[#allocation1 + $0x28] sm:$0xff pattern:$0x73625140]
        %v1366 = vld.sshfl [vmem:[#allocation1 + $0x30] sm:$0xff pattern:$0x73625140]
        %v1367 = vld.sshfl [vmem:[#allocation1 + $0x38] sm:$0xff pattern:$0x73625140]
        %1368 = vst [vmem:[#allocation1] ss:$4 sm:$0xff] %v255
        %1369 = vst [vmem:[%s1298] ss:$4 sm:$0xff] %v256
        %v1370 = vld.sshfl [vmem:[#allocation1] sm:$0xff pattern:$0x73625140]
        %v1371 = vld.sshfl [vmem:[#allocation1 + $0x8] sm:$0xff pattern:$0x73625140]
        %v1372 = vld.sshfl [vmem:[#allocation1 + $0x10] sm:$0xff pattern:$0x73625140]
        %v1373 = vld.sshfl [vmem:[#allocation1 + $0x18] sm:$0xff pattern:$0x73625140]
        %v1374 = vld.sshfl [vmem:[#allocation1 + $0x20] sm:$0xff pattern:$0x73625140]
        %v1375 = vld.sshfl [vmem:[#allocation1 + $0x28] sm:$0xff pattern:$0x73625140]
        %v1376 = vld.sshfl [vmem:[#allocation1 + $0x30] sm:$0xff pattern:$0x73625140]
        %v1377 = vld.sshfl [vmem:[#allocation1 + $0x38] sm:$0xff pattern:$0x73625140]
        %1442 = vmatpush.msra.mxu0 %v272
        %1443 = vmatpush.msra.mxu0 %v271
        %1444 = vmatpush.msra.mxu0 %v270
        %1445 = vmatpush.msra.mxu0 %v269
        %1446 = vmatpush.msra.mxu0 %v268
        %1447 = vmatpush.msra.mxu0 %v267
        %1448 = vmatpush.msra.mxu0 %v266
        %1449 = vmatpush.msra.mxu0 %v265
        %1450 = vmatpush.msra.mxu0 %v264
        %1451 = vmatpush.msra.mxu0 %v263
        %1452 = vmatpush.msra.mxu0 %v262
        %1453 = vmatpush.msra.mxu0 %v261
        %1454 = vmatpush.msra.mxu0 %v260
        %1455 = vmatpush.msra.mxu0 %v259
        %1456 = vmatpush.msra.mxu0 %v258
        %1457 = vmatpush.msra.mxu0 %v257
        %1458 = vmatmul.f32.gmra.mxu0 %v1300
        %v1459 = vpop.f32.mrf.mxu0
        %v1460 = vadd.f32 0.0, %v1459
        %1461 = vdwg.mxu0
        %1462 = vmatpush.msra.mxu0 %v288
        %1463 = vmatpush.msra.mxu0 %v287
        %1464 = vmatpush.msra.mxu0 %v286
        %1465 = vmatpush.msra.mxu0 %v285
        %1466 = vmatpush.msra.mxu0 %v284
        %1467 = vmatpush.msra.mxu0 %v283
        %1468 = vmatpush.msra.mxu0 %v282
        %1469 = vmatpush.msra.mxu0 %v281
        %1470 = vmatpush.msra.mxu0 %v280
        %1471 = vmatpush.msra.mxu0 %v279
        %1472 = vmatpush.msra.mxu0 %v278
        %1473 = vmatpush.msra.mxu0 %v277
        %1474 = vmatpush.msra.mxu0 %v276
        %1475 = vmatpush.msra.mxu0 %v275
        %1476 = vmatpush.msra.mxu0 %v274
        %1477 = vmatpush.msra.mxu0 %v273
        %1478 = vmatmul.f32.gmra.mxu0 %v1301
        %v1479 = vpop.f32.mrf.mxu0
        %v1480 = vadd.f32 %v1460, %v1479
        %1481 = vdwg.mxu0
        %1482 = vmatpush.msra.mxu0 %v304
        %1483 = vmatpush.msra.mxu0 %v303
        %1484 = vmatpush.msra.mxu0 %v302
        %1485 = vmatpush.msra.mxu0 %v301
        %1486 = vmatpush.msra.mxu0 %v300
        %1487 = vmatpush.msra.mxu0 %v299
        %1488 = vmatpush.msra.mxu0 %v298
        %1489 = vmatpush.msra.mxu0 %v297
        %1490 = vmatpush.msra.mxu0 %v296
        %1491 = vmatpush.msra.mxu0 %v295
        %1492 = vmatpush.msra.mxu0 %v294
        %1493 = vmatpush.msra.mxu0 %v293
        %1494 = vmatpush.msra.mxu0 %v292
        %1495 = vmatpush.msra.mxu0 %v291
        %1496 = vmatpush.msra.mxu0 %v290
        %1497 = vmatpush.msra.mxu0 %v289
        %1498 = vmatmul.f32.gmra.mxu0 %v1302
        %v1499 = vpop.f32.mrf.mxu0
        %v1500 = vadd.f32 %v1480, %v1499
        %1501 = vdwg.mxu0
        %1502 = vmatpush.msra.mxu0 %v320
        %1503 = vmatpush.msra.mxu0 %v319
        %1504 = vmatpush.msra.mxu0 %v318
        %1505 = vmatpush.msra.mxu0 %v317
        %1506 = vmatpush.msra.mxu0 %v316
        %1507 = vmatpush.msra.mxu0 %v315
        %1508 = vmatpush.msra.mxu0 %v314
        %1509 = vmatpush.msra.mxu0 %v313
        %1510 = vmatpush.msra.mxu0 %v312
        %1511 = vmatpush.msra.mxu0 %v311
        %1512 = vmatpush.msra.mxu0 %v310
        %1513 = vmatpush.msra.mxu0 %v309
        %1514 = vmatpush.msra.mxu0 %v308
        %1515 = vmatpush.msra.mxu0 %v307
        %1516 = vmatpush.msra.mxu0 %v306
        %1517 = vmatpush.msra.mxu0 %v305
        %1518 = vmatmul.f32.gmra.mxu0 %v1303
        %v1519 = vpop.f32.mrf.mxu0
        %v1520 = vadd.f32 %v1500, %v1519
        %1521 = vdwg.mxu0
        %1522 = vmatpush.msra.mxu0 %v336
        %1523 = vmatpush.msra.mxu0 %v335
        %1524 = vmatpush.msra.mxu0 %v334
        %1525 = vmatpush.msra.mxu0 %v333
        %1526 = vmatpush.msra.mxu0 %v332
        %1527 = vmatpush.msra.mxu0 %v331
        %1528 = vmatpush.msra.mxu0 %v330
        %1529 = vmatpush.msra.mxu0 %v329
        %1530 = vmatpush.msra.mxu0 %v328
        %1531 = vmatpush.msra.mxu0 %v327
        %1532 = vmatpush.msra.mxu0 %v326
        %1533 = vmatpush.msra.mxu0 %v325
        %1534 = vmatpush.msra.mxu0 %v324
        %1535 = vmatpush.msra.mxu0 %v323
        %1536 = vmatpush.msra.mxu0 %v322
        %1537 = vmatpush.msra.mxu0 %v321
        %1538 = vmatmul.f32.gmra.mxu0 %v1304
        %v1539 = vpop.f32.mrf.mxu0
        %v1540 = vadd.f32 %v1520, %v1539
        %1541 = vdwg.mxu0
        %1542 = vmatpush.msra.mxu0 %v352
        %1543 = vmatpush.msra.mxu0 %v351
        %1544 = vmatpush.msra.mxu0 %v350
        %1545 = vmatpush.msra.mxu0 %v349
        %1546 = vmatpush.msra.mxu0 %v348
        %1547 = vmatpush.msra.mxu0 %v347
        %1548 = vmatpush.msra.mxu0 %v346
        %1549 = vmatpush.msra.mxu0 %v345
        %1550 = vmatpush.msra.mxu0 %v344
        %1551 = vmatpush.msra.mxu0 %v343
        %1552 = vmatpush.msra.mxu0 %v342
        %1553 = vmatpush.msra.mxu0 %v341
        %1554 = vmatpush.msra.mxu0 %v340
        %1555 = vmatpush.msra.mxu0 %v339
        %1556 = vmatpush.msra.mxu0 %v338
        %1557 = vmatpush.msra.mxu0 %v337
        %1558 = vmatmul.f32.gmra.mxu0 %v1305
        %v1559 = vpop.f32.mrf.mxu0
        %v1560 = vadd.f32 %v1540, %v1559
        %1561 = vdwg.mxu0
        %1562 = vmatpush.msra.mxu0 %v368
        %1563 = vmatpush.msra.mxu0 %v367
        %1564 = vmatpush.msra.mxu0 %v366
        %1565 = vmatpush.msra.mxu0 %v365
        %1566 = vmatpush.msra.mxu0 %v364
        %1567 = vmatpush.msra.mxu0 %v363
        %1568 = vmatpush.msra.mxu0 %v362
        %1569 = vmatpush.msra.mxu0 %v361
        %1570 = vmatpush.msra.mxu0 %v360
        %1571 = vmatpush.msra.mxu0 %v359
        %1572 = vmatpush.msra.mxu0 %v358
        %1573 = vmatpush.msra.mxu0 %v357
        %1574 = vmatpush.msra.mxu0 %v356
        %1575 = vmatpush.msra.mxu0 %v355
        %1576 = vmatpush.msra.mxu0 %v354
        %1577 = vmatpush.msra.mxu0 %v353
        %1578 = vmatmul.f32.gmra.mxu0 %v1306
        %v1579 = vpop.f32.mrf.mxu0
        %v1580 = vadd.f32 %v1560, %v1579
        %1581 = vdwg.mxu0
        %1582 = vmatpush.msra.mxu0 %v384
        %1583 = vmatpush.msra.mxu0 %v383
        %1584 = vmatpush.msra.mxu0 %v382
        %1585 = vmatpush.msra.mxu0 %v381
        %1586 = vmatpush.msra.mxu0 %v380
        %1587 = vmatpush.msra.mxu0 %v379
        %1588 = vmatpush.msra.mxu0 %v378
        %1589 = vmatpush.msra.mxu0 %v377
        %1590 = vmatpush.msra.mxu0 %v376
        %1591 = vmatpush.msra.mxu0 %v375
        %1592 = vmatpush.msra.mxu0 %v374
        %1593 = vmatpush.msra.mxu0 %v373
        %1594 = vmatpush.msra.mxu0 %v372
        %1595 = vmatpush.msra.mxu0 %v371
        %1596 = vmatpush.msra.mxu0 %v370
        %1597 = vmatpush.msra.mxu0 %v369
        %1598 = vmatmul.f32.gmra.mxu0 %v1307
        %v1599 = vpop.f32.mrf.mxu0
        %v1600 = vadd.f32 %v1580, %v1599
        %1601 = vdwg.mxu0
        %1602 = vmatpush.msra.mxu0 %v400
        %1603 = vmatpush.msra.mxu0 %v399
        %1604 = vmatpush.msra.mxu0 %v398
        %1605 = vmatpush.msra.mxu0 %v397
        %1606 = vmatpush.msra.mxu0 %v396
        %1607 = vmatpush.msra.mxu0 %v395
        %1608 = vmatpush.msra.mxu0 %v394
        %1609 = vmatpush.msra.mxu0 %v393
        %1610 = vmatpush.msra.mxu0 %v392
        %1611 = vmatpush.msra.mxu0 %v391
        %1612 = vmatpush.msra.mxu0 %v390
        %1613 = vmatpush.msra.mxu0 %v389
        %1614 = vmatpush.msra.mxu0 %v388
        %1615 = vmatpush.msra.mxu0 %v387
        %1616 = vmatpush.msra.mxu0 %v386
        %1617 = vmatpush.msra.mxu0 %v385
        %1618 = vmatmul.f32.gmra.mxu0 %v1310
        %v1619 = vpop.f32.mrf.mxu0
        %v1620 = vadd.f32 %v1600, %v1619
        %1621 = vdwg.mxu0
        %1622 = vmatpush.msra.mxu0 %v416
        %1623 = vmatpush.msra.mxu0 %v415
        %1624 = vmatpush.msra.mxu0 %v414
        %1625 = vmatpush.msra.mxu0 %v413
        %1626 = vmatpush.msra.mxu0 %v412
        %1627 = vmatpush.msra.mxu0 %v411
        %1628 = vmatpush.msra.mxu0 %v410
        %1629 = vmatpush.msra.mxu0 %v409
        %1630 = vmatpush.msra.mxu0 %v408
        %1631 = vmatpush.msra.mxu0 %v407
        %1632 = vmatpush.msra.mxu0 %v406
        %1633 = vmatpush.msra.mxu0 %v405
        %1634 = vmatpush.msra.mxu0 %v404
        %1635 = vmatpush.msra.mxu0 %v403
        %1636 = vmatpush.msra.mxu0 %v402
        %1637 = vmatpush.msra.mxu0 %v401
        %1638 = vmatmul.f32.gmra.mxu0 %v1311
        %v1639 = vpop.f32.mrf.mxu0
        %v1640 = vadd.f32 %v1620, %v1639
        %1641 = vdwg.mxu0
        %1642 = vmatpush.msra.mxu0 %v432
        %1643 = vmatpush.msra.mxu0 %v431
        %1644 = vmatpush.msra.mxu0 %v430
        %1645 = vmatpush.msra.mxu0 %v429
        %1646 = vmatpush.msra.mxu0 %v428
        %1647 = vmatpush.msra.mxu0 %v427
        %1648 = vmatpush.msra.mxu0 %v426
        %1649 = vmatpush.msra.mxu0 %v425
        %1650 = vmatpush.msra.mxu0 %v424
        %1651 = vmatpush.msra.mxu0 %v423
        %1652 = vmatpush.msra.mxu0 %v422
        %1653 = vmatpush.msra.mxu0 %v421
        %1654 = vmatpush.msra.mxu0 %v420
        %1655 = vmatpush.msra.mxu0 %v419
        %1656 = vmatpush.msra.mxu0 %v418
        %1657 = vmatpush.msra.mxu0 %v417
        %1658 = vmatmul.f32.gmra.mxu0 %v1312
        %v1659 = vpop.f32.mrf.mxu0
        %v1660 = vadd.f32 %v1640, %v1659
        %1661 = vdwg.mxu0
        %1662 = vmatpush.msra.mxu0 %v448
        %1663 = vmatpush.msra.mxu0 %v447
        %1664 = vmatpush.msra.mxu0 %v446
        %1665 = vmatpush.msra.mxu0 %v445
        %1666 = vmatpush.msra.mxu0 %v444
        %1667 = vmatpush.msra.mxu0 %v443
        %1668 = vmatpush.msra.mxu0 %v442
        %1669 = vmatpush.msra.mxu0 %v441
        %1670 = vmatpush.msra.mxu0 %v440
        %1671 = vmatpush.msra.mxu0 %v439
        %1672 = vmatpush.msra.mxu0 %v438
        %1673 = vmatpush.msra.mxu0 %v437
        %1674 = vmatpush.msra.mxu0 %v436
        %1675 = vmatpush.msra.mxu0 %v435
        %1676 = vmatpush.msra.mxu0 %v434
        %1677 = vmatpush.msra.mxu0 %v433
        %1678 = vmatmul.f32.gmra.mxu0 %v1313
        %v1679 = vpop.f32.mrf.mxu0
        %v1680 = vadd.f32 %v1660, %v1679
        %1681 = vdwg.mxu0
        %1682 = vmatpush.msra.mxu0 %v464
        %1683 = vmatpush.msra.mxu0 %v463
        %1684 = vmatpush.msra.mxu0 %v462
        %1685 = vmatpush.msra.mxu0 %v461
        %1686 = vmatpush.msra.mxu0 %v460
        %1687 = vmatpush.msra.mxu0 %v459
        %1688 = vmatpush.msra.mxu0 %v458
        %1689 = vmatpush.msra.mxu0 %v457
        %1690 = vmatpush.msra.mxu0 %v456
        %1691 = vmatpush.msra.mxu0 %v455
        %1692 = vmatpush.msra.mxu0 %v454
        %1693 = vmatpush.msra.mxu0 %v453
        %1694 = vmatpush.msra.mxu0 %v452
        %1695 = vmatpush.msra.mxu0 %v451
        %1696 = vmatpush.msra.mxu0 %v450
        %1697 = vmatpush.msra.mxu0 %v449
        %1698 = vmatmul.f32.gmra.mxu0 %v1314
        %v1699 = vpop.f32.mrf.mxu0
        %v1700 = vadd.f32 %v1680, %v1699
        %1701 = vdwg.mxu0
        %1702 = vmatpush.msra.mxu0 %v480
        %1703 = vmatpush.msra.mxu0 %v479
        %1704 = vmatpush.msra.mxu0 %v478
        %1705 = vmatpush.msra.mxu0 %v477
        %1706 = vmatpush.msra.mxu0 %v476
        %1707 = vmatpush.msra.mxu0 %v475
        %1708 = vmatpush.msra.mxu0 %v474
        %1709 = vmatpush.msra.mxu0 %v473
        %1710 = vmatpush.msra.mxu0 %v472
        %1711 = vmatpush.msra.mxu0 %v471
        %1712 = vmatpush.msra.mxu0 %v470
        %1713 = vmatpush.msra.mxu0 %v469
        %1714 = vmatpush.msra.mxu0 %v468
        %1715 = vmatpush.msra.mxu0 %v467
        %1716 = vmatpush.msra.mxu0 %v466
        %1717 = vmatpush.msra.mxu0 %v465
        %1718 = vmatmul.f32.gmra.mxu0 %v1315
        %v1719 = vpop.f32.mrf.mxu0
        %v1720 = vadd.f32 %v1700, %v1719
        %1721 = vdwg.mxu0
        %1722 = vmatpush.msra.mxu0 %v496
        %1723 = vmatpush.msra.mxu0 %v495
        %1724 = vmatpush.msra.mxu0 %v494
        %1725 = vmatpush.msra.mxu0 %v493
        %1726 = vmatpush.msra.mxu0 %v492
        %1727 = vmatpush.msra.mxu0 %v491
        %1728 = vmatpush.msra.mxu0 %v490
        %1729 = vmatpush.msra.mxu0 %v489
        %1730 = vmatpush.msra.mxu0 %v488
        %1731 = vmatpush.msra.mxu0 %v487
        %1732 = vmatpush.msra.mxu0 %v486
        %1733 = vmatpush.msra.mxu0 %v485
        %1734 = vmatpush.msra.mxu0 %v484
        %1735 = vmatpush.msra.mxu0 %v483
        %1736 = vmatpush.msra.mxu0 %v482
        %1737 = vmatpush.msra.mxu0 %v481
        %1738 = vmatmul.f32.gmra.mxu0 %v1316
        %v1739 = vpop.f32.mrf.mxu0
        %v1740 = vadd.f32 %v1720, %v1739
        %1741 = vdwg.mxu0
        %1742 = vmatpush.msra.mxu0 %v512
        %1743 = vmatpush.msra.mxu0 %v511
        %1744 = vmatpush.msra.mxu0 %v510
        %1745 = vmatpush.msra.mxu0 %v509
        %1746 = vmatpush.msra.mxu0 %v508
        %1747 = vmatpush.msra.mxu0 %v507
        %1748 = vmatpush.msra.mxu0 %v506
        %1749 = vmatpush.msra.mxu0 %v505
        %1750 = vmatpush.msra.mxu0 %v504
        %1751 = vmatpush.msra.mxu0 %v503
        %1752 = vmatpush.msra.mxu0 %v502
        %1753 = vmatpush.msra.mxu0 %v501
        %1754 = vmatpush.msra.mxu0 %v500
        %1755 = vmatpush.msra.mxu0 %v499
        %1756 = vmatpush.msra.mxu0 %v498
        %1757 = vmatpush.msra.mxu0 %v497
        %1758 = vmatmul.f32.gmra.mxu0 %v1317
        %v1759 = vpop.f32.mrf.mxu0
        %v1760 = vadd.f32 %v1740, %v1759
        %1761 = vdwg.mxu0
        %1762 = vmatpush.msra.mxu0 %v528
        %1763 = vmatpush.msra.mxu0 %v527
        %1764 = vmatpush.msra.mxu0 %v526
        %1765 = vmatpush.msra.mxu0 %v525
        %1766 = vmatpush.msra.mxu0 %v524
        %1767 = vmatpush.msra.mxu0 %v523
        %1768 = vmatpush.msra.mxu0 %v522
        %1769 = vmatpush.msra.mxu0 %v521
        %1770 = vmatpush.msra.mxu0 %v520
        %1771 = vmatpush.msra.mxu0 %v519
        %1772 = vmatpush.msra.mxu0 %v518
        %1773 = vmatpush.msra.mxu0 %v517
        %1774 = vmatpush.msra.mxu0 %v516
        %1775 = vmatpush.msra.mxu0 %v515
        %1776 = vmatpush.msra.mxu0 %v514
        %1777 = vmatpush.msra.mxu0 %v513
        %1778 = vmatmul.f32.gmra.mxu0 %v1320
        %v1779 = vpop.f32.mrf.mxu0
        %v1780 = vadd.f32 %v1760, %v1779
        %1781 = vdwg.mxu0
        %1782 = vmatpush.msra.mxu0 %v544
        %1783 = vmatpush.msra.mxu0 %v543
        %1784 = vmatpush.msra.mxu0 %v542
        %1785 = vmatpush.msra.mxu0 %v541
        %1786 = vmatpush.msra.mxu0 %v540
        %1787 = vmatpush.msra.mxu0 %v539
        %1788 = vmatpush.msra.mxu0 %v538
        %1789 = vmatpush.msra.mxu0 %v537
        %1790 = vmatpush.msra.mxu0 %v536
        %1791 = vmatpush.msra.mxu0 %v535
        %1792 = vmatpush.msra.mxu0 %v534
        %1793 = vmatpush.msra.mxu0 %v533
        %1794 = vmatpush.msra.mxu0 %v532
        %1795 = vmatpush.msra.mxu0 %v531
        %1796 = vmatpush.msra.mxu0 %v530
        %1797 = vmatpush.msra.mxu0 %v529
        %1798 = vmatmul.f32.gmra.mxu0 %v1321
        %v1799 = vpop.f32.mrf.mxu0
        %v1800 = vadd.f32 %v1780, %v1799
        %1801 = vdwg.mxu0
        %1802 = vmatpush.msra.mxu0 %v560
        %1803 = vmatpush.msra.mxu0 %v559
        %1804 = vmatpush.msra.mxu0 %v558
        %1805 = vmatpush.msra.mxu0 %v557
        %1806 = vmatpush.msra.mxu0 %v556
        %1807 = vmatpush.msra.mxu0 %v555
        %1808 = vmatpush.msra.mxu0 %v554
        %1809 = vmatpush.msra.mxu0 %v553
        %1810 = vmatpush.msra.mxu0 %v552
        %1811 = vmatpush.msra.mxu0 %v551
        %1812 = vmatpush.msra.mxu0 %v550
        %1813 = vmatpush.msra.mxu0 %v549
        %1814 = vmatpush.msra.mxu0 %v548
        %1815 = vmatpush.msra.mxu0 %v547
        %1816 = vmatpush.msra.mxu0 %v546
        %1817 = vmatpush.msra.mxu0 %v545
        %1818 = vmatmul.f32.gmra.mxu0 %v1322
        %v1819 = vpop.f32.mrf.mxu0
        %v1820 = vadd.f32 %v1800, %v1819
        %1821 = vdwg.mxu0
        %1822 = vmatpush.msra.mxu0 %v576
        %1823 = vmatpush.msra.mxu0 %v575
        %1824 = vmatpush.msra.mxu0 %v574
        %1825 = vmatpush.msra.mxu0 %v573
        %1826 = vmatpush.msra.mxu0 %v572
        %1827 = vmatpush.msra.mxu0 %v571
        %1828 = vmatpush.msra.mxu0 %v570
        %1829 = vmatpush.msra.mxu0 %v569
        %1830 = vmatpush.msra.mxu0 %v568
        %1831 = vmatpush.msra.mxu0 %v567
        %1832 = vmatpush.msra.mxu0 %v566
        %1833 = vmatpush.msra.mxu0 %v565
        %1834 = vmatpush.msra.mxu0 %v564
        %1835 = vmatpush.msra.mxu0 %v563
        %1836 = vmatpush.msra.mxu0 %v562
        %1837 = vmatpush.msra.mxu0 %v561
        %1838 = vmatmul.f32.gmra.mxu0 %v1323
        %v1839 = vpop.f32.mrf.mxu0
        %v1840 = vadd.f32 %v1820, %v1839
        %1841 = vdwg.mxu0
        %1842 = vmatpush.msra.mxu0 %v592
        %1843 = vmatpush.msra.mxu0 %v591
        %1844 = vmatpush.msra.mxu0 %v590
        %1845 = vmatpush.msra.mxu0 %v589
        %1846 = vmatpush.msra.mxu0 %v588
        %1847 = vmatpush.msra.mxu0 %v587
        %1848 = vmatpush.msra.mxu0 %v586
        %1849 = vmatpush.msra.mxu0 %v585
        %1850 = vmatpush.msra.mxu0 %v584
        %1851 = vmatpush.msra.mxu0 %v583
        %1852 = vmatpush.msra.mxu0 %v582
        %1853 = vmatpush.msra.mxu0 %v581
        %1854 = vmatpush.msra.mxu0 %v580
        %1855 = vmatpush.msra.mxu0 %v579
        %1856 = vmatpush.msra.mxu0 %v578
        %1857 = vmatpush.msra.mxu0 %v577
        %1858 = vmatmul.f32.gmra.mxu0 %v1324
        %v1859 = vpop.f32.mrf.mxu0
        %v1860 = vadd.f32 %v1840, %v1859
        %1861 = vdwg.mxu0
        %1862 = vmatpush.msra.mxu0 %v608
        %1863 = vmatpush.msra.mxu0 %v607
        %1864 = vmatpush.msra.mxu0 %v606
        %1865 = vmatpush.msra.mxu0 %v605
        %1866 = vmatpush.msra.mxu0 %v604
        %1867 = vmatpush.msra.mxu0 %v603
        %1868 = vmatpush.msra.mxu0 %v602
        %1869 = vmatpush.msra.mxu0 %v601
        %1870 = vmatpush.msra.mxu0 %v600
        %1871 = vmatpush.msra.mxu0 %v599
        %1872 = vmatpush.msra.mxu0 %v598
        %1873 = vmatpush.msra.mxu0 %v597
        %1874 = vmatpush.msra.mxu0 %v596
        %1875 = vmatpush.msra.mxu0 %v595
        %1876 = vmatpush.msra.mxu0 %v594
        %1877 = vmatpush.msra.mxu0 %v593
        %1878 = vmatmul.f32.gmra.mxu0 %v1325
        %v1879 = vpop.f32.mrf.mxu0
        %v1880 = vadd.f32 %v1860, %v1879
        %1881 = vdwg.mxu0
        %1882 = vmatpush.msra.mxu0 %v624
        %1883 = vmatpush.msra.mxu0 %v623
        %1884 = vmatpush.msra.mxu0 %v622
        %1885 = vmatpush.msra.mxu0 %v621
        %1886 = vmatpush.msra.mxu0 %v620
        %1887 = vmatpush.msra.mxu0 %v619
        %1888 = vmatpush.msra.mxu0 %v618
        %1889 = vmatpush.msra.mxu0 %v617
        %1890 = vmatpush.msra.mxu0 %v616
        %1891 = vmatpush.msra.mxu0 %v615
        %1892 = vmatpush.msra.mxu0 %v614
        %1893 = vmatpush.msra.mxu0 %v613
        %1894 = vmatpush.msra.mxu0 %v612
        %1895 = vmatpush.msra.mxu0 %v611
        %1896 = vmatpush.msra.mxu0 %v610
        %1897 = vmatpush.msra.mxu0 %v609
        %1898 = vmatmul.f32.gmra.mxu0 %v1326
        %v1899 = vpop.f32.mrf.mxu0
        %v1900 = vadd.f32 %v1880, %v1899
        %1901 = vdwg.mxu0
        %1902 = vmatpush.msra.mxu0 %v640
        %1903 = vmatpush.msra.mxu0 %v639
        %1904 = vmatpush.msra.mxu0 %v638
        %1905 = vmatpush.msra.mxu0 %v637
        %1906 = vmatpush.msra.mxu0 %v636
        %1907 = vmatpush.msra.mxu0 %v635
        %1908 = vmatpush.msra.mxu0 %v634
        %1909 = vmatpush.msra.mxu0 %v633
        %1910 = vmatpush.msra.mxu0 %v632
        %1911 = vmatpush.msra.mxu0 %v631
        %1912 = vmatpush.msra.mxu0 %v630
        %1913 = vmatpush.msra.mxu0 %v629
        %1914 = vmatpush.msra.mxu0 %v628
        %1915 = vmatpush.msra.mxu0 %v627
        %1916 = vmatpush.msra.mxu0 %v626
        %1917 = vmatpush.msra.mxu0 %v625
        %1918 = vmatmul.f32.gmra.mxu0 %v1327
        %v1919 = vpop.f32.mrf.mxu0
        %v1920 = vadd.f32 %v1900, %v1919
        %1921 = vdwg.mxu0
        %1922 = vmatpush.msra.mxu0 %v656
        %1923 = vmatpush.msra.mxu0 %v655
        %1924 = vmatpush.msra.mxu0 %v654
        %1925 = vmatpush.msra.mxu0 %v653
        %1926 = vmatpush.msra.mxu0 %v652
        %1927 = vmatpush.msra.mxu0 %v651
        %1928 = vmatpush.msra.mxu0 %v650
        %1929 = vmatpush.msra.mxu0 %v649
        %1930 = vmatpush.msra.mxu0 %v648
        %1931 = vmatpush.msra.mxu0 %v647
        %1932 = vmatpush.msra.mxu0 %v646
        %1933 = vmatpush.msra.mxu0 %v645
        %1934 = vmatpush.msra.mxu0 %v644
        %1935 = vmatpush.msra.mxu0 %v643
        %1936 = vmatpush.msra.mxu0 %v642
        %1937 = vmatpush.msra.mxu0 %v641
        %1938 = vmatmul.f32.gmra.mxu0 %v1330
        %v1939 = vpop.f32.mrf.mxu0
        %v1940 = vadd.f32 %v1920, %v1939
        %1941 = vdwg.mxu0
        %1942 = vmatpush.msra.mxu0 %v672
        %1943 = vmatpush.msra.mxu0 %v671
        %1944 = vmatpush.msra.mxu0 %v670
        %1945 = vmatpush.msra.mxu0 %v669
        %1946 = vmatpush.msra.mxu0 %v668
        %1947 = vmatpush.msra.mxu0 %v667
        %1948 = vmatpush.msra.mxu0 %v666
        %1949 = vmatpush.msra.mxu0 %v665
        %1950 = vmatpush.msra.mxu0 %v664
        %1951 = vmatpush.msra.mxu0 %v663
        %1952 = vmatpush.msra.mxu0 %v662
        %1953 = vmatpush.msra.mxu0 %v661
        %1954 = vmatpush.msra.mxu0 %v660
        %1955 = vmatpush.msra.mxu0 %v659
        %1956 = vmatpush.msra.mxu0 %v658
        %1957 = vmatpush.msra.mxu0 %v657
        %1958 = vmatmul.f32.gmra.mxu0 %v1331
        %v1959 = vpop.f32.mrf.mxu0
        %v1960 = vadd.f32 %v1940, %v1959
        %1961 = vdwg.mxu0
        %1962 = vmatpush.msra.mxu0 %v688
        %1963 = vmatpush.msra.mxu0 %v687
        %1964 = vmatpush.msra.mxu0 %v686
        %1965 = vmatpush.msra.mxu0 %v685
        %1966 = vmatpush.msra.mxu0 %v684
        %1967 = vmatpush.msra.mxu0 %v683
        %1968 = vmatpush.msra.mxu0 %v682
        %1969 = vmatpush.msra.mxu0 %v681
        %1970 = vmatpush.msra.mxu0 %v680
        %1971 = vmatpush.msra.mxu0 %v679
        %1972 = vmatpush.msra.mxu0 %v678
        %1973 = vmatpush.msra.mxu0 %v677
        %1974 = vmatpush.msra.mxu0 %v676
        %1975 = vmatpush.msra.mxu0 %v675
        %1976 = vmatpush.msra.mxu0 %v674
        %1977 = vmatpush.msra.mxu0 %v673
        %1978 = vmatmul.f32.gmra.mxu0 %v1332
        %v1979 = vpop.f32.mrf.mxu0
        %v1980 = vadd.f32 %v1960, %v1979
        %1981 = vdwg.mxu0
        %1982 = vmatpush.msra.mxu0 %v704
        %1983 = vmatpush.msra.mxu0 %v703
        %1984 = vmatpush.msra.mxu0 %v702
        %1985 = vmatpush.msra.mxu0 %v701
        %1986 = vmatpush.msra.mxu0 %v700
        %1987 = vmatpush.msra.mxu0 %v699
        %1988 = vmatpush.msra.mxu0 %v698
        %1989 = vmatpush.msra.mxu0 %v697
        %1990 = vmatpush.msra.mxu0 %v696
        %1991 = vmatpush.msra.mxu0 %v695
        %1992 = vmatpush.msra.mxu0 %v694
        %1993 = vmatpush.msra.mxu0 %v693
        %1994 = vmatpush.msra.mxu0 %v692
        %1995 = vmatpush.msra.mxu0 %v691
        %1996 = vmatpush.msra.mxu0 %v690
        %1997 = vmatpush.msra.mxu0 %v689
        %1998 = vmatmul.f32.gmra.mxu0 %v1333
        %v1999 = vpop.f32.mrf.mxu0
        %v2000 = vadd.f32 %v1980, %v1999
        %2001 = vdwg.mxu0
        %2002 = vmatpush.msra.mxu0 %v720
        %2003 = vmatpush.msra.mxu0 %v719
        %2004 = vmatpush.msra.mxu0 %v718
        %2005 = vmatpush.msra.mxu0 %v717
        %2006 = vmatpush.msra.mxu0 %v716
        %2007 = vmatpush.msra.mxu0 %v715
        %2008 = vmatpush.msra.mxu0 %v714
        %2009 = vmatpush.msra.mxu0 %v713
        %2010 = vmatpush.msra.mxu0 %v712
        %2011 = vmatpush.msra.mxu0 %v711
        %2012 = vmatpush.msra.mxu0 %v710
        %2013 = vmatpush.msra.mxu0 %v709
        %2014 = vmatpush.msra.mxu0 %v708
        %2015 = vmatpush.msra.mxu0 %v707
        %2016 = vmatpush.msra.mxu0 %v706
        %2017 = vmatpush.msra.mxu0 %v705
        %2018 = vmatmul.f32.gmra.mxu0 %v1334
        %v2019 = vpop.f32.mrf.mxu0
        %v2020 = vadd.f32 %v2000, %v2019
        %2021 = vdwg.mxu0
        %2022 = vmatpush.msra.mxu0 %v736
        %2023 = vmatpush.msra.mxu0 %v735
        %2024 = vmatpush.msra.mxu0 %v734
        %2025 = vmatpush.msra.mxu0 %v733
        %2026 = vmatpush.msra.mxu0 %v732
        %2027 = vmatpush.msra.mxu0 %v731
        %2028 = vmatpush.msra.mxu0 %v730
        %2029 = vmatpush.msra.mxu0 %v729
        %2030 = vmatpush.msra.mxu0 %v728
        %2031 = vmatpush.msra.mxu0 %v727
        %2032 = vmatpush.msra.mxu0 %v726
        %2033 = vmatpush.msra.mxu0 %v725
        %2034 = vmatpush.msra.mxu0 %v724
        %2035 = vmatpush.msra.mxu0 %v723
        %2036 = vmatpush.msra.mxu0 %v722
        %2037 = vmatpush.msra.mxu0 %v721
        %2038 = vmatmul.f32.gmra.mxu0 %v1335
        %v2039 = vpop.f32.mrf.mxu0
        %v2040 = vadd.f32 %v2020, %v2039
        %2041 = vdwg.mxu0
        %2042 = vmatpush.msra.mxu0 %v752
        %2043 = vmatpush.msra.mxu0 %v751
        %2044 = vmatpush.msra.mxu0 %v750
        %2045 = vmatpush.msra.mxu0 %v749
        %2046 = vmatpush.msra.mxu0 %v748
        %2047 = vmatpush.msra.mxu0 %v747
        %2048 = vmatpush.msra.mxu0 %v746
        %2049 = vmatpush.msra.mxu0 %v745
        %2050 = vmatpush.msra.mxu0 %v744
        %2051 = vmatpush.msra.mxu0 %v743
        %2052 = vmatpush.msra.mxu0 %v742
        %2053 = vmatpush.msra.mxu0 %v741
        %2054 = vmatpush.msra.mxu0 %v740
        %2055 = vmatpush.msra.mxu0 %v739
        %2056 = vmatpush.msra.mxu0 %v738
        %2057 = vmatpush.msra.mxu0 %v737
        %2058 = vmatmul.f32.gmra.mxu0 %v1336
        %v2059 = vpop.f32.mrf.mxu0
        %v2060 = vadd.f32 %v2040, %v2059
        %2061 = vdwg.mxu0
        %2062 = vmatpush.msra.mxu0 %v768
        %2063 = vmatpush.msra.mxu0 %v767
        %2064 = vmatpush.msra.mxu0 %v766
        %2065 = vmatpush.msra.mxu0 %v765
        %2066 = vmatpush.msra.mxu0 %v764
        %2067 = vmatpush.msra.mxu0 %v763
        %2068 = vmatpush.msra.mxu0 %v762
        %2069 = vmatpush.msra.mxu0 %v761
        %2070 = vmatpush.msra.mxu0 %v760
        %2071 = vmatpush.msra.mxu0 %v759
        %2072 = vmatpush.msra.mxu0 %v758
        %2073 = vmatpush.msra.mxu0 %v757
        %2074 = vmatpush.msra.mxu0 %v756
        %2075 = vmatpush.msra.mxu0 %v755
        %2076 = vmatpush.msra.mxu0 %v754
        %2077 = vmatpush.msra.mxu0 %v753
        %2078 = vmatmul.f32.gmra.mxu0 %v1337
        %v2079 = vpop.f32.mrf.mxu0
        %v2080 = vadd.f32 %v2060, %v2079
        %2081 = vdwg.mxu0
        %2082 = vmatpush.msra.mxu0 %v784
        %2083 = vmatpush.msra.mxu0 %v783
        %2084 = vmatpush.msra.mxu0 %v782
        %2085 = vmatpush.msra.mxu0 %v781
        %2086 = vmatpush.msra.mxu0 %v780
        %2087 = vmatpush.msra.mxu0 %v779
        %2088 = vmatpush.msra.mxu0 %v778
        %2089 = vmatpush.msra.mxu0 %v777
        %2090 = vmatpush.msra.mxu0 %v776
        %2091 = vmatpush.msra.mxu0 %v775
        %2092 = vmatpush.msra.mxu0 %v774
        %2093 = vmatpush.msra.mxu0 %v773
        %2094 = vmatpush.msra.mxu0 %v772
        %2095 = vmatpush.msra.mxu0 %v771
        %2096 = vmatpush.msra.mxu0 %v770
        %2097 = vmatpush.msra.mxu0 %v769
        %2098 = vmatmul.f32.gmra.mxu0 %v1340
        %v2099 = vpop.f32.mrf.mxu0
        %v2100 = vadd.f32 %v2080, %v2099
        %2101 = vdwg.mxu0
        %2102 = vmatpush.msra.mxu0 %v800
        %2103 = vmatpush.msra.mxu0 %v799
        %2104 = vmatpush.msra.mxu0 %v798
        %2105 = vmatpush.msra.mxu0 %v797
        %2106 = vmatpush.msra.mxu0 %v796
        %2107 = vmatpush.msra.mxu0 %v795
        %2108 = vmatpush.msra.mxu0 %v794
        %2109 = vmatpush.msra.mxu0 %v793
        %2110 = vmatpush.msra.mxu0 %v792
        %2111 = vmatpush.msra.mxu0 %v791
        %2112 = vmatpush.msra.mxu0 %v790
        %2113 = vmatpush.msra.mxu0 %v789
        %2114 = vmatpush.msra.mxu0 %v788
        %2115 = vmatpush.msra.mxu0 %v787
        %2116 = vmatpush.msra.mxu0 %v786
        %2117 = vmatpush.msra.mxu0 %v785
        %2118 = vmatmul.f32.gmra.mxu0 %v1341
        %v2119 = vpop.f32.mrf.mxu0
        %v2120 = vadd.f32 %v2100, %v2119
        %2121 = vdwg.mxu0
        %2122 = vmatpush.msra.mxu0 %v816
        %2123 = vmatpush.msra.mxu0 %v815
        %2124 = vmatpush.msra.mxu0 %v814
        %2125 = vmatpush.msra.mxu0 %v813
        %2126 = vmatpush.msra.mxu0 %v812
        %2127 = vmatpush.msra.mxu0 %v811
        %2128 = vmatpush.msra.mxu0 %v810
        %2129 = vmatpush.msra.mxu0 %v809
        %2130 = vmatpush.msra.mxu0 %v808
        %2131 = vmatpush.msra.mxu0 %v807
        %2132 = vmatpush.msra.mxu0 %v806
        %2133 = vmatpush.msra.mxu0 %v805
        %2134 = vmatpush.msra.mxu0 %v804
        %2135 = vmatpush.msra.mxu0 %v803
        %2136 = vmatpush.msra.mxu0 %v802
        %2137 = vmatpush.msra.mxu0 %v801
        %2138 = vmatmul.f32.gmra.mxu0 %v1342
        %v2139 = vpop.f32.mrf.mxu0
        %v2140 = vadd.f32 %v2120, %v2139
        %2141 = vdwg.mxu0
        %2142 = vmatpush.msra.mxu0 %v832
        %2143 = vmatpush.msra.mxu0 %v831
        %2144 = vmatpush.msra.mxu0 %v830
        %2145 = vmatpush.msra.mxu0 %v829
        %2146 = vmatpush.msra.mxu0 %v828
        %2147 = vmatpush.msra.mxu0 %v827
        %2148 = vmatpush.msra.mxu0 %v826
        %2149 = vmatpush.msra.mxu0 %v825
        %2150 = vmatpush.msra.mxu0 %v824
        %2151 = vmatpush.msra.mxu0 %v823
        %2152 = vmatpush.msra.mxu0 %v822
        %2153 = vmatpush.msra.mxu0 %v821
        %2154 = vmatpush.msra.mxu0 %v820
        %2155 = vmatpush.msra.mxu0 %v819
        %2156 = vmatpush.msra.mxu0 %v818
        %2157 = vmatpush.msra.mxu0 %v817
        %2158 = vmatmul.f32.gmra.mxu0 %v1343
        %v2159 = vpop.f32.mrf.mxu0
        %v2160 = vadd.f32 %v2140, %v2159
        %2161 = vdwg.mxu0
        %2162 = vmatpush.msra.mxu0 %v848
        %2163 = vmatpush.msra.mxu0 %v847
        %2164 = vmatpush.msra.mxu0 %v846
        %2165 = vmatpush.msra.mxu0 %v845
        %2166 = vmatpush.msra.mxu0 %v844
        %2167 = vmatpush.msra.mxu0 %v843
        %2168 = vmatpush.msra.mxu0 %v842
        %2169 = vmatpush.msra.mxu0 %v841
        %2170 = vmatpush.msra.mxu0 %v840
        %2171 = vmatpush.msra.mxu0 %v839
        %2172 = vmatpush.msra.mxu0 %v838
        %2173 = vmatpush.msra.mxu0 %v837
        %2174 = vmatpush.msra.mxu0 %v836
        %2175 = vmatpush.msra.mxu0 %v835
        %2176 = vmatpush.msra.mxu0 %v834
        %2177 = vmatpush.msra.mxu0 %v833
        %2178 = vmatmul.f32.gmra.mxu0 %v1344
        %v2179 = vpop.f32.mrf.mxu0
        %v2180 = vadd.f32 %v2160, %v2179
        %2181 = vdwg.mxu0
        %2182 = vmatpush.msra.mxu0 %v864
        %2183 = vmatpush.msra.mxu0 %v863
        %2184 = vmatpush.msra.mxu0 %v862
        %2185 = vmatpush.msra.mxu0 %v861
        %2186 = vmatpush.msra.mxu0 %v860
        %2187 = vmatpush.msra.mxu0 %v859
        %2188 = vmatpush.msra.mxu0 %v858
        %2189 = vmatpush.msra.mxu0 %v857
        %2190 = vmatpush.msra.mxu0 %v856
        %2191 = vmatpush.msra.mxu0 %v855
        %2192 = vmatpush.msra.mxu0 %v854
        %2193 = vmatpush.msra.mxu0 %v853
        %2194 = vmatpush.msra.mxu0 %v852
        %2195 = vmatpush.msra.mxu0 %v851
        %2196 = vmatpush.msra.mxu0 %v850
        %2197 = vmatpush.msra.mxu0 %v849
        %2198 = vmatmul.f32.gmra.mxu0 %v1345
        %v2199 = vpop.f32.mrf.mxu0
        %v2200 = vadd.f32 %v2180, %v2199
        %2201 = vdwg.mxu0
        %2202 = vmatpush.msra.mxu0 %v880
        %2203 = vmatpush.msra.mxu0 %v879
        %2204 = vmatpush.msra.mxu0 %v878
        %2205 = vmatpush.msra.mxu0 %v877
        %2206 = vmatpush.msra.mxu0 %v876
        %2207 = vmatpush.msra.mxu0 %v875
        %2208 = vmatpush.msra.mxu0 %v874
        %2209 = vmatpush.msra.mxu0 %v873
        %2210 = vmatpush.msra.mxu0 %v872
        %2211 = vmatpush.msra.mxu0 %v871
        %2212 = vmatpush.msra.mxu0 %v870
        %2213 = vmatpush.msra.mxu0 %v869
        %2214 = vmatpush.msra.mxu0 %v868
        %2215 = vmatpush.msra.mxu0 %v867
        %2216 = vmatpush.msra.mxu0 %v866
        %2217 = vmatpush.msra.mxu0 %v865
        %2218 = vmatmul.f32.gmra.mxu0 %v1346
        %v2219 = vpop.f32.mrf.mxu0
        %v2220 = vadd.f32 %v2200, %v2219
        %2221 = vdwg.mxu0
        %2222 = vmatpush.msra.mxu0 %v896
        %2223 = vmatpush.msra.mxu0 %v895
        %2224 = vmatpush.msra.mxu0 %v894
        %2225 = vmatpush.msra.mxu0 %v893
        %2226 = vmatpush.msra.mxu0 %v892
        %2227 = vmatpush.msra.mxu0 %v891
        %2228 = vmatpush.msra.mxu0 %v890
        %2229 = vmatpush.msra.mxu0 %v889
        %2230 = vmatpush.msra.mxu0 %v888
        %2231 = vmatpush.msra.mxu0 %v887
        %2232 = vmatpush.msra.mxu0 %v886
        %2233 = vmatpush.msra.mxu0 %v885
        %2234 = vmatpush.msra.mxu0 %v884
        %2235 = vmatpush.msra.mxu0 %v883
        %2236 = vmatpush.msra.mxu0 %v882
        %2237 = vmatpush.msra.mxu0 %v881
        %2238 = vmatmul.f32.gmra.mxu0 %v1347
        %v2239 = vpop.f32.mrf.mxu0
        %v2240 = vadd.f32 %v2220, %v2239
        %2241 = vdwg.mxu0
        %2242 = vmatpush.msra.mxu0 %v912
        %2243 = vmatpush.msra.mxu0 %v911
        %2244 = vmatpush.msra.mxu0 %v910
        %2245 = vmatpush.msra.mxu0 %v909
        %2246 = vmatpush.msra.mxu0 %v908
        %2247 = vmatpush.msra.mxu0 %v907
        %2248 = vmatpush.msra.mxu0 %v906
        %2249 = vmatpush.msra.mxu0 %v905
        %2250 = vmatpush.msra.mxu0 %v904
        %2251 = vmatpush.msra.mxu0 %v903
        %2252 = vmatpush.msra.mxu0 %v902
        %2253 = vmatpush.msra.mxu0 %v901
        %2254 = vmatpush.msra.mxu0 %v900
        %2255 = vmatpush.msra.mxu0 %v899
        %2256 = vmatpush.msra.mxu0 %v898
        %2257 = vmatpush.msra.mxu0 %v897
        %2258 = vmatmul.f32.gmra.mxu0 %v1350
        %v2259 = vpop.f32.mrf.mxu0
        %v2260 = vadd.f32 %v2240, %v2259
        %2261 = vdwg.mxu0
        %2262 = vmatpush.msra.mxu0 %v928
        %2263 = vmatpush.msra.mxu0 %v927
        %2264 = vmatpush.msra.mxu0 %v926
        %2265 = vmatpush.msra.mxu0 %v925
        %2266 = vmatpush.msra.mxu0 %v924
        %2267 = vmatpush.msra.mxu0 %v923
        %2268 = vmatpush.msra.mxu0 %v922
        %2269 = vmatpush.msra.mxu0 %v921
        %2270 = vmatpush.msra.mxu0 %v920
        %2271 = vmatpush.msra.mxu0 %v919
        %2272 = vmatpush.msra.mxu0 %v918
        %2273 = vmatpush.msra.mxu0 %v917
        %2274 = vmatpush.msra.mxu0 %v916
        %2275 = vmatpush.msra.mxu0 %v915
        %2276 = vmatpush.msra.mxu0 %v914
        %2277 = vmatpush.msra.mxu0 %v913
        %2278 = vmatmul.f32.gmra.mxu0 %v1351
        %v2279 = vpop.f32.mrf.mxu0
        %v2280 = vadd.f32 %v2260, %v2279
        %2281 = vdwg.mxu0
        %2282 = vmatpush.msra.mxu0 %v944
        %2283 = vmatpush.msra.mxu0 %v943
        %2284 = vmatpush.msra.mxu0 %v942
        %2285 = vmatpush.msra.mxu0 %v941
        %2286 = vmatpush.msra.mxu0 %v940
        %2287 = vmatpush.msra.mxu0 %v939
        %2288 = vmatpush.msra.mxu0 %v938
        %2289 = vmatpush.msra.mxu0 %v937
        %2290 = vmatpush.msra.mxu0 %v936
        %2291 = vmatpush.msra.mxu0 %v935
        %2292 = vmatpush.msra.mxu0 %v934
        %2293 = vmatpush.msra.mxu0 %v933
        %2294 = vmatpush.msra.mxu0 %v932
        %2295 = vmatpush.msra.mxu0 %v931
        %2296 = vmatpush.msra.mxu0 %v930
        %2297 = vmatpush.msra.mxu0 %v929
        %2298 = vmatmul.f32.gmra.mxu0 %v1352
        %v2299 = vpop.f32.mrf.mxu0
        %v2300 = vadd.f32 %v2280, %v2299
        %2301 = vdwg.mxu0
        %2302 = vmatpush.msra.mxu0 %v960
        %2303 = vmatpush.msra.mxu0 %v959
        %2304 = vmatpush.msra.mxu0 %v958
        %2305 = vmatpush.msra.mxu0 %v957
        %2306 = vmatpush.msra.mxu0 %v956
        %2307 = vmatpush.msra.mxu0 %v955
        %2308 = vmatpush.msra.mxu0 %v954
        %2309 = vmatpush.msra.mxu0 %v953
        %2310 = vmatpush.msra.mxu0 %v952
        %2311 = vmatpush.msra.mxu0 %v951
        %2312 = vmatpush.msra.mxu0 %v950
        %2313 = vmatpush.msra.mxu0 %v949
        %2314 = vmatpush.msra.mxu0 %v948
        %2315 = vmatpush.msra.mxu0 %v947
        %2316 = vmatpush.msra.mxu0 %v946
        %2317 = vmatpush.msra.mxu0 %v945
        %2318 = vmatmul.f32.gmra.mxu0 %v1353
        %v2319 = vpop.f32.mrf.mxu0
        %v2320 = vadd.f32 %v2300, %v2319
        %2321 = vdwg.mxu0
        %2322 = vmatpush.msra.mxu0 %v976
        %2323 = vmatpush.msra.mxu0 %v975
        %2324 = vmatpush.msra.mxu0 %v974
        %2325 = vmatpush.msra.mxu0 %v973
        %2326 = vmatpush.msra.mxu0 %v972
        %2327 = vmatpush.msra.mxu0 %v971
        %2328 = vmatpush.msra.mxu0 %v970
        %2329 = vmatpush.msra.mxu0 %v969
        %2330 = vmatpush.msra.mxu0 %v968
        %2331 = vmatpush.msra.mxu0 %v967
        %2332 = vmatpush.msra.mxu0 %v966
        %2333 = vmatpush.msra.mxu0 %v965
        %2334 = vmatpush.msra.mxu0 %v964
        %2335 = vmatpush.msra.mxu0 %v963
        %2336 = vmatpush.msra.mxu0 %v962
        %2337 = vmatpush.msra.mxu0 %v961
        %2338 = vmatmul.f32.gmra.mxu0 %v1354
        %v2339 = vpop.f32.mrf.mxu0
        %v2340 = vadd.f32 %v2320, %v2339
        %2341 = vdwg.mxu0
        %2342 = vmatpush.msra.mxu0 %v992
        %2343 = vmatpush.msra.mxu0 %v991
        %2344 = vmatpush.msra.mxu0 %v990
        %2345 = vmatpush.msra.mxu0 %v989
        %2346 = vmatpush.msra.mxu0 %v988
        %2347 = vmatpush.msra.mxu0 %v987
        %2348 = vmatpush.msra.mxu0 %v986
        %2349 = vmatpush.msra.mxu0 %v985
        %2350 = vmatpush.msra.mxu0 %v984
        %2351 = vmatpush.msra.mxu0 %v983
        %2352 = vmatpush.msra.mxu0 %v982
        %2353 = vmatpush.msra.mxu0 %v981
        %2354 = vmatpush.msra.mxu0 %v980
        %2355 = vmatpush.msra.mxu0 %v979
        %2356 = vmatpush.msra.mxu0 %v978
        %2357 = vmatpush.msra.mxu0 %v977
        %2358 = vmatmul.f32.gmra.mxu0 %v1355
        %v2359 = vpop.f32.mrf.mxu0
        %v2360 = vadd.f32 %v2340, %v2359
        %2361 = vdwg.mxu0
        %2362 = vmatpush.msra.mxu0 %v1008
        %2363 = vmatpush.msra.mxu0 %v1007
        %2364 = vmatpush.msra.mxu0 %v1006
        %2365 = vmatpush.msra.mxu0 %v1005
        %2366 = vmatpush.msra.mxu0 %v1004
        %2367 = vmatpush.msra.mxu0 %v1003
        %2368 = vmatpush.msra.mxu0 %v1002
        %2369 = vmatpush.msra.mxu0 %v1001
        %2370 = vmatpush.msra.mxu0 %v1000
        %2371 = vmatpush.msra.mxu0 %v999
        %2372 = vmatpush.msra.mxu0 %v998
        %2373 = vmatpush.msra.mxu0 %v997
        %2374 = vmatpush.msra.mxu0 %v996
        %2375 = vmatpush.msra.mxu0 %v995
        %2376 = vmatpush.msra.mxu0 %v994
        %2377 = vmatpush.msra.mxu0 %v993
        %2378 = vmatmul.f32.gmra.mxu0 %v1356
        %v2379 = vpop.f32.mrf.mxu0
        %v2380 = vadd.f32 %v2360, %v2379
        %2381 = vdwg.mxu0
        %2382 = vmatpush.msra.mxu0 %v1024
        %2383 = vmatpush.msra.mxu0 %v1023
        %2384 = vmatpush.msra.mxu0 %v1022
        %2385 = vmatpush.msra.mxu0 %v1021
        %2386 = vmatpush.msra.mxu0 %v1020
        %2387 = vmatpush.msra.mxu0 %v1019
        %2388 = vmatpush.msra.mxu0 %v1018
        %2389 = vmatpush.msra.mxu0 %v1017
        %2390 = vmatpush.msra.mxu0 %v1016
        %2391 = vmatpush.msra.mxu0 %v1015
        %2392 = vmatpush.msra.mxu0 %v1014
        %2393 = vmatpush.msra.mxu0 %v1013
        %2394 = vmatpush.msra.mxu0 %v1012
        %2395 = vmatpush.msra.mxu0 %v1011
        %2396 = vmatpush.msra.mxu0 %v1010
        %2397 = vmatpush.msra.mxu0 %v1009
        %2398 = vmatmul.f32.gmra.mxu0 %v1357
        %v2399 = vpop.f32.mrf.mxu0
        %v2400 = vadd.f32 %v2380, %v2399
        %2401 = vdwg.mxu0
        %2402 = vmatpush.msra.mxu0 %v1040
        %2403 = vmatpush.msra.mxu0 %v1039
        %2404 = vmatpush.msra.mxu0 %v1038
        %2405 = vmatpush.msra.mxu0 %v1037
        %2406 = vmatpush.msra.mxu0 %v1036
        %2407 = vmatpush.msra.mxu0 %v1035
        %2408 = vmatpush.msra.mxu0 %v1034
        %2409 = vmatpush.msra.mxu0 %v1033
        %2410 = vmatpush.msra.mxu0 %v1032
        %2411 = vmatpush.msra.mxu0 %v1031
        %2412 = vmatpush.msra.mxu0 %v1030
        %2413 = vmatpush.msra.mxu0 %v1029
        %2414 = vmatpush.msra.mxu0 %v1028
        %2415 = vmatpush.msra.mxu0 %v1027
        %2416 = vmatpush.msra.mxu0 %v1026
        %2417 = vmatpush.msra.mxu0 %v1025
        %2418 = vmatmul.f32.gmra.mxu0 %v1360
        %v2419 = vpop.f32.mrf.mxu0
        %v2420 = vadd.f32 %v2400, %v2419
        %2421 = vdwg.mxu0
        %2422 = vmatpush.msra.mxu0 %v1056
        %2423 = vmatpush.msra.mxu0 %v1055
        %2424 = vmatpush.msra.mxu0 %v1054
        %2425 = vmatpush.msra.mxu0 %v1053
        %2426 = vmatpush.msra.mxu0 %v1052
        %2427 = vmatpush.msra.mxu0 %v1051
        %2428 = vmatpush.msra.mxu0 %v1050
        %2429 = vmatpush.msra.mxu0 %v1049
        %2430 = vmatpush.msra.mxu0 %v1048
        %2431 = vmatpush.msra.mxu0 %v1047
        %2432 = vmatpush.msra.mxu0 %v1046
        %2433 = vmatpush.msra.mxu0 %v1045
        %2434 = vmatpush.msra.mxu0 %v1044
        %2435 = vmatpush.msra.mxu0 %v1043
        %2436 = vmatpush.msra.mxu0 %v1042
        %2437 = vmatpush.msra.mxu0 %v1041
        %2438 = vmatmul.f32.gmra.mxu0 %v1361
        %v2439 = vpop.f32.mrf.mxu0
        %v2440 = vadd.f32 %v2420, %v2439
        %2441 = vdwg.mxu0
        %2442 = vmatpush.msra.mxu0 %v1072
        %2443 = vmatpush.msra.mxu0 %v1071
        %2444 = vmatpush.msra.mxu0 %v1070
        %2445 = vmatpush.msra.mxu0 %v1069
        %2446 = vmatpush.msra.mxu0 %v1068
        %2447 = vmatpush.msra.mxu0 %v1067
        %2448 = vmatpush.msra.mxu0 %v1066
        %2449 = vmatpush.msra.mxu0 %v1065
        %2450 = vmatpush.msra.mxu0 %v1064
        %2451 = vmatpush.msra.mxu0 %v1063
        %2452 = vmatpush.msra.mxu0 %v1062
        %2453 = vmatpush.msra.mxu0 %v1061
        %2454 = vmatpush.msra.mxu0 %v1060
        %2455 = vmatpush.msra.mxu0 %v1059
        %2456 = vmatpush.msra.mxu0 %v1058
        %2457 = vmatpush.msra.mxu0 %v1057
        %2458 = vmatmul.f32.gmra.mxu0 %v1362
        %v2459 = vpop.f32.mrf.mxu0
        %v2460 = vadd.f32 %v2440, %v2459
        %2461 = vdwg.mxu0
        %2462 = vmatpush.msra.mxu0 %v1088
        %2463 = vmatpush.msra.mxu0 %v1087
        %2464 = vmatpush.msra.mxu0 %v1086
        %2465 = vmatpush.msra.mxu0 %v1085
        %2466 = vmatpush.msra.mxu0 %v1084
        %2467 = vmatpush.msra.mxu0 %v1083
        %2468 = vmatpush.msra.mxu0 %v1082
        %2469 = vmatpush.msra.mxu0 %v1081
        %2470 = vmatpush.msra.mxu0 %v1080
        %2471 = vmatpush.msra.mxu0 %v1079
        %2472 = vmatpush.msra.mxu0 %v1078
        %2473 = vmatpush.msra.mxu0 %v1077
        %2474 = vmatpush.msra.mxu0 %v1076
        %2475 = vmatpush.msra.mxu0 %v1075
        %2476 = vmatpush.msra.mxu0 %v1074
        %2477 = vmatpush.msra.mxu0 %v1073
        %2478 = vmatmul.f32.gmra.mxu0 %v1363
        %v2479 = vpop.f32.mrf.mxu0
        %v2480 = vadd.f32 %v2460, %v2479
        %2481 = vdwg.mxu0
        %2482 = vmatpush.msra.mxu0 %v1104
        %2483 = vmatpush.msra.mxu0 %v1103
        %2484 = vmatpush.msra.mxu0 %v1102
        %2485 = vmatpush.msra.mxu0 %v1101
        %2486 = vmatpush.msra.mxu0 %v1100
        %2487 = vmatpush.msra.mxu0 %v1099
        %2488 = vmatpush.msra.mxu0 %v1098
        %2489 = vmatpush.msra.mxu0 %v1097
        %2490 = vmatpush.msra.mxu0 %v1096
        %2491 = vmatpush.msra.mxu0 %v1095
        %2492 = vmatpush.msra.mxu0 %v1094
        %2493 = vmatpush.msra.mxu0 %v1093
        %2494 = vmatpush.msra.mxu0 %v1092
        %2495 = vmatpush.msra.mxu0 %v1091
        %2496 = vmatpush.msra.mxu0 %v1090
        %2497 = vmatpush.msra.mxu0 %v1089
        %2498 = vmatmul.f32.gmra.mxu0 %v1364
        %v2499 = vpop.f32.mrf.mxu0
        %v2500 = vadd.f32 %v2480, %v2499
        %2501 = vdwg.mxu0
        %2502 = vmatpush.msra.mxu0 %v1120
        %2503 = vmatpush.msra.mxu0 %v1119
        %2504 = vmatpush.msra.mxu0 %v1118
        %2505 = vmatpush.msra.mxu0 %v1117
        %2506 = vmatpush.msra.mxu0 %v1116
        %2507 = vmatpush.msra.mxu0 %v1115
        %2508 = vmatpush.msra.mxu0 %v1114
        %2509 = vmatpush.msra.mxu0 %v1113
        %2510 = vmatpush.msra.mxu0 %v1112
        %2511 = vmatpush.msra.mxu0 %v1111
        %2512 = vmatpush.msra.mxu0 %v1110
        %2513 = vmatpush.msra.mxu0 %v1109
        %2514 = vmatpush.msra.mxu0 %v1108
        %2515 = vmatpush.msra.mxu0 %v1107
        %2516 = vmatpush.msra.mxu0 %v1106
        %2517 = vmatpush.msra.mxu0 %v1105
        %2518 = vmatmul.f32.gmra.mxu0 %v1365
        %v2519 = vpop.f32.mrf.mxu0
        %v2520 = vadd.f32 %v2500, %v2519
        %2521 = vdwg.mxu0
        %2522 = vmatpush.msra.mxu0 %v1136
        %2523 = vmatpush.msra.mxu0 %v1135
        %2524 = vmatpush.msra.mxu0 %v1134
        %2525 = vmatpush.msra.mxu0 %v1133
        %2526 = vmatpush.msra.mxu0 %v1132
        %2527 = vmatpush.msra.mxu0 %v1131
        %2528 = vmatpush.msra.mxu0 %v1130
        %2529 = vmatpush.msra.mxu0 %v1129
        %2530 = vmatpush.msra.mxu0 %v1128
        %2531 = vmatpush.msra.mxu0 %v1127
        %2532 = vmatpush.msra.mxu0 %v1126
        %2533 = vmatpush.msra.mxu0 %v1125
        %2534 = vmatpush.msra.mxu0 %v1124
        %2535 = vmatpush.msra.mxu0 %v1123
        %2536 = vmatpush.msra.mxu0 %v1122
        %2537 = vmatpush.msra.mxu0 %v1121
        %2538 = vmatmul.f32.gmra.mxu0 %v1366
        %v2539 = vpop.f32.mrf.mxu0
        %v2540 = vadd.f32 %v2520, %v2539
        %2541 = vdwg.mxu0
        %2542 = vmatpush.msra.mxu0 %v1152
        %2543 = vmatpush.msra.mxu0 %v1151
        %2544 = vmatpush.msra.mxu0 %v1150
        %2545 = vmatpush.msra.mxu0 %v1149
        %2546 = vmatpush.msra.mxu0 %v1148
        %2547 = vmatpush.msra.mxu0 %v1147
        %2548 = vmatpush.msra.mxu0 %v1146
        %2549 = vmatpush.msra.mxu0 %v1145
        %2550 = vmatpush.msra.mxu0 %v1144
        %2551 = vmatpush.msra.mxu0 %v1143
        %2552 = vmatpush.msra.mxu0 %v1142
        %2553 = vmatpush.msra.mxu0 %v1141
        %2554 = vmatpush.msra.mxu0 %v1140
        %2555 = vmatpush.msra.mxu0 %v1139
        %2556 = vmatpush.msra.mxu0 %v1138
        %2557 = vmatpush.msra.mxu0 %v1137
        %2558 = vmatmul.f32.gmra.mxu0 %v1367
        %v2559 = vpop.f32.mrf.mxu0
        %v2560 = vadd.f32 %v2540, %v2559
        %2561 = vdwg.mxu0
        %2562 = vmatpush.msra.mxu0 %v1168
        %2563 = vmatpush.msra.mxu0 %v1167
        %2564 = vmatpush.msra.mxu0 %v1166
        %2565 = vmatpush.msra.mxu0 %v1165
        %2566 = vmatpush.msra.mxu0 %v1164
        %2567 = vmatpush.msra.mxu0 %v1163
        %2568 = vmatpush.msra.mxu0 %v1162
        %2569 = vmatpush.msra.mxu0 %v1161
        %2570 = vmatpush.msra.mxu0 %v1160
        %2571 = vmatpush.msra.mxu0 %v1159
        %2572 = vmatpush.msra.mxu0 %v1158
        %2573 = vmatpush.msra.mxu0 %v1157
        %2574 = vmatpush.msra.mxu0 %v1156
        %2575 = vmatpush.msra.mxu0 %v1155
        %2576 = vmatpush.msra.mxu0 %v1154
        %2577 = vmatpush.msra.mxu0 %v1153
        %2578 = vmatmul.f32.gmra.mxu0 %v1370
        %v2579 = vpop.f32.mrf.mxu0
        %v2580 = vadd.f32 %v2560, %v2579
        %2581 = vdwg.mxu0
        %2582 = vmatpush.msra.mxu0 %v1184
        %2583 = vmatpush.msra.mxu0 %v1183
        %2584 = vmatpush.msra.mxu0 %v1182
        %2585 = vmatpush.msra.mxu0 %v1181
        %2586 = vmatpush.msra.mxu0 %v1180
        %2587 = vmatpush.msra.mxu0 %v1179
        %2588 = vmatpush.msra.mxu0 %v1178
        %2589 = vmatpush.msra.mxu0 %v1177
        %2590 = vmatpush.msra.mxu0 %v1176
        %2591 = vmatpush.msra.mxu0 %v1175
        %2592 = vmatpush.msra.mxu0 %v1174
        %2593 = vmatpush.msra.mxu0 %v1173
        %2594 = vmatpush.msra.mxu0 %v1172
        %2595 = vmatpush.msra.mxu0 %v1171
        %2596 = vmatpush.msra.mxu0 %v1170
        %2597 = vmatpush.msra.mxu0 %v1169
        %2598 = vmatmul.f32.gmra.mxu0 %v1371
        %v2599 = vpop.f32.mrf.mxu0
        %v2600 = vadd.f32 %v2580, %v2599
        %2601 = vdwg.mxu0
        %2602 = vmatpush.msra.mxu0 %v1200
        %2603 = vmatpush.msra.mxu0 %v1199
        %2604 = vmatpush.msra.mxu0 %v1198
        %2605 = vmatpush.msra.mxu0 %v1197
        %2606 = vmatpush.msra.mxu0 %v1196
        %2607 = vmatpush.msra.mxu0 %v1195
        %2608 = vmatpush.msra.mxu0 %v1194
        %2609 = vmatpush.msra.mxu0 %v1193
        %2610 = vmatpush.msra.mxu0 %v1192
        %2611 = vmatpush.msra.mxu0 %v1191
        %2612 = vmatpush.msra.mxu0 %v1190
        %2613 = vmatpush.msra.mxu0 %v1189
        %2614 = vmatpush.msra.mxu0 %v1188
        %2615 = vmatpush.msra.mxu0 %v1187
        %2616 = vmatpush.msra.mxu0 %v1186
        %2617 = vmatpush.msra.mxu0 %v1185
        %2618 = vmatmul.f32.gmra.mxu0 %v1372
        %v2619 = vpop.f32.mrf.mxu0
        %v2620 = vadd.f32 %v2600, %v2619
        %2621 = vdwg.mxu0
        %2622 = vmatpush.msra.mxu0 %v1216
        %2623 = vmatpush.msra.mxu0 %v1215
        %2624 = vmatpush.msra.mxu0 %v1214
        %2625 = vmatpush.msra.mxu0 %v1213
        %2626 = vmatpush.msra.mxu0 %v1212
        %2627 = vmatpush.msra.mxu0 %v1211
        %2628 = vmatpush.msra.mxu0 %v1210
        %2629 = vmatpush.msra.mxu0 %v1209
        %2630 = vmatpush.msra.mxu0 %v1208
        %2631 = vmatpush.msra.mxu0 %v1207
        %2632 = vmatpush.msra.mxu0 %v1206
        %2633 = vmatpush.msra.mxu0 %v1205
        %2634 = vmatpush.msra.mxu0 %v1204
        %2635 = vmatpush.msra.mxu0 %v1203
        %2636 = vmatpush.msra.mxu0 %v1202
        %2637 = vmatpush.msra.mxu0 %v1201
        %2638 = vmatmul.f32.gmra.mxu0 %v1373
        %v2639 = vpop.f32.mrf.mxu0
        %v2640 = vadd.f32 %v2620, %v2639
        %2641 = vdwg.mxu0
        %2642 = vmatpush.msra.mxu0 %v1232
        %2643 = vmatpush.msra.mxu0 %v1231
        %2644 = vmatpush.msra.mxu0 %v1230
        %2645 = vmatpush.msra.mxu0 %v1229
        %2646 = vmatpush.msra.mxu0 %v1228
        %2647 = vmatpush.msra.mxu0 %v1227
        %2648 = vmatpush.msra.mxu0 %v1226
        %2649 = vmatpush.msra.mxu0 %v1225
        %2650 = vmatpush.msra.mxu0 %v1224
        %2651 = vmatpush.msra.mxu0 %v1223
        %2652 = vmatpush.msra.mxu0 %v1222
        %2653 = vmatpush.msra.mxu0 %v1221
        %2654 = vmatpush.msra.mxu0 %v1220
        %2655 = vmatpush.msra.mxu0 %v1219
        %2656 = vmatpush.msra.mxu0 %v1218
        %2657 = vmatpush.msra.mxu0 %v1217
        %2658 = vmatmul.f32.gmra.mxu0 %v1374
        %v2659 = vpop.f32.mrf.mxu0
        %v2660 = vadd.f32 %v2640, %v2659
        %2661 = vdwg.mxu0
        %2662 = vmatpush.msra.mxu0 %v1248
        %2663 = vmatpush.msra.mxu0 %v1247
        %2664 = vmatpush.msra.mxu0 %v1246
        %2665 = vmatpush.msra.mxu0 %v1245
        %2666 = vmatpush.msra.mxu0 %v1244
        %2667 = vmatpush.msra.mxu0 %v1243
        %2668 = vmatpush.msra.mxu0 %v1242
        %2669 = vmatpush.msra.mxu0 %v1241
        %2670 = vmatpush.msra.mxu0 %v1240
        %2671 = vmatpush.msra.mxu0 %v1239
        %2672 = vmatpush.msra.mxu0 %v1238
        %2673 = vmatpush.msra.mxu0 %v1237
        %2674 = vmatpush.msra.mxu0 %v1236
        %2675 = vmatpush.msra.mxu0 %v1235
        %2676 = vmatpush.msra.mxu0 %v1234
        %2677 = vmatpush.msra.mxu0 %v1233
        %2678 = vmatmul.f32.gmra.mxu0 %v1375
        %v2679 = vpop.f32.mrf.mxu0
        %v2680 = vadd.f32 %v2660, %v2679
        %2681 = vdwg.mxu0
        %2682 = vmatpush.msra.mxu0 %v1264
        %2683 = vmatpush.msra.mxu0 %v1263
        %2684 = vmatpush.msra.mxu0 %v1262
        %2685 = vmatpush.msra.mxu0 %v1261
        %2686 = vmatpush.msra.mxu0 %v1260
        %2687 = vmatpush.msra.mxu0 %v1259
        %2688 = vmatpush.msra.mxu0 %v1258
        %2689 = vmatpush.msra.mxu0 %v1257
        %2690 = vmatpush.msra.mxu0 %v1256
        %2691 = vmatpush.msra.mxu0 %v1255
        %2692 = vmatpush.msra.mxu0 %v1254
        %2693 = vmatpush.msra.mxu0 %v1253
        %2694 = vmatpush.msra.mxu0 %v1252
        %2695 = vmatpush.msra.mxu0 %v1251
        %2696 = vmatpush.msra.mxu0 %v1250
        %2697 = vmatpush.msra.mxu0 %v1249
        %2698 = vmatmul.f32.gmra.mxu0 %v1376
        %v2699 = vpop.f32.mrf.mxu0
        %v2700 = vadd.f32 %v2680, %v2699
        %2701 = vdwg.mxu0
        %2702 = vmatpush.msra.mxu0 %v1280
        %2703 = vmatpush.msra.mxu0 %v1279
        %2704 = vmatpush.msra.mxu0 %v1278
        %2705 = vmatpush.msra.mxu0 %v1277
        %2706 = vmatpush.msra.mxu0 %v1276
        %2707 = vmatpush.msra.mxu0 %v1275
        %2708 = vmatpush.msra.mxu0 %v1274
        %2709 = vmatpush.msra.mxu0 %v1273
        %2710 = vmatpush.msra.mxu0 %v1272
        %2711 = vmatpush.msra.mxu0 %v1271
        %2712 = vmatpush.msra.mxu0 %v1270
        %2713 = vmatpush.msra.mxu0 %v1269
        %2714 = vmatpush.msra.mxu0 %v1268
        %2715 = vmatpush.msra.mxu0 %v1267
        %2716 = vmatpush.msra.mxu0 %v1266
        %2717 = vmatpush.msra.mxu0 %v1265
        %2718 = vmatmul.f32.gmra.mxu0 %v1377
        %v2719 = vpop.f32.mrf.mxu0
        %v2720 = vadd.f32 %v2700, %v2719
        %2721 = vdwg.mxu0
        %v2722 = vadd.f32 %v240, %v2720
        %2723 = vst [vmem:[#allocation2] sm:$0x3] %v2722
        %p2724 = scmp.eq.s32.totalorder %s17, 3
        // Predicated region
        $region45: #{simple_cnn_forward.5} parent=39 // pred_check
          %p2725 = pneg %p2724
        $region46: #{simple_cnn_forward.5} parent=39 // pred_check_branch
          %2727 = sbr.rel (%p2725) target = $region48
        $region47: #{simple_cnn_forward.5} parent=39 // pred_region
          %v2728 = vld [vmem:[#allocation2] sm:$0x3]
          %v2729 = vld [vmem:[%s2] sm:$0x1]
          %v2731 = vperm.slane %v2729, 0
          %v2733 = vadd.f32 %v2728, %v2731
          %v2734 = vmax.f32 %v2733, 0.0
          %v2735 = vld [vmem:[%s3] sm:$0xff]
          %v2736 = vld [vmem:[%s3 + $0x8] sm:$0xff]
          %v2737 = vld [vmem:[%s3 + $0x10] sm:$0xff]
          %v2738 = vld [vmem:[%s3 + $0x18] sm:$0xff]
          %v2739 = vld [vmem:[%s3 + $0x20] sm:$0xff]
          %v2740 = vld [vmem:[%s3 + $0x28] sm:$0xff]
          %v2741 = vld [vmem:[%s3 + $0x30] sm:$0xff]
          %v2742 = vld [vmem:[%s3 + $0x38] sm:$0xff]
          %v2743 = vld [vmem:[%s3 + $0x40] sm:$0xff]
          %v2744 = vld [vmem:[%s3 + $0x48] sm:$0xff]
          %v2745 = vld [vmem:[%s3 + $0x50] sm:$0xff]
          %v2746 = vld [vmem:[%s3 + $0x58] sm:$0xff]
          %v2747 = vld [vmem:[%s3 + $0x60] sm:$0xff]
          %v2748 = vld [vmem:[%s3 + $0x68] sm:$0xff]
          %v2749 = vld [vmem:[%s3 + $0x70] sm:$0xff]
          %v2750 = vld [vmem:[%s3 + $0x78] sm:$0xff]
          %v2751 = vld [vmem:[%s4] sm:$0x1]
          %v2753 = vperm.slane %v2751, 0
          %2755 = vmatpush.msra.mxu0 %v2750
          %2756 = vmatpush.msra.mxu0 %v2749
          %2757 = vmatpush.msra.mxu0 %v2748
          %2758 = vmatpush.msra.mxu0 %v2747
          %2759 = vmatpush.msra.mxu0 %v2746
          %2760 = vmatpush.msra.mxu0 %v2745
          %2761 = vmatpush.msra.mxu0 %v2744
          %2762 = vmatpush.msra.mxu0 %v2743
          %2763 = vmatpush.msra.mxu0 %v2742
          %2764 = vmatpush.msra.mxu0 %v2741
          %2765 = vmatpush.msra.mxu0 %v2740
          %2766 = vmatpush.msra.mxu0 %v2739
          %2767 = vmatpush.msra.mxu0 %v2738
          %2768 = vmatpush.msra.mxu0 %v2737
          %2769 = vmatpush.msra.mxu0 %v2736
          %2770 = vmatpush.msra.mxu0 %v2735
          %2771 = vmatmul.f32.gmra.mxu0 %v2734
          %v2772 = vpop.f32.mrf.mxu0
          %v2773 = vadd.f32 %v2753, %v2772
          %2774 = vdwg.mxu0
          %vm2775 = vcmask 74752
          %2776 = vst.msk [vmem:[#allocation3] sm:$0x3] %vm2775, %v2773
        $region48: #{simple_cnn_forward.5} parent=39 // pred_fallthru
          _
        // Predicated region
        $region49: #{simple_cnn_forward.5} parent=39 // pred_check
          %p2777 = pneg %p145
        $region50: #{simple_cnn_forward.5} parent=39 // pred_check_branch
          %2779 = sbr.rel (%p2777) target = $region52
        $region51: #{simple_cnn_forward.5} parent=39 // pred_region
          %2781 = vsyncadd [#allocation4], 0
          %s2783 = sshll.u32 [#allocation3], 4
          %s2784 = int_to_ptr.vmem [resolvable:$true] %s2783
          %s2785 = sshll.u32 %s5, 4
          %s2786 = int_to_ptr.hbm [resolvable:$true] %s2785
          %2788 = dma.vmem_to_hbm [thread:$0]  %s2784, 32, %s2786, [#allocation4]
        $region52: #{simple_cnn_forward.5} parent=39 // pred_fallthru
          _
        // Predicated region
        $region53: #{simple_cnn_forward.5} parent=39 // pred_check
          %p2789 = pneg %p145
        $region54: #{simple_cnn_forward.5} parent=39 // pred_check_branch
          %2791 = sbr.rel (%p2789) target = $region56
        $region55: #{simple_cnn_forward.5} parent=39 // pred_region
          %2793 = dma.done [#allocation4], 32
        $region56: #{simple_cnn_forward.5} parent=39 // pred_fallthru
          _
      $region40: #{simple_cnn_forward.5} parent=5 // pred_fallthru
        _
      %p2794 = scmp.le.s32.totalorder 2, %s12
      // Predicated region
      $region57: #{simple_cnn_forward.5} parent=5 // pred_check
        %p2795 = pneg %p2794
      $region58: #{simple_cnn_forward.5} parent=5 // pred_check_branch
        %2797 = sbr.rel (%p2795) target = $region60
      $region59: #{simple_cnn_forward.5} parent=5 // pred_region
        %s2798 = ssub.s32 %s12, 2
      $region60: #{simple_cnn_forward.5} parent=5 // pred_fallthru
        _
    $region6: #{simple_cnn_forward.5} parent=1 // loop_footer
      %s16 = sadd.s32 1, %s12
    $region7: #{simple_cnn_forward.5} parent=1 // loop_footer_branch
      %11 = sbr.rel target = $region3
    $region8: #{simple_cnn_forward.5} parent=1 // loop_exit
      _
    %2799 = vsyncpa [#allocation4], 1
    %s2800 = scalar_lea.sflag [#allocation4], 1
    %2801 = vsyncpa %s2800, 1

</llo_original>
